<compile_context>
chip_gen: v5e
topology: v5e:2x2
jax: 0.10.0
libtpu: 0.0.40
codegen_flags: <defaults>
</compile_context>

<pallas_src>
import functools

import jax
import jax.numpy as jnp
from jax import lax
from jax.experimental import pallas as pl
from jax.experimental.pallas import tpu as pltpu

# ----------------------------- model config (scaled) -----------------------------
B = 2
D_SP = 16          # spatial dim of x_base / x_query tokens   (orig 64)
C_BQ = 128         # number of base/query tokens              (orig 1024)
D_W = 64           # w-latent width                           (orig 512)
N_C, C_C = 32, 64      # coarse: tokens / channels            (orig 256, 512)
N_M, C_M = 128, 32     # mid:    tokens / channels            (orig 1024, 256)
N_F, C_F = 512, 16     # fine:   tokens / channels            (orig 4096, 128)
HEADS = 4
HEAD_DIM = D_W // HEADS
WS_DIM = 14            # 1 (zero) + 3 coarse + 3 mid + 7 fine
NEG_SLOPE = 0.01       # PyTorch nn.LeakyReLU default
MXU = jnp.bfloat16     # MXU operand dtype; accumulation stays f32


def _round_up(x, m):
    return (x + m - 1) // m * m


# ----------------------------- fused kernel -----------------------------
def _goa_kernel(xb_ref, xq_ref, xc_ref, xm_ref, xf_ref, w_ref, cb_ref, rb_ref,
                ws_ref, base_ref, *, wmeta, cbmeta, rbmeta):
    """Whole GOAEncoder forward (stage = fine) for one batch element.

    xb_ref/xq_ref : (1, D_SP, C_BQ) bf16  (x_base^T / x_query^T, token axis on lanes)
    xc/xm/xf_ref  : (1, N, C) bf16        (coarse / mid / fine backbone features)
    w_ref         : (R, 128) bf16 weight slab (transposed-path weights stored as W^T)
    cb_ref        : (512, 16) f32 column-bias slab (token-axis layers)
    rb_ref        : (R, 128) f32 row-bias slab (+ w_avg)
    ws_ref        : (1, 14, D_W) f32  -> rec_ws = ws_base + delta + w_avg
    base_ref      : (1, 1, D_W)  f32  -> ws_base
    """
    f32 = jnp.float32

    def W(name):                                  # bf16 weight view
        r0, r, c = wmeta[name]
        return w_ref[r0:r0 + r, :c]

    def CB(name):                                 # (n, 1) column bias (transposed paths)
        lane, n = cbmeta[name]
        return cb_ref[0:n, lane:lane + 1]

    def RB(name):                                 # (1, n) row bias
        r0, n = rbmeta[name]
        return rb_ref[r0:r0 + 1, :n]

    def bf(x):
        return x.astype(MXU)

    def leaky(x):
        return jnp.where(x > 0, x, NEG_SLOPE * x)

    def mm(a, b):                                 # canonical (M,K)@(K,N) on the MXU
        return lax.dot_general(a, b, (((1,), (0,)), ((), ())),
                               preferred_element_type=jnp.float32)

    xb = xb_ref[0]      # (16, 128) bf16
    xq = xq_ref[0]      # (16, 128) bf16
    xc = xc_ref[0]      # (32, 64)  bf16
    xm = xm_ref[0]      # (128, 32) bf16
    xf = xf_ref[0]      # (512, 16) bf16

    def mlp2_rows(x, w1, b1, w2, b2):             # get_mlp_layer in row orientation
        h = leaky(mm(bf(x), W(w1)) + RB(b1))
        return mm(bf(h), W(w2)) + RB(b2)

    # ---- base branch (spatial mapper runs on the transposed layout) ----
    hb = leaky(mm(W("bsp1_T"), xb) + CB("bsp1_b"))                       # (16, 128)
    s_base = (mm(W("bsp2_T"), bf(hb)) + CB("bsp2_b")
              + jnp.max(xb.astype(f32), axis=0, keepdims=True))          # (1, 128)
    ws_base = mlp2_rows(s_base, "bch1", "bch1_b", "bch2", "bch2_b")      # (1, 64)

    # ---- query branches (3 stacked spatial first layers, shared maxpool) ----
    xq_max = jnp.max(xq.astype(f32), axis=0, keepdims=True)              # (1, 128)
    hq = bf(leaky(mm(W("qsp1_T"), xq) + CB("qsp1_b")))                   # (48, 128)
    s_qc = mm(W("qsp_c2_T"), hq[0:D_SP]) + CB("qsp_c2_b") + xq_max       # (3, 128)
    s_qm = mm(W("qsp_m2_T"), hq[D_SP:2 * D_SP]) + CB("qsp_m2_b") + xq_max
    s_qf = mm(W("qsp_f2_T"), hq[2 * D_SP:3 * D_SP]) + CB("qsp_f2_b") + xq_max
    q_c = mlp2_rows(s_qc, "qch_c1", "qch_c1_b", "qch_c2", "qch_c2_b")    # (3, 64)
    q_m = mlp2_rows(s_qm, "qch_m1", "qch_m1_b", "qch_m2", "qch_m2_b")    # (3, 64)
    q_f = mlp2_rows(s_qf, "qch_f1", "qch_f1_b", "qch_f2", "qch_f2_b")    # (7, 64)

    # ---- key/value pyramid ----
    kv_c = leaky(mm(xc, W("cch")) + RB("cch_b"))                         # (32, 64)
    kv_c_bf = bf(kv_c)
    h1 = bf(leaky(mm(W("c2m1_T"), kv_c_bf) + CB("c2m1_b")))              # (64, 64)
    c2m = leaky(mm(W("c2m2_T"), h1) + CB("c2m2_b"))                      # (128, 64)
    kv_m = leaky(mm(xm, W("mch")) + RB("mch_b")) + c2m                   # (128, 64)
    kv_m_bf = bf(kv_m)
    hf = bf(leaky(mm(xf, W("fch1")) + RB("fch1_b")))                     # (512, 32)
    fine = leaky(mm(hf, W("fch2")) + RB("fch2_b"))                       # (512, 64)
    h2 = bf(leaky(mm(W("m2f1_T"), kv_m_bf) + CB("m2f1_b")))              # (256, 64)
    m2f = leaky(mm(W("m2f2_Ta"), h2[0:N_M])                              # 256-contraction
                + mm(W("m2f2_Tb"), h2[N_M:2 * N_M]) + CB("m2f2_b"))      # (512, 64)
    kv_f_bf = bf(fine + m2f)                                             # (512, 64)

    # ---- cross attention (fused K|V projection, hoisted K^T, per-head Wo accum) ----
    def cross_att(q, kv, p):
        Q = bf(mm(bf(q), W(p + "_wq")) + RB(p + "_bq"))                  # (Lq,64), pre-scaled
        KV = mm(kv, W(p + "_wkv")) + RB(p + "_bkv")                      # (Lk,128) f32
        KT = bf(jnp.transpose(KV[:, :D_W]))                              # (64, Lk), one transpose
        wo = W(p + "_wo")                                                # (64, 64)
        out = None
        for h in range(HEADS):
            sl = slice(h * HEAD_DIM, (h + 1) * HEAD_DIM)
            s = mm(Q[:, sl], KT[sl, :])                                  # (Lq, Lk) f32
            s = s - jnp.max(s, axis=-1, keepdims=True)
            e = jnp.exp(s)
            prob = e * pl.reciprocal(jnp.sum(e, axis=-1, keepdims=True), approx=True)
            vh = bf(KV[:, D_W + h * HEAD_DIM:D_W + (h + 1) * HEAD_DIM])  # (Lk, 16)
            ctx = mm(bf(prob), vh)                                       # (Lq, 16)
            part = mm(bf(ctx), wo[sl, :])                                # (Lq, 64)
            out = part if out is None else out + part
        return out + RB(p + "_bo")

    ws_c = cross_att(q_c, kv_c_bf, "attc")                               # (3, 64)
    ws_m = cross_att(q_m, kv_m_bf, "attm")                               # (3, 64)
    ws_f = cross_att(q_f, kv_f_bf, "attf")                               # (7, 64)

    # ---- 14-slot assembly + w_avg, single lane-contiguous output store ----
    shift = ws_base + RB("w_avg")                                        # (1, 64)
    ws_full = jnp.concatenate(
        [shift, ws_c + shift, ws_m + shift, ws_f + shift], axis=0)       # (14, 64)
    ws_ref[0] = ws_full.astype(ws_ref.dtype)
    base_ref[0] = ws_base.astype(base_ref.dtype)


# ----------------------------- host-side param packing -----------------------------
def _linear_init(key, din, dout):
    kw, kb = jax.random.split(key)
    w = jax.random.normal(kw, (din, dout), jnp.float32) * din ** -0.5
    b = jax.random.normal(kb, (dout,), jnp.float32) * 0.01
    return w, b


def _pack_rows(entries, dtype, align, lanes=128):
    """Stack 2-D arrays by rows at `align`-aligned offsets into one (R, lanes) slab."""
    meta, off = {}, 0
    for name, a in entries:
        r, c = a.shape
        assert c <= lanes, name
        meta[name] = (off, r, c)
        off += _round_up(r, align)
    slab = jnp.zeros((_round_up(off, align), lanes), dtype)
    for name, a in entries:
        r0, r, c = meta[name]
        slab = slab.at[r0:r0 + r, :c].set(a.astype(dtype))
    return slab, meta


def _pack_bias_rows(entries, lanes=128):
    """Each 1-D bias becomes one lane-dense row at an 8-aligned row offset."""
    meta = {name: (8 * i, b.shape[0]) for i, (name, b) in enumerate(entries)}
    slab = jnp.zeros((8 * len(entries), lanes), jnp.float32)
    for name, b in entries:
        r0, n = meta[name]
        slab = slab.at[r0, :n].set(b.astype(jnp.float32))
    return slab, meta


def _pack_bias_cols(entries):
    """Column biases (token-axis layers): one lane each, rows 0:len."""
    rows = _round_up(max(b.shape[0] for _, b in entries), 8)
    lanes = _round_up(len(entries), 8)
    slab = jnp.zeros((rows, lanes), jnp.float32)
    meta = {}
    for i, (name, b) in enumerate(entries):
        meta[name] = (i, b.shape[0])
        slab = slab.at[:b.shape[0], i].set(b.astype(jnp.float32))
    return slab, meta


def init_and_pack_params(key):
    keys = iter(jax.random.split(key, 64))

    def L(din, dout):
        return _linear_init(next(keys), din, dout)

    # raw params, PyTorch orientation (y = x @ W + b)
    bsp1, bsp2 = L(D_SP, D_SP), L(D_SP, 1)
    qspc1, qspc2 = L(D_SP, D_SP), L(D_SP, 3)
    qspm1, qspm2 = L(D_SP, D_SP), L(D_SP, 3)
    qspf1, qspf2 = L(D_SP, D_SP), L(D_SP, 7)
    bch1, bch2 = L(C_BQ, C_BQ), L(C_BQ, D_W)
    qchc1, qchc2 = L(C_BQ, C_BQ), L(C_BQ, D_W)
    qchm1, qchm2 = L(C_BQ, C_BQ), L(C_BQ, D_W)
    qchf1, qchf2 = L(C_BQ, C_BQ), L(C_BQ, D_W)
    cch = L(C_C, D_W)
    mch = L(C_M, D_W)
    fch1, fch2 = L(C_F, 2 * C_F), L(2 * C_F, D_W)
    c2m1, c2m2 = L(N_C, 2 * N_C), L(2 * N_C, N_M)
    m2f1, m2f2 = L(N_M, 2 * N_M), L(2 * N_M, N_F)
    atts = {name: dict(wq=L(D_W, D_W), wk=L(D_W, D_W), wv=L(D_W, D_W), wo=L(D_W, D_W))
            for name in ("attc", "attm", "attf")}
    w_avg = jax.random.normal(next(keys), (D_W,), jnp.float32) * 0.1

    scale = HEAD_DIM ** -0.5    # softmax scale folded into Wq / bq

    # ---- weight slab (bf16): transposed (token-axis) layers stored as W^T ----
    w_entries = [
        ("bsp1_T", bsp1[0].T), ("bsp2_T", bsp2[0].T),
        ("qsp1_T", jnp.concatenate([qspc1[0].T, qspm1[0].T, qspf1[0].T], axis=0)),
        ("qsp_c2_T", qspc2[0].T), ("qsp_m2_T", qspm2[0].T), ("qsp_f2_T", qspf2[0].T),
        ("c2m1_T", c2m1[0].T), ("c2m2_T", c2m2[0].T),
        ("m2f1_T", m2f1[0].T),
        ("m2f2_Ta", m2f2[0].T[:, :N_M]), ("m2f2_Tb", m2f2[0].T[:, N_M:]),
        ("bch1", bch1[0]), ("bch2", bch2[0]),
        ("qch_c1", qchc1[0]), ("qch_c2", qchc2[0]),
        ("qch_m1", qchm1[0]), ("qch_m2", qchm2[0]),
        ("qch_f1", qchf1[0]), ("qch_f2", qchf2[0]),
        ("cch", cch[0]), ("mch", mch[0]), ("fch1", fch1[0]), ("fch2", fch2[0]),
    ]
    for name, a in atts.items():
        w_entries += [
            (name + "_wq", a["wq"][0] * scale),
            (name + "_wkv", jnp.concatenate([a["wk"][0], a["wv"][0]], axis=1)),
            (name + "_wo", a["wo"][0]),
        ]

    rb_entries = [
        ("bch1_b", bch1[1]), ("bch2_b", bch2[1]),
        ("qch_c1_b", qchc1[1]), ("qch_c2_b", qchc2[1]),
        ("qch_m1_b", qchm1[1]), ("qch_m2_b", qchm2[1]),
        ("qch_f1_b", qchf1[1]), ("qch_f2_b", qchf2[1]),
        ("cch_b", cch[1]), ("mch_b", mch[1]),
        ("fch1_b", fch1[1]), ("fch2_b", fch2[1]),
    ]
    for name, a in atts.items():
        rb_entries += [
            (name + "_bq", a["wq"][1] * scale),
            (name + "_bkv", jnp.concatenate([a["wk"][1], a["wv"][1]])),
            (name + "_bo", a["wo"][1]),
        ]
    rb_entries.append(("w_avg", w_avg))

    cb_entries = [
        ("bsp1_b", bsp1[1]), ("bsp2_b", bsp2[1]),
        ("qsp1_b", jnp.concatenate([qspc1[1], qspm1[1], qspf1[1]])),
        ("qsp_c2_b", qspc2[1]), ("qsp_m2_b", qspm2[1]), ("qsp_f2_b", qspf2[1]),
        ("c2m1_b", c2m1[1]), ("c2m2_b", c2m2[1]),
        ("m2f1_b", m2f1[1]), ("m2f2_b", m2f2[1]),
    ]

    w_slab, wmeta = _pack_rows(w_entries, MXU, align=16)
    rb_slab, rbmeta = _pack_bias_rows(rb_entries)
    cb_slab, cbmeta = _pack_bias_cols(cb_entries)
    return (w_slab, cb_slab, rb_slab), (wmeta, cbmeta, rbmeta)


# ----------------------------- pallas_call wrapper -----------------------------
def make_net_forward(wmeta, cbmeta, rbmeta):
    kernel = functools.partial(_goa_kernel, wmeta=wmeta, cbmeta=cbmeta, rbmeta=rbmeta)

    @jax.jit
    def net_forward(x_base, x_query, x_coarse, x_mid, x_fine,
                    w_slab, cb_slab, rb_slab):
        """GOAEncoder.forward (stage=3 / Inference) + Net's `rec_ws = ws + w_avg`."""
        batch = x_base.shape[0]
        # one-off layout swap + bf16 cast so the 128-wide token axis stays on lanes
        xbT = jnp.swapaxes(x_base, 1, 2).astype(MXU)      # (B, D_SP, C_BQ)
        xqT = jnp.swapaxes(x_query, 1, 2).astype(MXU)
        xc = x_coarse.astype(MXU)
        xm = x_mid.astype(MXU)
        xf = x_fine.astype(MXU)

        in_specs = [
            pl.BlockSpec((1, D_SP, C_BQ), lambda i: (i, 0, 0)),
            pl.BlockSpec((1, D_SP, C_BQ), lambda i: (i, 0, 0)),
            pl.BlockSpec((1, N_C, C_C), lambda i: (i, 0, 0)),
            pl.BlockSpec((1, N_M, C_M), lambda i: (i, 0, 0)),
            pl.BlockSpec((1, N_F, C_F), lambda i: (i, 0, 0)),
            pl.BlockSpec(w_slab.shape, lambda i: (0, 0)),   # resident across grid
            pl.BlockSpec(cb_slab.shape, lambda i: (0, 0)),
            pl.BlockSpec(rb_slab.shape, lambda i: (0, 0)),
        ]
        out_shape = (
            jax.ShapeDtypeStruct((batch, WS_DIM, D_W), jnp.float32),   # rec_ws
            jax.ShapeDtypeStruct((batch, 1, D_W), jnp.float32),        # ws_base
        )
        out_specs = (
            pl.BlockSpec((1, WS_DIM, D_W), lambda i: (i, 0, 0)),
            pl.BlockSpec((1, 1, D_W), lambda i: (i, 0, 0)),
        )
        rec_ws, ws_base = pl.pallas_call(
            kernel,
            out_shape=out_shape,
            grid=(batch,),
            in_specs=in_specs,
            out_specs=out_specs,
            compiler_params=pltpu.CompilerParams(dimension_semantics=("parallel",)),
        )(xbT, xqT, xc, xm, xf, w_slab, cb_slab, rb_slab)

        ws_base_rep = jnp.broadcast_to(ws_base, (batch, WS_DIM, D_W))
        return rec_ws, ws_base_rep

    return net_forward


# ----------------------------- main -----------------------------
if __name__ == "__main__":
    key = jax.random.PRNGKey(0)
    k_par, k_b, k_q, k_c, k_m, k_f = jax.random.split(key, 6)

    (w_slab, cb_slab, rb_slab), (wmeta, cbmeta, rbmeta) = init_and_pack_params(k_par)
    net_forward = make_net_forward(wmeta, cbmeta, rbmeta)

    # swin backbone outputs (backbone itself is external; see TODO above)
    x_base = jax.random.normal(k_b, (B, C_BQ, D_SP), jnp.float32)
    x_query = jax.random.normal(k_q, (B, C_BQ, D_SP), jnp.float32)
    x_coarse = jax.random.normal(k_c, (B, N_C, C_C), jnp.float32)
    x_mid = jax.random.normal(k_m, (B, N_M, C_M), jnp.float32)
    x_fine = jax.random.normal(k_f, (B, N_F, C_F), jnp.float32)

    rec_ws, ws_base = net_forward(x_base, x_query, x_coarse, x_mid, x_fine,
                                  w_slab, cb_slab, rb_slab)
    jax.block_until_ready((rec_ws, ws_base))

    assert rec_ws.shape == (B, WS_DIM, D_W) and ws_base.shape == (B, WS_DIM, D_W)
    assert bool(jnp.all(jnp.isfinite(rec_ws))) and bool(jnp.all(jnp.isfinite(ws_base)))
    print("KERNEL_OK")
</pallas_src>

<mosaic_0001>
module attributes {stable_mosaic.version = 11 : i64} {
  func.func @_goa_kernel(%arg0: i32, %arg1: memref<1x16x128xbf16, #tpu.memory_space<vmem>>, %arg2: memref<1x16x128xbf16, #tpu.memory_space<vmem>>, %arg3: memref<1x32x64xbf16, #tpu.memory_space<vmem>>, %arg4: memref<1x128x32xbf16, #tpu.memory_space<vmem>>, %arg5: memref<1x512x16xbf16, #tpu.memory_space<vmem>>, %arg6: memref<3344x128xbf16, #tpu.memory_space<vmem>>, %arg7: memref<512x16xf32, #tpu.memory_space<vmem>>, %arg8: memref<176x128xf32, #tpu.memory_space<vmem>>, %arg9: memref<1x14x64xf32, #tpu.memory_space<vmem>>, %arg10: memref<1x1x64xf32, #tpu.memory_space<vmem>>) attributes {dimension_semantics = [#tpu.dimension_semantics<parallel>], iteration_bounds = array<i64: 2>, scalar_prefetch = 0 : i64, scratch_operands = 0 : i64, tpu.core_type = #tpu.core_type<tc>, window_params = [{transform_indices = @transform_0, window_bounds = array<i64: 1, 16, 128>}, {transform_indices = @transform_1, window_bounds = array<i64: 1, 16, 128>}, {transform_indices = @transform_2, window_bounds = array<i64: 1, 32, 64>}, {transform_indices = @transform_3, window_bounds = array<i64: 1, 128, 32>}, {transform_indices = @transform_4, window_bounds = array<i64: 1, 512, 16>}, {pipeline_mode = #tpu.pipeline_mode<synchronous>, transform_indices = @transform_5, window_bounds = array<i64: 3344, 128>}, {pipeline_mode = #tpu.pipeline_mode<synchronous>, transform_indices = @transform_6, window_bounds = array<i64: 512, 16>}, {pipeline_mode = #tpu.pipeline_mode<synchronous>, transform_indices = @transform_7, window_bounds = array<i64: 176, 128>}, {transform_indices = @transform_8, window_bounds = array<i64: 1, 14, 64>}, {transform_indices = @transform_9, window_bounds = array<i64: 1, 1, 64>}]} {
    %c0 = arith.constant 0 : index
    %c0_0 = arith.constant 0 : index
    %c0_1 = arith.constant 0 : index
    %0 = vector.load %arg1[%c0, %c0_0, %c0_1] : memref<1x16x128xbf16, #tpu.memory_space<vmem>>, vector<1x16x128xbf16>
    %1 = vector.shape_cast %0 : vector<1x16x128xbf16> to vector<16x128xbf16>
    %c0_2 = arith.constant 0 : index
    %c0_3 = arith.constant 0 : index
    %c0_4 = arith.constant 0 : index
    %2 = vector.load %arg2[%c0_2, %c0_3, %c0_4] : memref<1x16x128xbf16, #tpu.memory_space<vmem>>, vector<1x16x128xbf16>
    %3 = vector.shape_cast %2 : vector<1x16x128xbf16> to vector<16x128xbf16>
    %c0_5 = arith.constant 0 : index
    %c0_6 = arith.constant 0 : index
    %c0_7 = arith.constant 0 : index
    %4 = vector.load %arg3[%c0_5, %c0_6, %c0_7] : memref<1x32x64xbf16, #tpu.memory_space<vmem>>, vector<1x32x64xbf16>
    %5 = vector.shape_cast %4 : vector<1x32x64xbf16> to vector<32x64xbf16>
    %c0_8 = arith.constant 0 : index
    %c0_9 = arith.constant 0 : index
    %c0_10 = arith.constant 0 : index
    %6 = vector.load %arg4[%c0_8, %c0_9, %c0_10] : memref<1x128x32xbf16, #tpu.memory_space<vmem>>, vector<1x128x32xbf16>
    %7 = vector.shape_cast %6 : vector<1x128x32xbf16> to vector<128x32xbf16>
    %c0_11 = arith.constant 0 : index
    %c0_12 = arith.constant 0 : index
    %c0_13 = arith.constant 0 : index
    %8 = vector.load %arg5[%c0_11, %c0_12, %c0_13] : memref<1x512x16xbf16, #tpu.memory_space<vmem>>, vector<1x512x16xbf16>
    %9 = vector.shape_cast %8 : vector<1x512x16xbf16> to vector<512x16xbf16>
    %c0_14 = arith.constant 0 : index
    %c0_15 = arith.constant 0 : index
    %10 = vector.load %arg6[%c0_14, %c0_15] : memref<3344x128xbf16, #tpu.memory_space<vmem>>, vector<16x16xbf16>
    %cst = arith.constant dense<0.000000e+00> : vector<16x128xf32>
    %11 = tpu.matmul %10, %1, %cst {dimension_numbers = #tpu.dot_dimension_numbers<[1], [0], [0], [1], [0, 0, 1, 1], [], []>} : vector<16x16xbf16>, vector<16x128xbf16>, vector<16x128xf32> -> vector<16x128xf32>
    %c0_16 = arith.constant 0 : index
    %c0_17 = arith.constant 0 : index
    %12 = vector.load %arg7[%c0_16, %c0_17] : memref<512x16xf32, #tpu.memory_space<vmem>>, vector<16x1xf32>
    %13 = vector.broadcast %12 : vector<16x1xf32> to vector<16x128xf32>
    %14 = arith.addf %11, %13 : vector<16x128xf32>
    %cst_18 = arith.constant 0.000000e+00 : f32
    %15 = vector.broadcast %cst_18 : f32 to vector<16x128xf32>
    %16 = arith.cmpf ogt, %14, %15 : vector<16x128xf32>
    %cst_19 = arith.constant 0.00999999977 : f32
    %17 = vector.broadcast %cst_19 : f32 to vector<16x128xf32>
    %18 = arith.mulf %17, %14 : vector<16x128xf32>
    %19 = arith.select %16, %14, %18 : vector<16x128xi1>, vector<16x128xf32>
    %c16 = arith.constant 16 : index
    %c0_20 = arith.constant 0 : index
    %20 = vector.load %arg6[%c16, %c0_20] : memref<3344x128xbf16, #tpu.memory_space<vmem>>, vector<1x16xbf16>
    %21 = arith.truncf %19 : vector<16x128xf32> to vector<16x128xbf16>
    %cst_21 = arith.constant dense<0.000000e+00> : vector<1x128xf32>
    %22 = tpu.matmul %20, %21, %cst_21 {dimension_numbers = #tpu.dot_dimension_numbers<[1], [0], [0], [1], [0, 0, 1, 1], [], []>} : vector<1x16xbf16>, vector<16x128xbf16>, vector<1x128xf32> -> vector<1x128xf32>
    %c0_22 = arith.constant 0 : index
    %c1 = arith.constant 1 : index
    %23 = vector.load %arg7[%c0_22, %c1] : memref<512x16xf32, #tpu.memory_space<vmem>>, vector<1x1xf32>
    %24 = vector.broadcast %23 : vector<1x1xf32> to vector<1x128xf32>
    %25 = arith.addf %22, %24 : vector<1x128xf32>
    %26 = arith.extf %1 : vector<16x128xbf16> to vector<16x128xf32>
    %cst_23 = arith.constant dense<0xFF800000> : vector<128xf32>
    %27 = vector.multi_reduction <maximumf>, %26, %cst_23 [0] : vector<16x128xf32> to vector<128xf32>
    %28 = vector.shape_cast %27 : vector<128xf32> to vector<1x128xf32>
    %29 = arith.addf %25, %28 : vector<1x128xf32>
    %30 = arith.truncf %29 : vector<1x128xf32> to vector<1x128xbf16>
    %c1600 = arith.constant 1600 : index
    %c0_24 = arith.constant 0 : index
    %31 = vector.load %arg6[%c1600, %c0_24] : memref<3344x128xbf16, #tpu.memory_space<vmem>>, vector<128x128xbf16>
    %cst_25 = arith.constant dense<0.000000e+00> : vector<1x128xf32>
    %32 = tpu.matmul %30, %31, %cst_25 {dimension_numbers = #tpu.dot_dimension_numbers<[1], [0], [0], [1], [0, 0, 1, 1], [], []>} : vector<1x128xbf16>, vector<128x128xbf16>, vector<1x128xf32> -> vector<1x128xf32>
    %c0_26 = arith.constant 0 : index
    %c0_27 = arith.constant 0 : index
    %33 = vector.load %arg8[%c0_26, %c0_27] : memref<176x128xf32, #tpu.memory_space<vmem>>, vector<1x128xf32>
    %34 = arith.addf %32, %33 : vector<1x128xf32>
    %cst_28 = arith.constant 0.000000e+00 : f32
    %35 = vector.broadcast %cst_28 : f32 to vector<1x128xf32>
    %36 = arith.cmpf ogt, %34, %35 : vector<1x128xf32>
    %cst_29 = arith.constant 0.00999999977 : f32
    %37 = vector.broadcast %cst_29 : f32 to vector<1x128xf32>
    %38 = arith.mulf %37, %34 : vector<1x128xf32>
    %39 = arith.select %36, %34, %38 : vector<1x128xi1>, vector<1x128xf32>
    %40 = arith.truncf %39 : vector<1x128xf32> to vector<1x128xbf16>
    %c1728 = arith.constant 1728 : index
    %c0_30 = arith.constant 0 : index
    %41 = vector.load %arg6[%c1728, %c0_30] : memref<3344x128xbf16, #tpu.memory_space<vmem>>, vector<128x64xbf16>
    %cst_31 = arith.constant dense<0.000000e+00> : vector<1x64xf32>
    %42 = tpu.matmul %40, %41, %cst_31 {dimension_numbers = #tpu.dot_dimension_numbers<[1], [0], [0], [1], [0, 0, 1, 1], [], []>} : vector<1x128xbf16>, vector<128x64xbf16>, vector<1x64xf32> -> vector<1x64xf32>
    %c8 = arith.constant 8 : index
    %c0_32 = arith.constant 0 : index
    %43 = vector.load %arg8[%c8, %c0_32] : memref<176x128xf32, #tpu.memory_space<vmem>>, vector<1x64xf32>
    %44 = arith.addf %42, %43 : vector<1x64xf32>
    %45 = arith.extf %3 : vector<16x128xbf16> to vector<16x128xf32>
    %cst_33 = arith.constant dense<0xFF800000> : vector<128xf32>
    %46 = vector.multi_reduction <maximumf>, %45, %cst_33 [0] : vector<16x128xf32> to vector<128xf32>
    %47 = vector.shape_cast %46 : vector<128xf32> to vector<1x128xf32>
    %c32 = arith.constant 32 : index
    %c0_34 = arith.constant 0 : index
    %48 = vector.load %arg6[%c32, %c0_34] : memref<3344x128xbf16, #tpu.memory_space<vmem>>, vector<48x16xbf16>
    %cst_35 = arith.constant dense<0.000000e+00> : vector<48x128xf32>
    %49 = tpu.matmul %48, %3, %cst_35 {dimension_numbers = #tpu.dot_dimension_numbers<[1], [0], [0], [1], [0, 0, 1, 1], [], []>} : vector<48x16xbf16>, vector<16x128xbf16>, vector<48x128xf32> -> vector<48x128xf32>
    %c0_36 = arith.constant 0 : index
    %c2 = arith.constant 2 : index
    %50 = vector.load %arg7[%c0_36, %c2] : memref<512x16xf32, #tpu.memory_space<vmem>>, vector<48x1xf32>
    %51 = vector.broadcast %50 : vector<48x1xf32> to vector<48x128xf32>
    %52 = arith.addf %49, %51 : vector<48x128xf32>
    %cst_37 = arith.constant 0.000000e+00 : f32
    %53 = vector.broadcast %cst_37 : f32 to vector<48x128xf32>
    %54 = arith.cmpf ogt, %52, %53 : vector<48x128xf32>
    %cst_38 = arith.constant 0.00999999977 : f32
    %55 = vector.broadcast %cst_38 : f32 to vector<48x128xf32>
    %56 = arith.mulf %55, %52 : vector<48x128xf32>
    %57 = arith.select %54, %52, %56 : vector<48x128xi1>, vector<48x128xf32>
    %58 = arith.truncf %57 : vector<48x128xf32> to vector<48x128xbf16>
    %c80 = arith.constant 80 : index
    %c0_39 = arith.constant 0 : index
    %59 = vector.load %arg6[%c80, %c0_39] : memref<3344x128xbf16, #tpu.memory_space<vmem>>, vector<3x16xbf16>
    %60 = vector.extract_strided_slice %58 {offsets = [0, 0], sizes = [16, 128], strides = [1, 1]} : vector<48x128xbf16> to vector<16x128xbf16>
    %cst_40 = arith.constant dense<0.000000e+00> : vector<3x128xf32>
    %61 = tpu.matmul %59, %60, %cst_40 {dimension_numbers = #tpu.dot_dimension_numbers<[1], [0], [0], [1], [0, 0, 1, 1], [], []>} : vector<3x16xbf16>, vector<16x128xbf16>, vector<3x128xf32> -> vector<3x128xf32>
    %c0_41 = arith.constant 0 : index
    %c3 = arith.constant 3 : index
    %62 = vector.load %arg7[%c0_41, %c3] : memref<512x16xf32, #tpu.memory_space<vmem>>, vector<3x1xf32>
    %63 = vector.broadcast %62 : vector<3x1xf32> to vector<3x128xf32>
    %64 = arith.addf %61, %63 : vector<3x128xf32>
    %65 = vector.broadcast %47 : vector<1x128xf32> to vector<3x128xf32>
    %66 = arith.addf %64, %65 : vector<3x128xf32>
    %c96 = arith.constant 96 : index
    %c0_42 = arith.constant 0 : index
    %67 = vector.load %arg6[%c96, %c0_42] : memref<3344x128xbf16, #tpu.memory_space<vmem>>, vector<3x16xbf16>
    %68 = vector.extract_strided_slice %58 {offsets = [16, 0], sizes = [16, 128], strides = [1, 1]} : vector<48x128xbf16> to vector<16x128xbf16>
    %cst_43 = arith.constant dense<0.000000e+00> : vector<3x128xf32>
    %69 = tpu.matmul %67, %68, %cst_43 {dimension_numbers = #tpu.dot_dimension_numbers<[1], [0], [0], [1], [0, 0, 1, 1], [], []>} : vector<3x16xbf16>, vector<16x128xbf16>, vector<3x128xf32> -> vector<3x128xf32>
    %c0_44 = arith.constant 0 : index
    %c4 = arith.constant 4 : index
    %70 = vector.load %arg7[%c0_44, %c4] : memref<512x16xf32, #tpu.memory_space<vmem>>, vector<3x1xf32>
    %71 = vector.broadcast %70 : vector<3x1xf32> to vector<3x128xf32>
    %72 = arith.addf %69, %71 : vector<3x128xf32>
    %73 = vector.broadcast %47 : vector<1x128xf32> to vector<3x128xf32>
    %74 = arith.addf %72, %73 : vector<3x128xf32>
    %c112 = arith.constant 112 : index
    %c0_45 = arith.constant 0 : index
    %75 = vector.load %arg6[%c112, %c0_45] : memref<3344x128xbf16, #tpu.memory_space<vmem>>, vector<7x16xbf16>
    %76 = vector.extract_strided_slice %58 {offsets = [32, 0], sizes = [16, 128], strides = [1, 1]} : vector<48x128xbf16> to vector<16x128xbf16>
    %cst_46 = arith.constant dense<0.000000e+00> : vector<7x128xf32>
    %77 = tpu.matmul %75, %76, %cst_46 {dimension_numbers = #tpu.dot_dimension_numbers<[1], [0], [0], [1], [0, 0, 1, 1], [], []>} : vector<7x16xbf16>, vector<16x128xbf16>, vector<7x128xf32> -> vector<7x128xf32>
    %c0_47 = arith.constant 0 : index
    %c5 = arith.constant 5 : index
    %78 = vector.load %arg7[%c0_47, %c5] : memref<512x16xf32, #tpu.memory_space<vmem>>, vector<7x1xf32>
    %79 = vector.broadcast %78 : vector<7x1xf32> to vector<7x128xf32>
    %80 = arith.addf %77, %79 : vector<7x128xf32>
    %81 = vector.broadcast %47 : vector<1x128xf32> to vector<7x128xf32>
    %82 = arith.addf %80, %81 : vector<7x128xf32>
    %83 = arith.truncf %66 : vector<3x128xf32> to vector<3x128xbf16>
    %c1856 = arith.constant 1856 : index
    %c0_48 = arith.constant 0 : index
    %84 = vector.load %arg6[%c1856, %c0_48] : memref<3344x128xbf16, #tpu.memory_space<vmem>>, vector<128x128xbf16>
    %cst_49 = arith.constant dense<0.000000e+00> : vector<3x128xf32>
    %85 = tpu.matmul %83, %84, %cst_49 {dimension_numbers = #tpu.dot_dimension_numbers<[1], [0], [0], [1], [0, 0, 1, 1], [], []>} : vector<3x128xbf16>, vector<128x128xbf16>, vector<3x128xf32> -> vector<3x128xf32>
    %c16_50 = arith.constant 16 : index
    %c0_51 = arith.constant 0 : index
    %86 = vector.load %arg8[%c16_50, %c0_51] : memref<176x128xf32, #tpu.memory_space<vmem>>, vector<1x128xf32>
    %87 = vector.broadcast %86 : vector<1x128xf32> to vector<3x128xf32>
    %88 = arith.addf %85, %87 : vector<3x128xf32>
    %cst_52 = arith.constant 0.000000e+00 : f32
    %89 = vector.broadcast %cst_52 : f32 to vector<3x128xf32>
    %90 = arith.cmpf ogt, %88, %89 : vector<3x128xf32>
    %cst_53 = arith.constant 0.00999999977 : f32
    %91 = vector.broadcast %cst_53 : f32 to vector<3x128xf32>
    %92 = arith.mulf %91, %88 : vector<3x128xf32>
    %93 = arith.select %90, %88, %92 : vector<3x128xi1>, vector<3x128xf32>
    %94 = arith.truncf %93 : vector<3x128xf32> to vector<3x128xbf16>
    %c1984 = arith.constant 1984 : index
    %c0_54 = arith.constant 0 : index
    %95 = vector.load %arg6[%c1984, %c0_54] : memref<3344x128xbf16, #tpu.memory_space<vmem>>, vector<128x64xbf16>
    %cst_55 = arith.constant dense<0.000000e+00> : vector<3x64xf32>
    %96 = tpu.matmul %94, %95, %cst_55 {dimension_numbers = #tpu.dot_dimension_numbers<[1], [0], [0], [1], [0, 0, 1, 1], [], []>} : vector<3x128xbf16>, vector<128x64xbf16>, vector<3x64xf32> -> vector<3x64xf32>
    %c24 = arith.constant 24 : index
    %c0_56 = arith.constant 0 : index
    %97 = vector.load %arg8[%c24, %c0_56] : memref<176x128xf32, #tpu.memory_space<vmem>>, vector<1x64xf32>
    %98 = vector.broadcast %97 : vector<1x64xf32> to vector<3x64xf32>
    %99 = arith.addf %96, %98 : vector<3x64xf32>
    %100 = arith.truncf %74 : vector<3x128xf32> to vector<3x128xbf16>
    %c2112 = arith.constant 2112 : index
    %c0_57 = arith.constant 0 : index
    %101 = vector.load %arg6[%c2112, %c0_57] : memref<3344x128xbf16, #tpu.memory_space<vmem>>, vector<128x128xbf16>
    %cst_58 = arith.constant dense<0.000000e+00> : vector<3x128xf32>
    %102 = tpu.matmul %100, %101, %cst_58 {dimension_numbers = #tpu.dot_dimension_numbers<[1], [0], [0], [1], [0, 0, 1, 1], [], []>} : vector<3x128xbf16>, vector<128x128xbf16>, vector<3x128xf32> -> vector<3x128xf32>
    %c32_59 = arith.constant 32 : index
    %c0_60 = arith.constant 0 : index
    %103 = vector.load %arg8[%c32_59, %c0_60] : memref<176x128xf32, #tpu.memory_space<vmem>>, vector<1x128xf32>
    %104 = vector.broadcast %103 : vector<1x128xf32> to vector<3x128xf32>
    %105 = arith.addf %102, %104 : vector<3x128xf32>
    %cst_61 = arith.constant 0.000000e+00 : f32
    %106 = vector.broadcast %cst_61 : f32 to vector<3x128xf32>
    %107 = arith.cmpf ogt, %105, %106 : vector<3x128xf32>
    %cst_62 = arith.constant 0.00999999977 : f32
    %108 = vector.broadcast %cst_62 : f32 to vector<3x128xf32>
    %109 = arith.mulf %108, %105 : vector<3x128xf32>
    %110 = arith.select %107, %105, %109 : vector<3x128xi1>, vector<3x128xf32>
    %111 = arith.truncf %110 : vector<3x128xf32> to vector<3x128xbf16>
    %c2240 = arith.constant 2240 : index
    %c0_63 = arith.constant 0 : index
    %112 = vector.load %arg6[%c2240, %c0_63] : memref<3344x128xbf16, #tpu.memory_space<vmem>>, vector<128x64xbf16>
    %cst_64 = arith.constant dense<0.000000e+00> : vector<3x64xf32>
    %113 = tpu.matmul %111, %112, %cst_64 {dimension_numbers = #tpu.dot_dimension_numbers<[1], [0], [0], [1], [0, 0, 1, 1], [], []>} : vector<3x128xbf16>, vector<128x64xbf16>, vector<3x64xf32> -> vector<3x64xf32>
    %c40 = arith.constant 40 : index
    %c0_65 = arith.constant 0 : index
    %114 = vector.load %arg8[%c40, %c0_65] : memref<176x128xf32, #tpu.memory_space<vmem>>, vector<1x64xf32>
    %115 = vector.broadcast %114 : vector<1x64xf32> to vector<3x64xf32>
    %116 = arith.addf %113, %115 : vector<3x64xf32>
    %117 = arith.truncf %82 : vector<7x128xf32> to vector<7x128xbf16>
    %c2368 = arith.constant 2368 : index
    %c0_66 = arith.constant 0 : index
    %118 = vector.load %arg6[%c2368, %c0_66] : memref<3344x128xbf16, #tpu.memory_space<vmem>>, vector<128x128xbf16>
    %cst_67 = arith.constant dense<0.000000e+00> : vector<7x128xf32>
    %119 = tpu.matmul %117, %118, %cst_67 {dimension_numbers = #tpu.dot_dimension_numbers<[1], [0], [0], [1], [0, 0, 1, 1], [], []>} : vector<7x128xbf16>, vector<128x128xbf16>, vector<7x128xf32> -> vector<7x128xf32>
    %c48 = arith.constant 48 : index
    %c0_68 = arith.constant 0 : index
    %120 = vector.load %arg8[%c48, %c0_68] : memref<176x128xf32, #tpu.memory_space<vmem>>, vector<1x128xf32>
    %121 = vector.broadcast %120 : vector<1x128xf32> to vector<7x128xf32>
    %122 = arith.addf %119, %121 : vector<7x128xf32>
    %cst_69 = arith.constant 0.000000e+00 : f32
    %123 = vector.broadcast %cst_69 : f32 to vector<7x128xf32>
    %124 = arith.cmpf ogt, %122, %123 : vector<7x128xf32>
    %cst_70 = arith.constant 0.00999999977 : f32
    %125 = vector.broadcast %cst_70 : f32 to vector<7x128xf32>
    %126 = arith.mulf %125, %122 : vector<7x128xf32>
    %127 = arith.select %124, %122, %126 : vector<7x128xi1>, vector<7x128xf32>
    %128 = arith.truncf %127 : vector<7x128xf32> to vector<7x128xbf16>
    %c2496 = arith.constant 2496 : index
    %c0_71 = arith.constant 0 : index
    %129 = vector.load %arg6[%c2496, %c0_71] : memref<3344x128xbf16, #tpu.memory_space<vmem>>, vector<128x64xbf16>
    %cst_72 = arith.constant dense<0.000000e+00> : vector<7x64xf32>
    %130 = tpu.matmul %128, %129, %cst_72 {dimension_numbers = #tpu.dot_dimension_numbers<[1], [0], [0], [1], [0, 0, 1, 1], [], []>} : vector<7x128xbf16>, vector<128x64xbf16>, vector<7x64xf32> -> vector<7x64xf32>
    %c56 = arith.constant 56 : index
    %c0_73 = arith.constant 0 : index
    %131 = vector.load %arg8[%c56, %c0_73] : memref<176x128xf32, #tpu.memory_space<vmem>>, vector<1x64xf32>
    %132 = vector.broadcast %131 : vector<1x64xf32> to vector<7x64xf32>
    %133 = arith.addf %130, %132 : vector<7x64xf32>
    %c2624 = arith.constant 2624 : index
    %c0_74 = arith.constant 0 : index
    %134 = vector.load %arg6[%c2624, %c0_74] : memref<3344x128xbf16, #tpu.memory_space<vmem>>, vector<64x64xbf16>
    %cst_75 = arith.constant dense<0.000000e+00> : vector<32x64xf32>
    %135 = tpu.matmul %5, %134, %cst_75 {dimension_numbers = #tpu.dot_dimension_numbers<[1], [0], [0], [1], [0, 0, 1, 1], [], []>} : vector<32x64xbf16>, vector<64x64xbf16>, vector<32x64xf32> -> vector<32x64xf32>
    %c64 = arith.constant 64 : index
    %c0_76 = arith.constant 0 : index
    %136 = vector.load %arg8[%c64, %c0_76] : memref<176x128xf32, #tpu.memory_space<vmem>>, vector<1x64xf32>
    %137 = vector.broadcast %136 : vector<1x64xf32> to vector<32x64xf32>
    %138 = arith.addf %135, %137 : vector<32x64xf32>
    %cst_77 = arith.constant 0.000000e+00 : f32
    %139 = vector.broadcast %cst_77 : f32 to vector<32x64xf32>
    %140 = arith.cmpf ogt, %138, %139 : vector<32x64xf32>
    %cst_78 = arith.constant 0.00999999977 : f32
    %141 = vector.broadcast %cst_78 : f32 to vector<32x64xf32>
    %142 = arith.mulf %141, %138 : vector<32x64xf32>
    %143 = arith.select %140, %138, %142 : vector<32x64xi1>, vector<32x64xf32>
    %144 = arith.truncf %143 : vector<32x64xf32> to vector<32x64xbf16>
    %c128 = arith.constant 128 : index
    %c0_79 = arith.constant 0 : index
    %145 = vector.load %arg6[%c128, %c0_79] : memref<3344x128xbf16, #tpu.memory_space<vmem>>, vector<64x32xbf16>
    %cst_80 = arith.constant dense<0.000000e+00> : vector<64x64xf32>
    %146 = tpu.matmul %145, %144, %cst_80 {dimension_numbers = #tpu.dot_dimension_numbers<[1], [0], [0], [1], [0, 0, 1, 1], [], []>} : vector<64x32xbf16>, vector<32x64xbf16>, vector<64x64xf32> -> vector<64x64xf32>
    %c0_81 = arith.constant 0 : index
    %c6 = arith.constant 6 : index
    %147 = vector.load %arg7[%c0_81, %c6] : memref<512x16xf32, #tpu.memory_space<vmem>>, vector<64x1xf32>
    %148 = vector.broadcast %147 : vector<64x1xf32> to vector<64x64xf32>
    %149 = arith.addf %146, %148 : vector<64x64xf32>
    %cst_82 = arith.constant 0.000000e+00 : f32
    %150 = vector.broadcast %cst_82 : f32 to vector<64x64xf32>
    %151 = arith.cmpf ogt, %149, %150 : vector<64x64xf32>
    %cst_83 = arith.constant 0.00999999977 : f32
    %152 = vector.broadcast %cst_83 : f32 to vector<64x64xf32>
    %153 = arith.mulf %152, %149 : vector<64x64xf32>
    %154 = arith.select %151, %149, %153 : vector<64x64xi1>, vector<64x64xf32>
    %155 = arith.truncf %154 : vector<64x64xf32> to vector<64x64xbf16>
    %c192 = arith.constant 192 : index
    %c0_84 = arith.constant 0 : index
    %156 = vector.load %arg6[%c192, %c0_84] : memref<3344x128xbf16, #tpu.memory_space<vmem>>, vector<128x64xbf16>
    %cst_85 = arith.constant dense<0.000000e+00> : vector<128x64xf32>
    %157 = tpu.matmul %156, %155, %cst_85 {dimension_numbers = #tpu.dot_dimension_numbers<[1], [0], [0], [1], [0, 0, 1, 1], [], []>} : vector<128x64xbf16>, vector<64x64xbf16>, vector<128x64xf32> -> vector<128x64xf32>
    %c0_86 = arith.constant 0 : index
    %c7 = arith.constant 7 : index
    %158 = vector.load %arg7[%c0_86, %c7] : memref<512x16xf32, #tpu.memory_space<vmem>>, vector<128x1xf32>
    %159 = vector.broadcast %158 : vector<128x1xf32> to vector<128x64xf32>
    %160 = arith.addf %157, %159 : vector<128x64xf32>
    %cst_87 = arith.constant 0.000000e+00 : f32
    %161 = vector.broadcast %cst_87 : f32 to vector<128x64xf32>
    %162 = arith.cmpf ogt, %160, %161 : vector<128x64xf32>
    %cst_88 = arith.constant 0.00999999977 : f32
    %163 = vector.broadcast %cst_88 : f32 to vector<128x64xf32>
    %164 = arith.mulf %163, %160 : vector<128x64xf32>
    %165 = arith.select %162, %160, %164 : vector<128x64xi1>, vector<128x64xf32>
    %c2688 = arith.constant 2688 : index
    %c0_89 = arith.constant 0 : index
    %166 = vector.load %arg6[%c2688, %c0_89] : memref<3344x128xbf16, #tpu.memory_space<vmem>>, vector<32x64xbf16>
    %cst_90 = arith.constant dense<0.000000e+00> : vector<128x64xf32>
    %167 = tpu.matmul %7, %166, %cst_90 {dimension_numbers = #tpu.dot_dimension_numbers<[1], [0], [0], [1], [0, 0, 1, 1], [], []>} : vector<128x32xbf16>, vector<32x64xbf16>, vector<128x64xf32> -> vector<128x64xf32>
    %c72 = arith.constant 72 : index
    %c0_91 = arith.constant 0 : index
    %168 = vector.load %arg8[%c72, %c0_91] : memref<176x128xf32, #tpu.memory_space<vmem>>, vector<1x64xf32>
    %169 = vector.broadcast %168 : vector<1x64xf32> to vector<128x64xf32>
    %170 = arith.addf %167, %169 : vector<128x64xf32>
    %cst_92 = arith.constant 0.000000e+00 : f32
    %171 = vector.broadcast %cst_92 : f32 to vector<128x64xf32>
    %172 = arith.cmpf ogt, %170, %171 : vector<128x64xf32>
    %cst_93 = arith.constant 0.00999999977 : f32
    %173 = vector.broadcast %cst_93 : f32 to vector<128x64xf32>
    %174 = arith.mulf %173, %170 : vector<128x64xf32>
    %175 = arith.select %172, %170, %174 : vector<128x64xi1>, vector<128x64xf32>
    %176 = arith.addf %175, %165 : vector<128x64xf32>
    %177 = arith.truncf %176 : vector<128x64xf32> to vector<128x64xbf16>
    %c2720 = arith.constant 2720 : index
    %c0_94 = arith.constant 0 : index
    %178 = vector.load %arg6[%c2720, %c0_94] : memref<3344x128xbf16, #tpu.memory_space<vmem>>, vector<16x32xbf16>
    %cst_95 = arith.constant dense<0.000000e+00> : vector<512x32xf32>
    %179 = tpu.matmul %9, %178, %cst_95 {dimension_numbers = #tpu.dot_dimension_numbers<[1], [0], [0], [1], [0, 0, 1, 1], [], []>} : vector<512x16xbf16>, vector<16x32xbf16>, vector<512x32xf32> -> vector<512x32xf32>
    %c80_96 = arith.constant 80 : index
    %c0_97 = arith.constant 0 : index
    %180 = vector.load %arg8[%c80_96, %c0_97] : memref<176x128xf32, #tpu.memory_space<vmem>>, vector<1x32xf32>
    %181 = vector.broadcast %180 : vector<1x32xf32> to vector<512x32xf32>
    %182 = arith.addf %179, %181 : vector<512x32xf32>
    %cst_98 = arith.constant 0.000000e+00 : f32
    %183 = vector.broadcast %cst_98 : f32 to vector<512x32xf32>
    %184 = arith.cmpf ogt, %182, %183 : vector<512x32xf32>
    %cst_99 = arith.constant 0.00999999977 : f32
    %185 = vector.broadcast %cst_99 : f32 to vector<512x32xf32>
    %186 = arith.mulf %185, %182 : vector<512x32xf32>
    %187 = arith.select %184, %182, %186 : vector<512x32xi1>, vector<512x32xf32>
    %188 = arith.truncf %187 : vector<512x32xf32> to vector<512x32xbf16>
    %c2736 = arith.constant 2736 : index
    %c0_100 = arith.constant 0 : index
    %189 = vector.load %arg6[%c2736, %c0_100] : memref<3344x128xbf16, #tpu.memory_space<vmem>>, vector<32x64xbf16>
    %cst_101 = arith.constant dense<0.000000e+00> : vector<512x64xf32>
    %190 = tpu.matmul %188, %189, %cst_101 {dimension_numbers = #tpu.dot_dimension_numbers<[1], [0], [0], [1], [0, 0, 1, 1], [], []>} : vector<512x32xbf16>, vector<32x64xbf16>, vector<512x64xf32> -> vector<512x64xf32>
    %c88 = arith.constant 88 : index
    %c0_102 = arith.constant 0 : index
    %191 = vector.load %arg8[%c88, %c0_102] : memref<176x128xf32, #tpu.memory_space<vmem>>, vector<1x64xf32>
    %192 = vector.broadcast %191 : vector<1x64xf32> to vector<512x64xf32>
    %193 = arith.addf %190, %192 : vector<512x64xf32>
    %cst_103 = arith.constant 0.000000e+00 : f32
    %194 = vector.broadcast %cst_103 : f32 to vector<512x64xf32>
    %195 = arith.cmpf ogt, %193, %194 : vector<512x64xf32>
    %cst_104 = arith.constant 0.00999999977 : f32
    %196 = vector.broadcast %cst_104 : f32 to vector<512x64xf32>
    %197 = arith.mulf %196, %193 : vector<512x64xf32>
    %198 = arith.select %195, %193, %197 : vector<512x64xi1>, vector<512x64xf32>
    %c320 = arith.constant 320 : index
    %c0_105 = arith.constant 0 : index
    %199 = vector.load %arg6[%c320, %c0_105] : memref<3344x128xbf16, #tpu.memory_space<vmem>>, vector<256x128xbf16>
    %cst_106 = arith.constant dense<0.000000e+00> : vector<256x64xf32>
    %200 = tpu.matmul %199, %177, %cst_106 {dimension_numbers = #tpu.dot_dimension_numbers<[1], [0], [0], [1], [0, 0, 1, 1], [], []>} : vector<256x128xbf16>, vector<128x64xbf16>, vector<256x64xf32> -> vector<256x64xf32>
    %c0_107 = arith.constant 0 : index
    %c8_108 = arith.constant 8 : index
    %201 = vector.load %arg7[%c0_107, %c8_108] : memref<512x16xf32, #tpu.memory_space<vmem>>, vector<256x1xf32>
    %202 = vector.broadcast %201 : vector<256x1xf32> to vector<256x64xf32>
    %203 = arith.addf %200, %202 : vector<256x64xf32>
    %cst_109 = arith.constant 0.000000e+00 : f32
    %204 = vector.broadcast %cst_109 : f32 to vector<256x64xf32>
    %205 = arith.cmpf ogt, %203, %204 : vector<256x64xf32>
    %cst_110 = arith.constant 0.00999999977 : f32
    %206 = vector.broadcast %cst_110 : f32 to vector<256x64xf32>
    %207 = arith.mulf %206, %203 : vector<256x64xf32>
    %208 = arith.select %205, %203, %207 : vector<256x64xi1>, vector<256x64xf32>
    %209 = arith.truncf %208 : vector<256x64xf32> to vector<256x64xbf16>
    %c576 = arith.constant 576 : index
    %c0_111 = arith.constant 0 : index
    %210 = vector.load %arg6[%c576, %c0_111] : memref<3344x128xbf16, #tpu.memory_space<vmem>>, vector<512x128xbf16>
    %211 = vector.extract_strided_slice %209 {offsets = [0, 0], sizes = [128, 64], strides = [1, 1]} : vector<256x64xbf16> to vector<128x64xbf16>
    %cst_112 = arith.constant dense<0.000000e+00> : vector<512x64xf32>
    %212 = tpu.matmul %210, %211, %cst_112 {dimension_numbers = #tpu.dot_dimension_numbers<[1], [0], [0], [1], [0, 0, 1, 1], [], []>} : vector<512x128xbf16>, vector<128x64xbf16>, vector<512x64xf32> -> vector<512x64xf32>
    %c1088 = arith.constant 1088 : index
    %c0_113 = arith.constant 0 : index
    %213 = vector.load %arg6[%c1088, %c0_113] : memref<3344x128xbf16, #tpu.memory_space<vmem>>, vector<512x128xbf16>
    %214 = vector.extract_strided_slice %209 {offsets = [128, 0], sizes = [128, 64], strides = [1, 1]} : vector<256x64xbf16> to vector<128x64xbf16>
    %cst_114 = arith.constant dense<0.000000e+00> : vector<512x64xf32>
    %215 = tpu.matmul %213, %214, %cst_114 {dimension_numbers = #tpu.dot_dimension_numbers<[1], [0], [0], [1], [0, 0, 1, 1], [], []>} : vector<512x128xbf16>, vector<128x64xbf16>, vector<512x64xf32> -> vector<512x64xf32>
    %216 = arith.addf %212, %215 : vector<512x64xf32>
    %c0_115 = arith.constant 0 : index
    %c9 = arith.constant 9 : index
    %217 = vector.load %arg7[%c0_115, %c9] : memref<512x16xf32, #tpu.memory_space<vmem>>, vector<512x1xf32>
    %218 = vector.broadcast %217 : vector<512x1xf32> to vector<512x64xf32>
    %219 = arith.addf %216, %218 : vector<512x64xf32>
    %cst_116 = arith.constant 0.000000e+00 : f32
    %220 = vector.broadcast %cst_116 : f32 to vector<512x64xf32>
    %221 = arith.cmpf ogt, %219, %220 : vector<512x64xf32>
    %cst_117 = arith.constant 0.00999999977 : f32
    %222 = vector.broadcast %cst_117 : f32 to vector<512x64xf32>
    %223 = arith.mulf %222, %219 : vector<512x64xf32>
    %224 = arith.select %221, %219, %223 : vector<512x64xi1>, vector<512x64xf32>
    %225 = arith.addf %198, %224 : vector<512x64xf32>
    %226 = arith.truncf %225 : vector<512x64xf32> to vector<512x64xbf16>
    %227 = arith.truncf %99 : vector<3x64xf32> to vector<3x64xbf16>
    %c2768 = arith.constant 2768 : index
    %c0_118 = arith.constant 0 : index
    %228 = vector.load %arg6[%c2768, %c0_118] : memref<3344x128xbf16, #tpu.memory_space<vmem>>, vector<64x64xbf16>
    %cst_119 = arith.constant dense<0.000000e+00> : vector<3x64xf32>
    %229 = tpu.matmul %227, %228, %cst_119 {dimension_numbers = #tpu.dot_dimension_numbers<[1], [0], [0], [1], [0, 0, 1, 1], [], []>} : vector<3x64xbf16>, vector<64x64xbf16>, vector<3x64xf32> -> vector<3x64xf32>
    %c96_120 = arith.constant 96 : index
    %c0_121 = arith.constant 0 : index
    %230 = vector.load %arg8[%c96_120, %c0_121] : memref<176x128xf32, #tpu.memory_space<vmem>>, vector<1x64xf32>
    %231 = vector.broadcast %230 : vector<1x64xf32> to vector<3x64xf32>
    %232 = arith.addf %229, %231 : vector<3x64xf32>
    %233 = arith.truncf %232 : vector<3x64xf32> to vector<3x64xbf16>
    %c2832 = arith.constant 2832 : index
    %c0_122 = arith.constant 0 : index
    %234 = vector.load %arg6[%c2832, %c0_122] : memref<3344x128xbf16, #tpu.memory_space<vmem>>, vector<64x128xbf16>
    %cst_123 = arith.constant dense<0.000000e+00> : vector<32x128xf32>
    %235 = tpu.matmul %144, %234, %cst_123 {dimension_numbers = #tpu.dot_dimension_numbers<[1], [0], [0], [1], [0, 0, 1, 1], [], []>} : vector<32x64xbf16>, vector<64x128xbf16>, vector<32x128xf32> -> vector<32x128xf32>
    %c104 = arith.constant 104 : index
    %c0_124 = arith.constant 0 : index
    %236 = vector.load %arg8[%c104, %c0_124] : memref<176x128xf32, #tpu.memory_space<vmem>>, vector<1x128xf32>
    %237 = vector.broadcast %236 : vector<1x128xf32> to vector<32x128xf32>
    %238 = arith.addf %235, %237 : vector<32x128xf32>
    %239 = vector.extract_strided_slice %238 {offsets = [0, 0], sizes = [32, 64], strides = [1, 1]} : vector<32x128xf32> to vector<32x64xf32>
    %240 = tpu.transpose %239, [1, 0] : vector<32x64xf32> -> vector<64x32xf32>
    %241 = arith.truncf %240 : vector<64x32xf32> to vector<64x32xbf16>
    %c2896 = arith.constant 2896 : index
    %c0_125 = arith.constant 0 : index
    %242 = vector.load %arg6[%c2896, %c0_125] : memref<3344x128xbf16, #tpu.memory_space<vmem>>, vector<64x64xbf16>
    %243 = vector.extract_strided_slice %233 {offsets = [0, 0], sizes = [3, 16], strides = [1, 1]} : vector<3x64xbf16> to vector<3x16xbf16>
    %244 = vector.extract_strided_slice %241 {offsets = [0, 0], sizes = [16, 32], strides = [1, 1]} : vector<64x32xbf16> to vector<16x32xbf16>
    %cst_126 = arith.constant dense<0.000000e+00> : vector<3x32xf32>
    %245 = tpu.matmul %243, %244, %cst_126 {dimension_numbers = #tpu.dot_dimension_numbers<[1], [0], [0], [1], [0, 0, 1, 1], [], []>} : vector<3x16xbf16>, vector<16x32xbf16>, vector<3x32xf32> -> vector<3x32xf32>
    %cst_127 = arith.constant dense<0xFF800000> : vector<3xf32>
    %246 = vector.multi_reduction <maximumf>, %245, %cst_127 [1] : vector<3x32xf32> to vector<3xf32>
    %247 = vector.shape_cast %246 : vector<3xf32> to vector<3x1xf32>
    %248 = vector.broadcast %247 : vector<3x1xf32> to vector<3x32xf32>
    %249 = arith.subf %245, %248 : vector<3x32xf32>
    %250 = math.exp %249 : vector<3x32xf32>
    %cst_128 = arith.constant dense<0.000000e+00> : vector<3xf32>
    %251 = vector.multi_reduction <add>, %250, %cst_128 [1] : vector<3x32xf32> to vector<3xf32>
    %252 = vector.shape_cast %251 : vector<3xf32> to vector<3x1xf32>
    %253 = tpu.reciprocal %252 {approx = true} : vector<3x1xf32> -> vector<3x1xf32>
    %254 = vector.broadcast %253 : vector<3x1xf32> to vector<3x32xf32>
    %255 = arith.mulf %250, %254 : vector<3x32xf32>
    %256 = vector.extract_strided_slice %238 {offsets = [0, 64], sizes = [32, 16], strides = [1, 1]} : vector<32x128xf32> to vector<32x16xf32>
    %257 = arith.truncf %256 : vector<32x16xf32> to vector<32x16xbf16>
    %258 = arith.truncf %255 : vector<3x32xf32> to vector<3x32xbf16>
    %cst_129 = arith.constant dense<0.000000e+00> : vector<3x16xf32>
    %259 = tpu.matmul %258, %257, %cst_129 {dimension_numbers = #tpu.dot_dimension_numbers<[1], [0], [0], [1], [0, 0, 1, 1], [], []>} : vector<3x32xbf16>, vector<32x16xbf16>, vector<3x16xf32> -> vector<3x16xf32>
    %260 = arith.truncf %259 : vector<3x16xf32> to vector<3x16xbf16>
    %261 = vector.extract_strided_slice %242 {offsets = [0, 0], sizes = [16, 64], strides = [1, 1]} : vector<64x64xbf16> to vector<16x64xbf16>
    %cst_130 = arith.constant dense<0.000000e+00> : vector<3x64xf32>
    %262 = tpu.matmul %260, %261, %cst_130 {dimension_numbers = #tpu.dot_dimension_numbers<[1], [0], [0], [1], [0, 0, 1, 1], [], []>} : vector<3x16xbf16>, vector<16x64xbf16>, vector<3x64xf32> -> vector<3x64xf32>
    %263 = vector.extract_strided_slice %233 {offsets = [0, 16], sizes = [3, 16], strides = [1, 1]} : vector<3x64xbf16> to vector<3x16xbf16>
    %264 = vector.extract_strided_slice %241 {offsets = [16, 0], sizes = [16, 32], strides = [1, 1]} : vector<64x32xbf16> to vector<16x32xbf16>
    %cst_131 = arith.constant dense<0.000000e+00> : vector<3x32xf32>
    %265 = tpu.matmul %263, %264, %cst_131 {dimension_numbers = #tpu.dot_dimension_numbers<[1], [0], [0], [1], [0, 0, 1, 1], [], []>} : vector<3x16xbf16>, vector<16x32xbf16>, vector<3x32xf32> -> vector<3x32xf32>
    %cst_132 = arith.constant dense<0xFF800000> : vector<3xf32>
    %266 = vector.multi_reduction <maximumf>, %265, %cst_132 [1] : vector<3x32xf32> to vector<3xf32>
    %267 = vector.shape_cast %266 : vector<3xf32> to vector<3x1xf32>
    %268 = vector.broadcast %267 : vector<3x1xf32> to vector<3x32xf32>
    %269 = arith.subf %265, %268 : vector<3x32xf32>
    %270 = math.exp %269 : vector<3x32xf32>
    %cst_133 = arith.constant dense<0.000000e+00> : vector<3xf32>
    %271 = vector.multi_reduction <add>, %270, %cst_133 [1] : vector<3x32xf32> to vector<3xf32>
    %272 = vector.shape_cast %271 : vector<3xf32> to vector<3x1xf32>
    %273 = tpu.reciprocal %272 {approx = true} : vector<3x1xf32> -> vector<3x1xf32>
    %274 = vector.broadcast %273 : vector<3x1xf32> to vector<3x32xf32>
    %275 = arith.mulf %270, %274 : vector<3x32xf32>
    %276 = vector.extract_strided_slice %238 {offsets = [0, 80], sizes = [32, 16], strides = [1, 1]} : vector<32x128xf32> to vector<32x16xf32>
    %277 = arith.truncf %276 : vector<32x16xf32> to vector<32x16xbf16>
    %278 = arith.truncf %275 : vector<3x32xf32> to vector<3x32xbf16>
    %cst_134 = arith.constant dense<0.000000e+00> : vector<3x16xf32>
    %279 = tpu.matmul %278, %277, %cst_134 {dimension_numbers = #tpu.dot_dimension_numbers<[1], [0], [0], [1], [0, 0, 1, 1], [], []>} : vector<3x32xbf16>, vector<32x16xbf16>, vector<3x16xf32> -> vector<3x16xf32>
    %280 = arith.truncf %279 : vector<3x16xf32> to vector<3x16xbf16>
    %281 = vector.extract_strided_slice %242 {offsets = [16, 0], sizes = [16, 64], strides = [1, 1]} : vector<64x64xbf16> to vector<16x64xbf16>
    %cst_135 = arith.constant dense<0.000000e+00> : vector<3x64xf32>
    %282 = tpu.matmul %280, %281, %cst_135 {dimension_numbers = #tpu.dot_dimension_numbers<[1], [0], [0], [1], [0, 0, 1, 1], [], []>} : vector<3x16xbf16>, vector<16x64xbf16>, vector<3x64xf32> -> vector<3x64xf32>
    %283 = arith.addf %262, %282 : vector<3x64xf32>
    %284 = vector.extract_strided_slice %233 {offsets = [0, 32], sizes = [3, 16], strides = [1, 1]} : vector<3x64xbf16> to vector<3x16xbf16>
    %285 = vector.extract_strided_slice %241 {offsets = [32, 0], sizes = [16, 32], strides = [1, 1]} : vector<64x32xbf16> to vector<16x32xbf16>
    %cst_136 = arith.constant dense<0.000000e+00> : vector<3x32xf32>
    %286 = tpu.matmul %284, %285, %cst_136 {dimension_numbers = #tpu.dot_dimension_numbers<[1], [0], [0], [1], [0, 0, 1, 1], [], []>} : vector<3x16xbf16>, vector<16x32xbf16>, vector<3x32xf32> -> vector<3x32xf32>
    %cst_137 = arith.constant dense<0xFF800000> : vector<3xf32>
    %287 = vector.multi_reduction <maximumf>, %286, %cst_137 [1] : vector<3x32xf32> to vector<3xf32>
    %288 = vector.shape_cast %287 : vector<3xf32> to vector<3x1xf32>
    %289 = vector.broadcast %288 : vector<3x1xf32> to vector<3x32xf32>
    %290 = arith.subf %286, %289 : vector<3x32xf32>
    %291 = math.exp %290 : vector<3x32xf32>
    %cst_138 = arith.constant dense<0.000000e+00> : vector<3xf32>
    %292 = vector.multi_reduction <add>, %291, %cst_138 [1] : vector<3x32xf32> to vector<3xf32>
    %293 = vector.shape_cast %292 : vector<3xf32> to vector<3x1xf32>
    %294 = tpu.reciprocal %293 {approx = true} : vector<3x1xf32> -> vector<3x1xf32>
    %295 = vector.broadcast %294 : vector<3x1xf32> to vector<3x32xf32>
    %296 = arith.mulf %291, %295 : vector<3x32xf32>
    %297 = vector.extract_strided_slice %238 {offsets = [0, 96], sizes = [32, 16], strides = [1, 1]} : vector<32x128xf32> to vector<32x16xf32>
    %298 = arith.truncf %297 : vector<32x16xf32> to vector<32x16xbf16>
    %299 = arith.truncf %296 : vector<3x32xf32> to vector<3x32xbf16>
    %cst_139 = arith.constant dense<0.000000e+00> : vector<3x16xf32>
    %300 = tpu.matmul %299, %298, %cst_139 {dimension_numbers = #tpu.dot_dimension_numbers<[1], [0], [0], [1], [0, 0, 1, 1], [], []>} : vector<3x32xbf16>, vector<32x16xbf16>, vector<3x16xf32> -> vector<3x16xf32>
    %301 = arith.truncf %300 : vector<3x16xf32> to vector<3x16xbf16>
    %302 = vector.extract_strided_slice %242 {offsets = [32, 0], sizes = [16, 64], strides = [1, 1]} : vector<64x64xbf16> to vector<16x64xbf16>
    %cst_140 = arith.constant dense<0.000000e+00> : vector<3x64xf32>
    %303 = tpu.matmul %301, %302, %cst_140 {dimension_numbers = #tpu.dot_dimension_numbers<[1], [0], [0], [1], [0, 0, 1, 1], [], []>} : vector<3x16xbf16>, vector<16x64xbf16>, vector<3x64xf32> -> vector<3x64xf32>
    %304 = arith.addf %283, %303 : vector<3x64xf32>
    %305 = vector.extract_strided_slice %233 {offsets = [0, 48], sizes = [3, 16], strides = [1, 1]} : vector<3x64xbf16> to vector<3x16xbf16>
    %306 = vector.extract_strided_slice %241 {offsets = [48, 0], sizes = [16, 32], strides = [1, 1]} : vector<64x32xbf16> to vector<16x32xbf16>
    %cst_141 = arith.constant dense<0.000000e+00> : vector<3x32xf32>
    %307 = tpu.matmul %305, %306, %cst_141 {dimension_numbers = #tpu.dot_dimension_numbers<[1], [0], [0], [1], [0, 0, 1, 1], [], []>} : vector<3x16xbf16>, vector<16x32xbf16>, vector<3x32xf32> -> vector<3x32xf32>
    %cst_142 = arith.constant dense<0xFF800000> : vector<3xf32>
    %308 = vector.multi_reduction <maximumf>, %307, %cst_142 [1] : vector<3x32xf32> to vector<3xf32>
    %309 = vector.shape_cast %308 : vector<3xf32> to vector<3x1xf32>
    %310 = vector.broadcast %309 : vector<3x1xf32> to vector<3x32xf32>
    %311 = arith.subf %307, %310 : vector<3x32xf32>
    %312 = math.exp %311 : vector<3x32xf32>
    %cst_143 = arith.constant dense<0.000000e+00> : vector<3xf32>
    %313 = vector.multi_reduction <add>, %312, %cst_143 [1] : vector<3x32xf32> to vector<3xf32>
    %314 = vector.shape_cast %313 : vector<3xf32> to vector<3x1xf32>
    %315 = tpu.reciprocal %314 {approx = true} : vector<3x1xf32> -> vector<3x1xf32>
    %316 = vector.broadcast %315 : vector<3x1xf32> to vector<3x32xf32>
    %317 = arith.mulf %312, %316 : vector<3x32xf32>
    %318 = vector.extract_strided_slice %238 {offsets = [0, 112], sizes = [32, 16], strides = [1, 1]} : vector<32x128xf32> to vector<32x16xf32>
    %319 = arith.truncf %318 : vector<32x16xf32> to vector<32x16xbf16>
    %320 = arith.truncf %317 : vector<3x32xf32> to vector<3x32xbf16>
    %cst_144 = arith.constant dense<0.000000e+00> : vector<3x16xf32>
    %321 = tpu.matmul %320, %319, %cst_144 {dimension_numbers = #tpu.dot_dimension_numbers<[1], [0], [0], [1], [0, 0, 1, 1], [], []>} : vector<3x32xbf16>, vector<32x16xbf16>, vector<3x16xf32> -> vector<3x16xf32>
    %322 = arith.truncf %321 : vector<3x16xf32> to vector<3x16xbf16>
    %323 = vector.extract_strided_slice %242 {offsets = [48, 0], sizes = [16, 64], strides = [1, 1]} : vector<64x64xbf16> to vector<16x64xbf16>
    %cst_145 = arith.constant dense<0.000000e+00> : vector<3x64xf32>
    %324 = tpu.matmul %322, %323, %cst_145 {dimension_numbers = #tpu.dot_dimension_numbers<[1], [0], [0], [1], [0, 0, 1, 1], [], []>} : vector<3x16xbf16>, vector<16x64xbf16>, vector<3x64xf32> -> vector<3x64xf32>
    %325 = arith.addf %304, %324 : vector<3x64xf32>
    %c112_146 = arith.constant 112 : index
    %c0_147 = arith.constant 0 : index
    %326 = vector.load %arg8[%c112_146, %c0_147] : memref<176x128xf32, #tpu.memory_space<vmem>>, vector<1x64xf32>
    %327 = vector.broadcast %326 : vector<1x64xf32> to vector<3x64xf32>
    %328 = arith.addf %325, %327 : vector<3x64xf32>
    %329 = arith.truncf %116 : vector<3x64xf32> to vector<3x64xbf16>
    %c2960 = arith.constant 2960 : index
    %c0_148 = arith.constant 0 : index
    %330 = vector.load %arg6[%c2960, %c0_148] : memref<3344x128xbf16, #tpu.memory_space<vmem>>, vector<64x64xbf16>
    %cst_149 = arith.constant dense<0.000000e+00> : vector<3x64xf32>
    %331 = tpu.matmul %329, %330, %cst_149 {dimension_numbers = #tpu.dot_dimension_numbers<[1], [0], [0], [1], [0, 0, 1, 1], [], []>} : vector<3x64xbf16>, vector<64x64xbf16>, vector<3x64xf32> -> vector<3x64xf32>
    %c120 = arith.constant 120 : index
    %c0_150 = arith.constant 0 : index
    %332 = vector.load %arg8[%c120, %c0_150] : memref<176x128xf32, #tpu.memory_space<vmem>>, vector<1x64xf32>
    %333 = vector.broadcast %332 : vector<1x64xf32> to vector<3x64xf32>
    %334 = arith.addf %331, %333 : vector<3x64xf32>
    %335 = arith.truncf %334 : vector<3x64xf32> to vector<3x64xbf16>
    %c3024 = arith.constant 3024 : index
    %c0_151 = arith.constant 0 : index
    %336 = vector.load %arg6[%c3024, %c0_151] : memref<3344x128xbf16, #tpu.memory_space<vmem>>, vector<64x128xbf16>
    %cst_152 = arith.constant dense<0.000000e+00> : vector<128x128xf32>
    %337 = tpu.matmul %177, %336, %cst_152 {dimension_numbers = #tpu.dot_dimension_numbers<[1], [0], [0], [1], [0, 0, 1, 1], [], []>} : vector<128x64xbf16>, vector<64x128xbf16>, vector<128x128xf32> -> vector<128x128xf32>
    %c128_153 = arith.constant 128 : index
    %c0_154 = arith.constant 0 : index
    %338 = vector.load %arg8[%c128_153, %c0_154] : memref<176x128xf32, #tpu.memory_space<vmem>>, vector<1x128xf32>
    %339 = vector.broadcast %338 : vector<1x128xf32> to vector<128x128xf32>
    %340 = arith.addf %337, %339 : vector<128x128xf32>
    %341 = vector.extract_strided_slice %340 {offsets = [0, 0], sizes = [128, 64], strides = [1, 1]} : vector<128x128xf32> to vector<128x64xf32>
    %342 = tpu.transpose %341, [1, 0] : vector<128x64xf32> -> vector<64x128xf32>
    %343 = arith.truncf %342 : vector<64x128xf32> to vector<64x128xbf16>
    %c3088 = arith.constant 3088 : index
    %c0_155 = arith.constant 0 : index
    %344 = vector.load %arg6[%c3088, %c0_155] : memref<3344x128xbf16, #tpu.memory_space<vmem>>, vector<64x64xbf16>
    %345 = vector.extract_strided_slice %335 {offsets = [0, 0], sizes = [3, 16], strides = [1, 1]} : vector<3x64xbf16> to vector<3x16xbf16>
    %346 = vector.extract_strided_slice %343 {offsets = [0, 0], sizes = [16, 128], strides = [1, 1]} : vector<64x128xbf16> to vector<16x128xbf16>
    %cst_156 = arith.constant dense<0.000000e+00> : vector<3x128xf32>
    %347 = tpu.matmul %345, %346, %cst_156 {dimension_numbers = #tpu.dot_dimension_numbers<[1], [0], [0], [1], [0, 0, 1, 1], [], []>} : vector<3x16xbf16>, vector<16x128xbf16>, vector<3x128xf32> -> vector<3x128xf32>
    %cst_157 = arith.constant dense<0xFF800000> : vector<3xf32>
    %348 = vector.multi_reduction <maximumf>, %347, %cst_157 [1] : vector<3x128xf32> to vector<3xf32>
    %349 = vector.shape_cast %348 : vector<3xf32> to vector<3x1xf32>
    %350 = vector.broadcast %349 : vector<3x1xf32> to vector<3x128xf32>
    %351 = arith.subf %347, %350 : vector<3x128xf32>
    %352 = math.exp %351 : vector<3x128xf32>
    %cst_158 = arith.constant dense<0.000000e+00> : vector<3xf32>
    %353 = vector.multi_reduction <add>, %352, %cst_158 [1] : vector<3x128xf32> to vector<3xf32>
    %354 = vector.shape_cast %353 : vector<3xf32> to vector<3x1xf32>
    %355 = tpu.reciprocal %354 {approx = true} : vector<3x1xf32> -> vector<3x1xf32>
    %356 = vector.broadcast %355 : vector<3x1xf32> to vector<3x128xf32>
    %357 = arith.mulf %352, %356 : vector<3x128xf32>
    %358 = vector.extract_strided_slice %340 {offsets = [0, 64], sizes = [128, 16], strides = [1, 1]} : vector<128x128xf32> to vector<128x16xf32>
    %359 = arith.truncf %358 : vector<128x16xf32> to vector<128x16xbf16>
    %360 = arith.truncf %357 : vector<3x128xf32> to vector<3x128xbf16>
    %cst_159 = arith.constant dense<0.000000e+00> : vector<3x16xf32>
    %361 = tpu.matmul %360, %359, %cst_159 {dimension_numbers = #tpu.dot_dimension_numbers<[1], [0], [0], [1], [0, 0, 1, 1], [], []>} : vector<3x128xbf16>, vector<128x16xbf16>, vector<3x16xf32> -> vector<3x16xf32>
    %362 = arith.truncf %361 : vector<3x16xf32> to vector<3x16xbf16>
    %363 = vector.extract_strided_slice %344 {offsets = [0, 0], sizes = [16, 64], strides = [1, 1]} : vector<64x64xbf16> to vector<16x64xbf16>
    %cst_160 = arith.constant dense<0.000000e+00> : vector<3x64xf32>
    %364 = tpu.matmul %362, %363, %cst_160 {dimension_numbers = #tpu.dot_dimension_numbers<[1], [0], [0], [1], [0, 0, 1, 1], [], []>} : vector<3x16xbf16>, vector<16x64xbf16>, vector<3x64xf32> -> vector<3x64xf32>
    %365 = vector.extract_strided_slice %335 {offsets = [0, 16], sizes = [3, 16], strides = [1, 1]} : vector<3x64xbf16> to vector<3x16xbf16>
    %366 = vector.extract_strided_slice %343 {offsets = [16, 0], sizes = [16, 128], strides = [1, 1]} : vector<64x128xbf16> to vector<16x128xbf16>
    %cst_161 = arith.constant dense<0.000000e+00> : vector<3x128xf32>
    %367 = tpu.matmul %365, %366, %cst_161 {dimension_numbers = #tpu.dot_dimension_numbers<[1], [0], [0], [1], [0, 0, 1, 1], [], []>} : vector<3x16xbf16>, vector<16x128xbf16>, vector<3x128xf32> -> vector<3x128xf32>
    %cst_162 = arith.constant dense<0xFF800000> : vector<3xf32>
    %368 = vector.multi_reduction <maximumf>, %367, %cst_162 [1] : vector<3x128xf32> to vector<3xf32>
    %369 = vector.shape_cast %368 : vector<3xf32> to vector<3x1xf32>
    %370 = vector.broadcast %369 : vector<3x1xf32> to vector<3x128xf32>
    %371 = arith.subf %367, %370 : vector<3x128xf32>
    %372 = math.exp %371 : vector<3x128xf32>
    %cst_163 = arith.constant dense<0.000000e+00> : vector<3xf32>
    %373 = vector.multi_reduction <add>, %372, %cst_163 [1] : vector<3x128xf32> to vector<3xf32>
    %374 = vector.shape_cast %373 : vector<3xf32> to vector<3x1xf32>
    %375 = tpu.reciprocal %374 {approx = true} : vector<3x1xf32> -> vector<3x1xf32>
    %376 = vector.broadcast %375 : vector<3x1xf32> to vector<3x128xf32>
    %377 = arith.mulf %372, %376 : vector<3x128xf32>
    %378 = vector.extract_strided_slice %340 {offsets = [0, 80], sizes = [128, 16], strides = [1, 1]} : vector<128x128xf32> to vector<128x16xf32>
    %379 = arith.truncf %378 : vector<128x16xf32> to vector<128x16xbf16>
    %380 = arith.truncf %377 : vector<3x128xf32> to vector<3x128xbf16>
    %cst_164 = arith.constant dense<0.000000e+00> : vector<3x16xf32>
    %381 = tpu.matmul %380, %379, %cst_164 {dimension_numbers = #tpu.dot_dimension_numbers<[1], [0], [0], [1], [0, 0, 1, 1], [], []>} : vector<3x128xbf16>, vector<128x16xbf16>, vector<3x16xf32> -> vector<3x16xf32>
    %382 = arith.truncf %381 : vector<3x16xf32> to vector<3x16xbf16>
    %383 = vector.extract_strided_slice %344 {offsets = [16, 0], sizes = [16, 64], strides = [1, 1]} : vector<64x64xbf16> to vector<16x64xbf16>
    %cst_165 = arith.constant dense<0.000000e+00> : vector<3x64xf32>
    %384 = tpu.matmul %382, %383, %cst_165 {dimension_numbers = #tpu.dot_dimension_numbers<[1], [0], [0], [1], [0, 0, 1, 1], [], []>} : vector<3x16xbf16>, vector<16x64xbf16>, vector<3x64xf32> -> vector<3x64xf32>
    %385 = arith.addf %364, %384 : vector<3x64xf32>
    %386 = vector.extract_strided_slice %335 {offsets = [0, 32], sizes = [3, 16], strides = [1, 1]} : vector<3x64xbf16> to vector<3x16xbf16>
    %387 = vector.extract_strided_slice %343 {offsets = [32, 0], sizes = [16, 128], strides = [1, 1]} : vector<64x128xbf16> to vector<16x128xbf16>
    %cst_166 = arith.constant dense<0.000000e+00> : vector<3x128xf32>
    %388 = tpu.matmul %386, %387, %cst_166 {dimension_numbers = #tpu.dot_dimension_numbers<[1], [0], [0], [1], [0, 0, 1, 1], [], []>} : vector<3x16xbf16>, vector<16x128xbf16>, vector<3x128xf32> -> vector<3x128xf32>
    %cst_167 = arith.constant dense<0xFF800000> : vector<3xf32>
    %389 = vector.multi_reduction <maximumf>, %388, %cst_167 [1] : vector<3x128xf32> to vector<3xf32>
    %390 = vector.shape_cast %389 : vector<3xf32> to vector<3x1xf32>
    %391 = vector.broadcast %390 : vector<3x1xf32> to vector<3x128xf32>
    %392 = arith.subf %388, %391 : vector<3x128xf32>
    %393 = math.exp %392 : vector<3x128xf32>
    %cst_168 = arith.constant dense<0.000000e+00> : vector<3xf32>
    %394 = vector.multi_reduction <add>, %393, %cst_168 [1] : vector<3x128xf32> to vector<3xf32>
    %395 = vector.shape_cast %394 : vector<3xf32> to vector<3x1xf32>
    %396 = tpu.reciprocal %395 {approx = true} : vector<3x1xf32> -> vector<3x1xf32>
    %397 = vector.broadcast %396 : vector<3x1xf32> to vector<3x128xf32>
    %398 = arith.mulf %393, %397 : vector<3x128xf32>
    %399 = vector.extract_strided_slice %340 {offsets = [0, 96], sizes = [128, 16], strides = [1, 1]} : vector<128x128xf32> to vector<128x16xf32>
    %400 = arith.truncf %399 : vector<128x16xf32> to vector<128x16xbf16>
    %401 = arith.truncf %398 : vector<3x128xf32> to vector<3x128xbf16>
    %cst_169 = arith.constant dense<0.000000e+00> : vector<3x16xf32>
    %402 = tpu.matmul %401, %400, %cst_169 {dimension_numbers = #tpu.dot_dimension_numbers<[1], [0], [0], [1], [0, 0, 1, 1], [], []>} : vector<3x128xbf16>, vector<128x16xbf16>, vector<3x16xf32> -> vector<3x16xf32>
    %403 = arith.truncf %402 : vector<3x16xf32> to vector<3x16xbf16>
    %404 = vector.extract_strided_slice %344 {offsets = [32, 0], sizes = [16, 64], strides = [1, 1]} : vector<64x64xbf16> to vector<16x64xbf16>
    %cst_170 = arith.constant dense<0.000000e+00> : vector<3x64xf32>
    %405 = tpu.matmul %403, %404, %cst_170 {dimension_numbers = #tpu.dot_dimension_numbers<[1], [0], [0], [1], [0, 0, 1, 1], [], []>} : vector<3x16xbf16>, vector<16x64xbf16>, vector<3x64xf32> -> vector<3x64xf32>
    %406 = arith.addf %385, %405 : vector<3x64xf32>
    %407 = vector.extract_strided_slice %335 {offsets = [0, 48], sizes = [3, 16], strides = [1, 1]} : vector<3x64xbf16> to vector<3x16xbf16>
    %408 = vector.extract_strided_slice %343 {offsets = [48, 0], sizes = [16, 128], strides = [1, 1]} : vector<64x128xbf16> to vector<16x128xbf16>
    %cst_171 = arith.constant dense<0.000000e+00> : vector<3x128xf32>
    %409 = tpu.matmul %407, %408, %cst_171 {dimension_numbers = #tpu.dot_dimension_numbers<[1], [0], [0], [1], [0, 0, 1, 1], [], []>} : vector<3x16xbf16>, vector<16x128xbf16>, vector<3x128xf32> -> vector<3x128xf32>
    %cst_172 = arith.constant dense<0xFF800000> : vector<3xf32>
    %410 = vector.multi_reduction <maximumf>, %409, %cst_172 [1] : vector<3x128xf32> to vector<3xf32>
    %411 = vector.shape_cast %410 : vector<3xf32> to vector<3x1xf32>
    %412 = vector.broadcast %411 : vector<3x1xf32> to vector<3x128xf32>
    %413 = arith.subf %409, %412 : vector<3x128xf32>
    %414 = math.exp %413 : vector<3x128xf32>
    %cst_173 = arith.constant dense<0.000000e+00> : vector<3xf32>
    %415 = vector.multi_reduction <add>, %414, %cst_173 [1] : vector<3x128xf32> to vector<3xf32>
    %416 = vector.shape_cast %415 : vector<3xf32> to vector<3x1xf32>
    %417 = tpu.reciprocal %416 {approx = true} : vector<3x1xf32> -> vector<3x1xf32>
    %418 = vector.broadcast %417 : vector<3x1xf32> to vector<3x128xf32>
    %419 = arith.mulf %414, %418 : vector<3x128xf32>
    %420 = vector.extract_strided_slice %340 {offsets = [0, 112], sizes = [128, 16], strides = [1, 1]} : vector<128x128xf32> to vector<128x16xf32>
    %421 = arith.truncf %420 : vector<128x16xf32> to vector<128x16xbf16>
    %422 = arith.truncf %419 : vector<3x128xf32> to vector<3x128xbf16>
    %cst_174 = arith.constant dense<0.000000e+00> : vector<3x16xf32>
    %423 = tpu.matmul %422, %421, %cst_174 {dimension_numbers = #tpu.dot_dimension_numbers<[1], [0], [0], [1], [0, 0, 1, 1], [], []>} : vector<3x128xbf16>, vector<128x16xbf16>, vector<3x16xf32> -> vector<3x16xf32>
    %424 = arith.truncf %423 : vector<3x16xf32> to vector<3x16xbf16>
    %425 = vector.extract_strided_slice %344 {offsets = [48, 0], sizes = [16, 64], strides = [1, 1]} : vector<64x64xbf16> to vector<16x64xbf16>
    %cst_175 = arith.constant dense<0.000000e+00> : vector<3x64xf32>
    %426 = tpu.matmul %424, %425, %cst_175 {dimension_numbers = #tpu.dot_dimension_numbers<[1], [0], [0], [1], [0, 0, 1, 1], [], []>} : vector<3x16xbf16>, vector<16x64xbf16>, vector<3x64xf32> -> vector<3x64xf32>
    %427 = arith.addf %406, %426 : vector<3x64xf32>
    %c136 = arith.constant 136 : index
    %c0_176 = arith.constant 0 : index
    %428 = vector.load %arg8[%c136, %c0_176] : memref<176x128xf32, #tpu.memory_space<vmem>>, vector<1x64xf32>
    %429 = vector.broadcast %428 : vector<1x64xf32> to vector<3x64xf32>
    %430 = arith.addf %427, %429 : vector<3x64xf32>
    %431 = arith.truncf %133 : vector<7x64xf32> to vector<7x64xbf16>
    %c3152 = arith.constant 3152 : index
    %c0_177 = arith.constant 0 : index
    %432 = vector.load %arg6[%c3152, %c0_177] : memref<3344x128xbf16, #tpu.memory_space<vmem>>, vector<64x64xbf16>
    %cst_178 = arith.constant dense<0.000000e+00> : vector<7x64xf32>
    %433 = tpu.matmul %431, %432, %cst_178 {dimension_numbers = #tpu.dot_dimension_numbers<[1], [0], [0], [1], [0, 0, 1, 1], [], []>} : vector<7x64xbf16>, vector<64x64xbf16>, vector<7x64xf32> -> vector<7x64xf32>
    %c144 = arith.constant 144 : index
    %c0_179 = arith.constant 0 : index
    %434 = vector.load %arg8[%c144, %c0_179] : memref<176x128xf32, #tpu.memory_space<vmem>>, vector<1x64xf32>
    %435 = vector.broadcast %434 : vector<1x64xf32> to vector<7x64xf32>
    %436 = arith.addf %433, %435 : vector<7x64xf32>
    %437 = arith.truncf %436 : vector<7x64xf32> to vector<7x64xbf16>
    %c3216 = arith.constant 3216 : index
    %c0_180 = arith.constant 0 : index
    %438 = vector.load %arg6[%c3216, %c0_180] : memref<3344x128xbf16, #tpu.memory_space<vmem>>, vector<64x128xbf16>
    %cst_181 = arith.constant dense<0.000000e+00> : vector<512x128xf32>
    %439 = tpu.matmul %226, %438, %cst_181 {dimension_numbers = #tpu.dot_dimension_numbers<[1], [0], [0], [1], [0, 0, 1, 1], [], []>} : vector<512x64xbf16>, vector<64x128xbf16>, vector<512x128xf32> -> vector<512x128xf32>
    %c152 = arith.constant 152 : index
    %c0_182 = arith.constant 0 : index
    %440 = vector.load %arg8[%c152, %c0_182] : memref<176x128xf32, #tpu.memory_space<vmem>>, vector<1x128xf32>
    %441 = vector.broadcast %440 : vector<1x128xf32> to vector<512x128xf32>
    %442 = arith.addf %439, %441 : vector<512x128xf32>
    %443 = vector.extract_strided_slice %442 {offsets = [0, 0], sizes = [512, 64], strides = [1, 1]} : vector<512x128xf32> to vector<512x64xf32>
    %444 = tpu.transpose %443, [1, 0] : vector<512x64xf32> -> vector<64x512xf32>
    %445 = arith.truncf %444 : vector<64x512xf32> to vector<64x512xbf16>
    %c3280 = arith.constant 3280 : index
    %c0_183 = arith.constant 0 : index
    %446 = vector.load %arg6[%c3280, %c0_183] : memref<3344x128xbf16, #tpu.memory_space<vmem>>, vector<64x64xbf16>
    %447 = vector.extract_strided_slice %437 {offsets = [0, 0], sizes = [7, 16], strides = [1, 1]} : vector<7x64xbf16> to vector<7x16xbf16>
    %448 = vector.extract_strided_slice %445 {offsets = [0, 0], sizes = [16, 512], strides = [1, 1]} : vector<64x512xbf16> to vector<16x512xbf16>
    %cst_184 = arith.constant dense<0.000000e+00> : vector<7x512xf32>
    %449 = tpu.matmul %447, %448, %cst_184 {dimension_numbers = #tpu.dot_dimension_numbers<[1], [0], [0], [1], [0, 0, 1, 1], [], []>} : vector<7x16xbf16>, vector<16x512xbf16>, vector<7x512xf32> -> vector<7x512xf32>
    %cst_185 = arith.constant dense<0xFF800000> : vector<7xf32>
    %450 = vector.multi_reduction <maximumf>, %449, %cst_185 [1] : vector<7x512xf32> to vector<7xf32>
    %451 = vector.shape_cast %450 : vector<7xf32> to vector<7x1xf32>
    %452 = vector.broadcast %451 : vector<7x1xf32> to vector<7x512xf32>
    %453 = arith.subf %449, %452 : vector<7x512xf32>
    %454 = math.exp %453 : vector<7x512xf32>
    %cst_186 = arith.constant dense<0.000000e+00> : vector<7xf32>
    %455 = vector.multi_reduction <add>, %454, %cst_186 [1] : vector<7x512xf32> to vector<7xf32>
    %456 = vector.shape_cast %455 : vector<7xf32> to vector<7x1xf32>
    %457 = tpu.reciprocal %456 {approx = true} : vector<7x1xf32> -> vector<7x1xf32>
    %458 = vector.broadcast %457 : vector<7x1xf32> to vector<7x512xf32>
    %459 = arith.mulf %454, %458 : vector<7x512xf32>
    %460 = vector.extract_strided_slice %442 {offsets = [0, 64], sizes = [512, 16], strides = [1, 1]} : vector<512x128xf32> to vector<512x16xf32>
    %461 = arith.truncf %460 : vector<512x16xf32> to vector<512x16xbf16>
    %462 = arith.truncf %459 : vector<7x512xf32> to vector<7x512xbf16>
    %cst_187 = arith.constant dense<0.000000e+00> : vector<7x16xf32>
    %463 = tpu.matmul %462, %461, %cst_187 {dimension_numbers = #tpu.dot_dimension_numbers<[1], [0], [0], [1], [0, 0, 1, 1], [], []>} : vector<7x512xbf16>, vector<512x16xbf16>, vector<7x16xf32> -> vector<7x16xf32>
    %464 = arith.truncf %463 : vector<7x16xf32> to vector<7x16xbf16>
    %465 = vector.extract_strided_slice %446 {offsets = [0, 0], sizes = [16, 64], strides = [1, 1]} : vector<64x64xbf16> to vector<16x64xbf16>
    %cst_188 = arith.constant dense<0.000000e+00> : vector<7x64xf32>
    %466 = tpu.matmul %464, %465, %cst_188 {dimension_numbers = #tpu.dot_dimension_numbers<[1], [0], [0], [1], [0, 0, 1, 1], [], []>} : vector<7x16xbf16>, vector<16x64xbf16>, vector<7x64xf32> -> vector<7x64xf32>
    %467 = vector.extract_strided_slice %437 {offsets = [0, 16], sizes = [7, 16], strides = [1, 1]} : vector<7x64xbf16> to vector<7x16xbf16>
    %468 = vector.extract_strided_slice %445 {offsets = [16, 0], sizes = [16, 512], strides = [1, 1]} : vector<64x512xbf16> to vector<16x512xbf16>
    %cst_189 = arith.constant dense<0.000000e+00> : vector<7x512xf32>
    %469 = tpu.matmul %467, %468, %cst_189 {dimension_numbers = #tpu.dot_dimension_numbers<[1], [0], [0], [1], [0, 0, 1, 1], [], []>} : vector<7x16xbf16>, vector<16x512xbf16>, vector<7x512xf32> -> vector<7x512xf32>
    %cst_190 = arith.constant dense<0xFF800000> : vector<7xf32>
    %470 = vector.multi_reduction <maximumf>, %469, %cst_190 [1] : vector<7x512xf32> to vector<7xf32>
    %471 = vector.shape_cast %470 : vector<7xf32> to vector<7x1xf32>
    %472 = vector.broadcast %471 : vector<7x1xf32> to vector<7x512xf32>
    %473 = arith.subf %469, %472 : vector<7x512xf32>
    %474 = math.exp %473 : vector<7x512xf32>
    %cst_191 = arith.constant dense<0.000000e+00> : vector<7xf32>
    %475 = vector.multi_reduction <add>, %474, %cst_191 [1] : vector<7x512xf32> to vector<7xf32>
    %476 = vector.shape_cast %475 : vector<7xf32> to vector<7x1xf32>
    %477 = tpu.reciprocal %476 {approx = true} : vector<7x1xf32> -> vector<7x1xf32>
    %478 = vector.broadcast %477 : vector<7x1xf32> to vector<7x512xf32>
    %479 = arith.mulf %474, %478 : vector<7x512xf32>
    %480 = vector.extract_strided_slice %442 {offsets = [0, 80], sizes = [512, 16], strides = [1, 1]} : vector<512x128xf32> to vector<512x16xf32>
    %481 = arith.truncf %480 : vector<512x16xf32> to vector<512x16xbf16>
    %482 = arith.truncf %479 : vector<7x512xf32> to vector<7x512xbf16>
    %cst_192 = arith.constant dense<0.000000e+00> : vector<7x16xf32>
    %483 = tpu.matmul %482, %481, %cst_192 {dimension_numbers = #tpu.dot_dimension_numbers<[1], [0], [0], [1], [0, 0, 1, 1], [], []>} : vector<7x512xbf16>, vector<512x16xbf16>, vector<7x16xf32> -> vector<7x16xf32>
    %484 = arith.truncf %483 : vector<7x16xf32> to vector<7x16xbf16>
    %485 = vector.extract_strided_slice %446 {offsets = [16, 0], sizes = [16, 64], strides = [1, 1]} : vector<64x64xbf16> to vector<16x64xbf16>
    %cst_193 = arith.constant dense<0.000000e+00> : vector<7x64xf32>
    %486 = tpu.matmul %484, %485, %cst_193 {dimension_numbers = #tpu.dot_dimension_numbers<[1], [0], [0], [1], [0, 0, 1, 1], [], []>} : vector<7x16xbf16>, vector<16x64xbf16>, vector<7x64xf32> -> vector<7x64xf32>
    %487 = arith.addf %466, %486 : vector<7x64xf32>
    %488 = vector.extract_strided_slice %437 {offsets = [0, 32], sizes = [7, 16], strides = [1, 1]} : vector<7x64xbf16> to vector<7x16xbf16>
    %489 = vector.extract_strided_slice %445 {offsets = [32, 0], sizes = [16, 512], strides = [1, 1]} : vector<64x512xbf16> to vector<16x512xbf16>
    %cst_194 = arith.constant dense<0.000000e+00> : vector<7x512xf32>
    %490 = tpu.matmul %488, %489, %cst_194 {dimension_numbers = #tpu.dot_dimension_numbers<[1], [0], [0], [1], [0, 0, 1, 1], [], []>} : vector<7x16xbf16>, vector<16x512xbf16>, vector<7x512xf32> -> vector<7x512xf32>
    %cst_195 = arith.constant dense<0xFF800000> : vector<7xf32>
    %491 = vector.multi_reduction <maximumf>, %490, %cst_195 [1] : vector<7x512xf32> to vector<7xf32>
    %492 = vector.shape_cast %491 : vector<7xf32> to vector<7x1xf32>
    %493 = vector.broadcast %492 : vector<7x1xf32> to vector<7x512xf32>
    %494 = arith.subf %490, %493 : vector<7x512xf32>
    %495 = math.exp %494 : vector<7x512xf32>
    %cst_196 = arith.constant dense<0.000000e+00> : vector<7xf32>
    %496 = vector.multi_reduction <add>, %495, %cst_196 [1] : vector<7x512xf32> to vector<7xf32>
    %497 = vector.shape_cast %496 : vector<7xf32> to vector<7x1xf32>
    %498 = tpu.reciprocal %497 {approx = true} : vector<7x1xf32> -> vector<7x1xf32>
    %499 = vector.broadcast %498 : vector<7x1xf32> to vector<7x512xf32>
    %500 = arith.mulf %495, %499 : vector<7x512xf32>
    %501 = vector.extract_strided_slice %442 {offsets = [0, 96], sizes = [512, 16], strides = [1, 1]} : vector<512x128xf32> to vector<512x16xf32>
    %502 = arith.truncf %501 : vector<512x16xf32> to vector<512x16xbf16>
    %503 = arith.truncf %500 : vector<7x512xf32> to vector<7x512xbf16>
    %cst_197 = arith.constant dense<0.000000e+00> : vector<7x16xf32>
    %504 = tpu.matmul %503, %502, %cst_197 {dimension_numbers = #tpu.dot_dimension_numbers<[1], [0], [0], [1], [0, 0, 1, 1], [], []>} : vector<7x512xbf16>, vector<512x16xbf16>, vector<7x16xf32> -> vector<7x16xf32>
    %505 = arith.truncf %504 : vector<7x16xf32> to vector<7x16xbf16>
    %506 = vector.extract_strided_slice %446 {offsets = [32, 0], sizes = [16, 64], strides = [1, 1]} : vector<64x64xbf16> to vector<16x64xbf16>
    %cst_198 = arith.constant dense<0.000000e+00> : vector<7x64xf32>
    %507 = tpu.matmul %505, %506, %cst_198 {dimension_numbers = #tpu.dot_dimension_numbers<[1], [0], [0], [1], [0, 0, 1, 1], [], []>} : vector<7x16xbf16>, vector<16x64xbf16>, vector<7x64xf32> -> vector<7x64xf32>
    %508 = arith.addf %487, %507 : vector<7x64xf32>
    %509 = vector.extract_strided_slice %437 {offsets = [0, 48], sizes = [7, 16], strides = [1, 1]} : vector<7x64xbf16> to vector<7x16xbf16>
    %510 = vector.extract_strided_slice %445 {offsets = [48, 0], sizes = [16, 512], strides = [1, 1]} : vector<64x512xbf16> to vector<16x512xbf16>
    %cst_199 = arith.constant dense<0.000000e+00> : vector<7x512xf32>
    %511 = tpu.matmul %509, %510, %cst_199 {dimension_numbers = #tpu.dot_dimension_numbers<[1], [0], [0], [1], [0, 0, 1, 1], [], []>} : vector<7x16xbf16>, vector<16x512xbf16>, vector<7x512xf32> -> vector<7x512xf32>
    %cst_200 = arith.constant dense<0xFF800000> : vector<7xf32>
    %512 = vector.multi_reduction <maximumf>, %511, %cst_200 [1] : vector<7x512xf32> to vector<7xf32>
    %513 = vector.shape_cast %512 : vector<7xf32> to vector<7x1xf32>
    %514 = vector.broadcast %513 : vector<7x1xf32> to vector<7x512xf32>
    %515 = arith.subf %511, %514 : vector<7x512xf32>
    %516 = math.exp %515 : vector<7x512xf32>
    %cst_201 = arith.constant dense<0.000000e+00> : vector<7xf32>
    %517 = vector.multi_reduction <add>, %516, %cst_201 [1] : vector<7x512xf32> to vector<7xf32>
    %518 = vector.shape_cast %517 : vector<7xf32> to vector<7x1xf32>
    %519 = tpu.reciprocal %518 {approx = true} : vector<7x1xf32> -> vector<7x1xf32>
    %520 = vector.broadcast %519 : vector<7x1xf32> to vector<7x512xf32>
    %521 = arith.mulf %516, %520 : vector<7x512xf32>
    %522 = vector.extract_strided_slice %442 {offsets = [0, 112], sizes = [512, 16], strides = [1, 1]} : vector<512x128xf32> to vector<512x16xf32>
    %523 = arith.truncf %522 : vector<512x16xf32> to vector<512x16xbf16>
    %524 = arith.truncf %521 : vector<7x512xf32> to vector<7x512xbf16>
    %cst_202 = arith.constant dense<0.000000e+00> : vector<7x16xf32>
    %525 = tpu.matmul %524, %523, %cst_202 {dimension_numbers = #tpu.dot_dimension_numbers<[1], [0], [0], [1], [0, 0, 1, 1], [], []>} : vector<7x512xbf16>, vector<512x16xbf16>, vector<7x16xf32> -> vector<7x16xf32>
    %526 = arith.truncf %525 : vector<7x16xf32> to vector<7x16xbf16>
    %527 = vector.extract_strided_slice %446 {offsets = [48, 0], sizes = [16, 64], strides = [1, 1]} : vector<64x64xbf16> to vector<16x64xbf16>
    %cst_203 = arith.constant dense<0.000000e+00> : vector<7x64xf32>
    %528 = tpu.matmul %526, %527, %cst_203 {dimension_numbers = #tpu.dot_dimension_numbers<[1], [0], [0], [1], [0, 0, 1, 1], [], []>} : vector<7x16xbf16>, vector<16x64xbf16>, vector<7x64xf32> -> vector<7x64xf32>
    %529 = arith.addf %508, %528 : vector<7x64xf32>
    %c160 = arith.constant 160 : index
    %c0_204 = arith.constant 0 : index
    %530 = vector.load %arg8[%c160, %c0_204] : memref<176x128xf32, #tpu.memory_space<vmem>>, vector<1x64xf32>
    %531 = vector.broadcast %530 : vector<1x64xf32> to vector<7x64xf32>
    %532 = arith.addf %529, %531 : vector<7x64xf32>
    %c168 = arith.constant 168 : index
    %c0_205 = arith.constant 0 : index
    %533 = vector.load %arg8[%c168, %c0_205] : memref<176x128xf32, #tpu.memory_space<vmem>>, vector<1x64xf32>
    %534 = arith.addf %44, %533 : vector<1x64xf32>
    %535 = vector.broadcast %534 : vector<1x64xf32> to vector<3x64xf32>
    %536 = arith.addf %328, %535 : vector<3x64xf32>
    %537 = vector.broadcast %534 : vector<1x64xf32> to vector<3x64xf32>
    %538 = arith.addf %430, %537 : vector<3x64xf32>
    %539 = vector.broadcast %534 : vector<1x64xf32> to vector<7x64xf32>
    %540 = arith.addf %532, %539 : vector<7x64xf32>
    %541 = tpu.concatenate %534, %536, %538, %540 in 0 : vector<1x64xf32>, vector<3x64xf32>, vector<3x64xf32>, vector<7x64xf32> -> vector<14x64xf32>
    %c0_206 = arith.constant 0 : index
    %c0_207 = arith.constant 0 : index
    %c0_208 = arith.constant 0 : index
    %542 = vector.load %arg9[%c0_206, %c0_207, %c0_208] : memref<1x14x64xf32, #tpu.memory_space<vmem>>, vector<1x14x64xf32>
    %543 = vector.shape_cast %542 : vector<1x14x64xf32> to vector<14x64xf32>
    %544 = vector.shape_cast %541 : vector<14x64xf32> to vector<1x14x64xf32>
    tpu.vector_store %arg9[%c0_206, %c0_207, %c0_208], %544 {strides = array<i32>} : memref<1x14x64xf32, #tpu.memory_space<vmem>>, vector<1x14x64xf32>,
    %c0_209 = arith.constant 0 : index
    %c0_210 = arith.constant 0 : index
    %c0_211 = arith.constant 0 : index
    %545 = vector.load %arg10[%c0_209, %c0_210, %c0_211] : memref<1x1x64xf32, #tpu.memory_space<vmem>>, vector<1x1x64xf32>
    %546 = vector.shape_cast %545 : vector<1x1x64xf32> to vector<1x64xf32>
    %547 = vector.shape_cast %44 : vector<1x64xf32> to vector<1x1x64xf32>
    tpu.vector_store %arg10[%c0_209, %c0_210, %c0_211], %547 {strides = array<i32>} : memref<1x1x64xf32, #tpu.memory_space<vmem>>, vector<1x1x64xf32>,
    return
  }
  func.func @transform_0(%arg0: i32) -> (i32, i32, i32) {
    %c0_i32 = arith.constant 0 : i32
    %c0_i32_0 = arith.constant 0 : i32
    %c0_i32_1 = arith.constant 0 : i32
    return %arg0, %c0_i32, %c0_i32_0 : i32, i32, i32
  }
  func.func @transform_1(%arg0: i32) -> (i32, i32, i32) {
    %c0_i32 = arith.constant 0 : i32
    %c0_i32_0 = arith.constant 0 : i32
    %c0_i32_1 = arith.constant 0 : i32
    return %arg0, %c0_i32, %c0_i32_0 : i32, i32, i32
  }
  func.func @transform_2(%arg0: i32) -> (i32, i32, i32) {
    %c0_i32 = arith.constant 0 : i32
    %c0_i32_0 = arith.constant 0 : i32
    %c0_i32_1 = arith.constant 0 : i32
    return %arg0, %c0_i32, %c0_i32_0 : i32, i32, i32
  }
  func.func @transform_3(%arg0: i32) -> (i32, i32, i32) {
    %c0_i32 = arith.constant 0 : i32
    %c0_i32_0 = arith.constant 0 : i32
    %c0_i32_1 = arith.constant 0 : i32
    return %arg0, %c0_i32, %c0_i32_0 : i32, i32, i32
  }
  func.func @transform_4(%arg0: i32) -> (i32, i32, i32) {
    %c0_i32 = arith.constant 0 : i32
    %c0_i32_0 = arith.constant 0 : i32
    %c0_i32_1 = arith.constant 0 : i32
    return %arg0, %c0_i32, %c0_i32_0 : i32, i32, i32
  }
  func.func @transform_5(%arg0: i32) -> (i32, i32) {
    %c0_i32 = arith.constant 0 : i32
    %c0_i32_0 = arith.constant 0 : i32
    %c0_i32_1 = arith.constant 0 : i32
    return %c0_i32, %c0_i32_0 : i32, i32
  }
  func.func @transform_6(%arg0: i32) -> (i32, i32) {
    %c0_i32 = arith.constant 0 : i32
    %c0_i32_0 = arith.constant 0 : i32
    %c0_i32_1 = arith.constant 0 : i32
    return %c0_i32, %c0_i32_0 : i32, i32
  }
  func.func @transform_7(%arg0: i32) -> (i32, i32) {
    %c0_i32 = arith.constant 0 : i32
    %c0_i32_0 = arith.constant 0 : i32
    %c0_i32_1 = arith.constant 0 : i32
    return %c0_i32, %c0_i32_0 : i32, i32
  }
  func.func @transform_8(%arg0: i32) -> (i32, i32, i32) {
    %c0_i32 = arith.constant 0 : i32
    %c0_i32_0 = arith.constant 0 : i32
    %c0_i32_1 = arith.constant 0 : i32
    return %arg0, %c0_i32, %c0_i32_0 : i32, i32, i32
  }
  func.func @transform_9(%arg0: i32) -> (i32, i32, i32) {
    %c0_i32 = arith.constant 0 : i32
    %c0_i32_0 = arith.constant 0 : i32
    %c0_i32_1 = arith.constant 0 : i32
    return %arg0, %c0_i32, %c0_i32_0 : i32, i32, i32
  }
}

</mosaic_0001>

<llo_original>
// kernel: net_forward.1
$region0: #{net_forward.1}
  #allocation0 [shape = 'u32[]', space=smem, size = 0x4, offset = 0x4, fixed_abs, tag = 'smem constant byte address 0x4 - core index']
  #allocation1 [shape = 'u32[72,128]{1,0:T(1,128)}', space=vmem, size = 0x9000, scoped, tag = 'internal scratch']
  %s0 = inlined_call_operand.vmem [shape: bf16[2,16,128], index: 0, kind: input, shape index: {}]
  %s1 = inlined_call_operand.vmem [shape: bf16[2,16,128], index: 1, kind: input, shape index: {}]
  %s2 = inlined_call_operand.vmem [shape: bf16[2,32,64], index: 2, kind: input, shape index: {}]
  %s3 = inlined_call_operand.vmem [shape: bf16[2,128,32], index: 3, kind: input, shape index: {}]
  %s4 = inlined_call_operand.vmem [shape: bf16[2,512,16], index: 4, kind: input, shape index: {}]
  %s5 = inlined_call_operand.hbm [shape: bf16[3344,128], index: 5, kind: input, shape index: {}]
  %s6 = inlined_call_operand.vmem [shape: f32[512,16], index: 6, kind: input, shape index: {}]
  %s7 = inlined_call_operand.vmem [shape: f32[176,128], index: 7, kind: input, shape index: {}]
  %s8 = inlined_call_operand.vmem [shape: f32[2,14,64], index: 8, kind: output, shape index: {0}]
  %s9 = inlined_call_operand.vmem [shape: f32[2,1,64], index: 9, kind: output, shape index: {1}]
  %10 = xla_tuple %s8, %s9
  %s11 = sld [smem:[#allocation0]]
  $region77: #{net_forward.1} parent=0
    _
  %s13 = ssub.s32 1, %s11
  %s14 = scalar_select 0, %s13, %s11
  $region1: #{net_forward.1} parent=0
    #allocation2 [shape = 'u8[856064]{0}', space=vmem, size = 0xd1000, scoped, tag = 'input window, operand 5, single buffered']
    #allocation3 [shape = 's32[2]{0}', space=sflag, size = 0x8, scoped, tag = 'scoped memory for net_forward.1']
    %15 = vsyncpa [#allocation3], 0
    loop: start=0, step=1, limit=4
    $region2: #{net_forward.1} parent=1 // loop_pre_header
      _
    $region3: #{net_forward.1} parent=1 // loop_header
      %s17 = sphi 0, %s21
      %p18 = scmp.ge.s32.totalorder %s17, 4
      %s27 = sphi 0, %s29
      %s30 = sphi 0, %s27
      %s31 = sphi 0, %s30
      %s47 = sphi 0, %s31
      %s53 = sphi 0, %s55
      %s56 = sphi 0, %s53
      %s57 = sphi 0, %s56
      %s73 = sphi 0, %s57
      %s79 = sphi 0, %s81
      %s82 = sphi 0, %s79
      %s83 = sphi 0, %s82
      %s99 = sphi 0, %s83
      %s105 = sphi 0, %s107
      %s108 = sphi 0, %s105
      %s109 = sphi 0, %s108
      %s125 = sphi 0, %s109
      %s131 = sphi 0, %s133
      %s134 = sphi 0, %s131
      %s135 = sphi 0, %s134
      %s151 = sphi 0, %s135
      %s155 = sphi 0, %s155
      %s157 = sphi 0, %s155
      %s158 = sphi 0, %s157
      %s172 = sphi 0, %s158
      %s176 = sphi 0, %s176
      %s178 = sphi 0, %s176
      %s179 = sphi 0, %s178
      %s193 = sphi 0, %s179
      %s197 = sphi 0, %s197
      %s199 = sphi 0, %s197
      %s200 = sphi 0, %s199
      %s214 = sphi 0, %s200
      %s220 = sphi 0, %s222
      %s223 = sphi 0, %s220
      %s224 = sphi 0, %s223
      %s240 = sphi 0, %s224
      %s246 = sphi 0, %s248
      %s249 = sphi 0, %s246
      %s250 = sphi 0, %s249
      %s266 = sphi 0, %s250
    $region4: #{net_forward.1} parent=1 // loop_header_branch
      %20 = sbr.rel (%p18) target = $region8
    $region5: #{net_forward.1} parent=1 // loop_body
      %s22 = ssub.s32 %s17, 1
      %s23 = ssub.s32 %s17, 2
      %s24 = sadd.s32 %s17, 1
      %s25 = ssub.s32 %s17, %s24
      %p26 = scmp.eq.s32.totalorder %s25, 0
      %s28 = sadd.s32 %s27, 1
      %s29 = scalar_select %p26, %s27, %s28
      %p32 = pneg %p26
      %p33 = scmp.eq.s32.totalorder %s17, 1
      %p34 = por %p32, %p33
      %p35 = scmp.ne.s32.totalorder %s27, %s30
      %p36 = scmp.eq.s32.totalorder %s17, 0
      %p37 = por %p35, %p36
      %p38 = scmp.ne.s32.totalorder %s27, %s30
      %p39 = scmp.eq.s32.totalorder %s22, 1
      %p40 = por %p38, %p39
      %p41 = scmp.ne.s32.totalorder %s30, %s31
      %p42 = scmp.eq.s32.totalorder %s22, 0
      %p43 = por %p41, %p42
      %p44 = scmp.ne.s32.totalorder %s30, %s31
      %p45 = scmp.eq.s32.totalorder %s23, 1
      %p46 = por %p44, %p45
      %p48 = scmp.ne.s32.totalorder %s31, %s47
      %p49 = scmp.eq.s32.totalorder %s23, 0
      %p50 = por %p48, %p49
      %s51 = ssub.s32 %s17, %s24
      %p52 = scmp.eq.s32.totalorder %s51, 0
      %s54 = sadd.s32 %s53, 1
      %s55 = scalar_select %p52, %s53, %s54
      %p58 = pneg %p52
      %p59 = scmp.eq.s32.totalorder %s17, 1
      %p60 = por %p58, %p59
      %p61 = scmp.ne.s32.totalorder %s53, %s56
      %p62 = scmp.eq.s32.totalorder %s17, 0
      %p63 = por %p61, %p62
      %p64 = scmp.ne.s32.totalorder %s53, %s56
      %p65 = scmp.eq.s32.totalorder %s22, 1
      %p66 = por %p64, %p65
      %p67 = scmp.ne.s32.totalorder %s56, %s57
      %p68 = scmp.eq.s32.totalorder %s22, 0
      %p69 = por %p67, %p68
      %p70 = scmp.ne.s32.totalorder %s56, %s57
      %p71 = scmp.eq.s32.totalorder %s23, 1
      %p72 = por %p70, %p71
      %p74 = scmp.ne.s32.totalorder %s57, %s73
      %p75 = scmp.eq.s32.totalorder %s23, 0
      %p76 = por %p74, %p75
      %s77 = ssub.s32 %s17, %s24
      %p78 = scmp.eq.s32.totalorder %s77, 0
      %s80 = sadd.s32 %s79, 1
      %s81 = scalar_select %p78, %s79, %s80
      %p84 = pneg %p78
      %p85 = scmp.eq.s32.totalorder %s17, 1
      %p86 = por %p84, %p85
      %p87 = scmp.ne.s32.totalorder %s79, %s82
      %p88 = scmp.eq.s32.totalorder %s17, 0
      %p89 = por %p87, %p88
      %p90 = scmp.ne.s32.totalorder %s79, %s82
      %p91 = scmp.eq.s32.totalorder %s22, 1
      %p92 = por %p90, %p91
      %p93 = scmp.ne.s32.totalorder %s82, %s83
      %p94 = scmp.eq.s32.totalorder %s22, 0
      %p95 = por %p93, %p94
      %p96 = scmp.ne.s32.totalorder %s82, %s83
      %p97 = scmp.eq.s32.totalorder %s23, 1
      %p98 = por %p96, %p97
      %p100 = scmp.ne.s32.totalorder %s83, %s99
      %p101 = scmp.eq.s32.totalorder %s23, 0
      %p102 = por %p100, %p101
      %s103 = ssub.s32 %s17, %s24
      %p104 = scmp.eq.s32.totalorder %s103, 0
      %s106 = sadd.s32 %s105, 1
      %s107 = scalar_select %p104, %s105, %s106
      %p110 = pneg %p104
      %p111 = scmp.eq.s32.totalorder %s17, 1
      %p112 = por %p110, %p111
      %p113 = scmp.ne.s32.totalorder %s105, %s108
      %p114 = scmp.eq.s32.totalorder %s17, 0
      %p115 = por %p113, %p114
      %p116 = scmp.ne.s32.totalorder %s105, %s108
      %p117 = scmp.eq.s32.totalorder %s22, 1
      %p118 = por %p116, %p117
      %p119 = scmp.ne.s32.totalorder %s108, %s109
      %p120 = scmp.eq.s32.totalorder %s22, 0
      %p121 = por %p119, %p120
      %p122 = scmp.ne.s32.totalorder %s108, %s109
      %p123 = scmp.eq.s32.totalorder %s23, 1
      %p124 = por %p122, %p123
      %p126 = scmp.ne.s32.totalorder %s109, %s125
      %p127 = scmp.eq.s32.totalorder %s23, 0
      %p128 = por %p126, %p127
      %s129 = ssub.s32 %s17, %s24
      %p130 = scmp.eq.s32.totalorder %s129, 0
      %s132 = sadd.s32 %s131, 1
      %s133 = scalar_select %p130, %s131, %s132
      %p136 = pneg %p130
      %p137 = scmp.eq.s32.totalorder %s17, 1
      %p138 = por %p136, %p137
      %p139 = scmp.ne.s32.totalorder %s131, %s134
      %p140 = scmp.eq.s32.totalorder %s17, 0
      %p141 = por %p139, %p140
      %p142 = scmp.ne.s32.totalorder %s131, %s134
      %p143 = scmp.eq.s32.totalorder %s22, 1
      %p144 = por %p142, %p143
      %p145 = scmp.ne.s32.totalorder %s134, %s135
      %p146 = scmp.eq.s32.totalorder %s22, 0
      %p147 = por %p145, %p146
      %p148 = scmp.ne.s32.totalorder %s134, %s135
      %p149 = scmp.eq.s32.totalorder %s23, 1
      %p150 = por %p148, %p149
      %p152 = scmp.ne.s32.totalorder %s135, %s151
      %p153 = scmp.eq.s32.totalorder %s23, 0
      %p154 = por %p152, %p153
      %s156 = sadd.s32 %s155, 1
      %p159 = scmp.eq.s32.totalorder %s17, 1
      %p160 = scmp.ne.s32.totalorder %s155, %s157
      %p161 = scmp.eq.s32.totalorder %s17, 0
      %p162 = por %p160, %p161
      %p163 = scmp.ne.s32.totalorder %s155, %s157
      %p164 = scmp.eq.s32.totalorder %s22, 1
      %p165 = por %p163, %p164
      %p166 = scmp.ne.s32.totalorder %s157, %s158
      %p167 = scmp.eq.s32.totalorder %s22, 0
      %p168 = por %p166, %p167
      %p169 = scmp.ne.s32.totalorder %s157, %s158
      %p170 = scmp.eq.s32.totalorder %s23, 1
      %p171 = por %p169, %p170
      %p173 = scmp.ne.s32.totalorder %s158, %s172
      %p174 = scmp.eq.s32.totalorder %s23, 0
      %p175 = por %p173, %p174
      %s177 = sadd.s32 %s176, 1
      %p180 = scmp.eq.s32.totalorder %s17, 1
      %p181 = scmp.ne.s32.totalorder %s176, %s178
      %p182 = scmp.eq.s32.totalorder %s17, 0
      %p183 = por %p181, %p182
      %p184 = scmp.ne.s32.totalorder %s176, %s178
      %p185 = scmp.eq.s32.totalorder %s22, 1
      %p186 = por %p184, %p185
      %p187 = scmp.ne.s32.totalorder %s178, %s179
      %p188 = scmp.eq.s32.totalorder %s22, 0
      %p189 = por %p187, %p188
      %p190 = scmp.ne.s32.totalorder %s178, %s179
      %p191 = scmp.eq.s32.totalorder %s23, 1
      %p192 = por %p190, %p191
      %p194 = scmp.ne.s32.totalorder %s179, %s193
      %p195 = scmp.eq.s32.totalorder %s23, 0
      %p196 = por %p194, %p195
      %s198 = sadd.s32 %s197, 1
      %p201 = scmp.eq.s32.totalorder %s17, 1
      %p202 = scmp.ne.s32.totalorder %s197, %s199
      %p203 = scmp.eq.s32.totalorder %s17, 0
      %p204 = por %p202, %p203
      %p205 = scmp.ne.s32.totalorder %s197, %s199
      %p206 = scmp.eq.s32.totalorder %s22, 1
      %p207 = por %p205, %p206
      %p208 = scmp.ne.s32.totalorder %s199, %s200
      %p209 = scmp.eq.s32.totalorder %s22, 0
      %p210 = por %p208, %p209
      %p211 = scmp.ne.s32.totalorder %s199, %s200
      %p212 = scmp.eq.s32.totalorder %s23, 1
      %p213 = por %p211, %p212
      %p215 = scmp.ne.s32.totalorder %s200, %s214
      %p216 = scmp.eq.s32.totalorder %s23, 0
      %p217 = por %p215, %p216
      %s218 = ssub.s32 %s17, %s24
      %p219 = scmp.eq.s32.totalorder %s218, 0
      %s221 = sadd.s32 %s220, 1
      %s222 = scalar_select %p219, %s220, %s221
      %p225 = pneg %p219
      %p226 = scmp.eq.s32.totalorder %s17, 1
      %p227 = por %p225, %p226
      %p228 = scmp.ne.s32.totalorder %s220, %s223
      %p229 = scmp.eq.s32.totalorder %s17, 0
      %p230 = por %p228, %p229
      %p231 = scmp.ne.s32.totalorder %s220, %s223
      %p232 = scmp.eq.s32.totalorder %s22, 1
      %p233 = por %p231, %p232
      %p234 = scmp.ne.s32.totalorder %s223, %s224
      %p235 = scmp.eq.s32.totalorder %s22, 0
      %p236 = por %p234, %p235
      %p237 = scmp.ne.s32.totalorder %s223, %s224
      %p238 = scmp.eq.s32.totalorder %s23, 1
      %p239 = por %p237, %p238
      %p241 = scmp.ne.s32.totalorder %s224, %s240
      %p242 = scmp.eq.s32.totalorder %s23, 0
      %p243 = por %p241, %p242
      %s244 = ssub.s32 %s17, %s24
      %p245 = scmp.eq.s32.totalorder %s244, 0
      %s247 = sadd.s32 %s246, 1
      %s248 = scalar_select %p245, %s246, %s247
      %p251 = pneg %p245
      %p252 = scmp.eq.s32.totalorder %s17, 1
      %p253 = por %p251, %p252
      %p254 = scmp.ne.s32.totalorder %s246, %s249
      %p255 = scmp.eq.s32.totalorder %s17, 0
      %p256 = por %p254, %p255
      %p257 = scmp.ne.s32.totalorder %s246, %s249
      %p258 = scmp.eq.s32.totalorder %s22, 1
      %p259 = por %p257, %p258
      %p260 = scmp.ne.s32.totalorder %s249, %s250
      %p261 = scmp.eq.s32.totalorder %s22, 0
      %p262 = por %p260, %p261
      %p263 = scmp.ne.s32.totalorder %s249, %s250
      %p264 = scmp.eq.s32.totalorder %s23, 1
      %p265 = por %p263, %p264
      %p267 = scmp.ne.s32.totalorder %s250, %s266
      %p268 = scmp.eq.s32.totalorder %s23, 0
      %p269 = por %p267, %p268
      %p270 = scmp.le.s32.totalorder 1, %s17
      %p271 = scmp.lt.s32.totalorder %s17, 3
      %p272 = pnand %p270, %p271
      %p273 = pneg %p272
      // Predicated region
      $region9: #{net_forward.1} parent=5 // pred_check
        _
      $region10: #{net_forward.1} parent=5 // pred_check_branch
        %275 = sbr.rel (%p272) target = $region12
      $region11: #{net_forward.1} parent=5 // pred_region
        %s276 = ssub.s32 %s17, 1
        // Predicated region
        $region13: #{net_forward.1} parent=11 // pred_check
          %p277 = pneg %p168
        $region14: #{net_forward.1} parent=11 // pred_check_branch
          %279 = sbr.rel (%p277) target = $region16
        $region15: #{net_forward.1} parent=11 // pred_region
          %281 = vsyncadd [#allocation3], 0
          %s282 = sshll.u32 %s5, 4
          %s283 = int_to_ptr.hbm [resolvable:$true] %s282
          %s284 = sshll.u32 [#allocation2], 4
          %s285 = int_to_ptr.vmem [resolvable:$true] %s284
          %290 = dma.hbm_to_vmem [thread:$0]  %s283, 26752, %s285, [#allocation3], 64, 64, 4
        $region16: #{net_forward.1} parent=11 // pred_fallthru
          _
        // Predicated region
        $region17: #{net_forward.1} parent=11 // pred_check
          %p291 = pneg %p189
        $region18: #{net_forward.1} parent=11 // pred_check_branch
          %293 = sbr.rel (%p291) target = $region20
        $region19: #{net_forward.1} parent=11 // pred_region
          _
        $region20: #{net_forward.1} parent=11 // pred_fallthru
          _
        // Predicated region
        $region21: #{net_forward.1} parent=11 // pred_check
          %p294 = pneg %p210
        $region22: #{net_forward.1} parent=11 // pred_check_branch
          %296 = sbr.rel (%p294) target = $region24
        $region23: #{net_forward.1} parent=11 // pred_region
          _
        $region24: #{net_forward.1} parent=11 // pred_fallthru
          _
      $region12: #{net_forward.1} parent=5 // pred_fallthru
        _
      %p297 = scmp.lt.s32.totalorder %s17, 2
      // Predicated region
      $region25: #{net_forward.1} parent=5 // pred_check
        %p298 = pneg %p297
      $region26: #{net_forward.1} parent=5 // pred_check_branch
        %300 = sbr.rel (%p298) target = $region28
      $region27: #{net_forward.1} parent=5 // pred_region
        // Predicated region
        $region29: #{net_forward.1} parent=27 // pred_check
          %p301 = pneg %p37
        $region30: #{net_forward.1} parent=27 // pred_check_branch
          %303 = sbr.rel (%p301) target = $region32
        $region31: #{net_forward.1} parent=27 // pred_region
          %p304 = scmp.lt.s32.totalorder %s17, 1
          %s305 = scalar_select %p304, %s17, 1
          %s306 = smul.addr %s305, 2
          %s307 = smul.addr %s306, 4
          %s308 = scalar_lea.vmem %s0, %s307
        $region32: #{net_forward.1} parent=27 // pred_fallthru
          _
        // Predicated region
        $region33: #{net_forward.1} parent=27 // pred_check
          %p309 = pneg %p63
        $region34: #{net_forward.1} parent=27 // pred_check_branch
          %311 = sbr.rel (%p309) target = $region36
        $region35: #{net_forward.1} parent=27 // pred_region
          %p312 = scmp.lt.s32.totalorder %s17, 1
          %s313 = scalar_select %p312, %s17, 1
          %s314 = smul.addr %s313, 2
          %s315 = smul.addr %s314, 4
          %s316 = scalar_lea.vmem %s1, %s315
        $region36: #{net_forward.1} parent=27 // pred_fallthru
          _
        // Predicated region
        $region37: #{net_forward.1} parent=27 // pred_check
          %p317 = pneg %p89
        $region38: #{net_forward.1} parent=27 // pred_check_branch
          %319 = sbr.rel (%p317) target = $region40
        $region39: #{net_forward.1} parent=27 // pred_region
          %p320 = scmp.lt.s32.totalorder %s17, 1
          %s321 = scalar_select %p320, %s17, 1
          %s322 = smul.addr %s321, 4
          %s323 = smul.addr %s322, 4
          %s324 = scalar_lea.vmem %s2, %s323
        $region40: #{net_forward.1} parent=27 // pred_fallthru
          _
        // Predicated region
        $region41: #{net_forward.1} parent=27 // pred_check
          %p325 = pneg %p115
        $region42: #{net_forward.1} parent=27 // pred_check_branch
          %327 = sbr.rel (%p325) target = $region44
        $region43: #{net_forward.1} parent=27 // pred_region
          %p328 = scmp.lt.s32.totalorder %s17, 1
          %s329 = scalar_select %p328, %s17, 1
          %s330 = smul.addr %s329, 16
          %s331 = smul.addr %s330, 4
          %s332 = scalar_lea.vmem %s3, %s331
        $region44: #{net_forward.1} parent=27 // pred_fallthru
          _
        // Predicated region
        $region45: #{net_forward.1} parent=27 // pred_check
          %p333 = pneg %p141
        $region46: #{net_forward.1} parent=27 // pred_check_branch
          %335 = sbr.rel (%p333) target = $region48
        $region47: #{net_forward.1} parent=27 // pred_region
          %p336 = scmp.lt.s32.totalorder %s17, 1
          %s337 = scalar_select %p336, %s17, 1
          %s338 = smul.addr %s337, 64
          %s339 = smul.addr %s338, 4
          %s340 = scalar_lea.vmem %s4, %s339
        $region48: #{net_forward.1} parent=27 // pred_fallthru
          _
      $region28: #{net_forward.1} parent=5 // pred_fallthru
        _
      %p341 = scmp.le.s32.totalorder 1, %s17
      %p342 = scmp.lt.s32.totalorder %s17, 3
      %p343 = pnand %p341, %p342
      %p344 = pneg %p343
      // Predicated region
      $region49: #{net_forward.1} parent=5 // pred_check
        _
      $region50: #{net_forward.1} parent=5 // pred_check_branch
        %346 = sbr.rel (%p343) target = $region52
      $region51: #{net_forward.1} parent=5 // pred_region
        %s347 = ssub.s32 %s17, 1
        // Predicated region
        $region53: #{net_forward.1} parent=51 // pred_check
          %p348 = pneg %p168
        $region54: #{net_forward.1} parent=51 // pred_check_branch
          %350 = sbr.rel (%p348) target = $region56
        $region55: #{net_forward.1} parent=51 // pred_region
          %352 = dma.done [#allocation3], 26752
        $region56: #{net_forward.1} parent=51 // pred_fallthru
          _
        %p353 = scmp.lt.s32.totalorder %s22, 1
        %s354 = scalar_select %p353, %s22, 1
        %s355 = smul.addr %s354, 2
        %s356 = smul.addr %s355, 4
        %s357 = scalar_lea.vmem %s0, %s356
        %p358 = pneg %p43
        %p359 = pneg %p40
        %p360 = scmp.lt.s32.totalorder %s22, 1
        %s361 = scalar_select %p360, %s22, 1
        %s362 = smul.addr %s361, 2
        %s363 = smul.addr %s362, 4
        %s364 = scalar_lea.vmem %s1, %s363
        %p365 = pneg %p69
        %p366 = pneg %p66
        %p367 = scmp.lt.s32.totalorder %s22, 1
        %s368 = scalar_select %p367, %s22, 1
        %s369 = smul.addr %s368, 4
        %s370 = smul.addr %s369, 4
        %s371 = scalar_lea.vmem %s2, %s370
        %p372 = pneg %p95
        %p373 = pneg %p92
        %p374 = scmp.lt.s32.totalorder %s22, 1
        %s375 = scalar_select %p374, %s22, 1
        %s376 = smul.addr %s375, 16
        %s377 = smul.addr %s376, 4
        %s378 = scalar_lea.vmem %s3, %s377
        %p379 = pneg %p121
        %p380 = pneg %p118
        %p381 = scmp.lt.s32.totalorder %s22, 1
        %s382 = scalar_select %p381, %s22, 1
        %s383 = smul.addr %s382, 64
        %s384 = smul.addr %s383, 4
        %s385 = scalar_lea.vmem %s4, %s384
        %p386 = pneg %p147
        %p387 = pneg %p144
        %p388 = pneg %p168
        %p389 = pneg %p165
        %p390 = pneg %p189
        %p391 = pneg %p186
        %p392 = pneg %p210
        %p393 = pneg %p207
        %p394 = pneg %p236
        %p395 = pneg %p233
        %p396 = scmp.lt.s32.totalorder %s22, 1
        %s397 = scalar_select %p396, %s22, 1
        %s398 = smul.addr %s397, 2
        %s399 = smul.addr %s398, 8
        %s400 = scalar_lea.vmem %s8, %s399
        %p401 = pneg %p262
        %p402 = pneg %p259
        %p403 = scmp.lt.s32.totalorder %s22, 1
        %s404 = scalar_select %p403, %s22, 1
        %s405 = scalar_lea.vmem %s9, %s404
        %p406 = scmp.lt.s32.totalorder %s22, 1
        %s407 = scalar_select %p406, %s22, 1
        %s408 = smul.addr %s407, 2
        %s409 = smul.addr %s408, 4
        %s410 = scalar_lea.vmem %s0, %s409
        %p411 = scmp.lt.s32.totalorder %s22, 1
        %s412 = scalar_select %p411, %s22, 1
        %s413 = smul.addr %s412, 2
        %s414 = smul.addr %s413, 4
        %s415 = scalar_lea.vmem %s1, %s414
        %p416 = scmp.lt.s32.totalorder %s22, 1
        %s417 = scalar_select %p416, %s22, 1
        %s418 = smul.addr %s417, 4
        %s419 = smul.addr %s418, 4
        %s420 = scalar_lea.vmem %s2, %s419
        %p421 = scmp.lt.s32.totalorder %s22, 1
        %s422 = scalar_select %p421, %s22, 1
        %s423 = smul.addr %s422, 16
        %s424 = smul.addr %s423, 4
        %s425 = scalar_lea.vmem %s3, %s424
        %p426 = scmp.lt.s32.totalorder %s22, 1
        %s427 = scalar_select %p426, %s22, 1
        %s428 = smul.addr %s427, 64
        %s429 = smul.addr %s428, 4
        %s430 = scalar_lea.vmem %s4, %s429
        %p431 = scmp.lt.s32.totalorder %s22, 1
        %s432 = scalar_select %p431, %s22, 1
        %s433 = smul.addr %s432, 2
        %s434 = smul.addr %s433, 8
        %s435 = scalar_lea.vmem %s8, %s434
        %p436 = scmp.lt.s32.totalorder %s22, 1
        %s437 = scalar_select %p436, %s22, 1
        %s438 = scalar_lea.vmem %s9, %s437
        %v440 = vld [vmem:[%s410] sm:$0xf]
        %v441 = vld [vmem:[%s410 + $0x4] sm:$0xf]
        %v442 = vld [vmem:[%s415] sm:$0xf]
        %v443 = vld [vmem:[%s415 + $0x4] sm:$0xf]
        %v444 = vld [vmem:[%s420] sm:$0xf]
        %v445 = vld [vmem:[%s420 + $0x4] sm:$0xf]
        %v446 = vld [vmem:[%s420 + $0x8] sm:$0xf]
        %v447 = vld [vmem:[%s420 + $0xc] sm:$0xf]
        %v448 = vld [vmem:[%s425] sm:$0xf]
        %v449 = vld [vmem:[%s425 + $0x4] sm:$0xf]
        %v450 = vld [vmem:[%s425 + $0x8] sm:$0xf]
        %v451 = vld [vmem:[%s425 + $0xc] sm:$0xf]
        %v452 = vld [vmem:[%s425 + $0x10] sm:$0xf]
        %v453 = vld [vmem:[%s425 + $0x14] sm:$0xf]
        %v454 = vld [vmem:[%s425 + $0x18] sm:$0xf]
        %v455 = vld [vmem:[%s425 + $0x1c] sm:$0xf]
        %v456 = vld [vmem:[%s425 + $0x20] sm:$0xf]
        %v457 = vld [vmem:[%s425 + $0x24] sm:$0xf]
        %v458 = vld [vmem:[%s425 + $0x28] sm:$0xf]
        %v459 = vld [vmem:[%s425 + $0x2c] sm:$0xf]
        %v460 = vld [vmem:[%s425 + $0x30] sm:$0xf]
        %v461 = vld [vmem:[%s425 + $0x34] sm:$0xf]
        %v462 = vld [vmem:[%s425 + $0x38] sm:$0xf]
        %v463 = vld [vmem:[%s425 + $0x3c] sm:$0xf]
        %v464 = vld [vmem:[%s430] sm:$0xf]
        %v465 = vld [vmem:[%s430 + $0x4] sm:$0xf]
        %v466 = vld [vmem:[%s430 + $0x8] sm:$0xf]
        %v467 = vld [vmem:[%s430 + $0xc] sm:$0xf]
        %v468 = vld [vmem:[%s430 + $0x10] sm:$0xf]
        %v469 = vld [vmem:[%s430 + $0x14] sm:$0xf]
        %v470 = vld [vmem:[%s430 + $0x18] sm:$0xf]
        %v471 = vld [vmem:[%s430 + $0x1c] sm:$0xf]
        %v472 = vld [vmem:[%s430 + $0x20] sm:$0xf]
        %v473 = vld [vmem:[%s430 + $0x24] sm:$0xf]
        %v474 = vld [vmem:[%s430 + $0x28] sm:$0xf]
        %v475 = vld [vmem:[%s430 + $0x2c] sm:$0xf]
        %v476 = vld [vmem:[%s430 + $0x30] sm:$0xf]
        %v477 = vld [vmem:[%s430 + $0x34] sm:$0xf]
        %v478 = vld [vmem:[%s430 + $0x38] sm:$0xf]
        %v479 = vld [vmem:[%s430 + $0x3c] sm:$0xf]
        %v480 = vld [vmem:[%s430 + $0x40] sm:$0xf]
        %v481 = vld [vmem:[%s430 + $0x44] sm:$0xf]
        %v482 = vld [vmem:[%s430 + $0x48] sm:$0xf]
        %v483 = vld [vmem:[%s430 + $0x4c] sm:$0xf]
        %v484 = vld [vmem:[%s430 + $0x50] sm:$0xf]
        %v485 = vld [vmem:[%s430 + $0x54] sm:$0xf]
        %v486 = vld [vmem:[%s430 + $0x58] sm:$0xf]
        %v487 = vld [vmem:[%s430 + $0x5c] sm:$0xf]
        %v488 = vld [vmem:[%s430 + $0x60] sm:$0xf]
        %v489 = vld [vmem:[%s430 + $0x64] sm:$0xf]
        %v490 = vld [vmem:[%s430 + $0x68] sm:$0xf]
        %v491 = vld [vmem:[%s430 + $0x6c] sm:$0xf]
        %v492 = vld [vmem:[%s430 + $0x70] sm:$0xf]
        %v493 = vld [vmem:[%s430 + $0x74] sm:$0xf]
        %v494 = vld [vmem:[%s430 + $0x78] sm:$0xf]
        %v495 = vld [vmem:[%s430 + $0x7c] sm:$0xf]
        %v496 = vld [vmem:[%s430 + $0x80] sm:$0xf]
        %v497 = vld [vmem:[%s430 + $0x84] sm:$0xf]
        %v498 = vld [vmem:[%s430 + $0x88] sm:$0xf]
        %v499 = vld [vmem:[%s430 + $0x8c] sm:$0xf]
        %v500 = vld [vmem:[%s430 + $0x90] sm:$0xf]
        %v501 = vld [vmem:[%s430 + $0x94] sm:$0xf]
        %v502 = vld [vmem:[%s430 + $0x98] sm:$0xf]
        %v503 = vld [vmem:[%s430 + $0x9c] sm:$0xf]
        %v504 = vld [vmem:[%s430 + $0xa0] sm:$0xf]
        %v505 = vld [vmem:[%s430 + $0xa4] sm:$0xf]
        %v506 = vld [vmem:[%s430 + $0xa8] sm:$0xf]
        %v507 = vld [vmem:[%s430 + $0xac] sm:$0xf]
        %v508 = vld [vmem:[%s430 + $0xb0] sm:$0xf]
        %v509 = vld [vmem:[%s430 + $0xb4] sm:$0xf]
        %v510 = vld [vmem:[%s430 + $0xb8] sm:$0xf]
        %v511 = vld [vmem:[%s430 + $0xbc] sm:$0xf]
        %v512 = vld [vmem:[%s430 + $0xc0] sm:$0xf]
        %v513 = vld [vmem:[%s430 + $0xc4] sm:$0xf]
        %v514 = vld [vmem:[%s430 + $0xc8] sm:$0xf]
        %v515 = vld [vmem:[%s430 + $0xcc] sm:$0xf]
        %v516 = vld [vmem:[%s430 + $0xd0] sm:$0xf]
        %v517 = vld [vmem:[%s430 + $0xd4] sm:$0xf]
        %v518 = vld [vmem:[%s430 + $0xd8] sm:$0xf]
        %v519 = vld [vmem:[%s430 + $0xdc] sm:$0xf]
        %v520 = vld [vmem:[%s430 + $0xe0] sm:$0xf]
        %v521 = vld [vmem:[%s430 + $0xe4] sm:$0xf]
        %v522 = vld [vmem:[%s430 + $0xe8] sm:$0xf]
        %v523 = vld [vmem:[%s430 + $0xec] sm:$0xf]
        %v524 = vld [vmem:[%s430 + $0xf0] sm:$0xf]
        %v525 = vld [vmem:[%s430 + $0xf4] sm:$0xf]
        %v526 = vld [vmem:[%s430 + $0xf8] sm:$0xf]
        %v527 = vld [vmem:[%s430 + $0xfc] sm:$0xf]
        %v528 = vld [vmem:[#allocation2] sm:$0xf]
        %v529 = vld [vmem:[#allocation2 + $0x4] sm:$0xf]
        %v530 = vld [vmem:[%s6] sm:$0xff]
        %v531 = vld [vmem:[%s6 + $0x8] sm:$0xff]
        %533 = vset.pattern.permute.xlu0 0
        %534 = vperm.xlu0 %533, %v530
        %v535 = vpop.permute.xlu0 %534
        %538 = vset.pattern.permute.xlu0 0
        %539 = vperm.xlu0 %538, %v531
        %v540 = vpop.permute.xlu0 %539
        %v544 = vunpack.c.l.b16 %v528
        %v545 = vunpack.c.l.b16 %v529
        %v546 = vpack.c.b16 %v545, %v544
        %v549 = vunpack.c.l.b16 %v440
        %v550 = vunpack.c.l.b16 %v441
        %v551 = vpack.c.b16 %v550, %v549
        %vm553 = vcmask 130048
        %v555 = vsel %vm553, %v546, 0
        %557 = vmatpush.bf16.msra.mxu0 0
        %558 = vmatpush.bf16.msra.mxu0 0
        %559 = vmatpush.bf16.msra.mxu0 0
        %560 = vmatpush.bf16.msra.mxu0 0
        %561 = vmatpush.bf16.msra.mxu0 0
        %562 = vmatpush.bf16.msra.mxu0 0
        %563 = vmatpush.bf16.msra.mxu0 0
        %564 = vmatpush.bf16.msra.mxu0 %v551
        %565 = vmatmul.bf16.gmra.mxu0 %v555
        %v566 = vpop.f32.mrf.mxu0
        %v567 = vadd.f32 %v535, %v566
        %v568 = vpop.f32.mrf.mxu0
        %v569 = vadd.f32 %v540, %v568
        %570 = vdwg.mxu0
        %vm571 = vcmp.gt.f32.partialorder %v567, 0.0
        %vm572 = vcmp.gt.f32.partialorder %v569, 0.0
        %v573 = vmul.f32 %v567, 0.01
        %v574 = vmul.f32 %v569, 0.01
        %v575 = vsel %vm571, %v567, %v573
        %v576 = vsel %vm572, %v569, %v574
        %v577 = vld [vmem:[#allocation2 + $0x8] sm:$0x1]
        %v578 = vpack.c.bf16 %v576, %v575
        %v579 = vld [vmem:[%s6] sm:$0x1]
        %581 = vset.pattern.permute.xlu0 1
        %582 = vperm.xlu0 %581, %v579
        %v583 = vpop.permute.xlu0 %582
        %v586 = vsel %vm553, %v577, 0
        %588 = vmatpush.bf16.msra.mxu0 0
        %589 = vmatpush.bf16.msra.mxu0 0
        %590 = vmatpush.bf16.msra.mxu0 0
        %591 = vmatpush.bf16.msra.mxu0 0
        %592 = vmatpush.bf16.msra.mxu0 0
        %593 = vmatpush.bf16.msra.mxu0 0
        %594 = vmatpush.bf16.msra.mxu0 0
        %595 = vmatpush.bf16.msra.mxu0 %v578
        %596 = vmatmul.bf16.gmra.mxu0 %v586
        %v597 = vpop.f32.mrf.mxu0
        %v598 = vadd.f32 %v583, %v597
        %v599 = vpop.f32.mrf.mxu0
        %600 = vdwg.mxu0
        %v601 = vunpack.c.l.bf16 %v440
        %v602 = vunpack.c.l.bf16 %v441
        %v603 = vmax.f32 %v601, %v602
        %v604 = vrot.slane %v603, 4
        %v605 = vmax.f32 %v603, %v604
        %v606 = vrot.slane %v605, 2
        %v607 = vmax.f32 %v605, %v606
        %v608 = vrot.slane %v607, 1
        %v609 = vmax.f32 %v607, %v608
        %v610 = vadd.f32 %v598, %v609
        %v611 = vpack.c.bf16 %v610, %v610
        %v612 = vld [vmem:[#allocation2 + $0x320] sm:$0xf]
        %v613 = vld [vmem:[#allocation2 + $0x324] sm:$0xf]
        %v614 = vld [vmem:[#allocation2 + $0x328] sm:$0xf]
        %v615 = vld [vmem:[#allocation2 + $0x32c] sm:$0xf]
        %v616 = vld [vmem:[#allocation2 + $0x330] sm:$0xf]
        %v617 = vld [vmem:[#allocation2 + $0x334] sm:$0xf]
        %v618 = vld [vmem:[#allocation2 + $0x338] sm:$0xf]
        %v619 = vld [vmem:[#allocation2 + $0x33c] sm:$0xf]
        %v620 = vld [vmem:[#allocation2 + $0x340] sm:$0xf]
        %v621 = vld [vmem:[#allocation2 + $0x344] sm:$0xf]
        %v622 = vld [vmem:[#allocation2 + $0x348] sm:$0xf]
        %v623 = vld [vmem:[#allocation2 + $0x34c] sm:$0xf]
        %v624 = vld [vmem:[#allocation2 + $0x350] sm:$0xf]
        %v625 = vld [vmem:[#allocation2 + $0x354] sm:$0xf]
        %v626 = vld [vmem:[#allocation2 + $0x358] sm:$0xf]
        %v627 = vld [vmem:[#allocation2 + $0x35c] sm:$0xf]
        %v628 = vld [vmem:[%s7] sm:$0x1]
        %v645 = vunpack.c.l.b16 %v612
        %v646 = vunpack.c.l.b16 %v613
        %v647 = vunpack.c.l.b16 %v614
        %v648 = vunpack.c.l.b16 %v615
        %v649 = vunpack.c.l.b16 %v616
        %v650 = vunpack.c.l.b16 %v617
        %v651 = vunpack.c.l.b16 %v618
        %v652 = vunpack.c.l.b16 %v619
        %v653 = vunpack.c.l.b16 %v620
        %v654 = vunpack.c.l.b16 %v621
        %v655 = vunpack.c.l.b16 %v622
        %v656 = vunpack.c.l.b16 %v623
        %v657 = vunpack.c.l.b16 %v624
        %v658 = vunpack.c.l.b16 %v625
        %v659 = vunpack.c.l.b16 %v626
        %v660 = vunpack.c.l.b16 %v627
        %v661 = vpack.c.b16 %v646, %v645
        %v662 = vpack.c.b16 %v648, %v647
        %v663 = vpack.c.b16 %v650, %v649
        %v664 = vpack.c.b16 %v652, %v651
        %v665 = vpack.c.b16 %v654, %v653
        %v666 = vpack.c.b16 %v656, %v655
        %v667 = vpack.c.b16 %v658, %v657
        %v668 = vpack.c.b16 %v660, %v659
        %677 = vmatpush.bf16.msra.mxu0 %v668
        %678 = vmatpush.bf16.msra.mxu0 %v667
        %679 = vmatpush.bf16.msra.mxu0 %v666
        %680 = vmatpush.bf16.msra.mxu0 %v665
        %681 = vmatpush.bf16.msra.mxu0 %v664
        %682 = vmatpush.bf16.msra.mxu0 %v663
        %683 = vmatpush.bf16.msra.mxu0 %v662
        %684 = vmatpush.bf16.msra.mxu0 %v661
        %685 = vmatmul.bf16.gmra.mxu0 %v611
        %v686 = vpop.f32.mrf.mxu0
        %v687 = vadd.f32 %v628, %v686
        %v688 = vpop.f32.mrf.mxu0
        %689 = vdwg.mxu0
        %vm690 = vcmp.gt.f32.partialorder %v687, 0.0
        %v691 = vmul.f32 %v687, 0.01
        %v692 = vsel %vm690, %v687, %v691
        %v693 = vpack.c.bf16 %v692, %v692
        %v694 = vld [vmem:[#allocation2 + $0x360] sm:$0xf]
        %v695 = vld [vmem:[#allocation2 + $0x364] sm:$0xf]
        %v696 = vld [vmem:[#allocation2 + $0x368] sm:$0xf]
        %v697 = vld [vmem:[#allocation2 + $0x36c] sm:$0xf]
        %v698 = vld [vmem:[#allocation2 + $0x370] sm:$0xf]
        %v699 = vld [vmem:[#allocation2 + $0x374] sm:$0xf]
        %v700 = vld [vmem:[#allocation2 + $0x378] sm:$0xf]
        %v701 = vld [vmem:[#allocation2 + $0x37c] sm:$0xf]
        %v702 = vld [vmem:[#allocation2 + $0x380] sm:$0xf]
        %v703 = vld [vmem:[#allocation2 + $0x384] sm:$0xf]
        %v704 = vld [vmem:[#allocation2 + $0x388] sm:$0xf]
        %v705 = vld [vmem:[#allocation2 + $0x38c] sm:$0xf]
        %v706 = vld [vmem:[#allocation2 + $0x390] sm:$0xf]
        %v707 = vld [vmem:[#allocation2 + $0x394] sm:$0xf]
        %v708 = vld [vmem:[#allocation2 + $0x398] sm:$0xf]
        %v709 = vld [vmem:[#allocation2 + $0x39c] sm:$0xf]
        %v710 = vld [vmem:[%s7 + $0x8] sm:$0x1]
        %v727 = vunpack.c.l.b16 %v694
        %v728 = vunpack.c.l.b16 %v695
        %v729 = vunpack.c.l.b16 %v696
        %v730 = vunpack.c.l.b16 %v697
        %v731 = vunpack.c.l.b16 %v698
        %v732 = vunpack.c.l.b16 %v699
        %v733 = vunpack.c.l.b16 %v700
        %v734 = vunpack.c.l.b16 %v701
        %v735 = vunpack.c.l.b16 %v702
        %v736 = vunpack.c.l.b16 %v703
        %v737 = vunpack.c.l.b16 %v704
        %v738 = vunpack.c.l.b16 %v705
        %v739 = vunpack.c.l.b16 %v706
        %v740 = vunpack.c.l.b16 %v707
        %v741 = vunpack.c.l.b16 %v708
        %v742 = vunpack.c.l.b16 %v709
        %v743 = vpack.c.b16 %v728, %v727
        %v744 = vpack.c.b16 %v730, %v729
        %v745 = vpack.c.b16 %v732, %v731
        %v746 = vpack.c.b16 %v734, %v733
        %v747 = vpack.c.b16 %v736, %v735
        %v748 = vpack.c.b16 %v738, %v737
        %v749 = vpack.c.b16 %v740, %v739
        %v750 = vpack.c.b16 %v742, %v741
        %759 = vmatpush.bf16.msra.mxu0 %v750
        %760 = vmatpush.bf16.msra.mxu0 %v749
        %761 = vmatpush.bf16.msra.mxu0 %v748
        %762 = vmatpush.bf16.msra.mxu0 %v747
        %763 = vmatpush.bf16.msra.mxu0 %v746
        %764 = vmatpush.bf16.msra.mxu0 %v745
        %765 = vmatpush.bf16.msra.mxu0 %v744
        %766 = vmatpush.bf16.msra.mxu0 %v743
        %767 = vmatmul.bf16.gmra.mxu0 %v693
        %v768 = vpop.f32.mrf.mxu0
        %v769 = vadd.f32 %v710, %v768
        %v770 = vpop.f32.mrf.mxu0
        %771 = vdwg.mxu0
        %v772 = vunpack.c.l.bf16 %v442
        %v773 = vunpack.c.l.bf16 %v443
        %v774 = vmax.f32 %v772, %v773
        %v775 = vrot.slane %v774, 4
        %v776 = vmax.f32 %v774, %v775
        %v777 = vrot.slane %v776, 2
        %v778 = vmax.f32 %v776, %v777
        %v779 = vrot.slane %v778, 1
        %v780 = vmax.f32 %v778, %v779
        %v781 = vld [vmem:[#allocation2 + $0x10] sm:$0xf]
        %v782 = vld [vmem:[#allocation2 + $0x14] sm:$0xf]
        %v783 = vld [vmem:[#allocation2 + $0x18] sm:$0xf]
        %v784 = vld [vmem:[#allocation2 + $0x1c] sm:$0xf]
        %v785 = vld [vmem:[#allocation2 + $0x20] sm:$0xf]
        %v786 = vld [vmem:[#allocation2 + $0x24] sm:$0xf]
        %v787 = vld [vmem:[%s6] sm:$0xff]
        %v788 = vld [vmem:[%s6 + $0x8] sm:$0xff]
        %v789 = vld [vmem:[%s6 + $0x10] sm:$0xff]
        %v790 = vld [vmem:[%s6 + $0x18] sm:$0xff]
        %v791 = vld [vmem:[%s6 + $0x20] sm:$0xff]
        %v792 = vld [vmem:[%s6 + $0x28] sm:$0xff]
        %794 = vset.pattern.permute.xlu0 2
        %795 = vperm.xlu0 %794, %v787
        %v796 = vpop.permute.xlu0 %795
        %799 = vset.pattern.permute.xlu0 2
        %800 = vperm.xlu0 %799, %v788
        %v801 = vpop.permute.xlu0 %800
        %804 = vset.pattern.permute.xlu0 2
        %805 = vperm.xlu0 %804, %v789
        %v806 = vpop.permute.xlu0 %805
        %809 = vset.pattern.permute.xlu0 2
        %810 = vperm.xlu0 %809, %v790
        %v811 = vpop.permute.xlu0 %810
        %814 = vset.pattern.permute.xlu0 2
        %815 = vperm.xlu0 %814, %v791
        %v816 = vpop.permute.xlu0 %815
        %819 = vset.pattern.permute.xlu0 2
        %820 = vperm.xlu0 %819, %v792
        %v821 = vpop.permute.xlu0 %820
        %v829 = vunpack.c.l.b16 %v781
        %v830 = vunpack.c.l.b16 %v782
        %v831 = vunpack.c.l.b16 %v783
        %v832 = vunpack.c.l.b16 %v784
        %v833 = vunpack.c.l.b16 %v785
        %v834 = vunpack.c.l.b16 %v786
        %v835 = vpack.c.b16 %v830, %v829
        %v836 = vpack.c.b16 %v832, %v831
        %v837 = vpack.c.b16 %v834, %v833
        %v840 = vunpack.c.l.b16 %v442
        %v841 = vunpack.c.l.b16 %v443
        %v842 = vpack.c.b16 %v841, %v840
        %v845 = vsel %vm553, %v835, 0
        %v848 = vsel %vm553, %v836, 0
        %v851 = vsel %vm553, %v837, 0
        %853 = vmatpush.bf16.msra.mxu0 0
        %854 = vmatpush.bf16.msra.mxu0 0
        %855 = vmatpush.bf16.msra.mxu0 0
        %856 = vmatpush.bf16.msra.mxu0 0
        %857 = vmatpush.bf16.msra.mxu0 0
        %858 = vmatpush.bf16.msra.mxu0 0
        %859 = vmatpush.bf16.msra.mxu0 0
        %860 = vmatpush.bf16.msra.mxu0 %v842
        %861 = vmatmul.bf16.gmra.mxu0 %v845
        %v862 = vpop.f32.mrf.mxu0
        %v863 = vadd.f32 %v796, %v862
        %v864 = vpop.f32.mrf.mxu0
        %v865 = vadd.f32 %v801, %v864
        %866 = vmatmul.bf16.gmra.mxu0 %v848
        %v867 = vpop.f32.mrf.mxu0
        %v868 = vadd.f32 %v806, %v867
        %v869 = vpop.f32.mrf.mxu0
        %v870 = vadd.f32 %v811, %v869
        %871 = vmatmul.bf16.gmra.mxu0 %v851
        %v872 = vpop.f32.mrf.mxu0
        %v873 = vadd.f32 %v816, %v872
        %v874 = vpop.f32.mrf.mxu0
        %v875 = vadd.f32 %v821, %v874
        %876 = vdwg.mxu0
        %vm877 = vcmp.gt.f32.partialorder %v863, 0.0
        %vm878 = vcmp.gt.f32.partialorder %v865, 0.0
        %vm879 = vcmp.gt.f32.partialorder %v868, 0.0
        %vm880 = vcmp.gt.f32.partialorder %v870, 0.0
        %vm881 = vcmp.gt.f32.partialorder %v873, 0.0
        %vm882 = vcmp.gt.f32.partialorder %v875, 0.0
        %v883 = vmul.f32 %v863, 0.01
        %v884 = vmul.f32 %v865, 0.01
        %v885 = vmul.f32 %v868, 0.01
        %v886 = vmul.f32 %v870, 0.01
        %v887 = vmul.f32 %v873, 0.01
        %v888 = vmul.f32 %v875, 0.01
        %v889 = vsel %vm877, %v863, %v883
        %v890 = vsel %vm878, %v865, %v884
        %v891 = vsel %vm879, %v868, %v885
        %v892 = vsel %vm880, %v870, %v886
        %v893 = vsel %vm881, %v873, %v887
        %v894 = vsel %vm882, %v875, %v888
        %v895 = vpack.c.bf16 %v889, %v889
        %v896 = vpack.c.bf16 %v890, %v890
        %v897 = vpack.c.bf16 %v891, %v891
        %v898 = vpack.c.bf16 %v892, %v892
        %v899 = vpack.c.bf16 %v893, %v893
        %v900 = vpack.c.bf16 %v894, %v894
        %v901 = vld [vmem:[#allocation2 + $0x28] sm:$0x3]
        %v902 = vld [vmem:[%s6] sm:$0x7]
        %904 = vset.pattern.permute.xlu0 3
        %905 = vperm.xlu0 %904, %v902
        %v906 = vpop.permute.xlu0 %905
        %v910 = vunpack.c.l.b16 %v895
        %v911 = vunpack.c.l.b16 %v896
        %v912 = vpack.c.b16 %v911, %v910
        %v915 = vsel %vm553, %v901, 0
        %917 = vmatpush.bf16.msra.mxu0 0
        %918 = vmatpush.bf16.msra.mxu0 0
        %919 = vmatpush.bf16.msra.mxu0 0
        %920 = vmatpush.bf16.msra.mxu0 0
        %921 = vmatpush.bf16.msra.mxu0 0
        %922 = vmatpush.bf16.msra.mxu0 0
        %923 = vmatpush.bf16.msra.mxu0 0
        %924 = vmatpush.bf16.msra.mxu0 %v912
        %925 = vmatmul.bf16.gmra.mxu0 %v915
        %v926 = vpop.f32.mrf.mxu0
        %v927 = vadd.f32 %v906, %v926
        %v928 = vpop.f32.mrf.mxu0
        %929 = vdwg.mxu0
        %v930 = vadd.f32 %v927, %v780
        %v931 = vld [vmem:[#allocation2 + $0x30] sm:$0x3]
        %932 = vset.pattern.permute.xlu0 4
        %933 = vperm.xlu0 %932, %v902
        %v934 = vpop.permute.xlu0 %933
        %v938 = vunpack.c.l.b16 %v897
        %v939 = vunpack.c.l.b16 %v898
        %v940 = vpack.c.b16 %v939, %v938
        %v943 = vsel %vm553, %v931, 0
        %945 = vmatpush.bf16.msra.mxu0 0
        %946 = vmatpush.bf16.msra.mxu0 0
        %947 = vmatpush.bf16.msra.mxu0 0
        %948 = vmatpush.bf16.msra.mxu0 0
        %949 = vmatpush.bf16.msra.mxu0 0
        %950 = vmatpush.bf16.msra.mxu0 0
        %951 = vmatpush.bf16.msra.mxu0 0
        %952 = vmatpush.bf16.msra.mxu0 %v940
        %953 = vmatmul.bf16.gmra.mxu0 %v943
        %v954 = vpop.f32.mrf.mxu0
        %v955 = vadd.f32 %v934, %v954
        %v956 = vpop.f32.mrf.mxu0
        %957 = vdwg.mxu0
        %v958 = vadd.f32 %v955, %v780
        %v959 = vld [vmem:[#allocation2 + $0x38] sm:$0xf]
        %v960 = vld [vmem:[%s6] sm:$0x7f]
        %962 = vset.pattern.permute.xlu0 5
        %963 = vperm.xlu0 %962, %v960
        %v964 = vpop.permute.xlu0 %963
        %v968 = vunpack.c.l.b16 %v899
        %v969 = vunpack.c.l.b16 %v900
        %v970 = vpack.c.b16 %v969, %v968
        %v973 = vsel %vm553, %v959, 0
        %975 = vmatpush.bf16.msra.mxu0 0
        %976 = vmatpush.bf16.msra.mxu0 0
        %977 = vmatpush.bf16.msra.mxu0 0
        %978 = vmatpush.bf16.msra.mxu0 0
        %979 = vmatpush.bf16.msra.mxu0 0
        %980 = vmatpush.bf16.msra.mxu0 0
        %981 = vmatpush.bf16.msra.mxu0 0
        %982 = vmatpush.bf16.msra.mxu0 %v970
        %983 = vmatmul.bf16.gmra.mxu0 %v973
        %v984 = vpop.f32.mrf.mxu0
        %v985 = vadd.f32 %v964, %v984
        %v986 = vpop.f32.mrf.mxu0
        %987 = vdwg.mxu0
        %v988 = vadd.f32 %v985, %v780
        %v989 = vpack.c.bf16 %v930, %v930
        %v990 = vld [vmem:[#allocation2 + $0x3a0] sm:$0xf]
        %v991 = vld [vmem:[#allocation2 + $0x3a4] sm:$0xf]
        %v992 = vld [vmem:[#allocation2 + $0x3a8] sm:$0xf]
        %v993 = vld [vmem:[#allocation2 + $0x3ac] sm:$0xf]
        %v994 = vld [vmem:[#allocation2 + $0x3b0] sm:$0xf]
        %v995 = vld [vmem:[#allocation2 + $0x3b4] sm:$0xf]
        %v996 = vld [vmem:[#allocation2 + $0x3b8] sm:$0xf]
        %v997 = vld [vmem:[#allocation2 + $0x3bc] sm:$0xf]
        %v998 = vld [vmem:[#allocation2 + $0x3c0] sm:$0xf]
        %v999 = vld [vmem:[#allocation2 + $0x3c4] sm:$0xf]
        %v1000 = vld [vmem:[#allocation2 + $0x3c8] sm:$0xf]
        %v1001 = vld [vmem:[#allocation2 + $0x3cc] sm:$0xf]
        %v1002 = vld [vmem:[#allocation2 + $0x3d0] sm:$0xf]
        %v1003 = vld [vmem:[#allocation2 + $0x3d4] sm:$0xf]
        %v1004 = vld [vmem:[#allocation2 + $0x3d8] sm:$0xf]
        %v1005 = vld [vmem:[#allocation2 + $0x3dc] sm:$0xf]
        %v1006 = vld [vmem:[%s7 + $0x10] sm:$0x1]
        %v1007 = vperm.slane %v1006, 0
        %v1024 = vunpack.c.l.b16 %v990
        %v1025 = vunpack.c.l.b16 %v991
        %v1026 = vunpack.c.l.b16 %v992
        %v1027 = vunpack.c.l.b16 %v993
        %v1028 = vunpack.c.l.b16 %v994
        %v1029 = vunpack.c.l.b16 %v995
        %v1030 = vunpack.c.l.b16 %v996
        %v1031 = vunpack.c.l.b16 %v997
        %v1032 = vunpack.c.l.b16 %v998
        %v1033 = vunpack.c.l.b16 %v999
        %v1034 = vunpack.c.l.b16 %v1000
        %v1035 = vunpack.c.l.b16 %v1001
        %v1036 = vunpack.c.l.b16 %v1002
        %v1037 = vunpack.c.l.b16 %v1003
        %v1038 = vunpack.c.l.b16 %v1004
        %v1039 = vunpack.c.l.b16 %v1005
        %v1040 = vpack.c.b16 %v1025, %v1024
        %v1041 = vpack.c.b16 %v1027, %v1026
        %v1042 = vpack.c.b16 %v1029, %v1028
        %v1043 = vpack.c.b16 %v1031, %v1030
        %v1044 = vpack.c.b16 %v1033, %v1032
        %v1045 = vpack.c.b16 %v1035, %v1034
        %v1046 = vpack.c.b16 %v1037, %v1036
        %v1047 = vpack.c.b16 %v1039, %v1038
        %1056 = vmatpush.bf16.msra.mxu0 %v1047
        %1057 = vmatpush.bf16.msra.mxu0 %v1046
        %1058 = vmatpush.bf16.msra.mxu0 %v1045
        %1059 = vmatpush.bf16.msra.mxu0 %v1044
        %1060 = vmatpush.bf16.msra.mxu0 %v1043
        %1061 = vmatpush.bf16.msra.mxu0 %v1042
        %1062 = vmatpush.bf16.msra.mxu0 %v1041
        %1063 = vmatpush.bf16.msra.mxu0 %v1040
        %1064 = vmatmul.bf16.gmra.mxu0 %v989
        %v1065 = vpop.f32.mrf.mxu0
        %v1066 = vadd.f32 %v1007, %v1065
        %v1067 = vpop.f32.mrf.mxu0
        %1068 = vdwg.mxu0
        %vm1069 = vcmp.gt.f32.partialorder %v1066, 0.0
        %v1070 = vmul.f32 %v1066, 0.01
        %v1071 = vsel %vm1069, %v1066, %v1070
        %v1072 = vpack.c.bf16 %v1071, %v1071
        %v1073 = vld [vmem:[#allocation2 + $0x3e0] sm:$0xf]
        %v1074 = vld [vmem:[#allocation2 + $0x3e4] sm:$0xf]
        %v1075 = vld [vmem:[#allocation2 + $0x3e8] sm:$0xf]
        %v1076 = vld [vmem:[#allocation2 + $0x3ec] sm:$0xf]
        %v1077 = vld [vmem:[#allocation2 + $0x3f0] sm:$0xf]
        %v1078 = vld [vmem:[#allocation2 + $0x3f4] sm:$0xf]
        %v1079 = vld [vmem:[#allocation2 + $0x3f8] sm:$0xf]
        %v1080 = vld [vmem:[#allocation2 + $0x3fc] sm:$0xf]
        %v1081 = vld [vmem:[#allocation2 + $0x400] sm:$0xf]
        %v1082 = vld [vmem:[#allocation2 + $0x404] sm:$0xf]
        %v1083 = vld [vmem:[#allocation2 + $0x408] sm:$0xf]
        %v1084 = vld [vmem:[#allocation2 + $0x40c] sm:$0xf]
        %v1085 = vld [vmem:[#allocation2 + $0x410] sm:$0xf]
        %v1086 = vld [vmem:[#allocation2 + $0x414] sm:$0xf]
        %v1087 = vld [vmem:[#allocation2 + $0x418] sm:$0xf]
        %v1088 = vld [vmem:[#allocation2 + $0x41c] sm:$0xf]
        %v1089 = vld [vmem:[%s7 + $0x18] sm:$0x1]
        %v1090 = vperm.slane %v1089, 0
        %v1107 = vunpack.c.l.b16 %v1073
        %v1108 = vunpack.c.l.b16 %v1074
        %v1109 = vunpack.c.l.b16 %v1075
        %v1110 = vunpack.c.l.b16 %v1076
        %v1111 = vunpack.c.l.b16 %v1077
        %v1112 = vunpack.c.l.b16 %v1078
        %v1113 = vunpack.c.l.b16 %v1079
        %v1114 = vunpack.c.l.b16 %v1080
        %v1115 = vunpack.c.l.b16 %v1081
        %v1116 = vunpack.c.l.b16 %v1082
        %v1117 = vunpack.c.l.b16 %v1083
        %v1118 = vunpack.c.l.b16 %v1084
        %v1119 = vunpack.c.l.b16 %v1085
        %v1120 = vunpack.c.l.b16 %v1086
        %v1121 = vunpack.c.l.b16 %v1087
        %v1122 = vunpack.c.l.b16 %v1088
        %v1123 = vpack.c.b16 %v1108, %v1107
        %v1124 = vpack.c.b16 %v1110, %v1109
        %v1125 = vpack.c.b16 %v1112, %v1111
        %v1126 = vpack.c.b16 %v1114, %v1113
        %v1127 = vpack.c.b16 %v1116, %v1115
        %v1128 = vpack.c.b16 %v1118, %v1117
        %v1129 = vpack.c.b16 %v1120, %v1119
        %v1130 = vpack.c.b16 %v1122, %v1121
        %1139 = vmatpush.bf16.msra.mxu0 %v1130
        %1140 = vmatpush.bf16.msra.mxu0 %v1129
        %1141 = vmatpush.bf16.msra.mxu0 %v1128
        %1142 = vmatpush.bf16.msra.mxu0 %v1127
        %1143 = vmatpush.bf16.msra.mxu0 %v1126
        %1144 = vmatpush.bf16.msra.mxu0 %v1125
        %1145 = vmatpush.bf16.msra.mxu0 %v1124
        %1146 = vmatpush.bf16.msra.mxu0 %v1123
        %1147 = vmatmul.bf16.gmra.mxu0 %v1072
        %v1148 = vpop.f32.mrf.mxu0
        %v1149 = vadd.f32 %v1090, %v1148
        %v1150 = vpop.f32.mrf.mxu0
        %1151 = vdwg.mxu0
        %v1152 = vpack.c.bf16 %v958, %v958
        %v1153 = vld [vmem:[#allocation2 + $0x420] sm:$0xf]
        %v1154 = vld [vmem:[#allocation2 + $0x424] sm:$0xf]
        %v1155 = vld [vmem:[#allocation2 + $0x428] sm:$0xf]
        %v1156 = vld [vmem:[#allocation2 + $0x42c] sm:$0xf]
        %v1157 = vld [vmem:[#allocation2 + $0x430] sm:$0xf]
        %v1158 = vld [vmem:[#allocation2 + $0x434] sm:$0xf]
        %v1159 = vld [vmem:[#allocation2 + $0x438] sm:$0xf]
        %v1160 = vld [vmem:[#allocation2 + $0x43c] sm:$0xf]
        %v1161 = vld [vmem:[#allocation2 + $0x440] sm:$0xf]
        %v1162 = vld [vmem:[#allocation2 + $0x444] sm:$0xf]
        %v1163 = vld [vmem:[#allocation2 + $0x448] sm:$0xf]
        %v1164 = vld [vmem:[#allocation2 + $0x44c] sm:$0xf]
        %v1165 = vld [vmem:[#allocation2 + $0x450] sm:$0xf]
        %v1166 = vld [vmem:[#allocation2 + $0x454] sm:$0xf]
        %v1167 = vld [vmem:[#allocation2 + $0x458] sm:$0xf]
        %v1168 = vld [vmem:[#allocation2 + $0x45c] sm:$0xf]
        %v1169 = vld [vmem:[%s7 + $0x20] sm:$0x1]
        %v1170 = vperm.slane %v1169, 0
        %v1187 = vunpack.c.l.b16 %v1153
        %v1188 = vunpack.c.l.b16 %v1154
        %v1189 = vunpack.c.l.b16 %v1155
        %v1190 = vunpack.c.l.b16 %v1156
        %v1191 = vunpack.c.l.b16 %v1157
        %v1192 = vunpack.c.l.b16 %v1158
        %v1193 = vunpack.c.l.b16 %v1159
        %v1194 = vunpack.c.l.b16 %v1160
        %v1195 = vunpack.c.l.b16 %v1161
        %v1196 = vunpack.c.l.b16 %v1162
        %v1197 = vunpack.c.l.b16 %v1163
        %v1198 = vunpack.c.l.b16 %v1164
        %v1199 = vunpack.c.l.b16 %v1165
        %v1200 = vunpack.c.l.b16 %v1166
        %v1201 = vunpack.c.l.b16 %v1167
        %v1202 = vunpack.c.l.b16 %v1168
        %v1203 = vpack.c.b16 %v1188, %v1187
        %v1204 = vpack.c.b16 %v1190, %v1189
        %v1205 = vpack.c.b16 %v1192, %v1191
        %v1206 = vpack.c.b16 %v1194, %v1193
        %v1207 = vpack.c.b16 %v1196, %v1195
        %v1208 = vpack.c.b16 %v1198, %v1197
        %v1209 = vpack.c.b16 %v1200, %v1199
        %v1210 = vpack.c.b16 %v1202, %v1201
        %1219 = vmatpush.bf16.msra.mxu0 %v1210
        %1220 = vmatpush.bf16.msra.mxu0 %v1209
        %1221 = vmatpush.bf16.msra.mxu0 %v1208
        %1222 = vmatpush.bf16.msra.mxu0 %v1207
        %1223 = vmatpush.bf16.msra.mxu0 %v1206
        %1224 = vmatpush.bf16.msra.mxu0 %v1205
        %1225 = vmatpush.bf16.msra.mxu0 %v1204
        %1226 = vmatpush.bf16.msra.mxu0 %v1203
        %1227 = vmatmul.bf16.gmra.mxu0 %v1152
        %v1228 = vpop.f32.mrf.mxu0
        %v1229 = vadd.f32 %v1170, %v1228
        %v1230 = vpop.f32.mrf.mxu0
        %1231 = vdwg.mxu0
        %vm1232 = vcmp.gt.f32.partialorder %v1229, 0.0
        %v1233 = vmul.f32 %v1229, 0.01
        %v1234 = vsel %vm1232, %v1229, %v1233
        %v1235 = vpack.c.bf16 %v1234, %v1234
        %v1236 = vld [vmem:[#allocation2 + $0x460] sm:$0xf]
        %v1237 = vld [vmem:[#allocation2 + $0x464] sm:$0xf]
        %v1238 = vld [vmem:[#allocation2 + $0x468] sm:$0xf]
        %v1239 = vld [vmem:[#allocation2 + $0x46c] sm:$0xf]
        %v1240 = vld [vmem:[#allocation2 + $0x470] sm:$0xf]
        %v1241 = vld [vmem:[#allocation2 + $0x474] sm:$0xf]
        %v1242 = vld [vmem:[#allocation2 + $0x478] sm:$0xf]
        %v1243 = vld [vmem:[#allocation2 + $0x47c] sm:$0xf]
        %v1244 = vld [vmem:[#allocation2 + $0x480] sm:$0xf]
        %v1245 = vld [vmem:[#allocation2 + $0x484] sm:$0xf]
        %v1246 = vld [vmem:[#allocation2 + $0x488] sm:$0xf]
        %v1247 = vld [vmem:[#allocation2 + $0x48c] sm:$0xf]
        %v1248 = vld [vmem:[#allocation2 + $0x490] sm:$0xf]
        %v1249 = vld [vmem:[#allocation2 + $0x494] sm:$0xf]
        %v1250 = vld [vmem:[#allocation2 + $0x498] sm:$0xf]
        %v1251 = vld [vmem:[#allocation2 + $0x49c] sm:$0xf]
        %v1252 = vld [vmem:[%s7 + $0x28] sm:$0x1]
        %v1253 = vperm.slane %v1252, 0
        %v1270 = vunpack.c.l.b16 %v1236
        %v1271 = vunpack.c.l.b16 %v1237
        %v1272 = vunpack.c.l.b16 %v1238
        %v1273 = vunpack.c.l.b16 %v1239
        %v1274 = vunpack.c.l.b16 %v1240
        %v1275 = vunpack.c.l.b16 %v1241
        %v1276 = vunpack.c.l.b16 %v1242
        %v1277 = vunpack.c.l.b16 %v1243
        %v1278 = vunpack.c.l.b16 %v1244
        %v1279 = vunpack.c.l.b16 %v1245
        %v1280 = vunpack.c.l.b16 %v1246
        %v1281 = vunpack.c.l.b16 %v1247
        %v1282 = vunpack.c.l.b16 %v1248
        %v1283 = vunpack.c.l.b16 %v1249
        %v1284 = vunpack.c.l.b16 %v1250
        %v1285 = vunpack.c.l.b16 %v1251
        %v1286 = vpack.c.b16 %v1271, %v1270
        %v1287 = vpack.c.b16 %v1273, %v1272
        %v1288 = vpack.c.b16 %v1275, %v1274
        %v1289 = vpack.c.b16 %v1277, %v1276
        %v1290 = vpack.c.b16 %v1279, %v1278
        %v1291 = vpack.c.b16 %v1281, %v1280
        %v1292 = vpack.c.b16 %v1283, %v1282
        %v1293 = vpack.c.b16 %v1285, %v1284
        %1302 = vmatpush.bf16.msra.mxu0 %v1293
        %1303 = vmatpush.bf16.msra.mxu0 %v1292
        %1304 = vmatpush.bf16.msra.mxu0 %v1291
        %1305 = vmatpush.bf16.msra.mxu0 %v1290
        %1306 = vmatpush.bf16.msra.mxu0 %v1289
        %1307 = vmatpush.bf16.msra.mxu0 %v1288
        %1308 = vmatpush.bf16.msra.mxu0 %v1287
        %1309 = vmatpush.bf16.msra.mxu0 %v1286
        %1310 = vmatmul.bf16.gmra.mxu0 %v1235
        %v1311 = vpop.f32.mrf.mxu0
        %v1312 = vadd.f32 %v1253, %v1311
        %v1313 = vpop.f32.mrf.mxu0
        %1314 = vdwg.mxu0
        %v1315 = vpack.c.bf16 %v988, %v988
        %v1316 = vld [vmem:[#allocation2 + $0x4a0] sm:$0xf]
        %v1317 = vld [vmem:[#allocation2 + $0x4a4] sm:$0xf]
        %v1318 = vld [vmem:[#allocation2 + $0x4a8] sm:$0xf]
        %v1319 = vld [vmem:[#allocation2 + $0x4ac] sm:$0xf]
        %v1320 = vld [vmem:[#allocation2 + $0x4b0] sm:$0xf]
        %v1321 = vld [vmem:[#allocation2 + $0x4b4] sm:$0xf]
        %v1322 = vld [vmem:[#allocation2 + $0x4b8] sm:$0xf]
        %v1323 = vld [vmem:[#allocation2 + $0x4bc] sm:$0xf]
        %v1324 = vld [vmem:[#allocation2 + $0x4c0] sm:$0xf]
        %v1325 = vld [vmem:[#allocation2 + $0x4c4] sm:$0xf]
        %v1326 = vld [vmem:[#allocation2 + $0x4c8] sm:$0xf]
        %v1327 = vld [vmem:[#allocation2 + $0x4cc] sm:$0xf]
        %v1328 = vld [vmem:[#allocation2 + $0x4d0] sm:$0xf]
        %v1329 = vld [vmem:[#allocation2 + $0x4d4] sm:$0xf]
        %v1330 = vld [vmem:[#allocation2 + $0x4d8] sm:$0xf]
        %v1331 = vld [vmem:[#allocation2 + $0x4dc] sm:$0xf]
        %v1332 = vld [vmem:[%s7 + $0x30] sm:$0x1]
        %v1333 = vperm.slane %v1332, 0
        %v1350 = vunpack.c.l.b16 %v1316
        %v1351 = vunpack.c.l.b16 %v1317
        %v1352 = vunpack.c.l.b16 %v1318
        %v1353 = vunpack.c.l.b16 %v1319
        %v1354 = vunpack.c.l.b16 %v1320
        %v1355 = vunpack.c.l.b16 %v1321
        %v1356 = vunpack.c.l.b16 %v1322
        %v1357 = vunpack.c.l.b16 %v1323
        %v1358 = vunpack.c.l.b16 %v1324
        %v1359 = vunpack.c.l.b16 %v1325
        %v1360 = vunpack.c.l.b16 %v1326
        %v1361 = vunpack.c.l.b16 %v1327
        %v1362 = vunpack.c.l.b16 %v1328
        %v1363 = vunpack.c.l.b16 %v1329
        %v1364 = vunpack.c.l.b16 %v1330
        %v1365 = vunpack.c.l.b16 %v1331
        %v1366 = vpack.c.b16 %v1351, %v1350
        %v1367 = vpack.c.b16 %v1353, %v1352
        %v1368 = vpack.c.b16 %v1355, %v1354
        %v1369 = vpack.c.b16 %v1357, %v1356
        %v1370 = vpack.c.b16 %v1359, %v1358
        %v1371 = vpack.c.b16 %v1361, %v1360
        %v1372 = vpack.c.b16 %v1363, %v1362
        %v1373 = vpack.c.b16 %v1365, %v1364
        %1382 = vmatpush.bf16.msra.mxu0 %v1373
        %1383 = vmatpush.bf16.msra.mxu0 %v1372
        %1384 = vmatpush.bf16.msra.mxu0 %v1371
        %1385 = vmatpush.bf16.msra.mxu0 %v1370
        %1386 = vmatpush.bf16.msra.mxu0 %v1369
        %1387 = vmatpush.bf16.msra.mxu0 %v1368
        %1388 = vmatpush.bf16.msra.mxu0 %v1367
        %1389 = vmatpush.bf16.msra.mxu0 %v1366
        %1390 = vmatmul.bf16.gmra.mxu0 %v1315
        %v1391 = vpop.f32.mrf.mxu0
        %v1392 = vadd.f32 %v1333, %v1391
        %v1393 = vpop.f32.mrf.mxu0
        %1394 = vdwg.mxu0
        %vm1395 = vcmp.gt.f32.partialorder %v1392, 0.0
        %v1396 = vmul.f32 %v1392, 0.01
        %v1397 = vsel %vm1395, %v1392, %v1396
        %v1398 = vpack.c.bf16 %v1397, %v1397
        %v1399 = vld [vmem:[#allocation2 + $0x4e0] sm:$0xf]
        %v1400 = vld [vmem:[#allocation2 + $0x4e4] sm:$0xf]
        %v1401 = vld [vmem:[#allocation2 + $0x4e8] sm:$0xf]
        %v1402 = vld [vmem:[#allocation2 + $0x4ec] sm:$0xf]
        %v1403 = vld [vmem:[#allocation2 + $0x4f0] sm:$0xf]
        %v1404 = vld [vmem:[#allocation2 + $0x4f4] sm:$0xf]
        %v1405 = vld [vmem:[#allocation2 + $0x4f8] sm:$0xf]
        %v1406 = vld [vmem:[#allocation2 + $0x4fc] sm:$0xf]
        %v1407 = vld [vmem:[#allocation2 + $0x500] sm:$0xf]
        %v1408 = vld [vmem:[#allocation2 + $0x504] sm:$0xf]
        %v1409 = vld [vmem:[#allocation2 + $0x508] sm:$0xf]
        %v1410 = vld [vmem:[#allocation2 + $0x50c] sm:$0xf]
        %v1411 = vld [vmem:[#allocation2 + $0x510] sm:$0xf]
        %v1412 = vld [vmem:[#allocation2 + $0x514] sm:$0xf]
        %v1413 = vld [vmem:[#allocation2 + $0x518] sm:$0xf]
        %v1414 = vld [vmem:[#allocation2 + $0x51c] sm:$0xf]
        %v1415 = vld [vmem:[%s7 + $0x38] sm:$0x1]
        %v1416 = vperm.slane %v1415, 0
        %v1433 = vunpack.c.l.b16 %v1399
        %v1434 = vunpack.c.l.b16 %v1400
        %v1435 = vunpack.c.l.b16 %v1401
        %v1436 = vunpack.c.l.b16 %v1402
        %v1437 = vunpack.c.l.b16 %v1403
        %v1438 = vunpack.c.l.b16 %v1404
        %v1439 = vunpack.c.l.b16 %v1405
        %v1440 = vunpack.c.l.b16 %v1406
        %v1441 = vunpack.c.l.b16 %v1407
        %v1442 = vunpack.c.l.b16 %v1408
        %v1443 = vunpack.c.l.b16 %v1409
        %v1444 = vunpack.c.l.b16 %v1410
        %v1445 = vunpack.c.l.b16 %v1411
        %v1446 = vunpack.c.l.b16 %v1412
        %v1447 = vunpack.c.l.b16 %v1413
        %v1448 = vunpack.c.l.b16 %v1414
        %v1449 = vpack.c.b16 %v1434, %v1433
        %v1450 = vpack.c.b16 %v1436, %v1435
        %v1451 = vpack.c.b16 %v1438, %v1437
        %v1452 = vpack.c.b16 %v1440, %v1439
        %v1453 = vpack.c.b16 %v1442, %v1441
        %v1454 = vpack.c.b16 %v1444, %v1443
        %v1455 = vpack.c.b16 %v1446, %v1445
        %v1456 = vpack.c.b16 %v1448, %v1447
        %1465 = vmatpush.bf16.msra.mxu0 %v1456
        %1466 = vmatpush.bf16.msra.mxu0 %v1455
        %1467 = vmatpush.bf16.msra.mxu0 %v1454
        %1468 = vmatpush.bf16.msra.mxu0 %v1453
        %1469 = vmatpush.bf16.msra.mxu0 %v1452
        %1470 = vmatpush.bf16.msra.mxu0 %v1451
        %1471 = vmatpush.bf16.msra.mxu0 %v1450
        %1472 = vmatpush.bf16.msra.mxu0 %v1449
        %1473 = vmatmul.bf16.gmra.mxu0 %v1398
        %v1474 = vpop.f32.mrf.mxu0
        %v1475 = vadd.f32 %v1416, %v1474
        %v1476 = vpop.f32.mrf.mxu0
        %1477 = vdwg.mxu0
        %v1478 = vld [vmem:[#allocation2 + $0x520] sm:$0xf]
        %v1479 = vld [vmem:[#allocation2 + $0x524] sm:$0xf]
        %v1480 = vld [vmem:[#allocation2 + $0x528] sm:$0xf]
        %v1481 = vld [vmem:[#allocation2 + $0x52c] sm:$0xf]
        %v1482 = vld [vmem:[#allocation2 + $0x530] sm:$0xf]
        %v1483 = vld [vmem:[#allocation2 + $0x534] sm:$0xf]
        %v1484 = vld [vmem:[#allocation2 + $0x538] sm:$0xf]
        %v1485 = vld [vmem:[#allocation2 + $0x53c] sm:$0xf]
        %v1486 = vld [vmem:[%s7 + $0x40] sm:$0x1]
        %v1487 = vperm.slane %v1486, 0
        %v1492 = vunpack.c.l.b16 %v444
        %v1493 = vunpack.c.l.b16 %v445
        %v1494 = vunpack.c.l.b16 %v446
        %v1495 = vunpack.c.l.b16 %v447
        %v1496 = vpack.c.b16 %v1493, %v1492
        %v1497 = vpack.c.b16 %v1495, %v1494
        %v1506 = vunpack.c.l.b16 %v1478
        %v1507 = vunpack.c.l.b16 %v1479
        %v1508 = vunpack.c.l.b16 %v1480
        %v1509 = vunpack.c.l.b16 %v1481
        %v1510 = vunpack.c.l.b16 %v1482
        %v1511 = vunpack.c.l.b16 %v1483
        %v1512 = vunpack.c.l.b16 %v1484
        %v1513 = vunpack.c.l.b16 %v1485
        %v1514 = vpack.c.b16 %v1507, %v1506
        %v1515 = vpack.c.b16 %v1509, %v1508
        %v1516 = vpack.c.b16 %v1511, %v1510
        %v1517 = vpack.c.b16 %v1513, %v1512
        %vm1522 = vcmask 523264
        %v1524 = vsel %vm1522, %v1496, 0
        %v1527 = vsel %vm1522, %v1497, 0
        %1529 = vmatpush.bf16.msra.mxu0 0
        %1530 = vmatpush.bf16.msra.mxu0 0
        %1531 = vmatpush.bf16.msra.mxu0 0
        %1532 = vmatpush.bf16.msra.mxu0 0
        %1533 = vmatpush.bf16.msra.mxu0 %v1517
        %1534 = vmatpush.bf16.msra.mxu0 %v1516
        %1535 = vmatpush.bf16.msra.mxu0 %v1515
        %1536 = vmatpush.bf16.msra.mxu0 %v1514
        %1537 = vmatmul.bf16.gmra.mxu0 %v1524
        %v1538 = vpop.f32.mrf.mxu0
        %v1539 = vadd.f32 %v1487, %v1538
        %v1540 = vpop.f32.mrf.mxu0
        %v1541 = vadd.f32 %v1487, %v1540
        %1542 = vmatmul.bf16.gmra.mxu0 %v1527
        %v1543 = vpop.f32.mrf.mxu0
        %v1544 = vadd.f32 %v1487, %v1543
        %v1545 = vpop.f32.mrf.mxu0
        %v1546 = vadd.f32 %v1487, %v1545
        %1547 = vdwg.mxu0
        %vm1548 = vcmp.gt.f32.partialorder %v1539, 0.0
        %vm1549 = vcmp.gt.f32.partialorder %v1541, 0.0
        %vm1550 = vcmp.gt.f32.partialorder %v1544, 0.0
        %vm1551 = vcmp.gt.f32.partialorder %v1546, 0.0
        %v1552 = vmul.f32 %v1539, 0.01
        %v1553 = vmul.f32 %v1541, 0.01
        %v1554 = vmul.f32 %v1544, 0.01
        %v1555 = vmul.f32 %v1546, 0.01
        %v1556 = vsel %vm1548, %v1539, %v1552
        %v1557 = vsel %vm1549, %v1541, %v1553
        %v1558 = vsel %vm1550, %v1544, %v1554
        %v1559 = vsel %vm1551, %v1546, %v1555
        %v1560 = vpack.c.bf16 %v1557, %v1556
        %v1561 = vpack.c.bf16 %v1559, %v1558
        %v1562 = vld [vmem:[#allocation2 + $0x40] sm:$0xf]
        %v1563 = vld [vmem:[#allocation2 + $0x44] sm:$0xf]
        %v1564 = vld [vmem:[#allocation2 + $0x48] sm:$0xf]
        %v1565 = vld [vmem:[#allocation2 + $0x4c] sm:$0xf]
        %v1566 = vld [vmem:[#allocation2 + $0x50] sm:$0xf]
        %v1567 = vld [vmem:[#allocation2 + $0x54] sm:$0xf]
        %v1568 = vld [vmem:[#allocation2 + $0x58] sm:$0xf]
        %v1569 = vld [vmem:[#allocation2 + $0x5c] sm:$0xf]
        %v1570 = vld [vmem:[%s6] sm:$0xff]
        %v1571 = vld [vmem:[%s6 + $0x8] sm:$0xff]
        %v1572 = vld [vmem:[%s6 + $0x10] sm:$0xff]
        %v1573 = vld [vmem:[%s6 + $0x18] sm:$0xff]
        %v1574 = vld [vmem:[%s6 + $0x20] sm:$0xff]
        %v1575 = vld [vmem:[%s6 + $0x28] sm:$0xff]
        %v1576 = vld [vmem:[%s6 + $0x30] sm:$0xff]
        %v1577 = vld [vmem:[%s6 + $0x38] sm:$0xff]
        %1579 = vset.pattern.permute.xlu0 6
        %1580 = vperm.xlu0 %1579, %v1570
        %v1581 = vpop.permute.xlu0 %1580
        %1584 = vset.pattern.permute.xlu0 6
        %1585 = vperm.xlu0 %1584, %v1571
        %v1586 = vpop.permute.xlu0 %1585
        %1589 = vset.pattern.permute.xlu0 6
        %1590 = vperm.xlu0 %1589, %v1572
        %v1591 = vpop.permute.xlu0 %1590
        %1594 = vset.pattern.permute.xlu0 6
        %1595 = vperm.xlu0 %1594, %v1573
        %v1596 = vpop.permute.xlu0 %1595
        %1599 = vset.pattern.permute.xlu0 6
        %1600 = vperm.xlu0 %1599, %v1574
        %v1601 = vpop.permute.xlu0 %1600
        %1604 = vset.pattern.permute.xlu0 6
        %1605 = vperm.xlu0 %1604, %v1575
        %v1606 = vpop.permute.xlu0 %1605
        %1609 = vset.pattern.permute.xlu0 6
        %1610 = vperm.xlu0 %1609, %v1576
        %v1611 = vpop.permute.xlu0 %1610
        %1614 = vset.pattern.permute.xlu0 6
        %1615 = vperm.xlu0 %1614, %v1577
        %v1616 = vpop.permute.xlu0 %1615
        %v1626 = vunpack.c.l.b16 %v1562
        %v1627 = vunpack.c.l.b16 %v1563
        %v1628 = vunpack.c.l.b16 %v1564
        %v1629 = vunpack.c.l.b16 %v1565
        %v1630 = vunpack.c.l.b16 %v1566
        %v1631 = vunpack.c.l.b16 %v1567
        %v1632 = vunpack.c.l.b16 %v1568
        %v1633 = vunpack.c.l.b16 %v1569
        %v1634 = vpack.c.b16 %v1627, %v1626
        %v1635 = vpack.c.b16 %v1629, %v1628
        %v1636 = vpack.c.b16 %v1631, %v1630
        %v1637 = vpack.c.b16 %v1633, %v1632
        %vm1638 = vcmask 261120
        %v1640 = vsel %vm1638, %v1634, 0
        %v1643 = vsel %vm1638, %v1635, 0
        %v1646 = vsel %vm1638, %v1636, 0
        %v1649 = vsel %vm1638, %v1637, 0
        %1651 = vmatpush.bf16.msra.mxu0 0
        %1652 = vmatpush.bf16.msra.mxu0 0
        %1653 = vmatpush.bf16.msra.mxu0 0
        %1654 = vmatpush.bf16.msra.mxu0 0
        %1655 = vmatpush.bf16.msra.mxu0 0
        %1656 = vmatpush.bf16.msra.mxu0 0
        %1657 = vmatpush.bf16.msra.mxu0 %v1561
        %1658 = vmatpush.bf16.msra.mxu0 %v1560
        %1659 = vmatmul.bf16.gmra.mxu0 %v1640
        %v1660 = vpop.f32.mrf.mxu0
        %v1661 = vadd.f32 %v1581, %v1660
        %v1662 = vpop.f32.mrf.mxu0
        %v1663 = vadd.f32 %v1586, %v1662
        %1664 = vmatmul.bf16.gmra.mxu0 %v1643
        %v1665 = vpop.f32.mrf.mxu0
        %v1666 = vadd.f32 %v1591, %v1665
        %v1667 = vpop.f32.mrf.mxu0
        %v1668 = vadd.f32 %v1596, %v1667
        %1669 = vmatmul.bf16.gmra.mxu0 %v1646
        %v1670 = vpop.f32.mrf.mxu0
        %v1671 = vadd.f32 %v1601, %v1670
        %v1672 = vpop.f32.mrf.mxu0
        %v1673 = vadd.f32 %v1606, %v1672
        %1674 = vmatmul.bf16.gmra.mxu0 %v1649
        %v1675 = vpop.f32.mrf.mxu0
        %v1676 = vadd.f32 %v1611, %v1675
        %v1677 = vpop.f32.mrf.mxu0
        %v1678 = vadd.f32 %v1616, %v1677
        %1679 = vdwg.mxu0
        %vm1680 = vcmp.gt.f32.partialorder %v1661, 0.0
        %vm1681 = vcmp.gt.f32.partialorder %v1663, 0.0
        %vm1682 = vcmp.gt.f32.partialorder %v1666, 0.0
        %vm1683 = vcmp.gt.f32.partialorder %v1668, 0.0
        %vm1684 = vcmp.gt.f32.partialorder %v1671, 0.0
        %vm1685 = vcmp.gt.f32.partialorder %v1673, 0.0
        %vm1686 = vcmp.gt.f32.partialorder %v1676, 0.0
        %vm1687 = vcmp.gt.f32.partialorder %v1678, 0.0
        %v1688 = vmul.f32 %v1661, 0.01
        %v1689 = vmul.f32 %v1663, 0.01
        %v1690 = vmul.f32 %v1666, 0.01
        %v1691 = vmul.f32 %v1668, 0.01
        %v1692 = vmul.f32 %v1671, 0.01
        %v1693 = vmul.f32 %v1673, 0.01
        %v1694 = vmul.f32 %v1676, 0.01
        %v1695 = vmul.f32 %v1678, 0.01
        %v1696 = vsel %vm1680, %v1661, %v1688
        %v1697 = vsel %vm1681, %v1663, %v1689
        %v1698 = vsel %vm1682, %v1666, %v1690
        %v1699 = vsel %vm1683, %v1668, %v1691
        %v1700 = vsel %vm1684, %v1671, %v1692
        %v1701 = vsel %vm1685, %v1673, %v1693
        %v1702 = vsel %vm1686, %v1676, %v1694
        %v1703 = vsel %vm1687, %v1678, %v1695
        %v1704 = vpack.c.bf16 %v1697, %v1696
        %v1705 = vpack.c.bf16 %v1699, %v1698
        %v1706 = vpack.c.bf16 %v1701, %v1700
        %v1707 = vpack.c.bf16 %v1703, %v1702
        %v1708 = vld [vmem:[#allocation2 + $0x60] sm:$0xf]
        %v1709 = vld [vmem:[#allocation2 + $0x64] sm:$0xf]
        %v1710 = vld [vmem:[#allocation2 + $0x68] sm:$0xf]
        %v1711 = vld [vmem:[#allocation2 + $0x6c] sm:$0xf]
        %v1712 = vld [vmem:[#allocation2 + $0x70] sm:$0xf]
        %v1713 = vld [vmem:[#allocation2 + $0x74] sm:$0xf]
        %v1714 = vld [vmem:[#allocation2 + $0x78] sm:$0xf]
        %v1715 = vld [vmem:[#allocation2 + $0x7c] sm:$0xf]
        %v1716 = vld [vmem:[#allocation2 + $0x80] sm:$0xf]
        %v1717 = vld [vmem:[#allocation2 + $0x84] sm:$0xf]
        %v1718 = vld [vmem:[#allocation2 + $0x88] sm:$0xf]
        %v1719 = vld [vmem:[#allocation2 + $0x8c] sm:$0xf]
        %v1720 = vld [vmem:[#allocation2 + $0x90] sm:$0xf]
        %v1721 = vld [vmem:[#allocation2 + $0x94] sm:$0xf]
        %v1722 = vld [vmem:[#allocation2 + $0x98] sm:$0xf]
        %v1723 = vld [vmem:[#allocation2 + $0x9c] sm:$0xf]
        %v1724 = vld [vmem:[%s6] sm:$0xff]
        %v1725 = vld [vmem:[%s6 + $0x8] sm:$0xff]
        %v1726 = vld [vmem:[%s6 + $0x10] sm:$0xff]
        %v1727 = vld [vmem:[%s6 + $0x18] sm:$0xff]
        %v1728 = vld [vmem:[%s6 + $0x20] sm:$0xff]
        %v1729 = vld [vmem:[%s6 + $0x28] sm:$0xff]
        %v1730 = vld [vmem:[%s6 + $0x30] sm:$0xff]
        %v1731 = vld [vmem:[%s6 + $0x38] sm:$0xff]
        %v1732 = vld [vmem:[%s6 + $0x40] sm:$0xff]
        %v1733 = vld [vmem:[%s6 + $0x48] sm:$0xff]
        %v1734 = vld [vmem:[%s6 + $0x50] sm:$0xff]
        %v1735 = vld [vmem:[%s6 + $0x58] sm:$0xff]
        %v1736 = vld [vmem:[%s6 + $0x60] sm:$0xff]
        %v1737 = vld [vmem:[%s6 + $0x68] sm:$0xff]
        %v1738 = vld [vmem:[%s6 + $0x70] sm:$0xff]
        %v1739 = vld [vmem:[%s6 + $0x78] sm:$0xff]
        %1741 = vset.pattern.permute.xlu0 7
        %1742 = vperm.xlu0 %1741, %v1724
        %v1743 = vpop.permute.xlu0 %1742
        %1746 = vset.pattern.permute.xlu0 7
        %1747 = vperm.xlu0 %1746, %v1725
        %v1748 = vpop.permute.xlu0 %1747
        %1751 = vset.pattern.permute.xlu0 7
        %1752 = vperm.xlu0 %1751, %v1726
        %v1753 = vpop.permute.xlu0 %1752
        %1756 = vset.pattern.permute.xlu0 7
        %1757 = vperm.xlu0 %1756, %v1727
        %v1758 = vpop.permute.xlu0 %1757
        %1761 = vset.pattern.permute.xlu0 7
        %1762 = vperm.xlu0 %1761, %v1728
        %v1763 = vpop.permute.xlu0 %1762
        %1766 = vset.pattern.permute.xlu0 7
        %1767 = vperm.xlu0 %1766, %v1729
        %v1768 = vpop.permute.xlu0 %1767
        %1771 = vset.pattern.permute.xlu0 7
        %1772 = vperm.xlu0 %1771, %v1730
        %v1773 = vpop.permute.xlu0 %1772
        %1776 = vset.pattern.permute.xlu0 7
        %1777 = vperm.xlu0 %1776, %v1731
        %v1778 = vpop.permute.xlu0 %1777
        %1781 = vset.pattern.permute.xlu0 7
        %1782 = vperm.xlu0 %1781, %v1732
        %v1783 = vpop.permute.xlu0 %1782
        %1786 = vset.pattern.permute.xlu0 7
        %1787 = vperm.xlu0 %1786, %v1733
        %v1788 = vpop.permute.xlu0 %1787
        %1791 = vset.pattern.permute.xlu0 7
        %1792 = vperm.xlu0 %1791, %v1734
        %v1793 = vpop.permute.xlu0 %1792
        %1796 = vset.pattern.permute.xlu0 7
        %1797 = vperm.xlu0 %1796, %v1735
        %v1798 = vpop.permute.xlu0 %1797
        %1801 = vset.pattern.permute.xlu0 7
        %1802 = vperm.xlu0 %1801, %v1736
        %v1803 = vpop.permute.xlu0 %1802
        %1806 = vset.pattern.permute.xlu0 7
        %1807 = vperm.xlu0 %1806, %v1737
        %v1808 = vpop.permute.xlu0 %1807
        %1811 = vset.pattern.permute.xlu0 7
        %1812 = vperm.xlu0 %1811, %v1738
        %v1813 = vpop.permute.xlu0 %1812
        %1816 = vset.pattern.permute.xlu0 7
        %1817 = vperm.xlu0 %1816, %v1739
        %v1818 = vpop.permute.xlu0 %1817
        %v1836 = vunpack.c.l.b16 %v1708
        %v1837 = vunpack.c.l.b16 %v1709
        %v1838 = vunpack.c.l.b16 %v1710
        %v1839 = vunpack.c.l.b16 %v1711
        %v1840 = vunpack.c.l.b16 %v1712
        %v1841 = vunpack.c.l.b16 %v1713
        %v1842 = vunpack.c.l.b16 %v1714
        %v1843 = vunpack.c.l.b16 %v1715
        %v1844 = vunpack.c.l.b16 %v1716
        %v1845 = vunpack.c.l.b16 %v1717
        %v1846 = vunpack.c.l.b16 %v1718
        %v1847 = vunpack.c.l.b16 %v1719
        %v1848 = vunpack.c.l.b16 %v1720
        %v1849 = vunpack.c.l.b16 %v1721
        %v1850 = vunpack.c.l.b16 %v1722
        %v1851 = vunpack.c.l.b16 %v1723
        %v1852 = vpack.c.b16 %v1837, %v1836
        %v1853 = vpack.c.b16 %v1839, %v1838
        %v1854 = vpack.c.b16 %v1841, %v1840
        %v1855 = vpack.c.b16 %v1843, %v1842
        %v1856 = vpack.c.b16 %v1845, %v1844
        %v1857 = vpack.c.b16 %v1847, %v1846
        %v1858 = vpack.c.b16 %v1849, %v1848
        %v1859 = vpack.c.b16 %v1851, %v1850
        %v1861 = vsel %vm1522, %v1852, 0
        %v1864 = vsel %vm1522, %v1853, 0
        %v1867 = vsel %vm1522, %v1854, 0
        %v1870 = vsel %vm1522, %v1855, 0
        %v1873 = vsel %vm1522, %v1856, 0
        %v1876 = vsel %vm1522, %v1857, 0
        %v1879 = vsel %vm1522, %v1858, 0
        %v1882 = vsel %vm1522, %v1859, 0
        %1884 = vmatpush.bf16.msra.mxu0 0
        %1885 = vmatpush.bf16.msra.mxu0 0
        %1886 = vmatpush.bf16.msra.mxu0 0
        %1887 = vmatpush.bf16.msra.mxu0 0
        %1888 = vmatpush.bf16.msra.mxu0 %v1707
        %1889 = vmatpush.bf16.msra.mxu0 %v1706
        %1890 = vmatpush.bf16.msra.mxu0 %v1705
        %1891 = vmatpush.bf16.msra.mxu0 %v1704
        %1892 = vmatmul.bf16.gmra.mxu0 %v1861
        %v1893 = vpop.f32.mrf.mxu0
        %v1894 = vadd.f32 %v1743, %v1893
        %v1895 = vpop.f32.mrf.mxu0
        %v1896 = vadd.f32 %v1748, %v1895
        %1897 = vmatmul.bf16.gmra.mxu0 %v1864
        %v1898 = vpop.f32.mrf.mxu0
        %v1899 = vadd.f32 %v1753, %v1898
        %v1900 = vpop.f32.mrf.mxu0
        %v1901 = vadd.f32 %v1758, %v1900
        %1902 = vmatmul.bf16.gmra.mxu0 %v1867
        %v1903 = vpop.f32.mrf.mxu0
        %v1904 = vadd.f32 %v1763, %v1903
        %v1905 = vpop.f32.mrf.mxu0
        %v1906 = vadd.f32 %v1768, %v1905
        %1907 = vmatmul.bf16.gmra.mxu0 %v1870
        %v1908 = vpop.f32.mrf.mxu0
        %v1909 = vadd.f32 %v1773, %v1908
        %v1910 = vpop.f32.mrf.mxu0
        %v1911 = vadd.f32 %v1778, %v1910
        %1912 = vmatmul.bf16.gmra.mxu0 %v1873
        %v1913 = vpop.f32.mrf.mxu0
        %v1914 = vadd.f32 %v1783, %v1913
        %v1915 = vpop.f32.mrf.mxu0
        %v1916 = vadd.f32 %v1788, %v1915
        %1917 = vmatmul.bf16.gmra.mxu0 %v1876
        %v1918 = vpop.f32.mrf.mxu0
        %v1919 = vadd.f32 %v1793, %v1918
        %v1920 = vpop.f32.mrf.mxu0
        %v1921 = vadd.f32 %v1798, %v1920
        %1922 = vmatmul.bf16.gmra.mxu0 %v1879
        %v1923 = vpop.f32.mrf.mxu0
        %v1924 = vadd.f32 %v1803, %v1923
        %v1925 = vpop.f32.mrf.mxu0
        %v1926 = vadd.f32 %v1808, %v1925
        %1927 = vmatmul.bf16.gmra.mxu0 %v1882
        %v1928 = vpop.f32.mrf.mxu0
        %v1929 = vadd.f32 %v1813, %v1928
        %v1930 = vpop.f32.mrf.mxu0
        %v1931 = vadd.f32 %v1818, %v1930
        %1932 = vdwg.mxu0
        %vm1933 = vcmp.gt.f32.partialorder %v1894, 0.0
        %vm1934 = vcmp.gt.f32.partialorder %v1896, 0.0
        %vm1935 = vcmp.gt.f32.partialorder %v1899, 0.0
        %vm1936 = vcmp.gt.f32.partialorder %v1901, 0.0
        %vm1937 = vcmp.gt.f32.partialorder %v1904, 0.0
        %vm1938 = vcmp.gt.f32.partialorder %v1906, 0.0
        %vm1939 = vcmp.gt.f32.partialorder %v1909, 0.0
        %vm1940 = vcmp.gt.f32.partialorder %v1911, 0.0
        %vm1941 = vcmp.gt.f32.partialorder %v1914, 0.0
        %vm1942 = vcmp.gt.f32.partialorder %v1916, 0.0
        %vm1943 = vcmp.gt.f32.partialorder %v1919, 0.0
        %vm1944 = vcmp.gt.f32.partialorder %v1921, 0.0
        %vm1945 = vcmp.gt.f32.partialorder %v1924, 0.0
        %vm1946 = vcmp.gt.f32.partialorder %v1926, 0.0
        %vm1947 = vcmp.gt.f32.partialorder %v1929, 0.0
        %vm1948 = vcmp.gt.f32.partialorder %v1931, 0.0
        %v1949 = vmul.f32 %v1894, 0.01
        %v1950 = vmul.f32 %v1896, 0.01
        %v1951 = vmul.f32 %v1899, 0.01
        %v1952 = vmul.f32 %v1901, 0.01
        %v1953 = vmul.f32 %v1904, 0.01
        %v1954 = vmul.f32 %v1906, 0.01
        %v1955 = vmul.f32 %v1909, 0.01
        %v1956 = vmul.f32 %v1911, 0.01
        %v1957 = vmul.f32 %v1914, 0.01
        %v1958 = vmul.f32 %v1916, 0.01
        %v1959 = vmul.f32 %v1919, 0.01
        %v1960 = vmul.f32 %v1921, 0.01
        %v1961 = vmul.f32 %v1924, 0.01
        %v1962 = vmul.f32 %v1926, 0.01
        %v1963 = vmul.f32 %v1929, 0.01
        %v1964 = vmul.f32 %v1931, 0.01
        %v1965 = vsel %vm1933, %v1894, %v1949
        %v1966 = vsel %vm1934, %v1896, %v1950
        %v1967 = vsel %vm1935, %v1899, %v1951
        %v1968 = vsel %vm1936, %v1901, %v1952
        %v1969 = vsel %vm1937, %v1904, %v1953
        %v1970 = vsel %vm1938, %v1906, %v1954
        %v1971 = vsel %vm1939, %v1909, %v1955
        %v1972 = vsel %vm1940, %v1911, %v1956
        %v1973 = vsel %vm1941, %v1914, %v1957
        %v1974 = vsel %vm1942, %v1916, %v1958
        %v1975 = vsel %vm1943, %v1919, %v1959
        %v1976 = vsel %vm1944, %v1921, %v1960
        %v1977 = vsel %vm1945, %v1924, %v1961
        %v1978 = vsel %vm1946, %v1926, %v1962
        %v1979 = vsel %vm1947, %v1929, %v1963
        %v1980 = vsel %vm1948, %v1931, %v1964
        %v1981 = vld [vmem:[#allocation2 + $0x540] sm:$0xf]
        %v1982 = vld [vmem:[#allocation2 + $0x544] sm:$0xf]
        %v1983 = vld [vmem:[#allocation2 + $0x548] sm:$0xf]
        %v1984 = vld [vmem:[#allocation2 + $0x54c] sm:$0xf]
        %v1985 = vld [vmem:[%s7 + $0x48] sm:$0x1]
        %v1986 = vperm.slane %v1985, 0
        %v2003 = vunpack.c.l.b16 %v448
        %v2004 = vunpack.c.l.b16 %v449
        %v2005 = vunpack.c.l.b16 %v450
        %v2006 = vunpack.c.l.b16 %v451
        %v2007 = vunpack.c.l.b16 %v452
        %v2008 = vunpack.c.l.b16 %v453
        %v2009 = vunpack.c.l.b16 %v454
        %v2010 = vunpack.c.l.b16 %v455
        %v2011 = vunpack.c.l.b16 %v456
        %v2012 = vunpack.c.l.b16 %v457
        %v2013 = vunpack.c.l.b16 %v458
        %v2014 = vunpack.c.l.b16 %v459
        %v2015 = vunpack.c.l.b16 %v460
        %v2016 = vunpack.c.l.b16 %v461
        %v2017 = vunpack.c.l.b16 %v462
        %v2018 = vunpack.c.l.b16 %v463
        %v2019 = vpack.c.b16 %v2004, %v2003
        %v2020 = vpack.c.b16 %v2006, %v2005
        %v2021 = vpack.c.b16 %v2008, %v2007
        %v2022 = vpack.c.b16 %v2010, %v2009
        %v2023 = vpack.c.b16 %v2012, %v2011
        %v2024 = vpack.c.b16 %v2014, %v2013
        %v2025 = vpack.c.b16 %v2016, %v2015
        %v2026 = vpack.c.b16 %v2018, %v2017
        %v2031 = vunpack.c.l.b16 %v1981
        %v2032 = vunpack.c.l.b16 %v1982
        %v2033 = vunpack.c.l.b16 %v1983
        %v2034 = vunpack.c.l.b16 %v1984
        %v2035 = vpack.c.b16 %v2032, %v2031
        %v2036 = vpack.c.b16 %v2034, %v2033
        %v2040 = vsel %vm1638, %v2019, 0
        %v2043 = vsel %vm1638, %v2020, 0
        %v2046 = vsel %vm1638, %v2021, 0
        %v2049 = vsel %vm1638, %v2022, 0
        %v2052 = vsel %vm1638, %v2023, 0
        %v2055 = vsel %vm1638, %v2024, 0
        %v2058 = vsel %vm1638, %v2025, 0
        %v2061 = vsel %vm1638, %v2026, 0
        %2063 = vmatpush.bf16.msra.mxu0 0
        %2064 = vmatpush.bf16.msra.mxu0 0
        %2065 = vmatpush.bf16.msra.mxu0 0
        %2066 = vmatpush.bf16.msra.mxu0 0
        %2067 = vmatpush.bf16.msra.mxu0 0
        %2068 = vmatpush.bf16.msra.mxu0 0
        %2069 = vmatpush.bf16.msra.mxu0 %v2036
        %2070 = vmatpush.bf16.msra.mxu0 %v2035
        %2071 = vmatmul.bf16.gmra.mxu0 %v2040
        %v2072 = vpop.f32.mrf.mxu0
        %v2073 = vadd.f32 %v1986, %v2072
        %v2074 = vpop.f32.mrf.mxu0
        %v2075 = vadd.f32 %v1986, %v2074
        %2076 = vmatmul.bf16.gmra.mxu0 %v2043
        %v2077 = vpop.f32.mrf.mxu0
        %v2078 = vadd.f32 %v1986, %v2077
        %v2079 = vpop.f32.mrf.mxu0
        %v2080 = vadd.f32 %v1986, %v2079
        %2081 = vmatmul.bf16.gmra.mxu0 %v2046
        %v2082 = vpop.f32.mrf.mxu0
        %v2083 = vadd.f32 %v1986, %v2082
        %v2084 = vpop.f32.mrf.mxu0
        %v2085 = vadd.f32 %v1986, %v2084
        %2086 = vmatmul.bf16.gmra.mxu0 %v2049
        %v2087 = vpop.f32.mrf.mxu0
        %v2088 = vadd.f32 %v1986, %v2087
        %v2089 = vpop.f32.mrf.mxu0
        %v2090 = vadd.f32 %v1986, %v2089
        %2091 = vmatmul.bf16.gmra.mxu0 %v2052
        %v2092 = vpop.f32.mrf.mxu0
        %v2093 = vadd.f32 %v1986, %v2092
        %v2094 = vpop.f32.mrf.mxu0
        %v2095 = vadd.f32 %v1986, %v2094
        %2096 = vmatmul.bf16.gmra.mxu0 %v2055
        %v2097 = vpop.f32.mrf.mxu0
        %v2098 = vadd.f32 %v1986, %v2097
        %v2099 = vpop.f32.mrf.mxu0
        %v2100 = vadd.f32 %v1986, %v2099
        %2101 = vmatmul.bf16.gmra.mxu0 %v2058
        %v2102 = vpop.f32.mrf.mxu0
        %v2103 = vadd.f32 %v1986, %v2102
        %v2104 = vpop.f32.mrf.mxu0
        %v2105 = vadd.f32 %v1986, %v2104
        %2106 = vmatmul.bf16.gmra.mxu0 %v2061
        %v2107 = vpop.f32.mrf.mxu0
        %v2108 = vadd.f32 %v1986, %v2107
        %v2109 = vpop.f32.mrf.mxu0
        %v2110 = vadd.f32 %v1986, %v2109
        %2111 = vdwg.mxu0
        %vm2112 = vcmp.gt.f32.partialorder %v2073, 0.0
        %vm2113 = vcmp.gt.f32.partialorder %v2075, 0.0
        %vm2114 = vcmp.gt.f32.partialorder %v2078, 0.0
        %vm2115 = vcmp.gt.f32.partialorder %v2080, 0.0
        %vm2116 = vcmp.gt.f32.partialorder %v2083, 0.0
        %vm2117 = vcmp.gt.f32.partialorder %v2085, 0.0
        %vm2118 = vcmp.gt.f32.partialorder %v2088, 0.0
        %vm2119 = vcmp.gt.f32.partialorder %v2090, 0.0
        %vm2120 = vcmp.gt.f32.partialorder %v2093, 0.0
        %vm2121 = vcmp.gt.f32.partialorder %v2095, 0.0
        %vm2122 = vcmp.gt.f32.partialorder %v2098, 0.0
        %vm2123 = vcmp.gt.f32.partialorder %v2100, 0.0
        %vm2124 = vcmp.gt.f32.partialorder %v2103, 0.0
        %vm2125 = vcmp.gt.f32.partialorder %v2105, 0.0
        %vm2126 = vcmp.gt.f32.partialorder %v2108, 0.0
        %vm2127 = vcmp.gt.f32.partialorder %v2110, 0.0
        %v2128 = vmul.f32 %v2073, 0.01
        %v2129 = vmul.f32 %v2075, 0.01
        %v2130 = vmul.f32 %v2078, 0.01
        %v2131 = vmul.f32 %v2080, 0.01
        %v2132 = vmul.f32 %v2083, 0.01
        %v2133 = vmul.f32 %v2085, 0.01
        %v2134 = vmul.f32 %v2088, 0.01
        %v2135 = vmul.f32 %v2090, 0.01
        %v2136 = vmul.f32 %v2093, 0.01
        %v2137 = vmul.f32 %v2095, 0.01
        %v2138 = vmul.f32 %v2098, 0.01
        %v2139 = vmul.f32 %v2100, 0.01
        %v2140 = vmul.f32 %v2103, 0.01
        %v2141 = vmul.f32 %v2105, 0.01
        %v2142 = vmul.f32 %v2108, 0.01
        %v2143 = vmul.f32 %v2110, 0.01
        %v2144 = vsel %vm2112, %v2073, %v2128
        %v2145 = vsel %vm2113, %v2075, %v2129
        %v2146 = vsel %vm2114, %v2078, %v2130
        %v2147 = vsel %vm2115, %v2080, %v2131
        %v2148 = vsel %vm2116, %v2083, %v2132
        %v2149 = vsel %vm2117, %v2085, %v2133
        %v2150 = vsel %vm2118, %v2088, %v2134
        %v2151 = vsel %vm2119, %v2090, %v2135
        %v2152 = vsel %vm2120, %v2093, %v2136
        %v2153 = vsel %vm2121, %v2095, %v2137
        %v2154 = vsel %vm2122, %v2098, %v2138
        %v2155 = vsel %vm2123, %v2100, %v2139
        %v2156 = vsel %vm2124, %v2103, %v2140
        %v2157 = vsel %vm2125, %v2105, %v2141
        %v2158 = vsel %vm2126, %v2108, %v2142
        %v2159 = vsel %vm2127, %v2110, %v2143
        %v2160 = vadd.f32 %v2144, %v1965
        %v2161 = vadd.f32 %v2145, %v1966
        %v2162 = vadd.f32 %v2146, %v1967
        %v2163 = vadd.f32 %v2147, %v1968
        %v2164 = vadd.f32 %v2148, %v1969
        %v2165 = vadd.f32 %v2149, %v1970
        %v2166 = vadd.f32 %v2150, %v1971
        %v2167 = vadd.f32 %v2151, %v1972
        %v2168 = vadd.f32 %v2152, %v1973
        %v2169 = vadd.f32 %v2153, %v1974
        %v2170 = vadd.f32 %v2154, %v1975
        %v2171 = vadd.f32 %v2155, %v1976
        %v2172 = vadd.f32 %v2156, %v1977
        %v2173 = vadd.f32 %v2157, %v1978
        %v2174 = vadd.f32 %v2158, %v1979
        %v2175 = vadd.f32 %v2159, %v1980
        %v2176 = vpack.c.bf16 %v2161, %v2160
        %v2177 = vpack.c.bf16 %v2163, %v2162
        %v2178 = vpack.c.bf16 %v2165, %v2164
        %v2179 = vpack.c.bf16 %v2167, %v2166
        %v2180 = vpack.c.bf16 %v2169, %v2168
        %v2181 = vpack.c.bf16 %v2171, %v2170
        %v2182 = vpack.c.bf16 %v2173, %v2172
        %v2183 = vpack.c.bf16 %v2175, %v2174
        %v2184 = vld [vmem:[#allocation2 + $0x550] sm:$0xf]
        %v2185 = vld [vmem:[#allocation2 + $0x554] sm:$0xf]
        %v2186 = vld [vmem:[%s7 + $0x50] sm:$0x1]
        %v2187 = vperm.slane %v2186, 0
        %v2252 = vunpack.c.l.b16 %v464
        %v2253 = vunpack.c.l.b16 %v465
        %v2254 = vunpack.c.l.b16 %v466
        %v2255 = vunpack.c.l.b16 %v467
        %v2256 = vunpack.c.l.b16 %v468
        %v2257 = vunpack.c.l.b16 %v469
        %v2258 = vunpack.c.l.b16 %v470
        %v2259 = vunpack.c.l.b16 %v471
        %v2260 = vunpack.c.l.b16 %v472
        %v2261 = vunpack.c.l.b16 %v473
        %v2262 = vunpack.c.l.b16 %v474
        %v2263 = vunpack.c.l.b16 %v475
        %v2264 = vunpack.c.l.b16 %v476
        %v2265 = vunpack.c.l.b16 %v477
        %v2266 = vunpack.c.l.b16 %v478
        %v2267 = vunpack.c.l.b16 %v479
        %v2268 = vunpack.c.l.b16 %v480
        %v2269 = vunpack.c.l.b16 %v481
        %v2270 = vunpack.c.l.b16 %v482
        %v2271 = vunpack.c.l.b16 %v483
        %v2272 = vunpack.c.l.b16 %v484
        %v2273 = vunpack.c.l.b16 %v485
        %v2274 = vunpack.c.l.b16 %v486
        %v2275 = vunpack.c.l.b16 %v487
        %v2276 = vunpack.c.l.b16 %v488
        %v2277 = vunpack.c.l.b16 %v489
        %v2278 = vunpack.c.l.b16 %v490
        %v2279 = vunpack.c.l.b16 %v491
        %v2280 = vunpack.c.l.b16 %v492
        %v2281 = vunpack.c.l.b16 %v493
        %v2282 = vunpack.c.l.b16 %v494
        %v2283 = vunpack.c.l.b16 %v495
        %v2284 = vunpack.c.l.b16 %v496
        %v2285 = vunpack.c.l.b16 %v497
        %v2286 = vunpack.c.l.b16 %v498
        %v2287 = vunpack.c.l.b16 %v499
        %v2288 = vunpack.c.l.b16 %v500
        %v2289 = vunpack.c.l.b16 %v501
        %v2290 = vunpack.c.l.b16 %v502
        %v2291 = vunpack.c.l.b16 %v503
        %v2292 = vunpack.c.l.b16 %v504
        %v2293 = vunpack.c.l.b16 %v505
        %v2294 = vunpack.c.l.b16 %v506
        %v2295 = vunpack.c.l.b16 %v507
        %v2296 = vunpack.c.l.b16 %v508
        %v2297 = vunpack.c.l.b16 %v509
        %v2298 = vunpack.c.l.b16 %v510
        %v2299 = vunpack.c.l.b16 %v511
        %v2300 = vunpack.c.l.b16 %v512
        %v2301 = vunpack.c.l.b16 %v513
        %v2302 = vunpack.c.l.b16 %v514
        %v2303 = vunpack.c.l.b16 %v515
        %v2304 = vunpack.c.l.b16 %v516
        %v2305 = vunpack.c.l.b16 %v517
        %v2306 = vunpack.c.l.b16 %v518
        %v2307 = vunpack.c.l.b16 %v519
        %v2308 = vunpack.c.l.b16 %v520
        %v2309 = vunpack.c.l.b16 %v521
        %v2310 = vunpack.c.l.b16 %v522
        %v2311 = vunpack.c.l.b16 %v523
        %v2312 = vunpack.c.l.b16 %v524
        %v2313 = vunpack.c.l.b16 %v525
        %v2314 = vunpack.c.l.b16 %v526
        %v2315 = vunpack.c.l.b16 %v527
        %v2316 = vpack.c.b16 %v2253, %v2252
        %v2317 = vpack.c.b16 %v2255, %v2254
        %v2318 = vpack.c.b16 %v2257, %v2256
        %v2319 = vpack.c.b16 %v2259, %v2258
        %v2320 = vpack.c.b16 %v2261, %v2260
        %v2321 = vpack.c.b16 %v2263, %v2262
        %v2322 = vpack.c.b16 %v2265, %v2264
        %v2323 = vpack.c.b16 %v2267, %v2266
        %v2324 = vpack.c.b16 %v2269, %v2268
        %v2325 = vpack.c.b16 %v2271, %v2270
        %v2326 = vpack.c.b16 %v2273, %v2272
        %v2327 = vpack.c.b16 %v2275, %v2274
        %v2328 = vpack.c.b16 %v2277, %v2276
        %v2329 = vpack.c.b16 %v2279, %v2278
        %v2330 = vpack.c.b16 %v2281, %v2280
        %v2331 = vpack.c.b16 %v2283, %v2282
        %v2332 = vpack.c.b16 %v2285, %v2284
        %v2333 = vpack.c.b16 %v2287, %v2286
        %v2334 = vpack.c.b16 %v2289, %v2288
        %v2335 = vpack.c.b16 %v2291, %v2290
        %v2336 = vpack.c.b16 %v2293, %v2292
        %v2337 = vpack.c.b16 %v2295, %v2294
        %v2338 = vpack.c.b16 %v2297, %v2296
        %v2339 = vpack.c.b16 %v2299, %v2298
        %v2340 = vpack.c.b16 %v2301, %v2300
        %v2341 = vpack.c.b16 %v2303, %v2302
        %v2342 = vpack.c.b16 %v2305, %v2304
        %v2343 = vpack.c.b16 %v2307, %v2306
        %v2344 = vpack.c.b16 %v2309, %v2308
        %v2345 = vpack.c.b16 %v2311, %v2310
        %v2346 = vpack.c.b16 %v2313, %v2312
        %v2347 = vpack.c.b16 %v2315, %v2314
        %v2350 = vunpack.c.l.b16 %v2184
        %v2351 = vunpack.c.l.b16 %v2185
        %v2352 = vpack.c.b16 %v2351, %v2350
        %v2355 = vsel %vm553, %v2316, 0
        %v2358 = vsel %vm553, %v2317, 0
        %v2361 = vsel %vm553, %v2318, 0
        %v2364 = vsel %vm553, %v2319, 0
        %v2367 = vsel %vm553, %v2320, 0
        %v2370 = vsel %vm553, %v2321, 0
        %v2373 = vsel %vm553, %v2322, 0
        %v2376 = vsel %vm553, %v2323, 0
        %v2379 = vsel %vm553, %v2324, 0
        %v2382 = vsel %vm553, %v2325, 0
        %v2385 = vsel %vm553, %v2326, 0
        %v2388 = vsel %vm553, %v2327, 0
        %v2391 = vsel %vm553, %v2328, 0
        %v2394 = vsel %vm553, %v2329, 0
        %v2397 = vsel %vm553, %v2330, 0
        %v2400 = vsel %vm553, %v2331, 0
        %v2403 = vsel %vm553, %v2332, 0
        %v2406 = vsel %vm553, %v2333, 0
        %v2409 = vsel %vm553, %v2334, 0
        %v2412 = vsel %vm553, %v2335, 0
        %v2415 = vsel %vm553, %v2336, 0
        %v2418 = vsel %vm553, %v2337, 0
        %v2421 = vsel %vm553, %v2338, 0
        %v2424 = vsel %vm553, %v2339, 0
        %v2427 = vsel %vm553, %v2340, 0
        %v2430 = vsel %vm553, %v2341, 0
        %v2433 = vsel %vm553, %v2342, 0
        %v2436 = vsel %vm553, %v2343, 0
        %v2439 = vsel %vm553, %v2344, 0
        %v2442 = vsel %vm553, %v2345, 0
        %v2445 = vsel %vm553, %v2346, 0
        %v2448 = vsel %vm553, %v2347, 0
        %2450 = vmatpush.bf16.msra.mxu0 0
        %2451 = vmatpush.bf16.msra.mxu0 0
        %2452 = vmatpush.bf16.msra.mxu0 0
        %2453 = vmatpush.bf16.msra.mxu0 0
        %2454 = vmatpush.bf16.msra.mxu0 0
        %2455 = vmatpush.bf16.msra.mxu0 0
        %2456 = vmatpush.bf16.msra.mxu0 0
        %2457 = vmatpush.bf16.msra.mxu0 %v2352
        %2458 = vmatmul.bf16.gmra.mxu0 %v2355
        %v2459 = vpop.f32.mrf.mxu0
        %v2460 = vadd.f32 %v2187, %v2459
        %v2461 = vpop.f32.mrf.mxu0
        %v2462 = vadd.f32 %v2187, %v2461
        %2463 = vmatmul.bf16.gmra.mxu0 %v2358
        %v2464 = vpop.f32.mrf.mxu0
        %v2465 = vadd.f32 %v2187, %v2464
        %v2466 = vpop.f32.mrf.mxu0
        %v2467 = vadd.f32 %v2187, %v2466
        %2468 = vmatmul.bf16.gmra.mxu0 %v2361
        %v2469 = vpop.f32.mrf.mxu0
        %v2470 = vadd.f32 %v2187, %v2469
        %v2471 = vpop.f32.mrf.mxu0
        %v2472 = vadd.f32 %v2187, %v2471
        %2473 = vmatmul.bf16.gmra.mxu0 %v2364
        %v2474 = vpop.f32.mrf.mxu0
        %v2475 = vadd.f32 %v2187, %v2474
        %v2476 = vpop.f32.mrf.mxu0
        %v2477 = vadd.f32 %v2187, %v2476
        %2478 = vmatmul.bf16.gmra.mxu0 %v2367
        %v2479 = vpop.f32.mrf.mxu0
        %v2480 = vadd.f32 %v2187, %v2479
        %v2481 = vpop.f32.mrf.mxu0
        %v2482 = vadd.f32 %v2187, %v2481
        %2483 = vmatmul.bf16.gmra.mxu0 %v2370
        %v2484 = vpop.f32.mrf.mxu0
        %v2485 = vadd.f32 %v2187, %v2484
        %v2486 = vpop.f32.mrf.mxu0
        %v2487 = vadd.f32 %v2187, %v2486
        %2488 = vmatmul.bf16.gmra.mxu0 %v2373
        %v2489 = vpop.f32.mrf.mxu0
        %v2490 = vadd.f32 %v2187, %v2489
        %v2491 = vpop.f32.mrf.mxu0
        %v2492 = vadd.f32 %v2187, %v2491
        %2493 = vmatmul.bf16.gmra.mxu0 %v2376
        %v2494 = vpop.f32.mrf.mxu0
        %v2495 = vadd.f32 %v2187, %v2494
        %v2496 = vpop.f32.mrf.mxu0
        %v2497 = vadd.f32 %v2187, %v2496
        %2498 = vmatmul.bf16.gmra.mxu0 %v2379
        %v2499 = vpop.f32.mrf.mxu0
        %v2500 = vadd.f32 %v2187, %v2499
        %v2501 = vpop.f32.mrf.mxu0
        %v2502 = vadd.f32 %v2187, %v2501
        %2503 = vmatmul.bf16.gmra.mxu0 %v2382
        %v2504 = vpop.f32.mrf.mxu0
        %v2505 = vadd.f32 %v2187, %v2504
        %v2506 = vpop.f32.mrf.mxu0
        %v2507 = vadd.f32 %v2187, %v2506
        %2508 = vmatmul.bf16.gmra.mxu0 %v2385
        %v2509 = vpop.f32.mrf.mxu0
        %v2510 = vadd.f32 %v2187, %v2509
        %v2511 = vpop.f32.mrf.mxu0
        %v2512 = vadd.f32 %v2187, %v2511
        %2513 = vmatmul.bf16.gmra.mxu0 %v2388
        %v2514 = vpop.f32.mrf.mxu0
        %v2515 = vadd.f32 %v2187, %v2514
        %v2516 = vpop.f32.mrf.mxu0
        %v2517 = vadd.f32 %v2187, %v2516
        %2518 = vmatmul.bf16.gmra.mxu0 %v2391
        %v2519 = vpop.f32.mrf.mxu0
        %v2520 = vadd.f32 %v2187, %v2519
        %v2521 = vpop.f32.mrf.mxu0
        %v2522 = vadd.f32 %v2187, %v2521
        %2523 = vmatmul.bf16.gmra.mxu0 %v2394
        %v2524 = vpop.f32.mrf.mxu0
        %v2525 = vadd.f32 %v2187, %v2524
        %v2526 = vpop.f32.mrf.mxu0
        %v2527 = vadd.f32 %v2187, %v2526
        %2528 = vmatmul.bf16.gmra.mxu0 %v2397
        %v2529 = vpop.f32.mrf.mxu0
        %v2530 = vadd.f32 %v2187, %v2529
        %v2531 = vpop.f32.mrf.mxu0
        %v2532 = vadd.f32 %v2187, %v2531
        %2533 = vmatmul.bf16.gmra.mxu0 %v2400
        %v2534 = vpop.f32.mrf.mxu0
        %v2535 = vadd.f32 %v2187, %v2534
        %v2536 = vpop.f32.mrf.mxu0
        %v2537 = vadd.f32 %v2187, %v2536
        %2538 = vmatmul.bf16.gmra.mxu0 %v2403
        %v2539 = vpop.f32.mrf.mxu0
        %v2540 = vadd.f32 %v2187, %v2539
        %v2541 = vpop.f32.mrf.mxu0
        %v2542 = vadd.f32 %v2187, %v2541
        %2543 = vmatmul.bf16.gmra.mxu0 %v2406
        %v2544 = vpop.f32.mrf.mxu0
        %v2545 = vadd.f32 %v2187, %v2544
        %v2546 = vpop.f32.mrf.mxu0
        %v2547 = vadd.f32 %v2187, %v2546
        %2548 = vmatmul.bf16.gmra.mxu0 %v2409
        %v2549 = vpop.f32.mrf.mxu0
        %v2550 = vadd.f32 %v2187, %v2549
        %v2551 = vpop.f32.mrf.mxu0
        %v2552 = vadd.f32 %v2187, %v2551
        %2553 = vmatmul.bf16.gmra.mxu0 %v2412
        %v2554 = vpop.f32.mrf.mxu0
        %v2555 = vadd.f32 %v2187, %v2554
        %v2556 = vpop.f32.mrf.mxu0
        %v2557 = vadd.f32 %v2187, %v2556
        %2558 = vmatmul.bf16.gmra.mxu0 %v2415
        %v2559 = vpop.f32.mrf.mxu0
        %v2560 = vadd.f32 %v2187, %v2559
        %v2561 = vpop.f32.mrf.mxu0
        %v2562 = vadd.f32 %v2187, %v2561
        %2563 = vmatmul.bf16.gmra.mxu0 %v2418
        %v2564 = vpop.f32.mrf.mxu0
        %v2565 = vadd.f32 %v2187, %v2564
        %v2566 = vpop.f32.mrf.mxu0
        %v2567 = vadd.f32 %v2187, %v2566
        %2568 = vmatmul.bf16.gmra.mxu0 %v2421
        %v2569 = vpop.f32.mrf.mxu0
        %v2570 = vadd.f32 %v2187, %v2569
        %v2571 = vpop.f32.mrf.mxu0
        %v2572 = vadd.f32 %v2187, %v2571
        %2573 = vmatmul.bf16.gmra.mxu0 %v2424
        %v2574 = vpop.f32.mrf.mxu0
        %v2575 = vadd.f32 %v2187, %v2574
        %v2576 = vpop.f32.mrf.mxu0
        %v2577 = vadd.f32 %v2187, %v2576
        %2578 = vmatmul.bf16.gmra.mxu0 %v2427
        %v2579 = vpop.f32.mrf.mxu0
        %v2580 = vadd.f32 %v2187, %v2579
        %v2581 = vpop.f32.mrf.mxu0
        %v2582 = vadd.f32 %v2187, %v2581
        %2583 = vmatmul.bf16.gmra.mxu0 %v2430
        %v2584 = vpop.f32.mrf.mxu0
        %v2585 = vadd.f32 %v2187, %v2584
        %v2586 = vpop.f32.mrf.mxu0
        %v2587 = vadd.f32 %v2187, %v2586
        %2588 = vmatmul.bf16.gmra.mxu0 %v2433
        %v2589 = vpop.f32.mrf.mxu0
        %v2590 = vadd.f32 %v2187, %v2589
        %v2591 = vpop.f32.mrf.mxu0
        %v2592 = vadd.f32 %v2187, %v2591
        %2593 = vmatmul.bf16.gmra.mxu0 %v2436
        %v2594 = vpop.f32.mrf.mxu0
        %v2595 = vadd.f32 %v2187, %v2594
        %v2596 = vpop.f32.mrf.mxu0
        %v2597 = vadd.f32 %v2187, %v2596
        %2598 = vmatmul.bf16.gmra.mxu0 %v2439
        %v2599 = vpop.f32.mrf.mxu0
        %v2600 = vadd.f32 %v2187, %v2599
        %v2601 = vpop.f32.mrf.mxu0
        %v2602 = vadd.f32 %v2187, %v2601
        %2603 = vmatmul.bf16.gmra.mxu0 %v2442
        %v2604 = vpop.f32.mrf.mxu0
        %v2605 = vadd.f32 %v2187, %v2604
        %v2606 = vpop.f32.mrf.mxu0
        %v2607 = vadd.f32 %v2187, %v2606
        %2608 = vmatmul.bf16.gmra.mxu0 %v2445
        %v2609 = vpop.f32.mrf.mxu0
        %v2610 = vadd.f32 %v2187, %v2609
        %v2611 = vpop.f32.mrf.mxu0
        %v2612 = vadd.f32 %v2187, %v2611
        %2613 = vmatmul.bf16.gmra.mxu0 %v2448
        %v2614 = vpop.f32.mrf.mxu0
        %v2615 = vadd.f32 %v2187, %v2614
        %v2616 = vpop.f32.mrf.mxu0
        %v2617 = vadd.f32 %v2187, %v2616
        %2618 = vdwg.mxu0
        %vm2619 = vcmp.gt.f32.partialorder %v2460, 0.0
        %vm2620 = vcmp.gt.f32.partialorder %v2462, 0.0
        %vm2621 = vcmp.gt.f32.partialorder %v2465, 0.0
        %vm2622 = vcmp.gt.f32.partialorder %v2467, 0.0
        %vm2623 = vcmp.gt.f32.partialorder %v2470, 0.0
        %vm2624 = vcmp.gt.f32.partialorder %v2472, 0.0
        %vm2625 = vcmp.gt.f32.partialorder %v2475, 0.0
        %vm2626 = vcmp.gt.f32.partialorder %v2477, 0.0
        %vm2627 = vcmp.gt.f32.partialorder %v2480, 0.0
        %vm2628 = vcmp.gt.f32.partialorder %v2482, 0.0
        %vm2629 = vcmp.gt.f32.partialorder %v2485, 0.0
        %vm2630 = vcmp.gt.f32.partialorder %v2487, 0.0
        %vm2631 = vcmp.gt.f32.partialorder %v2490, 0.0
        %vm2632 = vcmp.gt.f32.partialorder %v2492, 0.0
        %vm2633 = vcmp.gt.f32.partialorder %v2495, 0.0
        %vm2634 = vcmp.gt.f32.partialorder %v2497, 0.0
        %vm2635 = vcmp.gt.f32.partialorder %v2500, 0.0
        %vm2636 = vcmp.gt.f32.partialorder %v2502, 0.0
        %vm2637 = vcmp.gt.f32.partialorder %v2505, 0.0
        %vm2638 = vcmp.gt.f32.partialorder %v2507, 0.0
        %vm2639 = vcmp.gt.f32.partialorder %v2510, 0.0
        %vm2640 = vcmp.gt.f32.partialorder %v2512, 0.0
        %vm2641 = vcmp.gt.f32.partialorder %v2515, 0.0
        %vm2642 = vcmp.gt.f32.partialorder %v2517, 0.0
        %vm2643 = vcmp.gt.f32.partialorder %v2520, 0.0
        %vm2644 = vcmp.gt.f32.partialorder %v2522, 0.0
        %vm2645 = vcmp.gt.f32.partialorder %v2525, 0.0
        %vm2646 = vcmp.gt.f32.partialorder %v2527, 0.0
        %vm2647 = vcmp.gt.f32.partialorder %v2530, 0.0
        %vm2648 = vcmp.gt.f32.partialorder %v2532, 0.0
        %vm2649 = vcmp.gt.f32.partialorder %v2535, 0.0
        %vm2650 = vcmp.gt.f32.partialorder %v2537, 0.0
        %vm2651 = vcmp.gt.f32.partialorder %v2540, 0.0
        %vm2652 = vcmp.gt.f32.partialorder %v2542, 0.0
        %vm2653 = vcmp.gt.f32.partialorder %v2545, 0.0
        %vm2654 = vcmp.gt.f32.partialorder %v2547, 0.0
        %vm2655 = vcmp.gt.f32.partialorder %v2550, 0.0
        %vm2656 = vcmp.gt.f32.partialorder %v2552, 0.0
        %vm2657 = vcmp.gt.f32.partialorder %v2555, 0.0
        %vm2658 = vcmp.gt.f32.partialorder %v2557, 0.0
        %vm2659 = vcmp.gt.f32.partialorder %v2560, 0.0
        %vm2660 = vcmp.gt.f32.partialorder %v2562, 0.0
        %vm2661 = vcmp.gt.f32.partialorder %v2565, 0.0
        %vm2662 = vcmp.gt.f32.partialorder %v2567, 0.0
        %vm2663 = vcmp.gt.f32.partialorder %v2570, 0.0
        %vm2664 = vcmp.gt.f32.partialorder %v2572, 0.0
        %vm2665 = vcmp.gt.f32.partialorder %v2575, 0.0
        %vm2666 = vcmp.gt.f32.partialorder %v2577, 0.0
        %vm2667 = vcmp.gt.f32.partialorder %v2580, 0.0
        %vm2668 = vcmp.gt.f32.partialorder %v2582, 0.0
        %vm2669 = vcmp.gt.f32.partialorder %v2585, 0.0
        %vm2670 = vcmp.gt.f32.partialorder %v2587, 0.0
        %vm2671 = vcmp.gt.f32.partialorder %v2590, 0.0
        %vm2672 = vcmp.gt.f32.partialorder %v2592, 0.0
        %vm2673 = vcmp.gt.f32.partialorder %v2595, 0.0
        %vm2674 = vcmp.gt.f32.partialorder %v2597, 0.0
        %vm2675 = vcmp.gt.f32.partialorder %v2600, 0.0
        %vm2676 = vcmp.gt.f32.partialorder %v2602, 0.0
        %vm2677 = vcmp.gt.f32.partialorder %v2605, 0.0
        %vm2678 = vcmp.gt.f32.partialorder %v2607, 0.0
        %vm2679 = vcmp.gt.f32.partialorder %v2610, 0.0
        %vm2680 = vcmp.gt.f32.partialorder %v2612, 0.0
        %vm2681 = vcmp.gt.f32.partialorder %v2615, 0.0
        %vm2682 = vcmp.gt.f32.partialorder %v2617, 0.0
        %v2683 = vmul.f32 %v2460, 0.01
        %v2684 = vmul.f32 %v2462, 0.01
        %v2685 = vmul.f32 %v2465, 0.01
        %v2686 = vmul.f32 %v2467, 0.01
        %v2687 = vmul.f32 %v2470, 0.01
        %v2688 = vmul.f32 %v2472, 0.01
        %v2689 = vmul.f32 %v2475, 0.01
        %v2690 = vmul.f32 %v2477, 0.01
        %v2691 = vmul.f32 %v2480, 0.01
        %v2692 = vmul.f32 %v2482, 0.01
        %v2693 = vmul.f32 %v2485, 0.01
        %v2694 = vmul.f32 %v2487, 0.01
        %v2695 = vmul.f32 %v2490, 0.01
        %v2696 = vmul.f32 %v2492, 0.01
        %v2697 = vmul.f32 %v2495, 0.01
        %v2698 = vmul.f32 %v2497, 0.01
        %v2699 = vmul.f32 %v2500, 0.01
        %v2700 = vmul.f32 %v2502, 0.01
        %v2701 = vmul.f32 %v2505, 0.01
        %v2702 = vmul.f32 %v2507, 0.01
        %v2703 = vmul.f32 %v2510, 0.01
        %v2704 = vmul.f32 %v2512, 0.01
        %v2705 = vmul.f32 %v2515, 0.01
        %v2706 = vmul.f32 %v2517, 0.01
        %v2707 = vmul.f32 %v2520, 0.01
        %v2708 = vmul.f32 %v2522, 0.01
        %v2709 = vmul.f32 %v2525, 0.01
        %v2710 = vmul.f32 %v2527, 0.01
        %v2711 = vmul.f32 %v2530, 0.01
        %v2712 = vmul.f32 %v2532, 0.01
        %v2713 = vmul.f32 %v2535, 0.01
        %v2714 = vmul.f32 %v2537, 0.01
        %v2715 = vmul.f32 %v2540, 0.01
        %v2716 = vmul.f32 %v2542, 0.01
        %v2717 = vmul.f32 %v2545, 0.01
        %v2718 = vmul.f32 %v2547, 0.01
        %v2719 = vmul.f32 %v2550, 0.01
        %v2720 = vmul.f32 %v2552, 0.01
        %v2721 = vmul.f32 %v2555, 0.01
        %v2722 = vmul.f32 %v2557, 0.01
        %v2723 = vmul.f32 %v2560, 0.01
        %v2724 = vmul.f32 %v2562, 0.01
        %v2725 = vmul.f32 %v2565, 0.01
        %v2726 = vmul.f32 %v2567, 0.01
        %v2727 = vmul.f32 %v2570, 0.01
        %v2728 = vmul.f32 %v2572, 0.01
        %v2729 = vmul.f32 %v2575, 0.01
        %v2730 = vmul.f32 %v2577, 0.01
        %v2731 = vmul.f32 %v2580, 0.01
        %v2732 = vmul.f32 %v2582, 0.01
        %v2733 = vmul.f32 %v2585, 0.01
        %v2734 = vmul.f32 %v2587, 0.01
        %v2735 = vmul.f32 %v2590, 0.01
        %v2736 = vmul.f32 %v2592, 0.01
        %v2737 = vmul.f32 %v2595, 0.01
        %v2738 = vmul.f32 %v2597, 0.01
        %v2739 = vmul.f32 %v2600, 0.01
        %v2740 = vmul.f32 %v2602, 0.01
        %v2741 = vmul.f32 %v2605, 0.01
        %v2742 = vmul.f32 %v2607, 0.01
        %v2743 = vmul.f32 %v2610, 0.01
        %v2744 = vmul.f32 %v2612, 0.01
        %v2745 = vmul.f32 %v2615, 0.01
        %v2746 = vmul.f32 %v2617, 0.01
        %v2747 = vsel %vm2619, %v2460, %v2683
        %v2748 = vsel %vm2620, %v2462, %v2684
        %v2749 = vsel %vm2621, %v2465, %v2685
        %v2750 = vsel %vm2622, %v2467, %v2686
        %v2751 = vsel %vm2623, %v2470, %v2687
        %v2752 = vsel %vm2624, %v2472, %v2688
        %v2753 = vsel %vm2625, %v2475, %v2689
        %v2754 = vsel %vm2626, %v2477, %v2690
        %v2755 = vsel %vm2627, %v2480, %v2691
        %v2756 = vsel %vm2628, %v2482, %v2692
        %v2757 = vsel %vm2629, %v2485, %v2693
        %v2758 = vsel %vm2630, %v2487, %v2694
        %v2759 = vsel %vm2631, %v2490, %v2695
        %v2760 = vsel %vm2632, %v2492, %v2696
        %v2761 = vsel %vm2633, %v2495, %v2697
        %v2762 = vsel %vm2634, %v2497, %v2698
        %v2763 = vsel %vm2635, %v2500, %v2699
        %v2764 = vsel %vm2636, %v2502, %v2700
        %v2765 = vsel %vm2637, %v2505, %v2701
        %v2766 = vsel %vm2638, %v2507, %v2702
        %v2767 = vsel %vm2639, %v2510, %v2703
        %v2768 = vsel %vm2640, %v2512, %v2704
        %v2769 = vsel %vm2641, %v2515, %v2705
        %v2770 = vsel %vm2642, %v2517, %v2706
        %v2771 = vsel %vm2643, %v2520, %v2707
        %v2772 = vsel %vm2644, %v2522, %v2708
        %v2773 = vsel %vm2645, %v2525, %v2709
        %v2774 = vsel %vm2646, %v2527, %v2710
        %v2775 = vsel %vm2647, %v2530, %v2711
        %v2776 = vsel %vm2648, %v2532, %v2712
        %v2777 = vsel %vm2649, %v2535, %v2713
        %v2778 = vsel %vm2650, %v2537, %v2714
        %v2779 = vsel %vm2651, %v2540, %v2715
        %v2780 = vsel %vm2652, %v2542, %v2716
        %v2781 = vsel %vm2653, %v2545, %v2717
        %v2782 = vsel %vm2654, %v2547, %v2718
        %v2783 = vsel %vm2655, %v2550, %v2719
        %v2784 = vsel %vm2656, %v2552, %v2720
        %v2785 = vsel %vm2657, %v2555, %v2721
        %v2786 = vsel %vm2658, %v2557, %v2722
        %v2787 = vsel %vm2659, %v2560, %v2723
        %v2788 = vsel %vm2660, %v2562, %v2724
        %v2789 = vsel %vm2661, %v2565, %v2725
        %v2790 = vsel %vm2662, %v2567, %v2726
        %v2791 = vsel %vm2663, %v2570, %v2727
        %v2792 = vsel %vm2664, %v2572, %v2728
        %v2793 = vsel %vm2665, %v2575, %v2729
        %v2794 = vsel %vm2666, %v2577, %v2730
        %v2795 = vsel %vm2667, %v2580, %v2731
        %v2796 = vsel %vm2668, %v2582, %v2732
        %v2797 = vsel %vm2669, %v2585, %v2733
        %v2798 = vsel %vm2670, %v2587, %v2734
        %v2799 = vsel %vm2671, %v2590, %v2735
        %v2800 = vsel %vm2672, %v2592, %v2736
        %v2801 = vsel %vm2673, %v2595, %v2737
        %v2802 = vsel %vm2674, %v2597, %v2738
        %v2803 = vsel %vm2675, %v2600, %v2739
        %v2804 = vsel %vm2676, %v2602, %v2740
        %v2805 = vsel %vm2677, %v2605, %v2741
        %v2806 = vsel %vm2678, %v2607, %v2742
        %v2807 = vsel %vm2679, %v2610, %v2743
        %v2808 = vsel %vm2680, %v2612, %v2744
        %v2809 = vsel %vm2681, %v2615, %v2745
        %v2810 = vsel %vm2682, %v2617, %v2746
        %v2811 = vpack.c.bf16 %v2748, %v2747
        %v2812 = vpack.c.bf16 %v2750, %v2749
        %v2813 = vpack.c.bf16 %v2752, %v2751
        %v2814 = vpack.c.bf16 %v2754, %v2753
        %v2815 = vpack.c.bf16 %v2756, %v2755
        %v2816 = vpack.c.bf16 %v2758, %v2757
        %v2817 = vpack.c.bf16 %v2760, %v2759
        %v2818 = vpack.c.bf16 %v2762, %v2761
        %v2819 = vpack.c.bf16 %v2764, %v2763
        %v2820 = vpack.c.bf16 %v2766, %v2765
        %v2821 = vpack.c.bf16 %v2768, %v2767
        %v2822 = vpack.c.bf16 %v2770, %v2769
        %v2823 = vpack.c.bf16 %v2772, %v2771
        %v2824 = vpack.c.bf16 %v2774, %v2773
        %v2825 = vpack.c.bf16 %v2776, %v2775
        %v2826 = vpack.c.bf16 %v2778, %v2777
        %v2827 = vpack.c.bf16 %v2780, %v2779
        %v2828 = vpack.c.bf16 %v2782, %v2781
        %v2829 = vpack.c.bf16 %v2784, %v2783
        %v2830 = vpack.c.bf16 %v2786, %v2785
        %v2831 = vpack.c.bf16 %v2788, %v2787
        %v2832 = vpack.c.bf16 %v2790, %v2789
        %v2833 = vpack.c.bf16 %v2792, %v2791
        %v2834 = vpack.c.bf16 %v2794, %v2793
        %v2835 = vpack.c.bf16 %v2796, %v2795
        %v2836 = vpack.c.bf16 %v2798, %v2797
        %v2837 = vpack.c.bf16 %v2800, %v2799
        %v2838 = vpack.c.bf16 %v2802, %v2801
        %v2839 = vpack.c.bf16 %v2804, %v2803
        %v2840 = vpack.c.bf16 %v2806, %v2805
        %v2841 = vpack.c.bf16 %v2808, %v2807
        %v2842 = vpack.c.bf16 %v2810, %v2809
        %v2843 = vld [vmem:[#allocation2 + $0x558] sm:$0xf]
        %v2844 = vld [vmem:[#allocation2 + $0x55c] sm:$0xf]
        %v2845 = vld [vmem:[#allocation2 + $0x560] sm:$0xf]
        %v2846 = vld [vmem:[#allocation2 + $0x564] sm:$0xf]
        %v2847 = vld [vmem:[%s7 + $0x58] sm:$0x1]
        %v2848 = vperm.slane %v2847, 0
        %v2853 = vunpack.c.l.b16 %v2843
        %v2854 = vunpack.c.l.b16 %v2844
        %v2855 = vunpack.c.l.b16 %v2845
        %v2856 = vunpack.c.l.b16 %v2846
        %v2857 = vpack.c.b16 %v2854, %v2853
        %v2858 = vpack.c.b16 %v2856, %v2855
        %v2862 = vsel %vm1638, %v2811, 0
        %v2865 = vsel %vm1638, %v2812, 0
        %v2868 = vsel %vm1638, %v2813, 0
        %v2871 = vsel %vm1638, %v2814, 0
        %v2874 = vsel %vm1638, %v2815, 0
        %v2877 = vsel %vm1638, %v2816, 0
        %v2880 = vsel %vm1638, %v2817, 0
        %v2883 = vsel %vm1638, %v2818, 0
        %v2886 = vsel %vm1638, %v2819, 0
        %v2889 = vsel %vm1638, %v2820, 0
        %v2892 = vsel %vm1638, %v2821, 0
        %v2895 = vsel %vm1638, %v2822, 0
        %v2898 = vsel %vm1638, %v2823, 0
        %v2901 = vsel %vm1638, %v2824, 0
        %v2904 = vsel %vm1638, %v2825, 0
        %v2907 = vsel %vm1638, %v2826, 0
        %v2910 = vsel %vm1638, %v2827, 0
        %v2913 = vsel %vm1638, %v2828, 0
        %v2916 = vsel %vm1638, %v2829, 0
        %v2919 = vsel %vm1638, %v2830, 0
        %v2922 = vsel %vm1638, %v2831, 0
        %v2925 = vsel %vm1638, %v2832, 0
        %v2928 = vsel %vm1638, %v2833, 0
        %v2931 = vsel %vm1638, %v2834, 0
        %v2934 = vsel %vm1638, %v2835, 0
        %v2937 = vsel %vm1638, %v2836, 0
        %v2940 = vsel %vm1638, %v2837, 0
        %v2943 = vsel %vm1638, %v2838, 0
        %v2946 = vsel %vm1638, %v2839, 0
        %v2949 = vsel %vm1638, %v2840, 0
        %v2952 = vsel %vm1638, %v2841, 0
        %v2955 = vsel %vm1638, %v2842, 0
        %2957 = vmatpush.bf16.msra.mxu0 0
        %2958 = vmatpush.bf16.msra.mxu0 0
        %2959 = vmatpush.bf16.msra.mxu0 0
        %2960 = vmatpush.bf16.msra.mxu0 0
        %2961 = vmatpush.bf16.msra.mxu0 0
        %2962 = vmatpush.bf16.msra.mxu0 0
        %2963 = vmatpush.bf16.msra.mxu0 %v2858
        %2964 = vmatpush.bf16.msra.mxu0 %v2857
        %2965 = vmatmul.bf16.gmra.mxu0 %v2862
        %v2966 = vpop.f32.mrf.mxu0
        %v2967 = vadd.f32 %v2848, %v2966
        %v2968 = vpop.f32.mrf.mxu0
        %v2969 = vadd.f32 %v2848, %v2968
        %2970 = vmatmul.bf16.gmra.mxu0 %v2865
        %v2971 = vpop.f32.mrf.mxu0
        %v2972 = vadd.f32 %v2848, %v2971
        %v2973 = vpop.f32.mrf.mxu0
        %v2974 = vadd.f32 %v2848, %v2973
        %2975 = vmatmul.bf16.gmra.mxu0 %v2868
        %v2976 = vpop.f32.mrf.mxu0
        %v2977 = vadd.f32 %v2848, %v2976
        %v2978 = vpop.f32.mrf.mxu0
        %v2979 = vadd.f32 %v2848, %v2978
        %2980 = vmatmul.bf16.gmra.mxu0 %v2871
        %v2981 = vpop.f32.mrf.mxu0
        %v2982 = vadd.f32 %v2848, %v2981
        %v2983 = vpop.f32.mrf.mxu0
        %v2984 = vadd.f32 %v2848, %v2983
        %2985 = vmatmul.bf16.gmra.mxu0 %v2874
        %v2986 = vpop.f32.mrf.mxu0
        %v2987 = vadd.f32 %v2848, %v2986
        %v2988 = vpop.f32.mrf.mxu0
        %v2989 = vadd.f32 %v2848, %v2988
        %2990 = vmatmul.bf16.gmra.mxu0 %v2877
        %v2991 = vpop.f32.mrf.mxu0
        %v2992 = vadd.f32 %v2848, %v2991
        %v2993 = vpop.f32.mrf.mxu0
        %v2994 = vadd.f32 %v2848, %v2993
        %2995 = vmatmul.bf16.gmra.mxu0 %v2880
        %v2996 = vpop.f32.mrf.mxu0
        %v2997 = vadd.f32 %v2848, %v2996
        %v2998 = vpop.f32.mrf.mxu0
        %v2999 = vadd.f32 %v2848, %v2998
        %3000 = vmatmul.bf16.gmra.mxu0 %v2883
        %v3001 = vpop.f32.mrf.mxu0
        %v3002 = vadd.f32 %v2848, %v3001
        %v3003 = vpop.f32.mrf.mxu0
        %v3004 = vadd.f32 %v2848, %v3003
        %3005 = vmatmul.bf16.gmra.mxu0 %v2886
        %v3006 = vpop.f32.mrf.mxu0
        %v3007 = vadd.f32 %v2848, %v3006
        %v3008 = vpop.f32.mrf.mxu0
        %v3009 = vadd.f32 %v2848, %v3008
        %3010 = vmatmul.bf16.gmra.mxu0 %v2889
        %v3011 = vpop.f32.mrf.mxu0
        %v3012 = vadd.f32 %v2848, %v3011
        %v3013 = vpop.f32.mrf.mxu0
        %v3014 = vadd.f32 %v2848, %v3013
        %3015 = vmatmul.bf16.gmra.mxu0 %v2892
        %v3016 = vpop.f32.mrf.mxu0
        %v3017 = vadd.f32 %v2848, %v3016
        %v3018 = vpop.f32.mrf.mxu0
        %v3019 = vadd.f32 %v2848, %v3018
        %3020 = vmatmul.bf16.gmra.mxu0 %v2895
        %v3021 = vpop.f32.mrf.mxu0
        %v3022 = vadd.f32 %v2848, %v3021
        %v3023 = vpop.f32.mrf.mxu0
        %v3024 = vadd.f32 %v2848, %v3023
        %3025 = vmatmul.bf16.gmra.mxu0 %v2898
        %v3026 = vpop.f32.mrf.mxu0
        %v3027 = vadd.f32 %v2848, %v3026
        %v3028 = vpop.f32.mrf.mxu0
        %v3029 = vadd.f32 %v2848, %v3028
        %3030 = vmatmul.bf16.gmra.mxu0 %v2901
        %v3031 = vpop.f32.mrf.mxu0
        %v3032 = vadd.f32 %v2848, %v3031
        %v3033 = vpop.f32.mrf.mxu0
        %v3034 = vadd.f32 %v2848, %v3033
        %3035 = vmatmul.bf16.gmra.mxu0 %v2904
        %v3036 = vpop.f32.mrf.mxu0
        %v3037 = vadd.f32 %v2848, %v3036
        %v3038 = vpop.f32.mrf.mxu0
        %v3039 = vadd.f32 %v2848, %v3038
        %3040 = vmatmul.bf16.gmra.mxu0 %v2907
        %v3041 = vpop.f32.mrf.mxu0
        %v3042 = vadd.f32 %v2848, %v3041
        %v3043 = vpop.f32.mrf.mxu0
        %v3044 = vadd.f32 %v2848, %v3043
        %3045 = vmatmul.bf16.gmra.mxu0 %v2910
        %v3046 = vpop.f32.mrf.mxu0
        %v3047 = vadd.f32 %v2848, %v3046
        %v3048 = vpop.f32.mrf.mxu0
        %v3049 = vadd.f32 %v2848, %v3048
        %3050 = vmatmul.bf16.gmra.mxu0 %v2913
        %v3051 = vpop.f32.mrf.mxu0
        %v3052 = vadd.f32 %v2848, %v3051
        %v3053 = vpop.f32.mrf.mxu0
        %v3054 = vadd.f32 %v2848, %v3053
        %3055 = vmatmul.bf16.gmra.mxu0 %v2916
        %v3056 = vpop.f32.mrf.mxu0
        %v3057 = vadd.f32 %v2848, %v3056
        %v3058 = vpop.f32.mrf.mxu0
        %v3059 = vadd.f32 %v2848, %v3058
        %3060 = vmatmul.bf16.gmra.mxu0 %v2919
        %v3061 = vpop.f32.mrf.mxu0
        %v3062 = vadd.f32 %v2848, %v3061
        %v3063 = vpop.f32.mrf.mxu0
        %v3064 = vadd.f32 %v2848, %v3063
        %3065 = vmatmul.bf16.gmra.mxu0 %v2922
        %v3066 = vpop.f32.mrf.mxu0
        %v3067 = vadd.f32 %v2848, %v3066
        %v3068 = vpop.f32.mrf.mxu0
        %v3069 = vadd.f32 %v2848, %v3068
        %3070 = vmatmul.bf16.gmra.mxu0 %v2925
        %v3071 = vpop.f32.mrf.mxu0
        %v3072 = vadd.f32 %v2848, %v3071
        %v3073 = vpop.f32.mrf.mxu0
        %v3074 = vadd.f32 %v2848, %v3073
        %3075 = vmatmul.bf16.gmra.mxu0 %v2928
        %v3076 = vpop.f32.mrf.mxu0
        %v3077 = vadd.f32 %v2848, %v3076
        %v3078 = vpop.f32.mrf.mxu0
        %v3079 = vadd.f32 %v2848, %v3078
        %3080 = vmatmul.bf16.gmra.mxu0 %v2931
        %v3081 = vpop.f32.mrf.mxu0
        %v3082 = vadd.f32 %v2848, %v3081
        %v3083 = vpop.f32.mrf.mxu0
        %v3084 = vadd.f32 %v2848, %v3083
        %3085 = vmatmul.bf16.gmra.mxu0 %v2934
        %v3086 = vpop.f32.mrf.mxu0
        %v3087 = vadd.f32 %v2848, %v3086
        %v3088 = vpop.f32.mrf.mxu0
        %v3089 = vadd.f32 %v2848, %v3088
        %3090 = vmatmul.bf16.gmra.mxu0 %v2937
        %v3091 = vpop.f32.mrf.mxu0
        %v3092 = vadd.f32 %v2848, %v3091
        %v3093 = vpop.f32.mrf.mxu0
        %v3094 = vadd.f32 %v2848, %v3093
        %3095 = vmatmul.bf16.gmra.mxu0 %v2940
        %v3096 = vpop.f32.mrf.mxu0
        %v3097 = vadd.f32 %v2848, %v3096
        %v3098 = vpop.f32.mrf.mxu0
        %v3099 = vadd.f32 %v2848, %v3098
        %3100 = vmatmul.bf16.gmra.mxu0 %v2943
        %v3101 = vpop.f32.mrf.mxu0
        %v3102 = vadd.f32 %v2848, %v3101
        %v3103 = vpop.f32.mrf.mxu0
        %v3104 = vadd.f32 %v2848, %v3103
        %3105 = vmatmul.bf16.gmra.mxu0 %v2946
        %v3106 = vpop.f32.mrf.mxu0
        %v3107 = vadd.f32 %v2848, %v3106
        %v3108 = vpop.f32.mrf.mxu0
        %v3109 = vadd.f32 %v2848, %v3108
        %3110 = vmatmul.bf16.gmra.mxu0 %v2949
        %v3111 = vpop.f32.mrf.mxu0
        %v3112 = vadd.f32 %v2848, %v3111
        %v3113 = vpop.f32.mrf.mxu0
        %v3114 = vadd.f32 %v2848, %v3113
        %3115 = vmatmul.bf16.gmra.mxu0 %v2952
        %v3116 = vpop.f32.mrf.mxu0
        %v3117 = vadd.f32 %v2848, %v3116
        %v3118 = vpop.f32.mrf.mxu0
        %v3119 = vadd.f32 %v2848, %v3118
        %3120 = vmatmul.bf16.gmra.mxu0 %v2955
        %v3121 = vpop.f32.mrf.mxu0
        %v3122 = vadd.f32 %v2848, %v3121
        %v3123 = vpop.f32.mrf.mxu0
        %v3124 = vadd.f32 %v2848, %v3123
        %3125 = vdwg.mxu0
        %vm3126 = vcmp.gt.f32.partialorder %v2967, 0.0
        %vm3127 = vcmp.gt.f32.partialorder %v2969, 0.0
        %vm3128 = vcmp.gt.f32.partialorder %v2972, 0.0
        %vm3129 = vcmp.gt.f32.partialorder %v2974, 0.0
        %vm3130 = vcmp.gt.f32.partialorder %v2977, 0.0
        %vm3131 = vcmp.gt.f32.partialorder %v2979, 0.0
        %vm3132 = vcmp.gt.f32.partialorder %v2982, 0.0
        %vm3133 = vcmp.gt.f32.partialorder %v2984, 0.0
        %vm3134 = vcmp.gt.f32.partialorder %v2987, 0.0
        %vm3135 = vcmp.gt.f32.partialorder %v2989, 0.0
        %vm3136 = vcmp.gt.f32.partialorder %v2992, 0.0
        %vm3137 = vcmp.gt.f32.partialorder %v2994, 0.0
        %vm3138 = vcmp.gt.f32.partialorder %v2997, 0.0
        %vm3139 = vcmp.gt.f32.partialorder %v2999, 0.0
        %vm3140 = vcmp.gt.f32.partialorder %v3002, 0.0
        %vm3141 = vcmp.gt.f32.partialorder %v3004, 0.0
        %vm3142 = vcmp.gt.f32.partialorder %v3007, 0.0
        %vm3143 = vcmp.gt.f32.partialorder %v3009, 0.0
        %vm3144 = vcmp.gt.f32.partialorder %v3012, 0.0
        %vm3145 = vcmp.gt.f32.partialorder %v3014, 0.0
        %vm3146 = vcmp.gt.f32.partialorder %v3017, 0.0
        %vm3147 = vcmp.gt.f32.partialorder %v3019, 0.0
        %vm3148 = vcmp.gt.f32.partialorder %v3022, 0.0
        %vm3149 = vcmp.gt.f32.partialorder %v3024, 0.0
        %vm3150 = vcmp.gt.f32.partialorder %v3027, 0.0
        %vm3151 = vcmp.gt.f32.partialorder %v3029, 0.0
        %vm3152 = vcmp.gt.f32.partialorder %v3032, 0.0
        %vm3153 = vcmp.gt.f32.partialorder %v3034, 0.0
        %vm3154 = vcmp.gt.f32.partialorder %v3037, 0.0
        %vm3155 = vcmp.gt.f32.partialorder %v3039, 0.0
        %vm3156 = vcmp.gt.f32.partialorder %v3042, 0.0
        %vm3157 = vcmp.gt.f32.partialorder %v3044, 0.0
        %vm3158 = vcmp.gt.f32.partialorder %v3047, 0.0
        %vm3159 = vcmp.gt.f32.partialorder %v3049, 0.0
        %vm3160 = vcmp.gt.f32.partialorder %v3052, 0.0
        %vm3161 = vcmp.gt.f32.partialorder %v3054, 0.0
        %vm3162 = vcmp.gt.f32.partialorder %v3057, 0.0
        %vm3163 = vcmp.gt.f32.partialorder %v3059, 0.0
        %vm3164 = vcmp.gt.f32.partialorder %v3062, 0.0
        %vm3165 = vcmp.gt.f32.partialorder %v3064, 0.0
        %vm3166 = vcmp.gt.f32.partialorder %v3067, 0.0
        %vm3167 = vcmp.gt.f32.partialorder %v3069, 0.0
        %vm3168 = vcmp.gt.f32.partialorder %v3072, 0.0
        %vm3169 = vcmp.gt.f32.partialorder %v3074, 0.0
        %vm3170 = vcmp.gt.f32.partialorder %v3077, 0.0
        %vm3171 = vcmp.gt.f32.partialorder %v3079, 0.0
        %vm3172 = vcmp.gt.f32.partialorder %v3082, 0.0
        %vm3173 = vcmp.gt.f32.partialorder %v3084, 0.0
        %vm3174 = vcmp.gt.f32.partialorder %v3087, 0.0
        %vm3175 = vcmp.gt.f32.partialorder %v3089, 0.0
        %vm3176 = vcmp.gt.f32.partialorder %v3092, 0.0
        %vm3177 = vcmp.gt.f32.partialorder %v3094, 0.0
        %vm3178 = vcmp.gt.f32.partialorder %v3097, 0.0
        %vm3179 = vcmp.gt.f32.partialorder %v3099, 0.0
        %vm3180 = vcmp.gt.f32.partialorder %v3102, 0.0
        %vm3181 = vcmp.gt.f32.partialorder %v3104, 0.0
        %vm3182 = vcmp.gt.f32.partialorder %v3107, 0.0
        %vm3183 = vcmp.gt.f32.partialorder %v3109, 0.0
        %vm3184 = vcmp.gt.f32.partialorder %v3112, 0.0
        %vm3185 = vcmp.gt.f32.partialorder %v3114, 0.0
        %vm3186 = vcmp.gt.f32.partialorder %v3117, 0.0
        %vm3187 = vcmp.gt.f32.partialorder %v3119, 0.0
        %vm3188 = vcmp.gt.f32.partialorder %v3122, 0.0
        %vm3189 = vcmp.gt.f32.partialorder %v3124, 0.0
        %v3190 = vmul.f32 %v2967, 0.01
        %v3191 = vmul.f32 %v2969, 0.01
        %v3192 = vmul.f32 %v2972, 0.01
        %v3193 = vmul.f32 %v2974, 0.01
        %v3194 = vmul.f32 %v2977, 0.01
        %v3195 = vmul.f32 %v2979, 0.01
        %v3196 = vmul.f32 %v2982, 0.01
        %v3197 = vmul.f32 %v2984, 0.01
        %v3198 = vmul.f32 %v2987, 0.01
        %v3199 = vmul.f32 %v2989, 0.01
        %v3200 = vmul.f32 %v2992, 0.01
        %v3201 = vmul.f32 %v2994, 0.01
        %v3202 = vmul.f32 %v2997, 0.01
        %v3203 = vmul.f32 %v2999, 0.01
        %v3204 = vmul.f32 %v3002, 0.01
        %v3205 = vmul.f32 %v3004, 0.01
        %v3206 = vmul.f32 %v3007, 0.01
        %v3207 = vmul.f32 %v3009, 0.01
        %v3208 = vmul.f32 %v3012, 0.01
        %v3209 = vmul.f32 %v3014, 0.01
        %v3210 = vmul.f32 %v3017, 0.01
        %v3211 = vmul.f32 %v3019, 0.01
        %v3212 = vmul.f32 %v3022, 0.01
        %v3213 = vmul.f32 %v3024, 0.01
        %v3214 = vmul.f32 %v3027, 0.01
        %v3215 = vmul.f32 %v3029, 0.01
        %v3216 = vmul.f32 %v3032, 0.01
        %v3217 = vmul.f32 %v3034, 0.01
        %v3218 = vmul.f32 %v3037, 0.01
        %v3219 = vmul.f32 %v3039, 0.01
        %v3220 = vmul.f32 %v3042, 0.01
        %v3221 = vmul.f32 %v3044, 0.01
        %v3222 = vmul.f32 %v3047, 0.01
        %v3223 = vmul.f32 %v3049, 0.01
        %v3224 = vmul.f32 %v3052, 0.01
        %v3225 = vmul.f32 %v3054, 0.01
        %v3226 = vmul.f32 %v3057, 0.01
        %v3227 = vmul.f32 %v3059, 0.01
        %v3228 = vmul.f32 %v3062, 0.01
        %v3229 = vmul.f32 %v3064, 0.01
        %v3230 = vmul.f32 %v3067, 0.01
        %v3231 = vmul.f32 %v3069, 0.01
        %v3232 = vmul.f32 %v3072, 0.01
        %v3233 = vmul.f32 %v3074, 0.01
        %v3234 = vmul.f32 %v3077, 0.01
        %v3235 = vmul.f32 %v3079, 0.01
        %v3236 = vmul.f32 %v3082, 0.01
        %v3237 = vmul.f32 %v3084, 0.01
        %v3238 = vmul.f32 %v3087, 0.01
        %v3239 = vmul.f32 %v3089, 0.01
        %v3240 = vmul.f32 %v3092, 0.01
        %v3241 = vmul.f32 %v3094, 0.01
        %v3242 = vmul.f32 %v3097, 0.01
        %v3243 = vmul.f32 %v3099, 0.01
        %v3244 = vmul.f32 %v3102, 0.01
        %v3245 = vmul.f32 %v3104, 0.01
        %v3246 = vmul.f32 %v3107, 0.01
        %v3247 = vmul.f32 %v3109, 0.01
        %v3248 = vmul.f32 %v3112, 0.01
        %v3249 = vmul.f32 %v3114, 0.01
        %v3250 = vmul.f32 %v3117, 0.01
        %v3251 = vmul.f32 %v3119, 0.01
        %v3252 = vmul.f32 %v3122, 0.01
        %v3253 = vmul.f32 %v3124, 0.01
        %v3254 = vsel %vm3126, %v2967, %v3190
        %v3255 = vsel %vm3127, %v2969, %v3191
        %v3256 = vsel %vm3128, %v2972, %v3192
        %v3257 = vsel %vm3129, %v2974, %v3193
        %v3258 = vsel %vm3130, %v2977, %v3194
        %v3259 = vsel %vm3131, %v2979, %v3195
        %v3260 = vsel %vm3132, %v2982, %v3196
        %v3261 = vsel %vm3133, %v2984, %v3197
        %v3262 = vsel %vm3134, %v2987, %v3198
        %v3263 = vsel %vm3135, %v2989, %v3199
        %v3264 = vsel %vm3136, %v2992, %v3200
        %v3265 = vsel %vm3137, %v2994, %v3201
        %v3266 = vsel %vm3138, %v2997, %v3202
        %v3267 = vsel %vm3139, %v2999, %v3203
        %v3268 = vsel %vm3140, %v3002, %v3204
        %v3269 = vsel %vm3141, %v3004, %v3205
        %v3270 = vsel %vm3142, %v3007, %v3206
        %v3271 = vsel %vm3143, %v3009, %v3207
        %v3272 = vsel %vm3144, %v3012, %v3208
        %v3273 = vsel %vm3145, %v3014, %v3209
        %v3274 = vsel %vm3146, %v3017, %v3210
        %v3275 = vsel %vm3147, %v3019, %v3211
        %v3276 = vsel %vm3148, %v3022, %v3212
        %v3277 = vsel %vm3149, %v3024, %v3213
        %v3278 = vsel %vm3150, %v3027, %v3214
        %v3279 = vsel %vm3151, %v3029, %v3215
        %v3280 = vsel %vm3152, %v3032, %v3216
        %v3281 = vsel %vm3153, %v3034, %v3217
        %v3282 = vsel %vm3154, %v3037, %v3218
        %v3283 = vsel %vm3155, %v3039, %v3219
        %v3284 = vsel %vm3156, %v3042, %v3220
        %v3285 = vsel %vm3157, %v3044, %v3221
        %v3286 = vsel %vm3158, %v3047, %v3222
        %v3287 = vsel %vm3159, %v3049, %v3223
        %v3288 = vsel %vm3160, %v3052, %v3224
        %v3289 = vsel %vm3161, %v3054, %v3225
        %v3290 = vsel %vm3162, %v3057, %v3226
        %v3291 = vsel %vm3163, %v3059, %v3227
        %v3292 = vsel %vm3164, %v3062, %v3228
        %v3293 = vsel %vm3165, %v3064, %v3229
        %v3294 = vsel %vm3166, %v3067, %v3230
        %v3295 = vsel %vm3167, %v3069, %v3231
        %v3296 = vsel %vm3168, %v3072, %v3232
        %v3297 = vsel %vm3169, %v3074, %v3233
        %v3298 = vsel %vm3170, %v3077, %v3234
        %v3299 = vsel %vm3171, %v3079, %v3235
        %v3300 = vsel %vm3172, %v3082, %v3236
        %v3301 = vsel %vm3173, %v3084, %v3237
        %v3302 = vsel %vm3174, %v3087, %v3238
        %v3303 = vsel %vm3175, %v3089, %v3239
        %v3304 = vsel %vm3176, %v3092, %v3240
        %v3305 = vsel %vm3177, %v3094, %v3241
        %v3306 = vsel %vm3178, %v3097, %v3242
        %v3307 = vsel %vm3179, %v3099, %v3243
        %v3308 = vsel %vm3180, %v3102, %v3244
        %v3309 = vsel %vm3181, %v3104, %v3245
        %v3310 = vsel %vm3182, %v3107, %v3246
        %v3311 = vsel %vm3183, %v3109, %v3247
        %v3312 = vsel %vm3184, %v3112, %v3248
        %v3313 = vsel %vm3185, %v3114, %v3249
        %v3314 = vsel %vm3186, %v3117, %v3250
        %v3315 = vsel %vm3187, %v3119, %v3251
        %v3316 = vsel %vm3188, %v3122, %v3252
        %v3317 = vsel %vm3189, %v3124, %v3253
        %v3318 = vld [vmem:[#allocation2 + $0xa0] sm:$0xf]
        %v3319 = vld [vmem:[#allocation2 + $0xa4] sm:$0xf]
        %v3320 = vld [vmem:[#allocation2 + $0xa8] sm:$0xf]
        %v3321 = vld [vmem:[#allocation2 + $0xac] sm:$0xf]
        %v3322 = vld [vmem:[#allocation2 + $0xb0] sm:$0xf]
        %v3323 = vld [vmem:[#allocation2 + $0xb4] sm:$0xf]
        %v3324 = vld [vmem:[#allocation2 + $0xb8] sm:$0xf]
        %v3325 = vld [vmem:[#allocation2 + $0xbc] sm:$0xf]
        %v3326 = vld [vmem:[#allocation2 + $0xc0] sm:$0xf]
        %v3327 = vld [vmem:[#allocation2 + $0xc4] sm:$0xf]
        %v3328 = vld [vmem:[#allocation2 + $0xc8] sm:$0xf]
        %v3329 = vld [vmem:[#allocation2 + $0xcc] sm:$0xf]
        %v3330 = vld [vmem:[#allocation2 + $0xd0] sm:$0xf]
        %v3331 = vld [vmem:[#allocation2 + $0xd4] sm:$0xf]
        %v3332 = vld [vmem:[#allocation2 + $0xd8] sm:$0xf]
        %v3333 = vld [vmem:[#allocation2 + $0xdc] sm:$0xf]
        %v3334 = vld [vmem:[#allocation2 + $0xe0] sm:$0xf]
        %v3335 = vld [vmem:[#allocation2 + $0xe4] sm:$0xf]
        %v3336 = vld [vmem:[#allocation2 + $0xe8] sm:$0xf]
        %v3337 = vld [vmem:[#allocation2 + $0xec] sm:$0xf]
        %v3338 = vld [vmem:[#allocation2 + $0xf0] sm:$0xf]
        %v3339 = vld [vmem:[#allocation2 + $0xf4] sm:$0xf]
        %v3340 = vld [vmem:[#allocation2 + $0xf8] sm:$0xf]
        %v3341 = vld [vmem:[#allocation2 + $0xfc] sm:$0xf]
        %v3342 = vld [vmem:[#allocation2 + $0x100] sm:$0xf]
        %v3343 = vld [vmem:[#allocation2 + $0x104] sm:$0xf]
        %v3344 = vld [vmem:[#allocation2 + $0x108] sm:$0xf]
        %v3345 = vld [vmem:[#allocation2 + $0x10c] sm:$0xf]
        %v3346 = vld [vmem:[#allocation2 + $0x110] sm:$0xf]
        %v3347 = vld [vmem:[#allocation2 + $0x114] sm:$0xf]
        %v3348 = vld [vmem:[#allocation2 + $0x118] sm:$0xf]
        %v3349 = vld [vmem:[#allocation2 + $0x11c] sm:$0xf]
        %v3350 = vld [vmem:[%s6] sm:$0xff]
        %v3351 = vld [vmem:[%s6 + $0x8] sm:$0xff]
        %v3352 = vld [vmem:[%s6 + $0x10] sm:$0xff]
        %v3353 = vld [vmem:[%s6 + $0x18] sm:$0xff]
        %v3354 = vld [vmem:[%s6 + $0x20] sm:$0xff]
        %v3355 = vld [vmem:[%s6 + $0x28] sm:$0xff]
        %v3356 = vld [vmem:[%s6 + $0x30] sm:$0xff]
        %v3357 = vld [vmem:[%s6 + $0x38] sm:$0xff]
        %v3358 = vld [vmem:[%s6 + $0x40] sm:$0xff]
        %v3359 = vld [vmem:[%s6 + $0x48] sm:$0xff]
        %v3360 = vld [vmem:[%s6 + $0x50] sm:$0xff]
        %v3361 = vld [vmem:[%s6 + $0x58] sm:$0xff]
        %v3362 = vld [vmem:[%s6 + $0x60] sm:$0xff]
        %v3363 = vld [vmem:[%s6 + $0x68] sm:$0xff]
        %v3364 = vld [vmem:[%s6 + $0x70] sm:$0xff]
        %v3365 = vld [vmem:[%s6 + $0x78] sm:$0xff]
        %v3366 = vld [vmem:[%s6 + $0x80] sm:$0xff]
        %v3367 = vld [vmem:[%s6 + $0x88] sm:$0xff]
        %v3368 = vld [vmem:[%s6 + $0x90] sm:$0xff]
        %v3369 = vld [vmem:[%s6 + $0x98] sm:$0xff]
        %v3370 = vld [vmem:[%s6 + $0xa0] sm:$0xff]
        %v3371 = vld [vmem:[%s6 + $0xa8] sm:$0xff]
        %v3372 = vld [vmem:[%s6 + $0xb0] sm:$0xff]
        %v3373 = vld [vmem:[%s6 + $0xb8] sm:$0xff]
        %v3374 = vld [vmem:[%s6 + $0xc0] sm:$0xff]
        %v3375 = vld [vmem:[%s6 + $0xc8] sm:$0xff]
        %v3376 = vld [vmem:[%s6 + $0xd0] sm:$0xff]
        %v3377 = vld [vmem:[%s6 + $0xd8] sm:$0xff]
        %v3378 = vld [vmem:[%s6 + $0xe0] sm:$0xff]
        %v3379 = vld [vmem:[%s6 + $0xe8] sm:$0xff]
        %v3380 = vld [vmem:[%s6 + $0xf0] sm:$0xff]
        %v3381 = vld [vmem:[%s6 + $0xf8] sm:$0xff]
        %3383 = vset.pattern.permute.xlu0 8
        %3384 = vperm.xlu0 %3383, %v3350
        %v3385 = vpop.permute.xlu0 %3384
        %3388 = vset.pattern.permute.xlu0 8
        %3389 = vperm.xlu0 %3388, %v3351
        %v3390 = vpop.permute.xlu0 %3389
        %3393 = vset.pattern.permute.xlu0 8
        %3394 = vperm.xlu0 %3393, %v3352
        %v3395 = vpop.permute.xlu0 %3394
        %3398 = vset.pattern.permute.xlu0 8
        %3399 = vperm.xlu0 %3398, %v3353
        %v3400 = vpop.permute.xlu0 %3399
        %3403 = vset.pattern.permute.xlu0 8
        %3404 = vperm.xlu0 %3403, %v3354
        %v3405 = vpop.permute.xlu0 %3404
        %3408 = vset.pattern.permute.xlu0 8
        %3409 = vperm.xlu0 %3408, %v3355
        %v3410 = vpop.permute.xlu0 %3409
        %3413 = vset.pattern.permute.xlu0 8
        %3414 = vperm.xlu0 %3413, %v3356
        %v3415 = vpop.permute.xlu0 %3414
        %3418 = vset.pattern.permute.xlu0 8
        %3419 = vperm.xlu0 %3418, %v3357
        %v3420 = vpop.permute.xlu0 %3419
        %3423 = vset.pattern.permute.xlu0 8
        %3424 = vperm.xlu0 %3423, %v3358
        %v3425 = vpop.permute.xlu0 %3424
        %3428 = vset.pattern.permute.xlu0 8
        %3429 = vperm.xlu0 %3428, %v3359
        %v3430 = vpop.permute.xlu0 %3429
        %3433 = vset.pattern.permute.xlu0 8
        %3434 = vperm.xlu0 %3433, %v3360
        %v3435 = vpop.permute.xlu0 %3434
        %3438 = vset.pattern.permute.xlu0 8
        %3439 = vperm.xlu0 %3438, %v3361
        %v3440 = vpop.permute.xlu0 %3439
        %3443 = vset.pattern.permute.xlu0 8
        %3444 = vperm.xlu0 %3443, %v3362
        %v3445 = vpop.permute.xlu0 %3444
        %3448 = vset.pattern.permute.xlu0 8
        %3449 = vperm.xlu0 %3448, %v3363
        %v3450 = vpop.permute.xlu0 %3449
        %3453 = vset.pattern.permute.xlu0 8
        %3454 = vperm.xlu0 %3453, %v3364
        %v3455 = vpop.permute.xlu0 %3454
        %3458 = vset.pattern.permute.xlu0 8
        %3459 = vperm.xlu0 %3458, %v3365
        %v3460 = vpop.permute.xlu0 %3459
        %3463 = vset.pattern.permute.xlu0 8
        %3464 = vperm.xlu0 %3463, %v3366
        %v3465 = vpop.permute.xlu0 %3464
        %3468 = vset.pattern.permute.xlu0 8
        %3469 = vperm.xlu0 %3468, %v3367
        %v3470 = vpop.permute.xlu0 %3469
        %3473 = vset.pattern.permute.xlu0 8
        %3474 = vperm.xlu0 %3473, %v3368
        %v3475 = vpop.permute.xlu0 %3474
        %3478 = vset.pattern.permute.xlu0 8
        %3479 = vperm.xlu0 %3478, %v3369
        %v3480 = vpop.permute.xlu0 %3479
        %3483 = vset.pattern.permute.xlu0 8
        %3484 = vperm.xlu0 %3483, %v3370
        %v3485 = vpop.permute.xlu0 %3484
        %3488 = vset.pattern.permute.xlu0 8
        %3489 = vperm.xlu0 %3488, %v3371
        %v3490 = vpop.permute.xlu0 %3489
        %3493 = vset.pattern.permute.xlu0 8
        %3494 = vperm.xlu0 %3493, %v3372
        %v3495 = vpop.permute.xlu0 %3494
        %3498 = vset.pattern.permute.xlu0 8
        %3499 = vperm.xlu0 %3498, %v3373
        %v3500 = vpop.permute.xlu0 %3499
        %3503 = vset.pattern.permute.xlu0 8
        %3504 = vperm.xlu0 %3503, %v3374
        %v3505 = vpop.permute.xlu0 %3504
        %3508 = vset.pattern.permute.xlu0 8
        %3509 = vperm.xlu0 %3508, %v3375
        %v3510 = vpop.permute.xlu0 %3509
        %3513 = vset.pattern.permute.xlu0 8
        %3514 = vperm.xlu0 %3513, %v3376
        %v3515 = vpop.permute.xlu0 %3514
        %3518 = vset.pattern.permute.xlu0 8
        %3519 = vperm.xlu0 %3518, %v3377
        %v3520 = vpop.permute.xlu0 %3519
        %3523 = vset.pattern.permute.xlu0 8
        %3524 = vperm.xlu0 %3523, %v3378
        %v3525 = vpop.permute.xlu0 %3524
        %3528 = vset.pattern.permute.xlu0 8
        %3529 = vperm.xlu0 %3528, %v3379
        %v3530 = vpop.permute.xlu0 %3529
        %3533 = vset.pattern.permute.xlu0 8
        %3534 = vperm.xlu0 %3533, %v3380
        %v3535 = vpop.permute.xlu0 %3534
        %3538 = vset.pattern.permute.xlu0 8
        %3539 = vperm.xlu0 %3538, %v3381
        %v3540 = vpop.permute.xlu0 %3539
        %v3574 = vunpack.c.l.b16 %v3318
        %v3575 = vunpack.c.l.b16 %v3319
        %v3576 = vunpack.c.l.b16 %v3320
        %v3577 = vunpack.c.l.b16 %v3321
        %v3578 = vunpack.c.l.b16 %v3322
        %v3579 = vunpack.c.l.b16 %v3323
        %v3580 = vunpack.c.l.b16 %v3324
        %v3581 = vunpack.c.l.b16 %v3325
        %v3582 = vunpack.c.l.b16 %v3326
        %v3583 = vunpack.c.l.b16 %v3327
        %v3584 = vunpack.c.l.b16 %v3328
        %v3585 = vunpack.c.l.b16 %v3329
        %v3586 = vunpack.c.l.b16 %v3330
        %v3587 = vunpack.c.l.b16 %v3331
        %v3588 = vunpack.c.l.b16 %v3332
        %v3589 = vunpack.c.l.b16 %v3333
        %v3590 = vunpack.c.l.b16 %v3334
        %v3591 = vunpack.c.l.b16 %v3335
        %v3592 = vunpack.c.l.b16 %v3336
        %v3593 = vunpack.c.l.b16 %v3337
        %v3594 = vunpack.c.l.b16 %v3338
        %v3595 = vunpack.c.l.b16 %v3339
        %v3596 = vunpack.c.l.b16 %v3340
        %v3597 = vunpack.c.l.b16 %v3341
        %v3598 = vunpack.c.l.b16 %v3342
        %v3599 = vunpack.c.l.b16 %v3343
        %v3600 = vunpack.c.l.b16 %v3344
        %v3601 = vunpack.c.l.b16 %v3345
        %v3602 = vunpack.c.l.b16 %v3346
        %v3603 = vunpack.c.l.b16 %v3347
        %v3604 = vunpack.c.l.b16 %v3348
        %v3605 = vunpack.c.l.b16 %v3349
        %v3606 = vpack.c.b16 %v3575, %v3574
        %v3607 = vpack.c.b16 %v3577, %v3576
        %v3608 = vpack.c.b16 %v3579, %v3578
        %v3609 = vpack.c.b16 %v3581, %v3580
        %v3610 = vpack.c.b16 %v3583, %v3582
        %v3611 = vpack.c.b16 %v3585, %v3584
        %v3612 = vpack.c.b16 %v3587, %v3586
        %v3613 = vpack.c.b16 %v3589, %v3588
        %v3614 = vpack.c.b16 %v3591, %v3590
        %v3615 = vpack.c.b16 %v3593, %v3592
        %v3616 = vpack.c.b16 %v3595, %v3594
        %v3617 = vpack.c.b16 %v3597, %v3596
        %v3618 = vpack.c.b16 %v3599, %v3598
        %v3619 = vpack.c.b16 %v3601, %v3600
        %v3620 = vpack.c.b16 %v3603, %v3602
        %v3621 = vpack.c.b16 %v3605, %v3604
        %3638 = vmatpush.bf16.msra.mxu0 %v2183
        %3639 = vmatpush.bf16.msra.mxu0 %v2182
        %3640 = vmatpush.bf16.msra.mxu0 %v2181
        %3641 = vmatpush.bf16.msra.mxu0 %v2180
        %3642 = vmatpush.bf16.msra.mxu0 %v2179
        %3643 = vmatpush.bf16.msra.mxu0 %v2178
        %3644 = vmatpush.bf16.msra.mxu0 %v2177
        %3645 = vmatpush.bf16.msra.mxu0 %v2176
        %3646 = vmatmul.bf16.gmra.mxu0 %v3606
        %v3647 = vpop.f32.mrf.mxu0
        %v3648 = vadd.f32 %v3385, %v3647
        %v3649 = vpop.f32.mrf.mxu0
        %v3650 = vadd.f32 %v3390, %v3649
        %3651 = vmatmul.bf16.gmra.mxu0 %v3607
        %v3652 = vpop.f32.mrf.mxu0
        %v3653 = vadd.f32 %v3395, %v3652
        %v3654 = vpop.f32.mrf.mxu0
        %v3655 = vadd.f32 %v3400, %v3654
        %3656 = vmatmul.bf16.gmra.mxu0 %v3608
        %v3657 = vpop.f32.mrf.mxu0
        %v3658 = vadd.f32 %v3405, %v3657
        %v3659 = vpop.f32.mrf.mxu0
        %v3660 = vadd.f32 %v3410, %v3659
        %3661 = vmatmul.bf16.gmra.mxu0 %v3609
        %v3662 = vpop.f32.mrf.mxu0
        %v3663 = vadd.f32 %v3415, %v3662
        %v3664 = vpop.f32.mrf.mxu0
        %v3665 = vadd.f32 %v3420, %v3664
        %3666 = vmatmul.bf16.gmra.mxu0 %v3610
        %v3667 = vpop.f32.mrf.mxu0
        %v3668 = vadd.f32 %v3425, %v3667
        %v3669 = vpop.f32.mrf.mxu0
        %v3670 = vadd.f32 %v3430, %v3669
        %3671 = vmatmul.bf16.gmra.mxu0 %v3611
        %v3672 = vpop.f32.mrf.mxu0
        %v3673 = vadd.f32 %v3435, %v3672
        %v3674 = vpop.f32.mrf.mxu0
        %v3675 = vadd.f32 %v3440, %v3674
        %3676 = vmatmul.bf16.gmra.mxu0 %v3612
        %v3677 = vpop.f32.mrf.mxu0
        %v3678 = vadd.f32 %v3445, %v3677
        %v3679 = vpop.f32.mrf.mxu0
        %v3680 = vadd.f32 %v3450, %v3679
        %3681 = vmatmul.bf16.gmra.mxu0 %v3613
        %v3682 = vpop.f32.mrf.mxu0
        %v3683 = vadd.f32 %v3455, %v3682
        %v3684 = vpop.f32.mrf.mxu0
        %v3685 = vadd.f32 %v3460, %v3684
        %3686 = vmatmul.bf16.gmra.mxu0 %v3614
        %v3687 = vpop.f32.mrf.mxu0
        %v3688 = vadd.f32 %v3465, %v3687
        %v3689 = vpop.f32.mrf.mxu0
        %v3690 = vadd.f32 %v3470, %v3689
        %3691 = vmatmul.bf16.gmra.mxu0 %v3615
        %v3692 = vpop.f32.mrf.mxu0
        %v3693 = vadd.f32 %v3475, %v3692
        %v3694 = vpop.f32.mrf.mxu0
        %v3695 = vadd.f32 %v3480, %v3694
        %3696 = vmatmul.bf16.gmra.mxu0 %v3616
        %v3697 = vpop.f32.mrf.mxu0
        %v3698 = vadd.f32 %v3485, %v3697
        %v3699 = vpop.f32.mrf.mxu0
        %v3700 = vadd.f32 %v3490, %v3699
        %3701 = vmatmul.bf16.gmra.mxu0 %v3617
        %v3702 = vpop.f32.mrf.mxu0
        %v3703 = vadd.f32 %v3495, %v3702
        %v3704 = vpop.f32.mrf.mxu0
        %v3705 = vadd.f32 %v3500, %v3704
        %3706 = vmatmul.bf16.gmra.mxu0 %v3618
        %v3707 = vpop.f32.mrf.mxu0
        %v3708 = vadd.f32 %v3505, %v3707
        %v3709 = vpop.f32.mrf.mxu0
        %v3710 = vadd.f32 %v3510, %v3709
        %3711 = vmatmul.bf16.gmra.mxu0 %v3619
        %v3712 = vpop.f32.mrf.mxu0
        %v3713 = vadd.f32 %v3515, %v3712
        %v3714 = vpop.f32.mrf.mxu0
        %v3715 = vadd.f32 %v3520, %v3714
        %3716 = vmatmul.bf16.gmra.mxu0 %v3620
        %v3717 = vpop.f32.mrf.mxu0
        %v3718 = vadd.f32 %v3525, %v3717
        %v3719 = vpop.f32.mrf.mxu0
        %v3720 = vadd.f32 %v3530, %v3719
        %3721 = vmatmul.bf16.gmra.mxu0 %v3621
        %v3722 = vpop.f32.mrf.mxu0
        %v3723 = vadd.f32 %v3535, %v3722
        %v3724 = vpop.f32.mrf.mxu0
        %v3725 = vadd.f32 %v3540, %v3724
        %3726 = vdwg.mxu0
        %vm3727 = vcmp.gt.f32.partialorder %v3648, 0.0
        %vm3728 = vcmp.gt.f32.partialorder %v3650, 0.0
        %vm3729 = vcmp.gt.f32.partialorder %v3653, 0.0
        %vm3730 = vcmp.gt.f32.partialorder %v3655, 0.0
        %vm3731 = vcmp.gt.f32.partialorder %v3658, 0.0
        %vm3732 = vcmp.gt.f32.partialorder %v3660, 0.0
        %vm3733 = vcmp.gt.f32.partialorder %v3663, 0.0
        %vm3734 = vcmp.gt.f32.partialorder %v3665, 0.0
        %vm3735 = vcmp.gt.f32.partialorder %v3668, 0.0
        %vm3736 = vcmp.gt.f32.partialorder %v3670, 0.0
        %vm3737 = vcmp.gt.f32.partialorder %v3673, 0.0
        %vm3738 = vcmp.gt.f32.partialorder %v3675, 0.0
        %vm3739 = vcmp.gt.f32.partialorder %v3678, 0.0
        %vm3740 = vcmp.gt.f32.partialorder %v3680, 0.0
        %vm3741 = vcmp.gt.f32.partialorder %v3683, 0.0
        %vm3742 = vcmp.gt.f32.partialorder %v3685, 0.0
        %vm3743 = vcmp.gt.f32.partialorder %v3688, 0.0
        %vm3744 = vcmp.gt.f32.partialorder %v3690, 0.0
        %vm3745 = vcmp.gt.f32.partialorder %v3693, 0.0
        %vm3746 = vcmp.gt.f32.partialorder %v3695, 0.0
        %vm3747 = vcmp.gt.f32.partialorder %v3698, 0.0
        %vm3748 = vcmp.gt.f32.partialorder %v3700, 0.0
        %vm3749 = vcmp.gt.f32.partialorder %v3703, 0.0
        %vm3750 = vcmp.gt.f32.partialorder %v3705, 0.0
        %vm3751 = vcmp.gt.f32.partialorder %v3708, 0.0
        %vm3752 = vcmp.gt.f32.partialorder %v3710, 0.0
        %vm3753 = vcmp.gt.f32.partialorder %v3713, 0.0
        %vm3754 = vcmp.gt.f32.partialorder %v3715, 0.0
        %vm3755 = vcmp.gt.f32.partialorder %v3718, 0.0
        %vm3756 = vcmp.gt.f32.partialorder %v3720, 0.0
        %vm3757 = vcmp.gt.f32.partialorder %v3723, 0.0
        %vm3758 = vcmp.gt.f32.partialorder %v3725, 0.0
        %v3759 = vmul.f32 %v3648, 0.01
        %v3760 = vmul.f32 %v3650, 0.01
        %v3761 = vmul.f32 %v3653, 0.01
        %v3762 = vmul.f32 %v3655, 0.01
        %v3763 = vmul.f32 %v3658, 0.01
        %v3764 = vmul.f32 %v3660, 0.01
        %v3765 = vmul.f32 %v3663, 0.01
        %v3766 = vmul.f32 %v3665, 0.01
        %v3767 = vmul.f32 %v3668, 0.01
        %v3768 = vmul.f32 %v3670, 0.01
        %v3769 = vmul.f32 %v3673, 0.01
        %v3770 = vmul.f32 %v3675, 0.01
        %v3771 = vmul.f32 %v3678, 0.01
        %v3772 = vmul.f32 %v3680, 0.01
        %v3773 = vmul.f32 %v3683, 0.01
        %v3774 = vmul.f32 %v3685, 0.01
        %v3775 = vmul.f32 %v3688, 0.01
        %v3776 = vmul.f32 %v3690, 0.01
        %v3777 = vmul.f32 %v3693, 0.01
        %v3778 = vmul.f32 %v3695, 0.01
        %v3779 = vmul.f32 %v3698, 0.01
        %v3780 = vmul.f32 %v3700, 0.01
        %v3781 = vmul.f32 %v3703, 0.01
        %v3782 = vmul.f32 %v3705, 0.01
        %v3783 = vmul.f32 %v3708, 0.01
        %v3784 = vmul.f32 %v3710, 0.01
        %v3785 = vmul.f32 %v3713, 0.01
        %v3786 = vmul.f32 %v3715, 0.01
        %v3787 = vmul.f32 %v3718, 0.01
        %v3788 = vmul.f32 %v3720, 0.01
        %v3789 = vmul.f32 %v3723, 0.01
        %v3790 = vmul.f32 %v3725, 0.01
        %v3791 = vsel %vm3727, %v3648, %v3759
        %v3792 = vsel %vm3728, %v3650, %v3760
        %v3793 = vsel %vm3729, %v3653, %v3761
        %v3794 = vsel %vm3730, %v3655, %v3762
        %v3795 = vsel %vm3731, %v3658, %v3763
        %v3796 = vsel %vm3732, %v3660, %v3764
        %v3797 = vsel %vm3733, %v3663, %v3765
        %v3798 = vsel %vm3734, %v3665, %v3766
        %v3799 = vsel %vm3735, %v3668, %v3767
        %v3800 = vsel %vm3736, %v3670, %v3768
        %v3801 = vsel %vm3737, %v3673, %v3769
        %v3802 = vsel %vm3738, %v3675, %v3770
        %v3803 = vsel %vm3739, %v3678, %v3771
        %v3804 = vsel %vm3740, %v3680, %v3772
        %v3805 = vsel %vm3741, %v3683, %v3773
        %v3806 = vsel %vm3742, %v3685, %v3774
        %v3807 = vsel %vm3743, %v3688, %v3775
        %v3808 = vsel %vm3744, %v3690, %v3776
        %v3809 = vsel %vm3745, %v3693, %v3777
        %v3810 = vsel %vm3746, %v3695, %v3778
        %v3811 = vsel %vm3747, %v3698, %v3779
        %v3812 = vsel %vm3748, %v3700, %v3780
        %v3813 = vsel %vm3749, %v3703, %v3781
        %v3814 = vsel %vm3750, %v3705, %v3782
        %v3815 = vsel %vm3751, %v3708, %v3783
        %v3816 = vsel %vm3752, %v3710, %v3784
        %v3817 = vsel %vm3753, %v3713, %v3785
        %v3818 = vsel %vm3754, %v3715, %v3786
        %v3819 = vsel %vm3755, %v3718, %v3787
        %v3820 = vsel %vm3756, %v3720, %v3788
        %v3821 = vsel %vm3757, %v3723, %v3789
        %v3822 = vsel %vm3758, %v3725, %v3790
        %v3823 = vpack.c.bf16 %v3791, %v3791
        %v3824 = vpack.c.bf16 %v3792, %v3792
        %v3825 = vpack.c.bf16 %v3793, %v3793
        %v3826 = vpack.c.bf16 %v3794, %v3794
        %v3827 = vpack.c.bf16 %v3795, %v3795
        %v3828 = vpack.c.bf16 %v3796, %v3796
        %v3829 = vpack.c.bf16 %v3797, %v3797
        %v3830 = vpack.c.bf16 %v3798, %v3798
        %v3831 = vpack.c.bf16 %v3799, %v3799
        %v3832 = vpack.c.bf16 %v3800, %v3800
        %v3833 = vpack.c.bf16 %v3801, %v3801
        %v3834 = vpack.c.bf16 %v3802, %v3802
        %v3835 = vpack.c.bf16 %v3803, %v3803
        %v3836 = vpack.c.bf16 %v3804, %v3804
        %v3837 = vpack.c.bf16 %v3805, %v3805
        %v3838 = vpack.c.bf16 %v3806, %v3806
        %v3839 = vpack.c.bf16 %v3807, %v3807
        %v3840 = vpack.c.bf16 %v3808, %v3808
        %v3841 = vpack.c.bf16 %v3809, %v3809
        %v3842 = vpack.c.bf16 %v3810, %v3810
        %v3843 = vpack.c.bf16 %v3811, %v3811
        %v3844 = vpack.c.bf16 %v3812, %v3812
        %v3845 = vpack.c.bf16 %v3813, %v3813
        %v3846 = vpack.c.bf16 %v3814, %v3814
        %v3847 = vpack.c.bf16 %v3815, %v3815
        %v3848 = vpack.c.bf16 %v3816, %v3816
        %v3849 = vpack.c.bf16 %v3817, %v3817
        %v3850 = vpack.c.bf16 %v3818, %v3818
        %v3851 = vpack.c.bf16 %v3819, %v3819
        %v3852 = vpack.c.bf16 %v3820, %v3820
        %v3853 = vpack.c.bf16 %v3821, %v3821
        %v3854 = vpack.c.bf16 %v3822, %v3822
        %v3855 = vld [vmem:[#allocation2 + $0x120] sm:$0xf]
        %v3856 = vld [vmem:[#allocation2 + $0x124] sm:$0xf]
        %v3857 = vld [vmem:[#allocation2 + $0x128] sm:$0xf]
        %v3858 = vld [vmem:[#allocation2 + $0x12c] sm:$0xf]
        %v3859 = vld [vmem:[#allocation2 + $0x130] sm:$0xf]
        %v3860 = vld [vmem:[#allocation2 + $0x134] sm:$0xf]
        %v3861 = vld [vmem:[#allocation2 + $0x138] sm:$0xf]
        %v3862 = vld [vmem:[#allocation2 + $0x13c] sm:$0xf]
        %v3863 = vld [vmem:[#allocation2 + $0x140] sm:$0xf]
        %v3864 = vld [vmem:[#allocation2 + $0x144] sm:$0xf]
        %v3865 = vld [vmem:[#allocation2 + $0x148] sm:$0xf]
        %v3866 = vld [vmem:[#allocation2 + $0x14c] sm:$0xf]
        %v3867 = vld [vmem:[#allocation2 + $0x150] sm:$0xf]
        %v3868 = vld [vmem:[#allocation2 + $0x154] sm:$0xf]
        %v3869 = vld [vmem:[#allocation2 + $0x158] sm:$0xf]
        %v3870 = vld [vmem:[#allocation2 + $0x15c] sm:$0xf]
        %v3871 = vld [vmem:[#allocation2 + $0x160] sm:$0xf]
        %v3872 = vld [vmem:[#allocation2 + $0x164] sm:$0xf]
        %v3873 = vld [vmem:[#allocation2 + $0x168] sm:$0xf]
        %v3874 = vld [vmem:[#allocation2 + $0x16c] sm:$0xf]
        %v3875 = vld [vmem:[#allocation2 + $0x170] sm:$0xf]
        %v3876 = vld [vmem:[#allocation2 + $0x174] sm:$0xf]
        %v3877 = vld [vmem:[#allocation2 + $0x178] sm:$0xf]
        %v3878 = vld [vmem:[#allocation2 + $0x17c] sm:$0xf]
        %v3879 = vld [vmem:[#allocation2 + $0x180] sm:$0xf]
        %v3880 = vld [vmem:[#allocation2 + $0x184] sm:$0xf]
        %v3881 = vld [vmem:[#allocation2 + $0x188] sm:$0xf]
        %v3882 = vld [vmem:[#allocation2 + $0x18c] sm:$0xf]
        %v3883 = vld [vmem:[#allocation2 + $0x190] sm:$0xf]
        %v3884 = vld [vmem:[#allocation2 + $0x194] sm:$0xf]
        %v3885 = vld [vmem:[#allocation2 + $0x198] sm:$0xf]
        %v3886 = vld [vmem:[#allocation2 + $0x19c] sm:$0xf]
        %v3887 = vld [vmem:[#allocation2 + $0x1a0] sm:$0xf]
        %v3888 = vld [vmem:[#allocation2 + $0x1a4] sm:$0xf]
        %v3889 = vld [vmem:[#allocation2 + $0x1a8] sm:$0xf]
        %v3890 = vld [vmem:[#allocation2 + $0x1ac] sm:$0xf]
        %v3891 = vld [vmem:[#allocation2 + $0x1b0] sm:$0xf]
        %v3892 = vld [vmem:[#allocation2 + $0x1b4] sm:$0xf]
        %v3893 = vld [vmem:[#allocation2 + $0x1b8] sm:$0xf]
        %v3894 = vld [vmem:[#allocation2 + $0x1bc] sm:$0xf]
        %v3895 = vld [vmem:[#allocation2 + $0x1c0] sm:$0xf]
        %v3896 = vld [vmem:[#allocation2 + $0x1c4] sm:$0xf]
        %v3897 = vld [vmem:[#allocation2 + $0x1c8] sm:$0xf]
        %v3898 = vld [vmem:[#allocation2 + $0x1cc] sm:$0xf]
        %v3899 = vld [vmem:[#allocation2 + $0x1d0] sm:$0xf]
        %v3900 = vld [vmem:[#allocation2 + $0x1d4] sm:$0xf]
        %v3901 = vld [vmem:[#allocation2 + $0x1d8] sm:$0xf]
        %v3902 = vld [vmem:[#allocation2 + $0x1dc] sm:$0xf]
        %v3903 = vld [vmem:[#allocation2 + $0x1e0] sm:$0xf]
        %v3904 = vld [vmem:[#allocation2 + $0x1e4] sm:$0xf]
        %v3905 = vld [vmem:[#allocation2 + $0x1e8] sm:$0xf]
        %v3906 = vld [vmem:[#allocation2 + $0x1ec] sm:$0xf]
        %v3907 = vld [vmem:[#allocation2 + $0x1f0] sm:$0xf]
        %v3908 = vld [vmem:[#allocation2 + $0x1f4] sm:$0xf]
        %v3909 = vld [vmem:[#allocation2 + $0x1f8] sm:$0xf]
        %v3910 = vld [vmem:[#allocation2 + $0x1fc] sm:$0xf]
        %v3911 = vld [vmem:[#allocation2 + $0x200] sm:$0xf]
        %v3912 = vld [vmem:[#allocation2 + $0x204] sm:$0xf]
        %v3913 = vld [vmem:[#allocation2 + $0x208] sm:$0xf]
        %v3914 = vld [vmem:[#allocation2 + $0x20c] sm:$0xf]
        %v3915 = vld [vmem:[#allocation2 + $0x210] sm:$0xf]
        %v3916 = vld [vmem:[#allocation2 + $0x214] sm:$0xf]
        %v3917 = vld [vmem:[#allocation2 + $0x218] sm:$0xf]
        %v3918 = vld [vmem:[#allocation2 + $0x21c] sm:$0xf]
        %v3919 = vld [vmem:[#allocation2 + $0x220] sm:$0xf]
        %v3920 = vld [vmem:[#allocation2 + $0x224] sm:$0xf]
        %v3921 = vld [vmem:[#allocation2 + $0x228] sm:$0xf]
        %v3922 = vld [vmem:[#allocation2 + $0x22c] sm:$0xf]
        %v3923 = vld [vmem:[#allocation2 + $0x230] sm:$0xf]
        %v3924 = vld [vmem:[#allocation2 + $0x234] sm:$0xf]
        %v3925 = vld [vmem:[#allocation2 + $0x238] sm:$0xf]
        %v3926 = vld [vmem:[#allocation2 + $0x23c] sm:$0xf]
        %v3927 = vld [vmem:[#allocation2 + $0x240] sm:$0xf]
        %v3928 = vld [vmem:[#allocation2 + $0x244] sm:$0xf]
        %v3929 = vld [vmem:[#allocation2 + $0x248] sm:$0xf]
        %v3930 = vld [vmem:[#allocation2 + $0x24c] sm:$0xf]
        %v3931 = vld [vmem:[#allocation2 + $0x250] sm:$0xf]
        %v3932 = vld [vmem:[#allocation2 + $0x254] sm:$0xf]
        %v3933 = vld [vmem:[#allocation2 + $0x258] sm:$0xf]
        %v3934 = vld [vmem:[#allocation2 + $0x25c] sm:$0xf]
        %v3935 = vld [vmem:[#allocation2 + $0x260] sm:$0xf]
        %v3936 = vld [vmem:[#allocation2 + $0x264] sm:$0xf]
        %v3937 = vld [vmem:[#allocation2 + $0x268] sm:$0xf]
        %v3938 = vld [vmem:[#allocation2 + $0x26c] sm:$0xf]
        %v3939 = vld [vmem:[#allocation2 + $0x270] sm:$0xf]
        %v3940 = vld [vmem:[#allocation2 + $0x274] sm:$0xf]
        %v3941 = vld [vmem:[#allocation2 + $0x278] sm:$0xf]
        %v3942 = vld [vmem:[#allocation2 + $0x27c] sm:$0xf]
        %v3943 = vld [vmem:[#allocation2 + $0x280] sm:$0xf]
        %v3944 = vld [vmem:[#allocation2 + $0x284] sm:$0xf]
        %v3945 = vld [vmem:[#allocation2 + $0x288] sm:$0xf]
        %v3946 = vld [vmem:[#allocation2 + $0x28c] sm:$0xf]
        %v3947 = vld [vmem:[#allocation2 + $0x290] sm:$0xf]
        %v3948 = vld [vmem:[#allocation2 + $0x294] sm:$0xf]
        %v3949 = vld [vmem:[#allocation2 + $0x298] sm:$0xf]
        %v3950 = vld [vmem:[#allocation2 + $0x29c] sm:$0xf]
        %v3951 = vld [vmem:[#allocation2 + $0x2a0] sm:$0xf]
        %v3952 = vld [vmem:[#allocation2 + $0x2a4] sm:$0xf]
        %v3953 = vld [vmem:[#allocation2 + $0x2a8] sm:$0xf]
        %v3954 = vld [vmem:[#allocation2 + $0x2ac] sm:$0xf]
        %v3955 = vld [vmem:[#allocation2 + $0x2b0] sm:$0xf]
        %v3956 = vld [vmem:[#allocation2 + $0x2b4] sm:$0xf]
        %v3957 = vld [vmem:[#allocation2 + $0x2b8] sm:$0xf]
        %v3958 = vld [vmem:[#allocation2 + $0x2bc] sm:$0xf]
        %v3959 = vld [vmem:[#allocation2 + $0x2c0] sm:$0xf]
        %v3960 = vld [vmem:[#allocation2 + $0x2c4] sm:$0xf]
        %v3961 = vld [vmem:[#allocation2 + $0x2c8] sm:$0xf]
        %v3962 = vld [vmem:[#allocation2 + $0x2cc] sm:$0xf]
        %v3963 = vld [vmem:[#allocation2 + $0x2d0] sm:$0xf]
        %v3964 = vld [vmem:[#allocation2 + $0x2d4] sm:$0xf]
        %v3965 = vld [vmem:[#allocation2 + $0x2d8] sm:$0xf]
        %v3966 = vld [vmem:[#allocation2 + $0x2dc] sm:$0xf]
        %v3967 = vld [vmem:[#allocation2 + $0x2e0] sm:$0xf]
        %v3968 = vld [vmem:[#allocation2 + $0x2e4] sm:$0xf]
        %v3969 = vld [vmem:[#allocation2 + $0x2e8] sm:$0xf]
        %v3970 = vld [vmem:[#allocation2 + $0x2ec] sm:$0xf]
        %v3971 = vld [vmem:[#allocation2 + $0x2f0] sm:$0xf]
        %v3972 = vld [vmem:[#allocation2 + $0x2f4] sm:$0xf]
        %v3973 = vld [vmem:[#allocation2 + $0x2f8] sm:$0xf]
        %v3974 = vld [vmem:[#allocation2 + $0x2fc] sm:$0xf]
        %v3975 = vld [vmem:[#allocation2 + $0x300] sm:$0xf]
        %v3976 = vld [vmem:[#allocation2 + $0x304] sm:$0xf]
        %v3977 = vld [vmem:[#allocation2 + $0x308] sm:$0xf]
        %v3978 = vld [vmem:[#allocation2 + $0x30c] sm:$0xf]
        %v3979 = vld [vmem:[#allocation2 + $0x310] sm:$0xf]
        %v3980 = vld [vmem:[#allocation2 + $0x314] sm:$0xf]
        %v3981 = vld [vmem:[#allocation2 + $0x318] sm:$0xf]
        %v3982 = vld [vmem:[#allocation2 + $0x31c] sm:$0xf]
        %v4047 = vunpack.c.l.b16 %v3919
        %v4048 = vunpack.c.l.b16 %v3920
        %v4049 = vunpack.c.l.b16 %v3921
        %v4050 = vunpack.c.l.b16 %v3922
        %v4051 = vunpack.c.l.b16 %v3923
        %v4052 = vunpack.c.l.b16 %v3924
        %v4053 = vunpack.c.l.b16 %v3925
        %v4054 = vunpack.c.l.b16 %v3926
        %v4055 = vunpack.c.l.b16 %v3927
        %v4056 = vunpack.c.l.b16 %v3928
        %v4057 = vunpack.c.l.b16 %v3929
        %v4058 = vunpack.c.l.b16 %v3930
        %v4059 = vunpack.c.l.b16 %v3931
        %v4060 = vunpack.c.l.b16 %v3932
        %v4061 = vunpack.c.l.b16 %v3933
        %v4062 = vunpack.c.l.b16 %v3934
        %v4063 = vunpack.c.l.b16 %v3935
        %v4064 = vunpack.c.l.b16 %v3936
        %v4065 = vunpack.c.l.b16 %v3937
        %v4066 = vunpack.c.l.b16 %v3938
        %v4067 = vunpack.c.l.b16 %v3939
        %v4068 = vunpack.c.l.b16 %v3940
        %v4069 = vunpack.c.l.b16 %v3941
        %v4070 = vunpack.c.l.b16 %v3942
        %v4071 = vunpack.c.l.b16 %v3943
        %v4072 = vunpack.c.l.b16 %v3944
        %v4073 = vunpack.c.l.b16 %v3945
        %v4074 = vunpack.c.l.b16 %v3946
        %v4075 = vunpack.c.l.b16 %v3947
        %v4076 = vunpack.c.l.b16 %v3948
        %v4077 = vunpack.c.l.b16 %v3949
        %v4078 = vunpack.c.l.b16 %v3950
        %v4079 = vunpack.c.l.b16 %v3951
        %v4080 = vunpack.c.l.b16 %v3952
        %v4081 = vunpack.c.l.b16 %v3953
        %v4082 = vunpack.c.l.b16 %v3954
        %v4083 = vunpack.c.l.b16 %v3955
        %v4084 = vunpack.c.l.b16 %v3956
        %v4085 = vunpack.c.l.b16 %v3957
        %v4086 = vunpack.c.l.b16 %v3958
        %v4087 = vunpack.c.l.b16 %v3959
        %v4088 = vunpack.c.l.b16 %v3960
        %v4089 = vunpack.c.l.b16 %v3961
        %v4090 = vunpack.c.l.b16 %v3962
        %v4091 = vunpack.c.l.b16 %v3963
        %v4092 = vunpack.c.l.b16 %v3964
        %v4093 = vunpack.c.l.b16 %v3965
        %v4094 = vunpack.c.l.b16 %v3966
        %v4095 = vunpack.c.l.b16 %v3967
        %v4096 = vunpack.c.l.b16 %v3968
        %v4097 = vunpack.c.l.b16 %v3969
        %v4098 = vunpack.c.l.b16 %v3970
        %v4099 = vunpack.c.l.b16 %v3971
        %v4100 = vunpack.c.l.b16 %v3972
        %v4101 = vunpack.c.l.b16 %v3973
        %v4102 = vunpack.c.l.b16 %v3974
        %v4103 = vunpack.c.l.b16 %v3975
        %v4104 = vunpack.c.l.b16 %v3976
        %v4105 = vunpack.c.l.b16 %v3977
        %v4106 = vunpack.c.l.b16 %v3978
        %v4107 = vunpack.c.l.b16 %v3979
        %v4108 = vunpack.c.l.b16 %v3980
        %v4109 = vunpack.c.l.b16 %v3981
        %v4110 = vunpack.c.l.b16 %v3982
        %v4111 = vpack.c.b16 %v4048, %v4047
        %v4112 = vpack.c.b16 %v4050, %v4049
        %v4113 = vpack.c.b16 %v4052, %v4051
        %v4114 = vpack.c.b16 %v4054, %v4053
        %v4115 = vpack.c.b16 %v4056, %v4055
        %v4116 = vpack.c.b16 %v4058, %v4057
        %v4117 = vpack.c.b16 %v4060, %v4059
        %v4118 = vpack.c.b16 %v4062, %v4061
        %v4119 = vpack.c.b16 %v4064, %v4063
        %v4120 = vpack.c.b16 %v4066, %v4065
        %v4121 = vpack.c.b16 %v4068, %v4067
        %v4122 = vpack.c.b16 %v4070, %v4069
        %v4123 = vpack.c.b16 %v4072, %v4071
        %v4124 = vpack.c.b16 %v4074, %v4073
        %v4125 = vpack.c.b16 %v4076, %v4075
        %v4126 = vpack.c.b16 %v4078, %v4077
        %v4127 = vpack.c.b16 %v4080, %v4079
        %v4128 = vpack.c.b16 %v4082, %v4081
        %v4129 = vpack.c.b16 %v4084, %v4083
        %v4130 = vpack.c.b16 %v4086, %v4085
        %v4131 = vpack.c.b16 %v4088, %v4087
        %v4132 = vpack.c.b16 %v4090, %v4089
        %v4133 = vpack.c.b16 %v4092, %v4091
        %v4134 = vpack.c.b16 %v4094, %v4093
        %v4135 = vpack.c.b16 %v4096, %v4095
        %v4136 = vpack.c.b16 %v4098, %v4097
        %v4137 = vpack.c.b16 %v4100, %v4099
        %v4138 = vpack.c.b16 %v4102, %v4101
        %v4139 = vpack.c.b16 %v4104, %v4103
        %v4140 = vpack.c.b16 %v4106, %v4105
        %v4141 = vpack.c.b16 %v4108, %v4107
        %v4142 = vpack.c.b16 %v4110, %v4109
        %v4191 = vunpack.c.l.b16 %v3839
        %v4192 = vunpack.c.l.b16 %v3840
        %v4193 = vunpack.c.l.b16 %v3841
        %v4194 = vunpack.c.l.b16 %v3842
        %v4195 = vunpack.c.l.b16 %v3843
        %v4196 = vunpack.c.l.b16 %v3844
        %v4197 = vunpack.c.l.b16 %v3845
        %v4198 = vunpack.c.l.b16 %v3846
        %v4199 = vunpack.c.l.b16 %v3847
        %v4200 = vunpack.c.l.b16 %v3848
        %v4201 = vunpack.c.l.b16 %v3849
        %v4202 = vunpack.c.l.b16 %v3850
        %v4203 = vunpack.c.l.b16 %v3851
        %v4204 = vunpack.c.l.b16 %v3852
        %v4205 = vunpack.c.l.b16 %v3853
        %v4206 = vunpack.c.l.b16 %v3854
        %v4207 = vpack.c.b16 %v4192, %v4191
        %v4208 = vpack.c.b16 %v4194, %v4193
        %v4209 = vpack.c.b16 %v4196, %v4195
        %v4210 = vpack.c.b16 %v4198, %v4197
        %v4211 = vpack.c.b16 %v4200, %v4199
        %v4212 = vpack.c.b16 %v4202, %v4201
        %v4213 = vpack.c.b16 %v4204, %v4203
        %v4214 = vpack.c.b16 %v4206, %v4205
        %4223 = vmatpush.bf16.msra.mxu0 %v4214
        %4224 = vmatpush.bf16.msra.mxu0 %v4213
        %4225 = vmatpush.bf16.msra.mxu0 %v4212
        %4226 = vmatpush.bf16.msra.mxu0 %v4211
        %4227 = vmatpush.bf16.msra.mxu0 %v4210
        %4228 = vmatpush.bf16.msra.mxu0 %v4209
        %4229 = vmatpush.bf16.msra.mxu0 %v4208
        %4230 = vmatpush.bf16.msra.mxu0 %v4207
        %4231 = vmatmul.bf16.gmra.mxu0 %v4111
        %v4232 = vpop.f32.mrf.mxu0
        %v4233 = vadd.f32 0.0, %v4232
        %v4234 = vpop.f32.mrf.mxu0
        %v4235 = vadd.f32 0.0, %v4234
        %4236 = vmatmul.bf16.gmra.mxu0 %v4112
        %v4237 = vpop.f32.mrf.mxu0
        %v4238 = vadd.f32 0.0, %v4237
        %v4239 = vpop.f32.mrf.mxu0
        %v4240 = vadd.f32 0.0, %v4239
        %4241 = vmatmul.bf16.gmra.mxu0 %v4113
        %v4242 = vpop.f32.mrf.mxu0
        %v4243 = vadd.f32 0.0, %v4242
        %v4244 = vpop.f32.mrf.mxu0
        %v4245 = vadd.f32 0.0, %v4244
        %4246 = vmatmul.bf16.gmra.mxu0 %v4114
        %v4247 = vpop.f32.mrf.mxu0
        %v4248 = vadd.f32 0.0, %v4247
        %v4249 = vpop.f32.mrf.mxu0
        %v4250 = vadd.f32 0.0, %v4249
        %4251 = vmatmul.bf16.gmra.mxu0 %v4115
        %v4252 = vpop.f32.mrf.mxu0
        %v4253 = vadd.f32 0.0, %v4252
        %v4254 = vpop.f32.mrf.mxu0
        %v4255 = vadd.f32 0.0, %v4254
        %4256 = vmatmul.bf16.gmra.mxu0 %v4116
        %v4257 = vpop.f32.mrf.mxu0
        %v4258 = vadd.f32 0.0, %v4257
        %v4259 = vpop.f32.mrf.mxu0
        %v4260 = vadd.f32 0.0, %v4259
        %4261 = vmatmul.bf16.gmra.mxu0 %v4117
        %v4262 = vpop.f32.mrf.mxu0
        %v4263 = vadd.f32 0.0, %v4262
        %v4264 = vpop.f32.mrf.mxu0
        %v4265 = vadd.f32 0.0, %v4264
        %4266 = vmatmul.bf16.gmra.mxu0 %v4118
        %v4267 = vpop.f32.mrf.mxu0
        %v4268 = vadd.f32 0.0, %v4267
        %v4269 = vpop.f32.mrf.mxu0
        %v4270 = vadd.f32 0.0, %v4269
        %4271 = vmatmul.bf16.gmra.mxu0 %v4119
        %v4272 = vpop.f32.mrf.mxu0
        %v4273 = vadd.f32 0.0, %v4272
        %v4274 = vpop.f32.mrf.mxu0
        %v4275 = vadd.f32 0.0, %v4274
        %4276 = vmatmul.bf16.gmra.mxu0 %v4120
        %v4277 = vpop.f32.mrf.mxu0
        %v4278 = vadd.f32 0.0, %v4277
        %v4279 = vpop.f32.mrf.mxu0
        %v4280 = vadd.f32 0.0, %v4279
        %4281 = vmatmul.bf16.gmra.mxu0 %v4121
        %v4282 = vpop.f32.mrf.mxu0
        %v4283 = vadd.f32 0.0, %v4282
        %v4284 = vpop.f32.mrf.mxu0
        %v4285 = vadd.f32 0.0, %v4284
        %4286 = vmatmul.bf16.gmra.mxu0 %v4122
        %v4287 = vpop.f32.mrf.mxu0
        %v4288 = vadd.f32 0.0, %v4287
        %v4289 = vpop.f32.mrf.mxu0
        %v4290 = vadd.f32 0.0, %v4289
        %4291 = vmatmul.bf16.gmra.mxu0 %v4123
        %v4292 = vpop.f32.mrf.mxu0
        %v4293 = vadd.f32 0.0, %v4292
        %v4294 = vpop.f32.mrf.mxu0
        %v4295 = vadd.f32 0.0, %v4294
        %4296 = vmatmul.bf16.gmra.mxu0 %v4124
        %v4297 = vpop.f32.mrf.mxu0
        %v4298 = vadd.f32 0.0, %v4297
        %v4299 = vpop.f32.mrf.mxu0
        %v4300 = vadd.f32 0.0, %v4299
        %4301 = vmatmul.bf16.gmra.mxu0 %v4125
        %v4302 = vpop.f32.mrf.mxu0
        %v4303 = vadd.f32 0.0, %v4302
        %v4304 = vpop.f32.mrf.mxu0
        %v4305 = vadd.f32 0.0, %v4304
        %4306 = vmatmul.bf16.gmra.mxu0 %v4126
        %v4307 = vpop.f32.mrf.mxu0
        %v4308 = vadd.f32 0.0, %v4307
        %v4309 = vpop.f32.mrf.mxu0
        %v4310 = vadd.f32 0.0, %v4309
        %4311 = vmatmul.bf16.gmra.mxu0 %v4127
        %v4312 = vpop.f32.mrf.mxu0
        %v4313 = vadd.f32 0.0, %v4312
        %v4314 = vpop.f32.mrf.mxu0
        %v4315 = vadd.f32 0.0, %v4314
        %4316 = vmatmul.bf16.gmra.mxu0 %v4128
        %v4317 = vpop.f32.mrf.mxu0
        %v4318 = vadd.f32 0.0, %v4317
        %v4319 = vpop.f32.mrf.mxu0
        %v4320 = vadd.f32 0.0, %v4319
        %4321 = vmatmul.bf16.gmra.mxu0 %v4129
        %v4322 = vpop.f32.mrf.mxu0
        %v4323 = vadd.f32 0.0, %v4322
        %v4324 = vpop.f32.mrf.mxu0
        %v4325 = vadd.f32 0.0, %v4324
        %4326 = vmatmul.bf16.gmra.mxu0 %v4130
        %v4327 = vpop.f32.mrf.mxu0
        %v4328 = vadd.f32 0.0, %v4327
        %v4329 = vpop.f32.mrf.mxu0
        %v4330 = vadd.f32 0.0, %v4329
        %4331 = vmatmul.bf16.gmra.mxu0 %v4131
        %v4332 = vpop.f32.mrf.mxu0
        %v4333 = vadd.f32 0.0, %v4332
        %v4334 = vpop.f32.mrf.mxu0
        %v4335 = vadd.f32 0.0, %v4334
        %4336 = vmatmul.bf16.gmra.mxu0 %v4132
        %v4337 = vpop.f32.mrf.mxu0
        %v4338 = vadd.f32 0.0, %v4337
        %v4339 = vpop.f32.mrf.mxu0
        %v4340 = vadd.f32 0.0, %v4339
        %4341 = vmatmul.bf16.gmra.mxu0 %v4133
        %v4342 = vpop.f32.mrf.mxu0
        %v4343 = vadd.f32 0.0, %v4342
        %v4344 = vpop.f32.mrf.mxu0
        %v4345 = vadd.f32 0.0, %v4344
        %4346 = vmatmul.bf16.gmra.mxu0 %v4134
        %v4347 = vpop.f32.mrf.mxu0
        %v4348 = vadd.f32 0.0, %v4347
        %v4349 = vpop.f32.mrf.mxu0
        %v4350 = vadd.f32 0.0, %v4349
        %4351 = vmatmul.bf16.gmra.mxu0 %v4135
        %v4352 = vpop.f32.mrf.mxu0
        %v4353 = vadd.f32 0.0, %v4352
        %v4354 = vpop.f32.mrf.mxu0
        %v4355 = vadd.f32 0.0, %v4354
        %4356 = vmatmul.bf16.gmra.mxu0 %v4136
        %v4357 = vpop.f32.mrf.mxu0
        %v4358 = vadd.f32 0.0, %v4357
        %v4359 = vpop.f32.mrf.mxu0
        %v4360 = vadd.f32 0.0, %v4359
        %4361 = vmatmul.bf16.gmra.mxu0 %v4137
        %v4362 = vpop.f32.mrf.mxu0
        %v4363 = vadd.f32 0.0, %v4362
        %v4364 = vpop.f32.mrf.mxu0
        %v4365 = vadd.f32 0.0, %v4364
        %4366 = vmatmul.bf16.gmra.mxu0 %v4138
        %v4367 = vpop.f32.mrf.mxu0
        %v4368 = vadd.f32 0.0, %v4367
        %v4369 = vpop.f32.mrf.mxu0
        %v4370 = vadd.f32 0.0, %v4369
        %4371 = vmatmul.bf16.gmra.mxu0 %v4139
        %v4372 = vpop.f32.mrf.mxu0
        %v4373 = vadd.f32 0.0, %v4372
        %v4374 = vpop.f32.mrf.mxu0
        %v4375 = vadd.f32 0.0, %v4374
        %4376 = vmatmul.bf16.gmra.mxu0 %v4140
        %v4377 = vpop.f32.mrf.mxu0
        %v4378 = vadd.f32 0.0, %v4377
        %v4379 = vpop.f32.mrf.mxu0
        %v4380 = vadd.f32 0.0, %v4379
        %4381 = vmatmul.bf16.gmra.mxu0 %v4141
        %v4382 = vpop.f32.mrf.mxu0
        %v4383 = vadd.f32 0.0, %v4382
        %v4384 = vpop.f32.mrf.mxu0
        %v4385 = vadd.f32 0.0, %v4384
        %4386 = vmatmul.bf16.gmra.mxu0 %v4142
        %v4387 = vpop.f32.mrf.mxu0
        %v4388 = vadd.f32 0.0, %v4387
        %v4389 = vpop.f32.mrf.mxu0
        %v4390 = vadd.f32 0.0, %v4389
        %4391 = vdwg.mxu0
        %v4456 = vunpack.c.l.b16 %v3855
        %v4457 = vunpack.c.l.b16 %v3856
        %v4458 = vunpack.c.l.b16 %v3857
        %v4459 = vunpack.c.l.b16 %v3858
        %v4460 = vunpack.c.l.b16 %v3859
        %v4461 = vunpack.c.l.b16 %v3860
        %v4462 = vunpack.c.l.b16 %v3861
        %v4463 = vunpack.c.l.b16 %v3862
        %v4464 = vunpack.c.l.b16 %v3863
        %v4465 = vunpack.c.l.b16 %v3864
        %v4466 = vunpack.c.l.b16 %v3865
        %v4467 = vunpack.c.l.b16 %v3866
        %v4468 = vunpack.c.l.b16 %v3867
        %v4469 = vunpack.c.l.b16 %v3868
        %v4470 = vunpack.c.l.b16 %v3869
        %v4471 = vunpack.c.l.b16 %v3870
        %v4472 = vunpack.c.l.b16 %v3871
        %v4473 = vunpack.c.l.b16 %v3872
        %v4474 = vunpack.c.l.b16 %v3873
        %v4475 = vunpack.c.l.b16 %v3874
        %v4476 = vunpack.c.l.b16 %v3875
        %v4477 = vunpack.c.l.b16 %v3876
        %v4478 = vunpack.c.l.b16 %v3877
        %v4479 = vunpack.c.l.b16 %v3878
        %v4480 = vunpack.c.l.b16 %v3879
        %v4481 = vunpack.c.l.b16 %v3880
        %v4482 = vunpack.c.l.b16 %v3881
        %v4483 = vunpack.c.l.b16 %v3882
        %v4484 = vunpack.c.l.b16 %v3883
        %v4485 = vunpack.c.l.b16 %v3884
        %v4486 = vunpack.c.l.b16 %v3885
        %v4487 = vunpack.c.l.b16 %v3886
        %v4488 = vunpack.c.l.b16 %v3887
        %v4489 = vunpack.c.l.b16 %v3888
        %v4490 = vunpack.c.l.b16 %v3889
        %v4491 = vunpack.c.l.b16 %v3890
        %v4492 = vunpack.c.l.b16 %v3891
        %v4493 = vunpack.c.l.b16 %v3892
        %v4494 = vunpack.c.l.b16 %v3893
        %v4495 = vunpack.c.l.b16 %v3894
        %v4496 = vunpack.c.l.b16 %v3895
        %v4497 = vunpack.c.l.b16 %v3896
        %v4498 = vunpack.c.l.b16 %v3897
        %v4499 = vunpack.c.l.b16 %v3898
        %v4500 = vunpack.c.l.b16 %v3899
        %v4501 = vunpack.c.l.b16 %v3900
        %v4502 = vunpack.c.l.b16 %v3901
        %v4503 = vunpack.c.l.b16 %v3902
        %v4504 = vunpack.c.l.b16 %v3903
        %v4505 = vunpack.c.l.b16 %v3904
        %v4506 = vunpack.c.l.b16 %v3905
        %v4507 = vunpack.c.l.b16 %v3906
        %v4508 = vunpack.c.l.b16 %v3907
        %v4509 = vunpack.c.l.b16 %v3908
        %v4510 = vunpack.c.l.b16 %v3909
        %v4511 = vunpack.c.l.b16 %v3910
        %v4512 = vunpack.c.l.b16 %v3911
        %v4513 = vunpack.c.l.b16 %v3912
        %v4514 = vunpack.c.l.b16 %v3913
        %v4515 = vunpack.c.l.b16 %v3914
        %v4516 = vunpack.c.l.b16 %v3915
        %v4517 = vunpack.c.l.b16 %v3916
        %v4518 = vunpack.c.l.b16 %v3917
        %v4519 = vunpack.c.l.b16 %v3918
        %v4520 = vpack.c.b16 %v4457, %v4456
        %v4521 = vpack.c.b16 %v4459, %v4458
        %v4522 = vpack.c.b16 %v4461, %v4460
        %v4523 = vpack.c.b16 %v4463, %v4462
        %v4524 = vpack.c.b16 %v4465, %v4464
        %v4525 = vpack.c.b16 %v4467, %v4466
        %v4526 = vpack.c.b16 %v4469, %v4468
        %v4527 = vpack.c.b16 %v4471, %v4470
        %v4528 = vpack.c.b16 %v4473, %v4472
        %v4529 = vpack.c.b16 %v4475, %v4474
        %v4530 = vpack.c.b16 %v4477, %v4476
        %v4531 = vpack.c.b16 %v4479, %v4478
        %v4532 = vpack.c.b16 %v4481, %v4480
        %v4533 = vpack.c.b16 %v4483, %v4482
        %v4534 = vpack.c.b16 %v4485, %v4484
        %v4535 = vpack.c.b16 %v4487, %v4486
        %v4536 = vpack.c.b16 %v4489, %v4488
        %v4537 = vpack.c.b16 %v4491, %v4490
        %v4538 = vpack.c.b16 %v4493, %v4492
        %v4539 = vpack.c.b16 %v4495, %v4494
        %v4540 = vpack.c.b16 %v4497, %v4496
        %v4541 = vpack.c.b16 %v4499, %v4498
        %v4542 = vpack.c.b16 %v4501, %v4500
        %v4543 = vpack.c.b16 %v4503, %v4502
        %v4544 = vpack.c.b16 %v4505, %v4504
        %v4545 = vpack.c.b16 %v4507, %v4506
        %v4546 = vpack.c.b16 %v4509, %v4508
        %v4547 = vpack.c.b16 %v4511, %v4510
        %v4548 = vpack.c.b16 %v4513, %v4512
        %v4549 = vpack.c.b16 %v4515, %v4514
        %v4550 = vpack.c.b16 %v4517, %v4516
        %v4551 = vpack.c.b16 %v4519, %v4518
        %v4600 = vunpack.c.l.b16 %v3823
        %v4601 = vunpack.c.l.b16 %v3824
        %v4602 = vunpack.c.l.b16 %v3825
        %v4603 = vunpack.c.l.b16 %v3826
        %v4604 = vunpack.c.l.b16 %v3827
        %v4605 = vunpack.c.l.b16 %v3828
        %v4606 = vunpack.c.l.b16 %v3829
        %v4607 = vunpack.c.l.b16 %v3830
        %v4608 = vunpack.c.l.b16 %v3831
        %v4609 = vunpack.c.l.b16 %v3832
        %v4610 = vunpack.c.l.b16 %v3833
        %v4611 = vunpack.c.l.b16 %v3834
        %v4612 = vunpack.c.l.b16 %v3835
        %v4613 = vunpack.c.l.b16 %v3836
        %v4614 = vunpack.c.l.b16 %v3837
        %v4615 = vunpack.c.l.b16 %v3838
        %v4616 = vpack.c.b16 %v4601, %v4600
        %v4617 = vpack.c.b16 %v4603, %v4602
        %v4618 = vpack.c.b16 %v4605, %v4604
        %v4619 = vpack.c.b16 %v4607, %v4606
        %v4620 = vpack.c.b16 %v4609, %v4608
        %v4621 = vpack.c.b16 %v4611, %v4610
        %v4622 = vpack.c.b16 %v4613, %v4612
        %v4623 = vpack.c.b16 %v4615, %v4614
        %4632 = vmatpush.bf16.msra.mxu0 %v4623
        %4633 = vmatpush.bf16.msra.mxu0 %v4622
        %4634 = vmatpush.bf16.msra.mxu0 %v4621
        %4635 = vmatpush.bf16.msra.mxu0 %v4620
        %4636 = vmatpush.bf16.msra.mxu0 %v4619
        %4637 = vmatpush.bf16.msra.mxu0 %v4618
        %4638 = vmatpush.bf16.msra.mxu0 %v4617
        %4639 = vmatpush.bf16.msra.mxu0 %v4616
        %4640 = vmatmul.bf16.gmra.mxu0 %v4520
        %v4641 = vpop.f32.mrf.mxu0
        %v4642 = vadd.f32 %v4233, %v4641
        %v4643 = vpop.f32.mrf.mxu0
        %v4644 = vadd.f32 %v4235, %v4643
        %4645 = vmatmul.bf16.gmra.mxu0 %v4521
        %v4646 = vpop.f32.mrf.mxu0
        %v4647 = vadd.f32 %v4238, %v4646
        %v4648 = vpop.f32.mrf.mxu0
        %v4649 = vadd.f32 %v4240, %v4648
        %4650 = vmatmul.bf16.gmra.mxu0 %v4522
        %v4651 = vpop.f32.mrf.mxu0
        %v4652 = vadd.f32 %v4243, %v4651
        %v4653 = vpop.f32.mrf.mxu0
        %v4654 = vadd.f32 %v4245, %v4653
        %4655 = vmatmul.bf16.gmra.mxu0 %v4523
        %v4656 = vpop.f32.mrf.mxu0
        %v4657 = vadd.f32 %v4248, %v4656
        %v4658 = vpop.f32.mrf.mxu0
        %v4659 = vadd.f32 %v4250, %v4658
        %4660 = vmatmul.bf16.gmra.mxu0 %v4524
        %v4661 = vpop.f32.mrf.mxu0
        %v4662 = vadd.f32 %v4253, %v4661
        %v4663 = vpop.f32.mrf.mxu0
        %v4664 = vadd.f32 %v4255, %v4663
        %4665 = vmatmul.bf16.gmra.mxu0 %v4525
        %v4666 = vpop.f32.mrf.mxu0
        %v4667 = vadd.f32 %v4258, %v4666
        %v4668 = vpop.f32.mrf.mxu0
        %v4669 = vadd.f32 %v4260, %v4668
        %4670 = vmatmul.bf16.gmra.mxu0 %v4526
        %v4671 = vpop.f32.mrf.mxu0
        %v4672 = vadd.f32 %v4263, %v4671
        %v4673 = vpop.f32.mrf.mxu0
        %v4674 = vadd.f32 %v4265, %v4673
        %4675 = vmatmul.bf16.gmra.mxu0 %v4527
        %v4676 = vpop.f32.mrf.mxu0
        %v4677 = vadd.f32 %v4268, %v4676
        %v4678 = vpop.f32.mrf.mxu0
        %v4679 = vadd.f32 %v4270, %v4678
        %4680 = vmatmul.bf16.gmra.mxu0 %v4528
        %v4681 = vpop.f32.mrf.mxu0
        %v4682 = vadd.f32 %v4273, %v4681
        %v4683 = vpop.f32.mrf.mxu0
        %v4684 = vadd.f32 %v4275, %v4683
        %4685 = vmatmul.bf16.gmra.mxu0 %v4529
        %v4686 = vpop.f32.mrf.mxu0
        %v4687 = vadd.f32 %v4278, %v4686
        %v4688 = vpop.f32.mrf.mxu0
        %v4689 = vadd.f32 %v4280, %v4688
        %4690 = vmatmul.bf16.gmra.mxu0 %v4530
        %v4691 = vpop.f32.mrf.mxu0
        %v4692 = vadd.f32 %v4283, %v4691
        %v4693 = vpop.f32.mrf.mxu0
        %v4694 = vadd.f32 %v4285, %v4693
        %4695 = vmatmul.bf16.gmra.mxu0 %v4531
        %v4696 = vpop.f32.mrf.mxu0
        %v4697 = vadd.f32 %v4288, %v4696
        %v4698 = vpop.f32.mrf.mxu0
        %v4699 = vadd.f32 %v4290, %v4698
        %4700 = vmatmul.bf16.gmra.mxu0 %v4532
        %v4701 = vpop.f32.mrf.mxu0
        %v4702 = vadd.f32 %v4293, %v4701
        %v4703 = vpop.f32.mrf.mxu0
        %v4704 = vadd.f32 %v4295, %v4703
        %4705 = vmatmul.bf16.gmra.mxu0 %v4533
        %v4706 = vpop.f32.mrf.mxu0
        %v4707 = vadd.f32 %v4298, %v4706
        %v4708 = vpop.f32.mrf.mxu0
        %v4709 = vadd.f32 %v4300, %v4708
        %4710 = vmatmul.bf16.gmra.mxu0 %v4534
        %v4711 = vpop.f32.mrf.mxu0
        %v4712 = vadd.f32 %v4303, %v4711
        %v4713 = vpop.f32.mrf.mxu0
        %v4714 = vadd.f32 %v4305, %v4713
        %4715 = vmatmul.bf16.gmra.mxu0 %v4535
        %v4716 = vpop.f32.mrf.mxu0
        %v4717 = vadd.f32 %v4308, %v4716
        %v4718 = vpop.f32.mrf.mxu0
        %v4719 = vadd.f32 %v4310, %v4718
        %4720 = vmatmul.bf16.gmra.mxu0 %v4536
        %v4721 = vpop.f32.mrf.mxu0
        %v4722 = vadd.f32 %v4313, %v4721
        %v4723 = vpop.f32.mrf.mxu0
        %v4724 = vadd.f32 %v4315, %v4723
        %4725 = vmatmul.bf16.gmra.mxu0 %v4537
        %v4726 = vpop.f32.mrf.mxu0
        %v4727 = vadd.f32 %v4318, %v4726
        %v4728 = vpop.f32.mrf.mxu0
        %v4729 = vadd.f32 %v4320, %v4728
        %4730 = vmatmul.bf16.gmra.mxu0 %v4538
        %v4731 = vpop.f32.mrf.mxu0
        %v4732 = vadd.f32 %v4323, %v4731
        %v4733 = vpop.f32.mrf.mxu0
        %v4734 = vadd.f32 %v4325, %v4733
        %4735 = vmatmul.bf16.gmra.mxu0 %v4539
        %v4736 = vpop.f32.mrf.mxu0
        %v4737 = vadd.f32 %v4328, %v4736
        %v4738 = vpop.f32.mrf.mxu0
        %v4739 = vadd.f32 %v4330, %v4738
        %4740 = vmatmul.bf16.gmra.mxu0 %v4540
        %v4741 = vpop.f32.mrf.mxu0
        %v4742 = vadd.f32 %v4333, %v4741
        %v4743 = vpop.f32.mrf.mxu0
        %v4744 = vadd.f32 %v4335, %v4743
        %4745 = vmatmul.bf16.gmra.mxu0 %v4541
        %v4746 = vpop.f32.mrf.mxu0
        %v4747 = vadd.f32 %v4338, %v4746
        %v4748 = vpop.f32.mrf.mxu0
        %v4749 = vadd.f32 %v4340, %v4748
        %4750 = vmatmul.bf16.gmra.mxu0 %v4542
        %v4751 = vpop.f32.mrf.mxu0
        %v4752 = vadd.f32 %v4343, %v4751
        %v4753 = vpop.f32.mrf.mxu0
        %v4754 = vadd.f32 %v4345, %v4753
        %4755 = vmatmul.bf16.gmra.mxu0 %v4543
        %v4756 = vpop.f32.mrf.mxu0
        %v4757 = vadd.f32 %v4348, %v4756
        %v4758 = vpop.f32.mrf.mxu0
        %v4759 = vadd.f32 %v4350, %v4758
        %4760 = vmatmul.bf16.gmra.mxu0 %v4544
        %v4761 = vpop.f32.mrf.mxu0
        %v4762 = vadd.f32 %v4353, %v4761
        %v4763 = vpop.f32.mrf.mxu0
        %v4764 = vadd.f32 %v4355, %v4763
        %4765 = vmatmul.bf16.gmra.mxu0 %v4545
        %v4766 = vpop.f32.mrf.mxu0
        %v4767 = vadd.f32 %v4358, %v4766
        %v4768 = vpop.f32.mrf.mxu0
        %v4769 = vadd.f32 %v4360, %v4768
        %4770 = vmatmul.bf16.gmra.mxu0 %v4546
        %v4771 = vpop.f32.mrf.mxu0
        %v4772 = vadd.f32 %v4363, %v4771
        %v4773 = vpop.f32.mrf.mxu0
        %v4774 = vadd.f32 %v4365, %v4773
        %4775 = vmatmul.bf16.gmra.mxu0 %v4547
        %v4776 = vpop.f32.mrf.mxu0
        %v4777 = vadd.f32 %v4368, %v4776
        %v4778 = vpop.f32.mrf.mxu0
        %v4779 = vadd.f32 %v4370, %v4778
        %4780 = vmatmul.bf16.gmra.mxu0 %v4548
        %v4781 = vpop.f32.mrf.mxu0
        %v4782 = vadd.f32 %v4373, %v4781
        %v4783 = vpop.f32.mrf.mxu0
        %v4784 = vadd.f32 %v4375, %v4783
        %4785 = vmatmul.bf16.gmra.mxu0 %v4549
        %v4786 = vpop.f32.mrf.mxu0
        %v4787 = vadd.f32 %v4378, %v4786
        %v4788 = vpop.f32.mrf.mxu0
        %v4789 = vadd.f32 %v4380, %v4788
        %4790 = vmatmul.bf16.gmra.mxu0 %v4550
        %v4791 = vpop.f32.mrf.mxu0
        %v4792 = vadd.f32 %v4383, %v4791
        %v4793 = vpop.f32.mrf.mxu0
        %v4794 = vadd.f32 %v4385, %v4793
        %4795 = vmatmul.bf16.gmra.mxu0 %v4551
        %v4796 = vpop.f32.mrf.mxu0
        %v4797 = vadd.f32 %v4388, %v4796
        %v4798 = vpop.f32.mrf.mxu0
        %v4799 = vadd.f32 %v4390, %v4798
        %4800 = vdwg.mxu0
        %v4801 = vld [vmem:[%s6] sm:$0xff]
        %v4802 = vld [vmem:[%s6 + $0x8] sm:$0xff]
        %v4803 = vld [vmem:[%s6 + $0x10] sm:$0xff]
        %v4804 = vld [vmem:[%s6 + $0x18] sm:$0xff]
        %v4805 = vld [vmem:[%s6 + $0x20] sm:$0xff]
        %v4806 = vld [vmem:[%s6 + $0x28] sm:$0xff]
        %v4807 = vld [vmem:[%s6 + $0x30] sm:$0xff]
        %v4808 = vld [vmem:[%s6 + $0x38] sm:$0xff]
        %v4809 = vld [vmem:[%s6 + $0x40] sm:$0xff]
        %v4810 = vld [vmem:[%s6 + $0x48] sm:$0xff]
        %v4811 = vld [vmem:[%s6 + $0x50] sm:$0xff]
        %v4812 = vld [vmem:[%s6 + $0x58] sm:$0xff]
        %v4813 = vld [vmem:[%s6 + $0x60] sm:$0xff]
        %v4814 = vld [vmem:[%s6 + $0x68] sm:$0xff]
        %v4815 = vld [vmem:[%s6 + $0x70] sm:$0xff]
        %v4816 = vld [vmem:[%s6 + $0x78] sm:$0xff]
        %v4817 = vld [vmem:[%s6 + $0x80] sm:$0xff]
        %v4818 = vld [vmem:[%s6 + $0x88] sm:$0xff]
        %v4819 = vld [vmem:[%s6 + $0x90] sm:$0xff]
        %v4820 = vld [vmem:[%s6 + $0x98] sm:$0xff]
        %v4821 = vld [vmem:[%s6 + $0xa0] sm:$0xff]
        %v4822 = vld [vmem:[%s6 + $0xa8] sm:$0xff]
        %v4823 = vld [vmem:[%s6 + $0xb0] sm:$0xff]
        %v4824 = vld [vmem:[%s6 + $0xb8] sm:$0xff]
        %v4825 = vld [vmem:[%s6 + $0xc0] sm:$0xff]
        %v4826 = vld [vmem:[%s6 + $0xc8] sm:$0xff]
        %v4827 = vld [vmem:[%s6 + $0xd0] sm:$0xff]
        %v4828 = vld [vmem:[%s6 + $0xd8] sm:$0xff]
        %v4829 = vld [vmem:[%s6 + $0xe0] sm:$0xff]
        %v4830 = vld [vmem:[%s6 + $0xe8] sm:$0xff]
        %v4831 = vld [vmem:[%s6 + $0xf0] sm:$0xff]
        %v4832 = vld [vmem:[%s6 + $0xf8] sm:$0xff]
        %v4833 = vld [vmem:[%s6 + $0x100] sm:$0xff]
        %v4834 = vld [vmem:[%s6 + $0x108] sm:$0xff]
        %v4835 = vld [vmem:[%s6 + $0x110] sm:$0xff]
        %v4836 = vld [vmem:[%s6 + $0x118] sm:$0xff]
        %v4837 = vld [vmem:[%s6 + $0x120] sm:$0xff]
        %v4838 = vld [vmem:[%s6 + $0x128] sm:$0xff]
        %v4839 = vld [vmem:[%s6 + $0x130] sm:$0xff]
        %v4840 = vld [vmem:[%s6 + $0x138] sm:$0xff]
        %v4841 = vld [vmem:[%s6 + $0x140] sm:$0xff]
        %v4842 = vld [vmem:[%s6 + $0x148] sm:$0xff]
        %v4843 = vld [vmem:[%s6 + $0x150] sm:$0xff]
        %v4844 = vld [vmem:[%s6 + $0x158] sm:$0xff]
        %v4845 = vld [vmem:[%s6 + $0x160] sm:$0xff]
        %v4846 = vld [vmem:[%s6 + $0x168] sm:$0xff]
        %v4847 = vld [vmem:[%s6 + $0x170] sm:$0xff]
        %v4848 = vld [vmem:[%s6 + $0x178] sm:$0xff]
        %v4849 = vld [vmem:[%s6 + $0x180] sm:$0xff]
        %v4850 = vld [vmem:[%s6 + $0x188] sm:$0xff]
        %v4851 = vld [vmem:[%s6 + $0x190] sm:$0xff]
        %v4852 = vld [vmem:[%s6 + $0x198] sm:$0xff]
        %v4853 = vld [vmem:[%s6 + $0x1a0] sm:$0xff]
        %v4854 = vld [vmem:[%s6 + $0x1a8] sm:$0xff]
        %v4855 = vld [vmem:[%s6 + $0x1b0] sm:$0xff]
        %v4856 = vld [vmem:[%s6 + $0x1b8] sm:$0xff]
        %v4857 = vld [vmem:[%s6 + $0x1c0] sm:$0xff]
        %v4858 = vld [vmem:[%s6 + $0x1c8] sm:$0xff]
        %v4859 = vld [vmem:[%s6 + $0x1d0] sm:$0xff]
        %v4860 = vld [vmem:[%s6 + $0x1d8] sm:$0xff]
        %v4861 = vld [vmem:[%s6 + $0x1e0] sm:$0xff]
        %v4862 = vld [vmem:[%s6 + $0x1e8] sm:$0xff]
        %v4863 = vld [vmem:[%s6 + $0x1f0] sm:$0xff]
        %v4864 = vld [vmem:[%s6 + $0x1f8] sm:$0xff]
        %4866 = vset.pattern.permute.xlu0 9
        %4867 = vperm.xlu0 %4866, %v4801
        %v4868 = vpop.permute.xlu0 %4867
        %4871 = vset.pattern.permute.xlu0 9
        %4872 = vperm.xlu0 %4871, %v4802
        %v4873 = vpop.permute.xlu0 %4872
        %4876 = vset.pattern.permute.xlu0 9
        %4877 = vperm.xlu0 %4876, %v4803
        %v4878 = vpop.permute.xlu0 %4877
        %4881 = vset.pattern.permute.xlu0 9
        %4882 = vperm.xlu0 %4881, %v4804
        %v4883 = vpop.permute.xlu0 %4882
        %4886 = vset.pattern.permute.xlu0 9
        %4887 = vperm.xlu0 %4886, %v4805
        %v4888 = vpop.permute.xlu0 %4887
        %4891 = vset.pattern.permute.xlu0 9
        %4892 = vperm.xlu0 %4891, %v4806
        %v4893 = vpop.permute.xlu0 %4892
        %4896 = vset.pattern.permute.xlu0 9
        %4897 = vperm.xlu0 %4896, %v4807
        %v4898 = vpop.permute.xlu0 %4897
        %4901 = vset.pattern.permute.xlu0 9
        %4902 = vperm.xlu0 %4901, %v4808
        %v4903 = vpop.permute.xlu0 %4902
        %4906 = vset.pattern.permute.xlu0 9
        %4907 = vperm.xlu0 %4906, %v4809
        %v4908 = vpop.permute.xlu0 %4907
        %4911 = vset.pattern.permute.xlu0 9
        %4912 = vperm.xlu0 %4911, %v4810
        %v4913 = vpop.permute.xlu0 %4912
        %4916 = vset.pattern.permute.xlu0 9
        %4917 = vperm.xlu0 %4916, %v4811
        %v4918 = vpop.permute.xlu0 %4917
        %4921 = vset.pattern.permute.xlu0 9
        %4922 = vperm.xlu0 %4921, %v4812
        %v4923 = vpop.permute.xlu0 %4922
        %4926 = vset.pattern.permute.xlu0 9
        %4927 = vperm.xlu0 %4926, %v4813
        %v4928 = vpop.permute.xlu0 %4927
        %4931 = vset.pattern.permute.xlu0 9
        %4932 = vperm.xlu0 %4931, %v4814
        %v4933 = vpop.permute.xlu0 %4932
        %4936 = vset.pattern.permute.xlu0 9
        %4937 = vperm.xlu0 %4936, %v4815
        %v4938 = vpop.permute.xlu0 %4937
        %4941 = vset.pattern.permute.xlu0 9
        %4942 = vperm.xlu0 %4941, %v4816
        %v4943 = vpop.permute.xlu0 %4942
        %4946 = vset.pattern.permute.xlu0 9
        %4947 = vperm.xlu0 %4946, %v4817
        %v4948 = vpop.permute.xlu0 %4947
        %4951 = vset.pattern.permute.xlu0 9
        %4952 = vperm.xlu0 %4951, %v4818
        %v4953 = vpop.permute.xlu0 %4952
        %4956 = vset.pattern.permute.xlu0 9
        %4957 = vperm.xlu0 %4956, %v4819
        %v4958 = vpop.permute.xlu0 %4957
        %4961 = vset.pattern.permute.xlu0 9
        %4962 = vperm.xlu0 %4961, %v4820
        %v4963 = vpop.permute.xlu0 %4962
        %4966 = vset.pattern.permute.xlu0 9
        %4967 = vperm.xlu0 %4966, %v4821
        %v4968 = vpop.permute.xlu0 %4967
        %4971 = vset.pattern.permute.xlu0 9
        %4972 = vperm.xlu0 %4971, %v4822
        %v4973 = vpop.permute.xlu0 %4972
        %4976 = vset.pattern.permute.xlu0 9
        %4977 = vperm.xlu0 %4976, %v4823
        %v4978 = vpop.permute.xlu0 %4977
        %4981 = vset.pattern.permute.xlu0 9
        %4982 = vperm.xlu0 %4981, %v4824
        %v4983 = vpop.permute.xlu0 %4982
        %4986 = vset.pattern.permute.xlu0 9
        %4987 = vperm.xlu0 %4986, %v4825
        %v4988 = vpop.permute.xlu0 %4987
        %4991 = vset.pattern.permute.xlu0 9
        %4992 = vperm.xlu0 %4991, %v4826
        %v4993 = vpop.permute.xlu0 %4992
        %4996 = vset.pattern.permute.xlu0 9
        %4997 = vperm.xlu0 %4996, %v4827
        %v4998 = vpop.permute.xlu0 %4997
        %5001 = vset.pattern.permute.xlu0 9
        %5002 = vperm.xlu0 %5001, %v4828
        %v5003 = vpop.permute.xlu0 %5002
        %5006 = vset.pattern.permute.xlu0 9
        %5007 = vperm.xlu0 %5006, %v4829
        %v5008 = vpop.permute.xlu0 %5007
        %5011 = vset.pattern.permute.xlu0 9
        %5012 = vperm.xlu0 %5011, %v4830
        %v5013 = vpop.permute.xlu0 %5012
        %5016 = vset.pattern.permute.xlu0 9
        %5017 = vperm.xlu0 %5016, %v4831
        %v5018 = vpop.permute.xlu0 %5017
        %5021 = vset.pattern.permute.xlu0 9
        %5022 = vperm.xlu0 %5021, %v4832
        %v5023 = vpop.permute.xlu0 %5022
        %5026 = vset.pattern.permute.xlu0 9
        %5027 = vperm.xlu0 %5026, %v4833
        %v5028 = vpop.permute.xlu0 %5027
        %5031 = vset.pattern.permute.xlu0 9
        %5032 = vperm.xlu0 %5031, %v4834
        %v5033 = vpop.permute.xlu0 %5032
        %5036 = vset.pattern.permute.xlu0 9
        %5037 = vperm.xlu0 %5036, %v4835
        %v5038 = vpop.permute.xlu0 %5037
        %5041 = vset.pattern.permute.xlu0 9
        %5042 = vperm.xlu0 %5041, %v4836
        %v5043 = vpop.permute.xlu0 %5042
        %5046 = vset.pattern.permute.xlu0 9
        %5047 = vperm.xlu0 %5046, %v4837
        %v5048 = vpop.permute.xlu0 %5047
        %5051 = vset.pattern.permute.xlu0 9
        %5052 = vperm.xlu0 %5051, %v4838
        %v5053 = vpop.permute.xlu0 %5052
        %5056 = vset.pattern.permute.xlu0 9
        %5057 = vperm.xlu0 %5056, %v4839
        %v5058 = vpop.permute.xlu0 %5057
        %5061 = vset.pattern.permute.xlu0 9
        %5062 = vperm.xlu0 %5061, %v4840
        %v5063 = vpop.permute.xlu0 %5062
        %5066 = vset.pattern.permute.xlu0 9
        %5067 = vperm.xlu0 %5066, %v4841
        %v5068 = vpop.permute.xlu0 %5067
        %5071 = vset.pattern.permute.xlu0 9
        %5072 = vperm.xlu0 %5071, %v4842
        %v5073 = vpop.permute.xlu0 %5072
        %5076 = vset.pattern.permute.xlu0 9
        %5077 = vperm.xlu0 %5076, %v4843
        %v5078 = vpop.permute.xlu0 %5077
        %5081 = vset.pattern.permute.xlu0 9
        %5082 = vperm.xlu0 %5081, %v4844
        %v5083 = vpop.permute.xlu0 %5082
        %5086 = vset.pattern.permute.xlu0 9
        %5087 = vperm.xlu0 %5086, %v4845
        %v5088 = vpop.permute.xlu0 %5087
        %5091 = vset.pattern.permute.xlu0 9
        %5092 = vperm.xlu0 %5091, %v4846
        %v5093 = vpop.permute.xlu0 %5092
        %5096 = vset.pattern.permute.xlu0 9
        %5097 = vperm.xlu0 %5096, %v4847
        %v5098 = vpop.permute.xlu0 %5097
        %5101 = vset.pattern.permute.xlu0 9
        %5102 = vperm.xlu0 %5101, %v4848
        %v5103 = vpop.permute.xlu0 %5102
        %5106 = vset.pattern.permute.xlu0 9
        %5107 = vperm.xlu0 %5106, %v4849
        %v5108 = vpop.permute.xlu0 %5107
        %5111 = vset.pattern.permute.xlu0 9
        %5112 = vperm.xlu0 %5111, %v4850
        %v5113 = vpop.permute.xlu0 %5112
        %5116 = vset.pattern.permute.xlu0 9
        %5117 = vperm.xlu0 %5116, %v4851
        %v5118 = vpop.permute.xlu0 %5117
        %5121 = vset.pattern.permute.xlu0 9
        %5122 = vperm.xlu0 %5121, %v4852
        %v5123 = vpop.permute.xlu0 %5122
        %5126 = vset.pattern.permute.xlu0 9
        %5127 = vperm.xlu0 %5126, %v4853
        %v5128 = vpop.permute.xlu0 %5127
        %5131 = vset.pattern.permute.xlu0 9
        %5132 = vperm.xlu0 %5131, %v4854
        %v5133 = vpop.permute.xlu0 %5132
        %5136 = vset.pattern.permute.xlu0 9
        %5137 = vperm.xlu0 %5136, %v4855
        %v5138 = vpop.permute.xlu0 %5137
        %5141 = vset.pattern.permute.xlu0 9
        %5142 = vperm.xlu0 %5141, %v4856
        %v5143 = vpop.permute.xlu0 %5142
        %5146 = vset.pattern.permute.xlu0 9
        %5147 = vperm.xlu0 %5146, %v4857
        %v5148 = vpop.permute.xlu0 %5147
        %5151 = vset.pattern.permute.xlu0 9
        %5152 = vperm.xlu0 %5151, %v4858
        %v5153 = vpop.permute.xlu0 %5152
        %5156 = vset.pattern.permute.xlu0 9
        %5157 = vperm.xlu0 %5156, %v4859
        %v5158 = vpop.permute.xlu0 %5157
        %5161 = vset.pattern.permute.xlu0 9
        %5162 = vperm.xlu0 %5161, %v4860
        %v5163 = vpop.permute.xlu0 %5162
        %5166 = vset.pattern.permute.xlu0 9
        %5167 = vperm.xlu0 %5166, %v4861
        %v5168 = vpop.permute.xlu0 %5167
        %5171 = vset.pattern.permute.xlu0 9
        %5172 = vperm.xlu0 %5171, %v4862
        %v5173 = vpop.permute.xlu0 %5172
        %5176 = vset.pattern.permute.xlu0 9
        %5177 = vperm.xlu0 %5176, %v4863
        %v5178 = vpop.permute.xlu0 %5177
        %5181 = vset.pattern.permute.xlu0 9
        %5182 = vperm.xlu0 %5181, %v4864
        %v5183 = vpop.permute.xlu0 %5182
        %v5185 = vadd.f32 %v4642, %v4868
        %v5186 = vadd.f32 %v4644, %v4873
        %v5187 = vadd.f32 %v4647, %v4878
        %v5188 = vadd.f32 %v4649, %v4883
        %v5189 = vadd.f32 %v4652, %v4888
        %v5190 = vadd.f32 %v4654, %v4893
        %v5191 = vadd.f32 %v4657, %v4898
        %v5192 = vadd.f32 %v4659, %v4903
        %v5193 = vadd.f32 %v4662, %v4908
        %v5194 = vadd.f32 %v4664, %v4913
        %v5195 = vadd.f32 %v4667, %v4918
        %v5196 = vadd.f32 %v4669, %v4923
        %v5197 = vadd.f32 %v4672, %v4928
        %v5198 = vadd.f32 %v4674, %v4933
        %v5199 = vadd.f32 %v4677, %v4938
        %v5200 = vadd.f32 %v4679, %v4943
        %v5201 = vadd.f32 %v4682, %v4948
        %v5202 = vadd.f32 %v4684, %v4953
        %v5203 = vadd.f32 %v4687, %v4958
        %v5204 = vadd.f32 %v4689, %v4963
        %v5205 = vadd.f32 %v4692, %v4968
        %v5206 = vadd.f32 %v4694, %v4973
        %v5207 = vadd.f32 %v4697, %v4978
        %v5208 = vadd.f32 %v4699, %v4983
        %v5209 = vadd.f32 %v4702, %v4988
        %v5210 = vadd.f32 %v4704, %v4993
        %v5211 = vadd.f32 %v4707, %v4998
        %v5212 = vadd.f32 %v4709, %v5003
        %v5213 = vadd.f32 %v4712, %v5008
        %v5214 = vadd.f32 %v4714, %v5013
        %v5215 = vadd.f32 %v4717, %v5018
        %v5216 = vadd.f32 %v4719, %v5023
        %v5217 = vadd.f32 %v4722, %v5028
        %v5218 = vadd.f32 %v4724, %v5033
        %v5219 = vadd.f32 %v4727, %v5038
        %v5220 = vadd.f32 %v4729, %v5043
        %v5221 = vadd.f32 %v4732, %v5048
        %v5222 = vadd.f32 %v4734, %v5053
        %v5223 = vadd.f32 %v4737, %v5058
        %v5224 = vadd.f32 %v4739, %v5063
        %v5225 = vadd.f32 %v4742, %v5068
        %v5226 = vadd.f32 %v4744, %v5073
        %v5227 = vadd.f32 %v4747, %v5078
        %v5228 = vadd.f32 %v4749, %v5083
        %v5229 = vadd.f32 %v4752, %v5088
        %v5230 = vadd.f32 %v4754, %v5093
        %v5231 = vadd.f32 %v4757, %v5098
        %v5232 = vadd.f32 %v4759, %v5103
        %v5233 = vadd.f32 %v4762, %v5108
        %v5234 = vadd.f32 %v4764, %v5113
        %v5235 = vadd.f32 %v4767, %v5118
        %v5236 = vadd.f32 %v4769, %v5123
        %v5237 = vadd.f32 %v4772, %v5128
        %v5238 = vadd.f32 %v4774, %v5133
        %v5239 = vadd.f32 %v4777, %v5138
        %v5240 = vadd.f32 %v4779, %v5143
        %v5241 = vadd.f32 %v4782, %v5148
        %v5242 = vadd.f32 %v4784, %v5153
        %v5243 = vadd.f32 %v4787, %v5158
        %v5244 = vadd.f32 %v4789, %v5163
        %v5245 = vadd.f32 %v4792, %v5168
        %v5246 = vadd.f32 %v4794, %v5173
        %v5247 = vadd.f32 %v4797, %v5178
        %v5248 = vadd.f32 %v4799, %v5183
        %vm5249 = vcmp.gt.f32.partialorder %v5185, 0.0
        %vm5250 = vcmp.gt.f32.partialorder %v5186, 0.0
        %vm5251 = vcmp.gt.f32.partialorder %v5187, 0.0
        %vm5252 = vcmp.gt.f32.partialorder %v5188, 0.0
        %vm5253 = vcmp.gt.f32.partialorder %v5189, 0.0
        %vm5254 = vcmp.gt.f32.partialorder %v5190, 0.0
        %vm5255 = vcmp.gt.f32.partialorder %v5191, 0.0
        %vm5256 = vcmp.gt.f32.partialorder %v5192, 0.0
        %vm5257 = vcmp.gt.f32.partialorder %v5193, 0.0
        %vm5258 = vcmp.gt.f32.partialorder %v5194, 0.0
        %vm5259 = vcmp.gt.f32.partialorder %v5195, 0.0
        %vm5260 = vcmp.gt.f32.partialorder %v5196, 0.0
        %vm5261 = vcmp.gt.f32.partialorder %v5197, 0.0
        %vm5262 = vcmp.gt.f32.partialorder %v5198, 0.0
        %vm5263 = vcmp.gt.f32.partialorder %v5199, 0.0
        %vm5264 = vcmp.gt.f32.partialorder %v5200, 0.0
        %vm5265 = vcmp.gt.f32.partialorder %v5201, 0.0
        %vm5266 = vcmp.gt.f32.partialorder %v5202, 0.0
        %vm5267 = vcmp.gt.f32.partialorder %v5203, 0.0
        %vm5268 = vcmp.gt.f32.partialorder %v5204, 0.0
        %vm5269 = vcmp.gt.f32.partialorder %v5205, 0.0
        %vm5270 = vcmp.gt.f32.partialorder %v5206, 0.0
        %vm5271 = vcmp.gt.f32.partialorder %v5207, 0.0
        %vm5272 = vcmp.gt.f32.partialorder %v5208, 0.0
        %vm5273 = vcmp.gt.f32.partialorder %v5209, 0.0
        %vm5274 = vcmp.gt.f32.partialorder %v5210, 0.0
        %vm5275 = vcmp.gt.f32.partialorder %v5211, 0.0
        %vm5276 = vcmp.gt.f32.partialorder %v5212, 0.0
        %vm5277 = vcmp.gt.f32.partialorder %v5213, 0.0
        %vm5278 = vcmp.gt.f32.partialorder %v5214, 0.0
        %vm5279 = vcmp.gt.f32.partialorder %v5215, 0.0
        %vm5280 = vcmp.gt.f32.partialorder %v5216, 0.0
        %vm5281 = vcmp.gt.f32.partialorder %v5217, 0.0
        %vm5282 = vcmp.gt.f32.partialorder %v5218, 0.0
        %vm5283 = vcmp.gt.f32.partialorder %v5219, 0.0
        %vm5284 = vcmp.gt.f32.partialorder %v5220, 0.0
        %vm5285 = vcmp.gt.f32.partialorder %v5221, 0.0
        %vm5286 = vcmp.gt.f32.partialorder %v5222, 0.0
        %vm5287 = vcmp.gt.f32.partialorder %v5223, 0.0
        %vm5288 = vcmp.gt.f32.partialorder %v5224, 0.0
        %vm5289 = vcmp.gt.f32.partialorder %v5225, 0.0
        %vm5290 = vcmp.gt.f32.partialorder %v5226, 0.0
        %vm5291 = vcmp.gt.f32.partialorder %v5227, 0.0
        %vm5292 = vcmp.gt.f32.partialorder %v5228, 0.0
        %vm5293 = vcmp.gt.f32.partialorder %v5229, 0.0
        %vm5294 = vcmp.gt.f32.partialorder %v5230, 0.0
        %vm5295 = vcmp.gt.f32.partialorder %v5231, 0.0
        %vm5296 = vcmp.gt.f32.partialorder %v5232, 0.0
        %vm5297 = vcmp.gt.f32.partialorder %v5233, 0.0
        %vm5298 = vcmp.gt.f32.partialorder %v5234, 0.0
        %vm5299 = vcmp.gt.f32.partialorder %v5235, 0.0
        %vm5300 = vcmp.gt.f32.partialorder %v5236, 0.0
        %vm5301 = vcmp.gt.f32.partialorder %v5237, 0.0
        %vm5302 = vcmp.gt.f32.partialorder %v5238, 0.0
        %vm5303 = vcmp.gt.f32.partialorder %v5239, 0.0
        %vm5304 = vcmp.gt.f32.partialorder %v5240, 0.0
        %vm5305 = vcmp.gt.f32.partialorder %v5241, 0.0
        %vm5306 = vcmp.gt.f32.partialorder %v5242, 0.0
        %vm5307 = vcmp.gt.f32.partialorder %v5243, 0.0
        %vm5308 = vcmp.gt.f32.partialorder %v5244, 0.0
        %vm5309 = vcmp.gt.f32.partialorder %v5245, 0.0
        %vm5310 = vcmp.gt.f32.partialorder %v5246, 0.0
        %vm5311 = vcmp.gt.f32.partialorder %v5247, 0.0
        %vm5312 = vcmp.gt.f32.partialorder %v5248, 0.0
        %v5313 = vmul.f32 %v5185, 0.01
        %v5314 = vmul.f32 %v5186, 0.01
        %v5315 = vmul.f32 %v5187, 0.01
        %v5316 = vmul.f32 %v5188, 0.01
        %v5317 = vmul.f32 %v5189, 0.01
        %v5318 = vmul.f32 %v5190, 0.01
        %v5319 = vmul.f32 %v5191, 0.01
        %v5320 = vmul.f32 %v5192, 0.01
        %v5321 = vmul.f32 %v5193, 0.01
        %v5322 = vmul.f32 %v5194, 0.01
        %v5323 = vmul.f32 %v5195, 0.01
        %v5324 = vmul.f32 %v5196, 0.01
        %v5325 = vmul.f32 %v5197, 0.01
        %v5326 = vmul.f32 %v5198, 0.01
        %v5327 = vmul.f32 %v5199, 0.01
        %v5328 = vmul.f32 %v5200, 0.01
        %v5329 = vmul.f32 %v5201, 0.01
        %v5330 = vmul.f32 %v5202, 0.01
        %v5331 = vmul.f32 %v5203, 0.01
        %v5332 = vmul.f32 %v5204, 0.01
        %v5333 = vmul.f32 %v5205, 0.01
        %v5334 = vmul.f32 %v5206, 0.01
        %v5335 = vmul.f32 %v5207, 0.01
        %v5336 = vmul.f32 %v5208, 0.01
        %v5337 = vmul.f32 %v5209, 0.01
        %v5338 = vmul.f32 %v5210, 0.01
        %v5339 = vmul.f32 %v5211, 0.01
        %v5340 = vmul.f32 %v5212, 0.01
        %v5341 = vmul.f32 %v5213, 0.01
        %v5342 = vmul.f32 %v5214, 0.01
        %v5343 = vmul.f32 %v5215, 0.01
        %v5344 = vmul.f32 %v5216, 0.01
        %v5345 = vmul.f32 %v5217, 0.01
        %v5346 = vmul.f32 %v5218, 0.01
        %v5347 = vmul.f32 %v5219, 0.01
        %v5348 = vmul.f32 %v5220, 0.01
        %v5349 = vmul.f32 %v5221, 0.01
        %v5350 = vmul.f32 %v5222, 0.01
        %v5351 = vmul.f32 %v5223, 0.01
        %v5352 = vmul.f32 %v5224, 0.01
        %v5353 = vmul.f32 %v5225, 0.01
        %v5354 = vmul.f32 %v5226, 0.01
        %v5355 = vmul.f32 %v5227, 0.01
        %v5356 = vmul.f32 %v5228, 0.01
        %v5357 = vmul.f32 %v5229, 0.01
        %v5358 = vmul.f32 %v5230, 0.01
        %v5359 = vmul.f32 %v5231, 0.01
        %v5360 = vmul.f32 %v5232, 0.01
        %v5361 = vmul.f32 %v5233, 0.01
        %v5362 = vmul.f32 %v5234, 0.01
        %v5363 = vmul.f32 %v5235, 0.01
        %v5364 = vmul.f32 %v5236, 0.01
        %v5365 = vmul.f32 %v5237, 0.01
        %v5366 = vmul.f32 %v5238, 0.01
        %v5367 = vmul.f32 %v5239, 0.01
        %v5368 = vmul.f32 %v5240, 0.01
        %v5369 = vmul.f32 %v5241, 0.01
        %v5370 = vmul.f32 %v5242, 0.01
        %v5371 = vmul.f32 %v5243, 0.01
        %v5372 = vmul.f32 %v5244, 0.01
        %v5373 = vmul.f32 %v5245, 0.01
        %v5374 = vmul.f32 %v5246, 0.01
        %v5375 = vmul.f32 %v5247, 0.01
        %v5376 = vmul.f32 %v5248, 0.01
        %v5377 = vsel %vm5249, %v5185, %v5313
        %v5378 = vsel %vm5250, %v5186, %v5314
        %v5379 = vsel %vm5251, %v5187, %v5315
        %v5380 = vsel %vm5252, %v5188, %v5316
        %v5381 = vsel %vm5253, %v5189, %v5317
        %v5382 = vsel %vm5254, %v5190, %v5318
        %v5383 = vsel %vm5255, %v5191, %v5319
        %v5384 = vsel %vm5256, %v5192, %v5320
        %v5385 = vsel %vm5257, %v5193, %v5321
        %v5386 = vsel %vm5258, %v5194, %v5322
        %v5387 = vsel %vm5259, %v5195, %v5323
        %v5388 = vsel %vm5260, %v5196, %v5324
        %v5389 = vsel %vm5261, %v5197, %v5325
        %v5390 = vsel %vm5262, %v5198, %v5326
        %v5391 = vsel %vm5263, %v5199, %v5327
        %v5392 = vsel %vm5264, %v5200, %v5328
        %v5393 = vsel %vm5265, %v5201, %v5329
        %v5394 = vsel %vm5266, %v5202, %v5330
        %v5395 = vsel %vm5267, %v5203, %v5331
        %v5396 = vsel %vm5268, %v5204, %v5332
        %v5397 = vsel %vm5269, %v5205, %v5333
        %v5398 = vsel %vm5270, %v5206, %v5334
        %v5399 = vsel %vm5271, %v5207, %v5335
        %v5400 = vsel %vm5272, %v5208, %v5336
        %v5401 = vsel %vm5273, %v5209, %v5337
        %v5402 = vsel %vm5274, %v5210, %v5338
        %v5403 = vsel %vm5275, %v5211, %v5339
        %v5404 = vsel %vm5276, %v5212, %v5340
        %v5405 = vsel %vm5277, %v5213, %v5341
        %v5406 = vsel %vm5278, %v5214, %v5342
        %v5407 = vsel %vm5279, %v5215, %v5343
        %v5408 = vsel %vm5280, %v5216, %v5344
        %v5409 = vsel %vm5281, %v5217, %v5345
        %v5410 = vsel %vm5282, %v5218, %v5346
        %v5411 = vsel %vm5283, %v5219, %v5347
        %v5412 = vsel %vm5284, %v5220, %v5348
        %v5413 = vsel %vm5285, %v5221, %v5349
        %v5414 = vsel %vm5286, %v5222, %v5350
        %v5415 = vsel %vm5287, %v5223, %v5351
        %v5416 = vsel %vm5288, %v5224, %v5352
        %v5417 = vsel %vm5289, %v5225, %v5353
        %v5418 = vsel %vm5290, %v5226, %v5354
        %v5419 = vsel %vm5291, %v5227, %v5355
        %v5420 = vsel %vm5292, %v5228, %v5356
        %v5421 = vsel %vm5293, %v5229, %v5357
        %v5422 = vsel %vm5294, %v5230, %v5358
        %v5423 = vsel %vm5295, %v5231, %v5359
        %v5424 = vsel %vm5296, %v5232, %v5360
        %v5425 = vsel %vm5297, %v5233, %v5361
        %v5426 = vsel %vm5298, %v5234, %v5362
        %v5427 = vsel %vm5299, %v5235, %v5363
        %v5428 = vsel %vm5300, %v5236, %v5364
        %v5429 = vsel %vm5301, %v5237, %v5365
        %v5430 = vsel %vm5302, %v5238, %v5366
        %v5431 = vsel %vm5303, %v5239, %v5367
        %v5432 = vsel %vm5304, %v5240, %v5368
        %v5433 = vsel %vm5305, %v5241, %v5369
        %v5434 = vsel %vm5306, %v5242, %v5370
        %v5435 = vsel %vm5307, %v5243, %v5371
        %v5436 = vsel %vm5308, %v5244, %v5372
        %v5437 = vsel %vm5309, %v5245, %v5373
        %v5438 = vsel %vm5310, %v5246, %v5374
        %v5439 = vsel %vm5311, %v5247, %v5375
        %v5440 = vsel %vm5312, %v5248, %v5376
        %v5441 = vadd.f32 %v3254, %v5377
        %v5442 = vadd.f32 %v3255, %v5378
        %v5443 = vadd.f32 %v3256, %v5379
        %v5444 = vadd.f32 %v3257, %v5380
        %v5445 = vadd.f32 %v3258, %v5381
        %v5446 = vadd.f32 %v3259, %v5382
        %v5447 = vadd.f32 %v3260, %v5383
        %v5448 = vadd.f32 %v3261, %v5384
        %v5449 = vadd.f32 %v3262, %v5385
        %v5450 = vadd.f32 %v3263, %v5386
        %v5451 = vadd.f32 %v3264, %v5387
        %v5452 = vadd.f32 %v3265, %v5388
        %v5453 = vadd.f32 %v3266, %v5389
        %v5454 = vadd.f32 %v3267, %v5390
        %v5455 = vadd.f32 %v3268, %v5391
        %v5456 = vadd.f32 %v3269, %v5392
        %v5457 = vadd.f32 %v3270, %v5393
        %v5458 = vadd.f32 %v3271, %v5394
        %v5459 = vadd.f32 %v3272, %v5395
        %v5460 = vadd.f32 %v3273, %v5396
        %v5461 = vadd.f32 %v3274, %v5397
        %v5462 = vadd.f32 %v3275, %v5398
        %v5463 = vadd.f32 %v3276, %v5399
        %v5464 = vadd.f32 %v3277, %v5400
        %v5465 = vadd.f32 %v3278, %v5401
        %v5466 = vadd.f32 %v3279, %v5402
        %v5467 = vadd.f32 %v3280, %v5403
        %v5468 = vadd.f32 %v3281, %v5404
        %v5469 = vadd.f32 %v3282, %v5405
        %v5470 = vadd.f32 %v3283, %v5406
        %v5471 = vadd.f32 %v3284, %v5407
        %v5472 = vadd.f32 %v3285, %v5408
        %v5473 = vadd.f32 %v3286, %v5409
        %v5474 = vadd.f32 %v3287, %v5410
        %v5475 = vadd.f32 %v3288, %v5411
        %v5476 = vadd.f32 %v3289, %v5412
        %v5477 = vadd.f32 %v3290, %v5413
        %v5478 = vadd.f32 %v3291, %v5414
        %v5479 = vadd.f32 %v3292, %v5415
        %v5480 = vadd.f32 %v3293, %v5416
        %v5481 = vadd.f32 %v3294, %v5417
        %v5482 = vadd.f32 %v3295, %v5418
        %v5483 = vadd.f32 %v3296, %v5419
        %v5484 = vadd.f32 %v3297, %v5420
        %v5485 = vadd.f32 %v3298, %v5421
        %v5486 = vadd.f32 %v3299, %v5422
        %v5487 = vadd.f32 %v3300, %v5423
        %v5488 = vadd.f32 %v3301, %v5424
        %v5489 = vadd.f32 %v3302, %v5425
        %v5490 = vadd.f32 %v3303, %v5426
        %v5491 = vadd.f32 %v3304, %v5427
        %v5492 = vadd.f32 %v3305, %v5428
        %v5493 = vadd.f32 %v3306, %v5429
        %v5494 = vadd.f32 %v3307, %v5430
        %v5495 = vadd.f32 %v3308, %v5431
        %v5496 = vadd.f32 %v3309, %v5432
        %v5497 = vadd.f32 %v3310, %v5433
        %v5498 = vadd.f32 %v3311, %v5434
        %v5499 = vadd.f32 %v3312, %v5435
        %v5500 = vadd.f32 %v3313, %v5436
        %v5501 = vadd.f32 %v3314, %v5437
        %v5502 = vadd.f32 %v3315, %v5438
        %v5503 = vadd.f32 %v3316, %v5439
        %v5504 = vadd.f32 %v3317, %v5440
        %v5505 = vpack.c.bf16 %v5442, %v5441
        %v5506 = vpack.c.bf16 %v5444, %v5443
        %v5507 = vpack.c.bf16 %v5446, %v5445
        %v5508 = vpack.c.bf16 %v5448, %v5447
        %v5509 = vpack.c.bf16 %v5450, %v5449
        %v5510 = vpack.c.bf16 %v5452, %v5451
        %v5511 = vpack.c.bf16 %v5454, %v5453
        %v5512 = vpack.c.bf16 %v5456, %v5455
        %v5513 = vpack.c.bf16 %v5458, %v5457
        %v5514 = vpack.c.bf16 %v5460, %v5459
        %v5515 = vpack.c.bf16 %v5462, %v5461
        %v5516 = vpack.c.bf16 %v5464, %v5463
        %v5517 = vpack.c.bf16 %v5466, %v5465
        %v5518 = vpack.c.bf16 %v5468, %v5467
        %v5519 = vpack.c.bf16 %v5470, %v5469
        %v5520 = vpack.c.bf16 %v5472, %v5471
        %v5521 = vpack.c.bf16 %v5474, %v5473
        %v5522 = vpack.c.bf16 %v5476, %v5475
        %v5523 = vpack.c.bf16 %v5478, %v5477
        %v5524 = vpack.c.bf16 %v5480, %v5479
        %v5525 = vpack.c.bf16 %v5482, %v5481
        %v5526 = vpack.c.bf16 %v5484, %v5483
        %v5527 = vpack.c.bf16 %v5486, %v5485
        %v5528 = vpack.c.bf16 %v5488, %v5487
        %v5529 = vpack.c.bf16 %v5490, %v5489
        %v5530 = vpack.c.bf16 %v5492, %v5491
        %v5531 = vpack.c.bf16 %v5494, %v5493
        %v5532 = vpack.c.bf16 %v5496, %v5495
        %v5533 = vpack.c.bf16 %v5498, %v5497
        %v5534 = vpack.c.bf16 %v5500, %v5499
        %v5535 = vpack.c.bf16 %v5502, %v5501
        %v5536 = vpack.c.bf16 %v5504, %v5503
        %v5537 = vpack.c.bf16 %v1149, %v1149
        %v5538 = vld [vmem:[#allocation2 + $0x568] sm:$0xf]
        %v5539 = vld [vmem:[#allocation2 + $0x56c] sm:$0xf]
        %v5540 = vld [vmem:[#allocation2 + $0x570] sm:$0xf]
        %v5541 = vld [vmem:[#allocation2 + $0x574] sm:$0xf]
        %v5542 = vld [vmem:[#allocation2 + $0x578] sm:$0xf]
        %v5543 = vld [vmem:[#allocation2 + $0x57c] sm:$0xf]
        %v5544 = vld [vmem:[#allocation2 + $0x580] sm:$0xf]
        %v5545 = vld [vmem:[#allocation2 + $0x584] sm:$0xf]
        %v5546 = vld [vmem:[%s7 + $0x60] sm:$0x1]
        %v5547 = vperm.slane %v5546, 0
        %v5556 = vunpack.c.l.b16 %v5538
        %v5557 = vunpack.c.l.b16 %v5539
        %v5558 = vunpack.c.l.b16 %v5540
        %v5559 = vunpack.c.l.b16 %v5541
        %v5560 = vunpack.c.l.b16 %v5542
        %v5561 = vunpack.c.l.b16 %v5543
        %v5562 = vunpack.c.l.b16 %v5544
        %v5563 = vunpack.c.l.b16 %v5545
        %v5564 = vpack.c.b16 %v5557, %v5556
        %v5565 = vpack.c.b16 %v5559, %v5558
        %v5566 = vpack.c.b16 %v5561, %v5560
        %v5567 = vpack.c.b16 %v5563, %v5562
        %v5573 = vsel %vm1522, %v5537, 0
        %5575 = vmatpush.bf16.msra.mxu0 0
        %5576 = vmatpush.bf16.msra.mxu0 0
        %5577 = vmatpush.bf16.msra.mxu0 0
        %5578 = vmatpush.bf16.msra.mxu0 0
        %5579 = vmatpush.bf16.msra.mxu0 %v5567
        %5580 = vmatpush.bf16.msra.mxu0 %v5566
        %5581 = vmatpush.bf16.msra.mxu0 %v5565
        %5582 = vmatpush.bf16.msra.mxu0 %v5564
        %5583 = vmatmul.bf16.gmra.mxu0 %v5573
        %v5584 = vpop.f32.mrf.mxu0
        %v5585 = vadd.f32 %v5547, %v5584
        %v5586 = vpop.f32.mrf.mxu0
        %5587 = vdwg.mxu0
        %v5588 = vpack.c.bf16 %v5585, %v5585
        %v5589 = vld [vmem:[#allocation2 + $0x588] sm:$0xf]
        %v5590 = vld [vmem:[#allocation2 + $0x58c] sm:$0xf]
        %v5591 = vld [vmem:[#allocation2 + $0x590] sm:$0xf]
        %v5592 = vld [vmem:[#allocation2 + $0x594] sm:$0xf]
        %v5593 = vld [vmem:[#allocation2 + $0x598] sm:$0xf]
        %v5594 = vld [vmem:[#allocation2 + $0x59c] sm:$0xf]
        %v5595 = vld [vmem:[#allocation2 + $0x5a0] sm:$0xf]
        %v5596 = vld [vmem:[#allocation2 + $0x5a4] sm:$0xf]
        %v5597 = vld [vmem:[%s7 + $0x68] sm:$0x1]
        %v5598 = vperm.slane %v5597, 0
        %v5607 = vunpack.c.l.b16 %v5589
        %v5608 = vunpack.c.l.b16 %v5590
        %v5609 = vunpack.c.l.b16 %v5591
        %v5610 = vunpack.c.l.b16 %v5592
        %v5611 = vunpack.c.l.b16 %v5593
        %v5612 = vunpack.c.l.b16 %v5594
        %v5613 = vunpack.c.l.b16 %v5595
        %v5614 = vunpack.c.l.b16 %v5596
        %v5615 = vpack.c.b16 %v5608, %v5607
        %v5616 = vpack.c.b16 %v5610, %v5609
        %v5617 = vpack.c.b16 %v5612, %v5611
        %v5618 = vpack.c.b16 %v5614, %v5613
        %v5624 = vsel %vm1522, %v1560, 0
        %v5627 = vsel %vm1522, %v1561, 0
        %5629 = vmatpush.bf16.msra.mxu0 0
        %5630 = vmatpush.bf16.msra.mxu0 0
        %5631 = vmatpush.bf16.msra.mxu0 0
        %5632 = vmatpush.bf16.msra.mxu0 0
        %5633 = vmatpush.bf16.msra.mxu0 %v5618
        %5634 = vmatpush.bf16.msra.mxu0 %v5617
        %5635 = vmatpush.bf16.msra.mxu0 %v5616
        %5636 = vmatpush.bf16.msra.mxu0 %v5615
        %5637 = vmatmul.bf16.gmra.mxu0 %v5624
        %v5638 = vpop.f32.mrf.mxu0
        %v5639 = vadd.f32 %v5598, %v5638
        %v5640 = vpop.f32.mrf.mxu0
        %v5641 = vadd.f32 %v5598, %v5640
        %5642 = vmatmul.bf16.gmra.mxu0 %v5627
        %v5643 = vpop.f32.mrf.mxu0
        %v5644 = vadd.f32 %v5598, %v5643
        %v5645 = vpop.f32.mrf.mxu0
        %v5646 = vadd.f32 %v5598, %v5645
        %5647 = vdwg.mxu0
        %5648 = vxpose.xlu0.b32.start [1/16] %v5639, 128
        %5649 = vxpose.xlu0.b32.cont [2/16] %v5641, 128
        %5650 = vxpose.xlu0.b32.cont [3/16] %v5644, 128
        %5651 = vxpose.xlu0.b32.cont [4/16] %v5646, 128
        %5652 = vxpose.xlu0.b32.cont [5/16] 0.0, 128
        %5653 = vxpose.xlu0.b32.cont [6/16] 0.0, 128
        %5654 = vxpose.xlu0.b32.cont [7/16] 0.0, 128
        %5655 = vxpose.xlu0.b32.cont [8/16] 0.0, 128
        %5656 = vxpose.xlu0.b32.cont [9/16] 0.0, 128
        %5657 = vxpose.xlu0.b32.cont [10/16] 0.0, 128
        %5658 = vxpose.xlu0.b32.cont [11/16] 0.0, 128
        %5659 = vxpose.xlu0.b32.cont [12/16] 0.0, 128
        %5660 = vxpose.xlu0.b32.cont [13/16] 0.0, 128
        %5661 = vxpose.xlu0.b32.cont [14/16] 0.0, 128
        %5662 = vxpose.xlu0.b32.cont [15/16] 0.0, 128
        %5663 = vxpose.xlu0.b32.end [16/16] 0.0, 128
        %v5664 = vpop.trf.xlu0
        %v5665 = vpop.trf.xlu0
        %v5666 = vpop.trf.xlu0
        %v5667 = vpop.trf.xlu0
        %v5668 = vpop.trf.xlu0
        %v5669 = vpop.trf.xlu0
        %v5670 = vpop.trf.xlu0
        %v5671 = vpop.trf.xlu0
        %v5672 = vpop.trf.xlu0
        %v5673 = vpop.trf.xlu0
        %v5674 = vpop.trf.xlu0
        %v5675 = vpop.trf.xlu0
        %v5676 = vpop.trf.xlu0
        %v5677 = vpop.trf.xlu0
        %v5678 = vpop.trf.xlu0
        %v5679 = vpop.trf.xlu0
        %v5680 = vpack.c.bf16 %v5664, %v5664
        %v5681 = vpack.c.bf16 %v5665, %v5665
        %v5682 = vpack.c.bf16 %v5666, %v5666
        %v5683 = vpack.c.bf16 %v5667, %v5667
        %v5684 = vpack.c.bf16 %v5668, %v5668
        %v5685 = vpack.c.bf16 %v5669, %v5669
        %v5686 = vpack.c.bf16 %v5670, %v5670
        %v5687 = vpack.c.bf16 %v5671, %v5671
        %v5688 = vld [vmem:[#allocation2 + $0x5a8] sm:$0xf]
        %v5689 = vld [vmem:[#allocation2 + $0x5ac] sm:$0xf]
        %v5690 = vld [vmem:[#allocation2 + $0x5b0] sm:$0xf]
        %v5691 = vld [vmem:[#allocation2 + $0x5b4] sm:$0xf]
        %v5692 = vld [vmem:[#allocation2 + $0x5b8] sm:$0xf]
        %v5693 = vld [vmem:[#allocation2 + $0x5bc] sm:$0xf]
        %v5694 = vld [vmem:[#allocation2 + $0x5c0] sm:$0xf]
        %v5695 = vld [vmem:[#allocation2 + $0x5c4] sm:$0xf]
        %v5698 = vunpack.c.l.b16 %v5680
        %v5699 = vunpack.c.l.b16 %v5681
        %v5700 = vpack.c.b16 %v5699, %v5698
        %v5703 = vsel %vm553, %v5588, 0
        %5705 = vmatpush.bf16.msra.mxu0 0
        %5706 = vmatpush.bf16.msra.mxu0 0
        %5707 = vmatpush.bf16.msra.mxu0 0
        %5708 = vmatpush.bf16.msra.mxu0 0
        %5709 = vmatpush.bf16.msra.mxu0 0
        %5710 = vmatpush.bf16.msra.mxu0 0
        %5711 = vmatpush.bf16.msra.mxu0 0
        %5712 = vmatpush.bf16.msra.mxu0 %v5700
        %5713 = vmatmul.bf16.gmra.mxu0 %v5703
        %v5714 = vpop.f32.mrf.mxu0
        %v5715 = vadd.f32 0.0, %v5714
        %v5716 = vpop.f32.mrf.mxu0
        %5717 = vdwg.mxu0
        %vm5718 = vcmask 256000
        %v5719 = vsel %vm5718, %v5715, -inf
        %5720 = vmax.xlane.f32.xlu0 %v5719
        %v5721 = vpop.xlane.xlu0 %5720
        %v5722 = vsub.f32 %v5715, %v5721
        %v5723 = vmul.f32 %v5722, 1.442695
        %v5724 = vpow.pop %v5723
        %v5725 = vsel %vm5718, %v5724, 0.0
        %5726 = vadd.xlane.f32.xlu0 %v5725
        %v5727 = vpop.xlane.xlu0 %5726
        %v5728 = vrcp.pop %v5727
        %v5729 = vmul.f32 %v5724, %v5728
        %v5730 = vpack.c.bf16 %v5641, %v5639
        %v5731 = vpack.c.bf16 %v5646, %v5644
        %v5732 = vpack.c.bf16 %v5729, %v5729
        %5735 = vrot.lane.b32.xlu0 %v5730, 64
        %v5736 = vpop.permute.xlu0 %5735
        %5737 = vrot.lane.b32.xlu0 %v5731, 64
        %v5738 = vpop.permute.xlu0 %5737
        %v5742 = vsel %vm1638, %v5732, 0
        %5744 = vmatpush.bf16.msra.mxu0 0
        %5745 = vmatpush.bf16.msra.mxu0 0
        %5746 = vmatpush.bf16.msra.mxu0 0
        %5747 = vmatpush.bf16.msra.mxu0 0
        %5748 = vmatpush.bf16.msra.mxu0 0
        %5749 = vmatpush.bf16.msra.mxu0 0
        %5750 = vmatpush.bf16.msra.mxu0 %v5738
        %5751 = vmatpush.bf16.msra.mxu0 %v5736
        %5752 = vmatmul.bf16.gmra.mxu0 %v5742
        %v5753 = vpop.f32.mrf.mxu0
        %v5754 = vadd.f32 0.0, %v5753
        %v5755 = vpop.f32.mrf.mxu0
        %5756 = vdwg.mxu0
        %v5757 = vpack.c.bf16 %v5754, %v5754
        %v5759 = vunpack.c.l.b16 %v5588
        %v5760 = vpack.c.b16 %v5759, %v5759
        %5761 = vrot.lane.b32.xlu0 %v5760, 112
        %v5762 = vpop.permute.xlu0 %5761
        %v5765 = vunpack.c.l.b16 %v5682
        %v5766 = vunpack.c.l.b16 %v5683
        %v5767 = vpack.c.b16 %v5766, %v5765
        %v5770 = vsel %vm553, %v5762, 0
        %5772 = vmatpush.bf16.msra.mxu0 0
        %5773 = vmatpush.bf16.msra.mxu0 0
        %5774 = vmatpush.bf16.msra.mxu0 0
        %5775 = vmatpush.bf16.msra.mxu0 0
        %5776 = vmatpush.bf16.msra.mxu0 0
        %5777 = vmatpush.bf16.msra.mxu0 0
        %5778 = vmatpush.bf16.msra.mxu0 0
        %5779 = vmatpush.bf16.msra.mxu0 %v5767
        %5780 = vmatmul.bf16.gmra.mxu0 %v5770
        %v5781 = vpop.f32.mrf.mxu0
        %v5782 = vadd.f32 0.0, %v5781
        %v5783 = vpop.f32.mrf.mxu0
        %5784 = vdwg.mxu0
        %v5785 = vsel %vm5718, %v5782, -inf
        %5786 = vmax.xlane.f32.xlu0 %v5785
        %v5787 = vpop.xlane.xlu0 %5786
        %v5788 = vsub.f32 %v5782, %v5787
        %v5789 = vmul.f32 %v5788, 1.442695
        %v5790 = vpow.pop %v5789
        %v5791 = vsel %vm5718, %v5790, 0.0
        %5792 = vadd.xlane.f32.xlu0 %v5791
        %v5793 = vpop.xlane.xlu0 %5792
        %v5794 = vrcp.pop %v5793
        %v5795 = vmul.f32 %v5790, %v5794
        %v5796 = vpack.c.bf16 %v5795, %v5795
        %5797 = vrot.lane.b32.xlu0 %v5730, 48
        %v5798 = vpop.permute.xlu0 %5797
        %5799 = vrot.lane.b32.xlu0 %v5731, 48
        %v5800 = vpop.permute.xlu0 %5799
        %v5804 = vsel %vm1638, %v5796, 0
        %5806 = vmatpush.bf16.msra.mxu0 0
        %5807 = vmatpush.bf16.msra.mxu0 0
        %5808 = vmatpush.bf16.msra.mxu0 0
        %5809 = vmatpush.bf16.msra.mxu0 0
        %5810 = vmatpush.bf16.msra.mxu0 0
        %5811 = vmatpush.bf16.msra.mxu0 0
        %5812 = vmatpush.bf16.msra.mxu0 %v5800
        %5813 = vmatpush.bf16.msra.mxu0 %v5798
        %5814 = vmatmul.bf16.gmra.mxu0 %v5804
        %v5815 = vpop.f32.mrf.mxu0
        %v5816 = vadd.f32 0.0, %v5815
        %v5817 = vpop.f32.mrf.mxu0
        %5818 = vdwg.mxu0
        %v5819 = vpack.c.bf16 %v5816, %v5816
        %v5822 = vunpack.c.l.b16 %v5690
        %v5823 = vunpack.c.l.b16 %v5691
        %v5824 = vpack.c.b16 %v5823, %v5822
        %v5827 = vsel %vm553, %v5819, 0
        %5829 = vmatpush.bf16.msra.mxu0 0
        %5830 = vmatpush.bf16.msra.mxu0 0
        %5831 = vmatpush.bf16.msra.mxu0 0
        %5832 = vmatpush.bf16.msra.mxu0 0
        %5833 = vmatpush.bf16.msra.mxu0 0
        %5834 = vmatpush.bf16.msra.mxu0 0
        %5835 = vmatpush.bf16.msra.mxu0 0
        %5836 = vmatpush.bf16.msra.mxu0 %v5824
        %5837 = vmatmul.bf16.gmra.mxu0 %v5827
        %v5838 = vpop.f32.mrf.mxu0
        %v5839 = vadd.f32 0.0, %v5838
        %v5840 = vpop.f32.mrf.mxu0
        %5841 = vdwg.mxu0
        %v5844 = vunpack.c.l.b16 %v5688
        %v5845 = vunpack.c.l.b16 %v5689
        %v5846 = vpack.c.b16 %v5845, %v5844
        %v5849 = vsel %vm553, %v5757, 0
        %5851 = vmatpush.bf16.msra.mxu0 0
        %5852 = vmatpush.bf16.msra.mxu0 0
        %5853 = vmatpush.bf16.msra.mxu0 0
        %5854 = vmatpush.bf16.msra.mxu0 0
        %5855 = vmatpush.bf16.msra.mxu0 0
        %5856 = vmatpush.bf16.msra.mxu0 0
        %5857 = vmatpush.bf16.msra.mxu0 0
        %5858 = vmatpush.bf16.msra.mxu0 %v5846
        %5859 = vmatmul.bf16.gmra.mxu0 %v5849
        %v5860 = vpop.f32.mrf.mxu0
        %v5861 = vadd.f32 %v5839, %v5860
        %v5862 = vpop.f32.mrf.mxu0
        %5863 = vdwg.mxu0
        %5864 = vrot.lane.b32.xlu0 %v5760, 96
        %v5865 = vpop.permute.xlu0 %5864
        %v5868 = vunpack.c.l.b16 %v5684
        %v5869 = vunpack.c.l.b16 %v5685
        %v5870 = vpack.c.b16 %v5869, %v5868
        %v5873 = vsel %vm553, %v5865, 0
        %5875 = vmatpush.bf16.msra.mxu0 0
        %5876 = vmatpush.bf16.msra.mxu0 0
        %5877 = vmatpush.bf16.msra.mxu0 0
        %5878 = vmatpush.bf16.msra.mxu0 0
        %5879 = vmatpush.bf16.msra.mxu0 0
        %5880 = vmatpush.bf16.msra.mxu0 0
        %5881 = vmatpush.bf16.msra.mxu0 0
        %5882 = vmatpush.bf16.msra.mxu0 %v5870
        %5883 = vmatmul.bf16.gmra.mxu0 %v5873
        %v5884 = vpop.f32.mrf.mxu0
        %v5885 = vadd.f32 0.0, %v5884
        %v5886 = vpop.f32.mrf.mxu0
        %5887 = vdwg.mxu0
        %v5888 = vsel %vm5718, %v5885, -inf
        %5889 = vmax.xlane.f32.xlu0 %v5888
        %v5890 = vpop.xlane.xlu0 %5889
        %v5891 = vsub.f32 %v5885, %v5890
        %v5892 = vmul.f32 %v5891, 1.442695
        %v5893 = vpow.pop %v5892
        %v5894 = vsel %vm5718, %v5893, 0.0
        %5895 = vadd.xlane.f32.xlu0 %v5894
        %v5896 = vpop.xlane.xlu0 %5895
        %v5897 = vrcp.pop %v5896
        %v5898 = vmul.f32 %v5893, %v5897
        %v5899 = vpack.c.bf16 %v5898, %v5898
        %5900 = vrot.lane.b32.xlu0 %v5730, 32
        %v5901 = vpop.permute.xlu0 %5900
        %5902 = vrot.lane.b32.xlu0 %v5731, 32
        %v5903 = vpop.permute.xlu0 %5902
        %v5907 = vsel %vm1638, %v5899, 0
        %5909 = vmatpush.bf16.msra.mxu0 0
        %5910 = vmatpush.bf16.msra.mxu0 0
        %5911 = vmatpush.bf16.msra.mxu0 0
        %5912 = vmatpush.bf16.msra.mxu0 0
        %5913 = vmatpush.bf16.msra.mxu0 0
        %5914 = vmatpush.bf16.msra.mxu0 0
        %5915 = vmatpush.bf16.msra.mxu0 %v5903
        %5916 = vmatpush.bf16.msra.mxu0 %v5901
        %5917 = vmatmul.bf16.gmra.mxu0 %v5907
        %v5918 = vpop.f32.mrf.mxu0
        %v5919 = vadd.f32 0.0, %v5918
        %v5920 = vpop.f32.mrf.mxu0
        %5921 = vdwg.mxu0
        %v5922 = vpack.c.bf16 %v5919, %v5919
        %v5925 = vunpack.c.l.b16 %v5692
        %v5926 = vunpack.c.l.b16 %v5693
        %v5927 = vpack.c.b16 %v5926, %v5925
        %v5930 = vsel %vm553, %v5922, 0
        %5932 = vmatpush.bf16.msra.mxu0 0
        %5933 = vmatpush.bf16.msra.mxu0 0
        %5934 = vmatpush.bf16.msra.mxu0 0
        %5935 = vmatpush.bf16.msra.mxu0 0
        %5936 = vmatpush.bf16.msra.mxu0 0
        %5937 = vmatpush.bf16.msra.mxu0 0
        %5938 = vmatpush.bf16.msra.mxu0 0
        %5939 = vmatpush.bf16.msra.mxu0 %v5927
        %5940 = vmatmul.bf16.gmra.mxu0 %v5930
        %v5941 = vpop.f32.mrf.mxu0
        %v5942 = vadd.f32 0.0, %v5941
        %v5943 = vpop.f32.mrf.mxu0
        %5944 = vdwg.mxu0
        %v5945 = vadd.f32 %v5861, %v5942
        %5946 = vrot.lane.b32.xlu0 %v5760, 80
        %v5947 = vpop.permute.xlu0 %5946
        %v5950 = vunpack.c.l.b16 %v5686
        %v5951 = vunpack.c.l.b16 %v5687
        %v5952 = vpack.c.b16 %v5951, %v5950
        %v5955 = vsel %vm553, %v5947, 0
        %5957 = vmatpush.bf16.msra.mxu0 0
        %5958 = vmatpush.bf16.msra.mxu0 0
        %5959 = vmatpush.bf16.msra.mxu0 0
        %5960 = vmatpush.bf16.msra.mxu0 0
        %5961 = vmatpush.bf16.msra.mxu0 0
        %5962 = vmatpush.bf16.msra.mxu0 0
        %5963 = vmatpush.bf16.msra.mxu0 0
        %5964 = vmatpush.bf16.msra.mxu0 %v5952
        %5965 = vmatmul.bf16.gmra.mxu0 %v5955
        %v5966 = vpop.f32.mrf.mxu0
        %v5967 = vadd.f32 0.0, %v5966
        %v5968 = vpop.f32.mrf.mxu0
        %5969 = vdwg.mxu0
        %v5970 = vsel %vm5718, %v5967, -inf
        %5971 = vmax.xlane.f32.xlu0 %v5970
        %v5972 = vpop.xlane.xlu0 %5971
        %v5973 = vsub.f32 %v5967, %v5972
        %v5974 = vmul.f32 %v5973, 1.442695
        %v5975 = vpow.pop %v5974
        %v5976 = vsel %vm5718, %v5975, 0.0
        %5977 = vadd.xlane.f32.xlu0 %v5976
        %v5978 = vpop.xlane.xlu0 %5977
        %v5979 = vrcp.pop %v5978
        %v5980 = vmul.f32 %v5975, %v5979
        %v5981 = vpack.c.bf16 %v5980, %v5980
        %5982 = vrot.lane.b32.xlu0 %v5730, 16
        %v5983 = vpop.permute.xlu0 %5982
        %5984 = vrot.lane.b32.xlu0 %v5731, 16
        %v5985 = vpop.permute.xlu0 %5984
        %v5989 = vsel %vm1638, %v5981, 0
        %5991 = vmatpush.bf16.msra.mxu0 0
        %5992 = vmatpush.bf16.msra.mxu0 0
        %5993 = vmatpush.bf16.msra.mxu0 0
        %5994 = vmatpush.bf16.msra.mxu0 0
        %5995 = vmatpush.bf16.msra.mxu0 0
        %5996 = vmatpush.bf16.msra.mxu0 0
        %5997 = vmatpush.bf16.msra.mxu0 %v5985
        %5998 = vmatpush.bf16.msra.mxu0 %v5983
        %5999 = vmatmul.bf16.gmra.mxu0 %v5989
        %v6000 = vpop.f32.mrf.mxu0
        %v6001 = vadd.f32 0.0, %v6000
        %v6002 = vpop.f32.mrf.mxu0
        %6003 = vdwg.mxu0
        %v6004 = vpack.c.bf16 %v6001, %v6001
        %v6007 = vunpack.c.l.b16 %v5694
        %v6008 = vunpack.c.l.b16 %v5695
        %v6009 = vpack.c.b16 %v6008, %v6007
        %v6012 = vsel %vm553, %v6004, 0
        %6014 = vmatpush.bf16.msra.mxu0 0
        %6015 = vmatpush.bf16.msra.mxu0 0
        %6016 = vmatpush.bf16.msra.mxu0 0
        %6017 = vmatpush.bf16.msra.mxu0 0
        %6018 = vmatpush.bf16.msra.mxu0 0
        %6019 = vmatpush.bf16.msra.mxu0 0
        %6020 = vmatpush.bf16.msra.mxu0 0
        %6021 = vmatpush.bf16.msra.mxu0 %v6009
        %6022 = vmatmul.bf16.gmra.mxu0 %v6012
        %v6023 = vpop.f32.mrf.mxu0
        %v6024 = vadd.f32 0.0, %v6023
        %v6025 = vpop.f32.mrf.mxu0
        %6026 = vdwg.mxu0
        %v6027 = vadd.f32 %v5945, %v6024
        %v6028 = vld [vmem:[%s7 + $0x70] sm:$0x1]
        %v6029 = vperm.slane %v6028, 0
        %v6030 = vadd.f32 %v6027, %v6029
        %v6031 = vpack.c.bf16 %v1312, %v1312
        %v6032 = vld [vmem:[#allocation2 + $0x5c8] sm:$0xf]
        %v6033 = vld [vmem:[#allocation2 + $0x5cc] sm:$0xf]
        %v6034 = vld [vmem:[#allocation2 + $0x5d0] sm:$0xf]
        %v6035 = vld [vmem:[#allocation2 + $0x5d4] sm:$0xf]
        %v6036 = vld [vmem:[#allocation2 + $0x5d8] sm:$0xf]
        %v6037 = vld [vmem:[#allocation2 + $0x5dc] sm:$0xf]
        %v6038 = vld [vmem:[#allocation2 + $0x5e0] sm:$0xf]
        %v6039 = vld [vmem:[#allocation2 + $0x5e4] sm:$0xf]
        %v6040 = vld [vmem:[%s7 + $0x78] sm:$0x1]
        %v6041 = vperm.slane %v6040, 0
        %v6050 = vunpack.c.l.b16 %v6032
        %v6051 = vunpack.c.l.b16 %v6033
        %v6052 = vunpack.c.l.b16 %v6034
        %v6053 = vunpack.c.l.b16 %v6035
        %v6054 = vunpack.c.l.b16 %v6036
        %v6055 = vunpack.c.l.b16 %v6037
        %v6056 = vunpack.c.l.b16 %v6038
        %v6057 = vunpack.c.l.b16 %v6039
        %v6058 = vpack.c.b16 %v6051, %v6050
        %v6059 = vpack.c.b16 %v6053, %v6052
        %v6060 = vpack.c.b16 %v6055, %v6054
        %v6061 = vpack.c.b16 %v6057, %v6056
        %v6067 = vsel %vm1522, %v6031, 0
        %6069 = vmatpush.bf16.msra.mxu0 0
        %6070 = vmatpush.bf16.msra.mxu0 0
        %6071 = vmatpush.bf16.msra.mxu0 0
        %6072 = vmatpush.bf16.msra.mxu0 0
        %6073 = vmatpush.bf16.msra.mxu0 %v6061
        %6074 = vmatpush.bf16.msra.mxu0 %v6060
        %6075 = vmatpush.bf16.msra.mxu0 %v6059
        %6076 = vmatpush.bf16.msra.mxu0 %v6058
        %6077 = vmatmul.bf16.gmra.mxu0 %v6067
        %v6078 = vpop.f32.mrf.mxu0
        %v6079 = vadd.f32 %v6041, %v6078
        %v6080 = vpop.f32.mrf.mxu0
        %6081 = vdwg.mxu0
        %v6082 = vpack.c.bf16 %v6079, %v6079
        %v6083 = vld [vmem:[#allocation2 + $0x5e8] sm:$0xf]
        %v6084 = vld [vmem:[#allocation2 + $0x5ec] sm:$0xf]
        %v6085 = vld [vmem:[#allocation2 + $0x5f0] sm:$0xf]
        %v6086 = vld [vmem:[#allocation2 + $0x5f4] sm:$0xf]
        %v6087 = vld [vmem:[#allocation2 + $0x5f8] sm:$0xf]
        %v6088 = vld [vmem:[#allocation2 + $0x5fc] sm:$0xf]
        %v6089 = vld [vmem:[#allocation2 + $0x600] sm:$0xf]
        %v6090 = vld [vmem:[#allocation2 + $0x604] sm:$0xf]
        %v6091 = vld [vmem:[%s7 + $0x80] sm:$0x1]
        %v6092 = vperm.slane %v6091, 0
        %v6101 = vunpack.c.l.b16 %v6083
        %v6102 = vunpack.c.l.b16 %v6084
        %v6103 = vunpack.c.l.b16 %v6085
        %v6104 = vunpack.c.l.b16 %v6086
        %v6105 = vunpack.c.l.b16 %v6087
        %v6106 = vunpack.c.l.b16 %v6088
        %v6107 = vunpack.c.l.b16 %v6089
        %v6108 = vunpack.c.l.b16 %v6090
        %v6109 = vpack.c.b16 %v6102, %v6101
        %v6110 = vpack.c.b16 %v6104, %v6103
        %v6111 = vpack.c.b16 %v6106, %v6105
        %v6112 = vpack.c.b16 %v6108, %v6107
        %v6118 = vsel %vm1522, %v2176, 0
        %v6121 = vsel %vm1522, %v2177, 0
        %v6124 = vsel %vm1522, %v2178, 0
        %v6127 = vsel %vm1522, %v2179, 0
        %v6130 = vsel %vm1522, %v2180, 0
        %v6133 = vsel %vm1522, %v2181, 0
        %v6136 = vsel %vm1522, %v2182, 0
        %v6139 = vsel %vm1522, %v2183, 0
        %6141 = vmatpush.bf16.msra.mxu0 0
        %6142 = vmatpush.bf16.msra.mxu0 0
        %6143 = vmatpush.bf16.msra.mxu0 0
        %6144 = vmatpush.bf16.msra.mxu0 0
        %6145 = vmatpush.bf16.msra.mxu0 %v6112
        %6146 = vmatpush.bf16.msra.mxu0 %v6111
        %6147 = vmatpush.bf16.msra.mxu0 %v6110
        %6148 = vmatpush.bf16.msra.mxu0 %v6109
        %6149 = vmatmul.bf16.gmra.mxu0 %v6118
        %v6150 = vpop.f32.mrf.mxu0
        %v6151 = vadd.f32 %v6092, %v6150
        %v6152 = vpop.f32.mrf.mxu0
        %v6153 = vadd.f32 %v6092, %v6152
        %6154 = vmatmul.bf16.gmra.mxu0 %v6121
        %v6155 = vpop.f32.mrf.mxu0
        %v6156 = vadd.f32 %v6092, %v6155
        %v6157 = vpop.f32.mrf.mxu0
        %v6158 = vadd.f32 %v6092, %v6157
        %6159 = vmatmul.bf16.gmra.mxu0 %v6124
        %v6160 = vpop.f32.mrf.mxu0
        %v6161 = vadd.f32 %v6092, %v6160
        %v6162 = vpop.f32.mrf.mxu0
        %v6163 = vadd.f32 %v6092, %v6162
        %6164 = vmatmul.bf16.gmra.mxu0 %v6127
        %v6165 = vpop.f32.mrf.mxu0
        %v6166 = vadd.f32 %v6092, %v6165
        %v6167 = vpop.f32.mrf.mxu0
        %v6168 = vadd.f32 %v6092, %v6167
        %6169 = vmatmul.bf16.gmra.mxu0 %v6130
        %v6170 = vpop.f32.mrf.mxu0
        %v6171 = vadd.f32 %v6092, %v6170
        %v6172 = vpop.f32.mrf.mxu0
        %v6173 = vadd.f32 %v6092, %v6172
        %6174 = vmatmul.bf16.gmra.mxu0 %v6133
        %v6175 = vpop.f32.mrf.mxu0
        %v6176 = vadd.f32 %v6092, %v6175
        %v6177 = vpop.f32.mrf.mxu0
        %v6178 = vadd.f32 %v6092, %v6177
        %6179 = vmatmul.bf16.gmra.mxu0 %v6136
        %v6180 = vpop.f32.mrf.mxu0
        %v6181 = vadd.f32 %v6092, %v6180
        %v6182 = vpop.f32.mrf.mxu0
        %v6183 = vadd.f32 %v6092, %v6182
        %6184 = vmatmul.bf16.gmra.mxu0 %v6139
        %v6185 = vpop.f32.mrf.mxu0
        %v6186 = vadd.f32 %v6092, %v6185
        %v6187 = vpop.f32.mrf.mxu0
        %v6188 = vadd.f32 %v6092, %v6187
        %6189 = vdwg.mxu0
        %6190 = vxpose.xlu0.b32.start [1/16] %v6151, 128
        %6191 = vxpose.xlu0.b32.cont [2/16] %v6153, 128
        %6192 = vxpose.xlu0.b32.cont [3/16] %v6156, 128
        %6193 = vxpose.xlu0.b32.cont [4/16] %v6158, 128
        %6194 = vxpose.xlu0.b32.cont [5/16] %v6161, 128
        %6195 = vxpose.xlu0.b32.cont [6/16] %v6163, 128
        %6196 = vxpose.xlu0.b32.cont [7/16] %v6166, 128
        %6197 = vxpose.xlu0.b32.cont [8/16] %v6168, 128
        %6198 = vxpose.xlu0.b32.cont [9/16] %v6171, 128
        %6199 = vxpose.xlu0.b32.cont [10/16] %v6173, 128
        %6200 = vxpose.xlu0.b32.cont [11/16] %v6176, 128
        %6201 = vxpose.xlu0.b32.cont [12/16] %v6178, 128
        %6202 = vxpose.xlu0.b32.cont [13/16] %v6181, 128
        %6203 = vxpose.xlu0.b32.cont [14/16] %v6183, 128
        %6204 = vxpose.xlu0.b32.cont [15/16] %v6186, 128
        %6205 = vxpose.xlu0.b32.end [16/16] %v6188, 128
        %v6206 = vpop.trf.xlu0
        %v6207 = vpop.trf.xlu0
        %v6208 = vpop.trf.xlu0
        %v6209 = vpop.trf.xlu0
        %v6210 = vpop.trf.xlu0
        %v6211 = vpop.trf.xlu0
        %v6212 = vpop.trf.xlu0
        %v6213 = vpop.trf.xlu0
        %v6214 = vpop.trf.xlu0
        %v6215 = vpop.trf.xlu0
        %v6216 = vpop.trf.xlu0
        %v6217 = vpop.trf.xlu0
        %v6218 = vpop.trf.xlu0
        %v6219 = vpop.trf.xlu0
        %v6220 = vpop.trf.xlu0
        %v6221 = vpop.trf.xlu0
        %v6222 = vpack.c.bf16 %v6206, %v6206
        %v6223 = vpack.c.bf16 %v6207, %v6207
        %v6224 = vpack.c.bf16 %v6208, %v6208
        %v6225 = vpack.c.bf16 %v6209, %v6209
        %v6226 = vpack.c.bf16 %v6210, %v6210
        %v6227 = vpack.c.bf16 %v6211, %v6211
        %v6228 = vpack.c.bf16 %v6212, %v6212
        %v6229 = vpack.c.bf16 %v6213, %v6213
        %v6230 = vld [vmem:[#allocation2 + $0x608] sm:$0xf]
        %v6231 = vld [vmem:[#allocation2 + $0x60c] sm:$0xf]
        %v6232 = vld [vmem:[#allocation2 + $0x610] sm:$0xf]
        %v6233 = vld [vmem:[#allocation2 + $0x614] sm:$0xf]
        %v6234 = vld [vmem:[#allocation2 + $0x618] sm:$0xf]
        %v6235 = vld [vmem:[#allocation2 + $0x61c] sm:$0xf]
        %v6236 = vld [vmem:[#allocation2 + $0x620] sm:$0xf]
        %v6237 = vld [vmem:[#allocation2 + $0x624] sm:$0xf]
        %v6240 = vunpack.c.l.b16 %v6222
        %v6241 = vunpack.c.l.b16 %v6223
        %v6242 = vpack.c.b16 %v6241, %v6240
        %v6245 = vsel %vm553, %v6082, 0
        %6247 = vmatpush.bf16.msra.mxu0 0
        %6248 = vmatpush.bf16.msra.mxu0 0
        %6249 = vmatpush.bf16.msra.mxu0 0
        %6250 = vmatpush.bf16.msra.mxu0 0
        %6251 = vmatpush.bf16.msra.mxu0 0
        %6252 = vmatpush.bf16.msra.mxu0 0
        %6253 = vmatpush.bf16.msra.mxu0 0
        %6254 = vmatpush.bf16.msra.mxu0 %v6242
        %6255 = vmatmul.bf16.gmra.mxu0 %v6245
        %v6256 = vpop.f32.mrf.mxu0
        %v6257 = vadd.f32 0.0, %v6256
        %v6258 = vpop.f32.mrf.mxu0
        %6259 = vdwg.mxu0
        %vm6260 = vcmask 1042432
        %v6261 = vsel %vm6260, %v6257, -inf
        %6262 = vmax.xlane.f32.xlu0 %v6261
        %v6263 = vpop.xlane.xlu0 %6262
        %v6264 = vsub.f32 %v6257, %v6263
        %v6265 = vmul.f32 %v6264, 1.442695
        %v6266 = vpow.pop %v6265
        %v6267 = vsel %vm6260, %v6266, 0.0
        %6268 = vadd.xlane.f32.xlu0 %v6267
        %v6269 = vpop.xlane.xlu0 %6268
        %v6270 = vrcp.pop %v6269
        %v6271 = vmul.f32 %v6266, %v6270
        %v6272 = vpack.c.bf16 %v6153, %v6151
        %v6273 = vpack.c.bf16 %v6158, %v6156
        %v6274 = vpack.c.bf16 %v6163, %v6161
        %v6275 = vpack.c.bf16 %v6168, %v6166
        %v6276 = vpack.c.bf16 %v6173, %v6171
        %v6277 = vpack.c.bf16 %v6178, %v6176
        %v6278 = vpack.c.bf16 %v6183, %v6181
        %v6279 = vpack.c.bf16 %v6188, %v6186
        %v6280 = vpack.c.bf16 %v6271, %v6271
        %6289 = vrot.lane.b32.xlu0 %v6272, 64
        %v6290 = vpop.permute.xlu0 %6289
        %6291 = vrot.lane.b32.xlu0 %v6273, 64
        %v6292 = vpop.permute.xlu0 %6291
        %6293 = vrot.lane.b32.xlu0 %v6274, 64
        %v6294 = vpop.permute.xlu0 %6293
        %6295 = vrot.lane.b32.xlu0 %v6275, 64
        %v6296 = vpop.permute.xlu0 %6295
        %6297 = vrot.lane.b32.xlu0 %v6276, 64
        %v6298 = vpop.permute.xlu0 %6297
        %6299 = vrot.lane.b32.xlu0 %v6277, 64
        %v6300 = vpop.permute.xlu0 %6299
        %6301 = vrot.lane.b32.xlu0 %v6278, 64
        %v6302 = vpop.permute.xlu0 %6301
        %6303 = vrot.lane.b32.xlu0 %v6279, 64
        %v6304 = vpop.permute.xlu0 %6303
        %6313 = vmatpush.bf16.msra.mxu0 %v6304
        %6314 = vmatpush.bf16.msra.mxu0 %v6302
        %6315 = vmatpush.bf16.msra.mxu0 %v6300
        %6316 = vmatpush.bf16.msra.mxu0 %v6298
        %6317 = vmatpush.bf16.msra.mxu0 %v6296
        %6318 = vmatpush.bf16.msra.mxu0 %v6294
        %6319 = vmatpush.bf16.msra.mxu0 %v6292
        %6320 = vmatpush.bf16.msra.mxu0 %v6290
        %6321 = vmatmul.bf16.gmra.mxu0 %v6280
        %v6322 = vpop.f32.mrf.mxu0
        %v6323 = vadd.f32 0.0, %v6322
        %v6324 = vpop.f32.mrf.mxu0
        %6325 = vdwg.mxu0
        %v6326 = vpack.c.bf16 %v6323, %v6323
        %v6328 = vunpack.c.l.b16 %v6082
        %v6329 = vpack.c.b16 %v6328, %v6328
        %6330 = vrot.lane.b32.xlu0 %v6329, 112
        %v6331 = vpop.permute.xlu0 %6330
        %v6334 = vunpack.c.l.b16 %v6224
        %v6335 = vunpack.c.l.b16 %v6225
        %v6336 = vpack.c.b16 %v6335, %v6334
        %v6339 = vsel %vm553, %v6331, 0
        %6341 = vmatpush.bf16.msra.mxu0 0
        %6342 = vmatpush.bf16.msra.mxu0 0
        %6343 = vmatpush.bf16.msra.mxu0 0
        %6344 = vmatpush.bf16.msra.mxu0 0
        %6345 = vmatpush.bf16.msra.mxu0 0
        %6346 = vmatpush.bf16.msra.mxu0 0
        %6347 = vmatpush.bf16.msra.mxu0 0
        %6348 = vmatpush.bf16.msra.mxu0 %v6336
        %6349 = vmatmul.bf16.gmra.mxu0 %v6339
        %v6350 = vpop.f32.mrf.mxu0
        %v6351 = vadd.f32 0.0, %v6350
        %v6352 = vpop.f32.mrf.mxu0
        %6353 = vdwg.mxu0
        %v6354 = vsel %vm6260, %v6351, -inf
        %6355 = vmax.xlane.f32.xlu0 %v6354
        %v6356 = vpop.xlane.xlu0 %6355
        %v6357 = vsub.f32 %v6351, %v6356
        %v6358 = vmul.f32 %v6357, 1.442695
        %v6359 = vpow.pop %v6358
        %v6360 = vsel %vm6260, %v6359, 0.0
        %6361 = vadd.xlane.f32.xlu0 %v6360
        %v6362 = vpop.xlane.xlu0 %6361
        %v6363 = vrcp.pop %v6362
        %v6364 = vmul.f32 %v6359, %v6363
        %v6365 = vpack.c.bf16 %v6364, %v6364
        %6366 = vrot.lane.b32.xlu0 %v6272, 48
        %v6367 = vpop.permute.xlu0 %6366
        %6368 = vrot.lane.b32.xlu0 %v6273, 48
        %v6369 = vpop.permute.xlu0 %6368
        %6370 = vrot.lane.b32.xlu0 %v6274, 48
        %v6371 = vpop.permute.xlu0 %6370
        %6372 = vrot.lane.b32.xlu0 %v6275, 48
        %v6373 = vpop.permute.xlu0 %6372
        %6374 = vrot.lane.b32.xlu0 %v6276, 48
        %v6375 = vpop.permute.xlu0 %6374
        %6376 = vrot.lane.b32.xlu0 %v6277, 48
        %v6377 = vpop.permute.xlu0 %6376
        %6378 = vrot.lane.b32.xlu0 %v6278, 48
        %v6379 = vpop.permute.xlu0 %6378
        %6380 = vrot.lane.b32.xlu0 %v6279, 48
        %v6381 = vpop.permute.xlu0 %6380
        %6390 = vmatpush.bf16.msra.mxu0 %v6381
        %6391 = vmatpush.bf16.msra.mxu0 %v6379
        %6392 = vmatpush.bf16.msra.mxu0 %v6377
        %6393 = vmatpush.bf16.msra.mxu0 %v6375
        %6394 = vmatpush.bf16.msra.mxu0 %v6373
        %6395 = vmatpush.bf16.msra.mxu0 %v6371
        %6396 = vmatpush.bf16.msra.mxu0 %v6369
        %6397 = vmatpush.bf16.msra.mxu0 %v6367
        %6398 = vmatmul.bf16.gmra.mxu0 %v6365
        %v6399 = vpop.f32.mrf.mxu0
        %v6400 = vadd.f32 0.0, %v6399
        %v6401 = vpop.f32.mrf.mxu0
        %6402 = vdwg.mxu0
        %v6403 = vpack.c.bf16 %v6400, %v6400
        %v6406 = vunpack.c.l.b16 %v6232
        %v6407 = vunpack.c.l.b16 %v6233
        %v6408 = vpack.c.b16 %v6407, %v6406
        %v6411 = vsel %vm553, %v6403, 0
        %6413 = vmatpush.bf16.msra.mxu0 0
        %6414 = vmatpush.bf16.msra.mxu0 0
        %6415 = vmatpush.bf16.msra.mxu0 0
        %6416 = vmatpush.bf16.msra.mxu0 0
        %6417 = vmatpush.bf16.msra.mxu0 0
        %6418 = vmatpush.bf16.msra.mxu0 0
        %6419 = vmatpush.bf16.msra.mxu0 0
        %6420 = vmatpush.bf16.msra.mxu0 %v6408
        %6421 = vmatmul.bf16.gmra.mxu0 %v6411
        %v6422 = vpop.f32.mrf.mxu0
        %v6423 = vadd.f32 0.0, %v6422
        %v6424 = vpop.f32.mrf.mxu0
        %6425 = vdwg.mxu0
        %v6428 = vunpack.c.l.b16 %v6230
        %v6429 = vunpack.c.l.b16 %v6231
        %v6430 = vpack.c.b16 %v6429, %v6428
        %v6433 = vsel %vm553, %v6326, 0
        %6435 = vmatpush.bf16.msra.mxu0 0
        %6436 = vmatpush.bf16.msra.mxu0 0
        %6437 = vmatpush.bf16.msra.mxu0 0
        %6438 = vmatpush.bf16.msra.mxu0 0
        %6439 = vmatpush.bf16.msra.mxu0 0
        %6440 = vmatpush.bf16.msra.mxu0 0
        %6441 = vmatpush.bf16.msra.mxu0 0
        %6442 = vmatpush.bf16.msra.mxu0 %v6430
        %6443 = vmatmul.bf16.gmra.mxu0 %v6433
        %v6444 = vpop.f32.mrf.mxu0
        %v6445 = vadd.f32 %v6423, %v6444
        %v6446 = vpop.f32.mrf.mxu0
        %6447 = vdwg.mxu0
        %6448 = vrot.lane.b32.xlu0 %v6329, 96
        %v6449 = vpop.permute.xlu0 %6448
        %v6452 = vunpack.c.l.b16 %v6226
        %v6453 = vunpack.c.l.b16 %v6227
        %v6454 = vpack.c.b16 %v6453, %v6452
        %v6457 = vsel %vm553, %v6449, 0
        %6459 = vmatpush.bf16.msra.mxu0 0
        %6460 = vmatpush.bf16.msra.mxu0 0
        %6461 = vmatpush.bf16.msra.mxu0 0
        %6462 = vmatpush.bf16.msra.mxu0 0
        %6463 = vmatpush.bf16.msra.mxu0 0
        %6464 = vmatpush.bf16.msra.mxu0 0
        %6465 = vmatpush.bf16.msra.mxu0 0
        %6466 = vmatpush.bf16.msra.mxu0 %v6454
        %6467 = vmatmul.bf16.gmra.mxu0 %v6457
        %v6468 = vpop.f32.mrf.mxu0
        %v6469 = vadd.f32 0.0, %v6468
        %v6470 = vpop.f32.mrf.mxu0
        %6471 = vdwg.mxu0
        %v6472 = vsel %vm6260, %v6469, -inf
        %6473 = vmax.xlane.f32.xlu0 %v6472
        %v6474 = vpop.xlane.xlu0 %6473
        %v6475 = vsub.f32 %v6469, %v6474
        %v6476 = vmul.f32 %v6475, 1.442695
        %v6477 = vpow.pop %v6476
        %v6478 = vsel %vm6260, %v6477, 0.0
        %6479 = vadd.xlane.f32.xlu0 %v6478
        %v6480 = vpop.xlane.xlu0 %6479
        %v6481 = vrcp.pop %v6480
        %v6482 = vmul.f32 %v6477, %v6481
        %v6483 = vpack.c.bf16 %v6482, %v6482
        %6484 = vrot.lane.b32.xlu0 %v6272, 32
        %v6485 = vpop.permute.xlu0 %6484
        %6486 = vrot.lane.b32.xlu0 %v6273, 32
        %v6487 = vpop.permute.xlu0 %6486
        %6488 = vrot.lane.b32.xlu0 %v6274, 32
        %v6489 = vpop.permute.xlu0 %6488
        %6490 = vrot.lane.b32.xlu0 %v6275, 32
        %v6491 = vpop.permute.xlu0 %6490
        %6492 = vrot.lane.b32.xlu0 %v6276, 32
        %v6493 = vpop.permute.xlu0 %6492
        %6494 = vrot.lane.b32.xlu0 %v6277, 32
        %v6495 = vpop.permute.xlu0 %6494
        %6496 = vrot.lane.b32.xlu0 %v6278, 32
        %v6497 = vpop.permute.xlu0 %6496
        %6498 = vrot.lane.b32.xlu0 %v6279, 32
        %v6499 = vpop.permute.xlu0 %6498
        %6508 = vmatpush.bf16.msra.mxu0 %v6499
        %6509 = vmatpush.bf16.msra.mxu0 %v6497
        %6510 = vmatpush.bf16.msra.mxu0 %v6495
        %6511 = vmatpush.bf16.msra.mxu0 %v6493
        %6512 = vmatpush.bf16.msra.mxu0 %v6491
        %6513 = vmatpush.bf16.msra.mxu0 %v6489
        %6514 = vmatpush.bf16.msra.mxu0 %v6487
        %6515 = vmatpush.bf16.msra.mxu0 %v6485
        %6516 = vmatmul.bf16.gmra.mxu0 %v6483
        %v6517 = vpop.f32.mrf.mxu0
        %v6518 = vadd.f32 0.0, %v6517
        %v6519 = vpop.f32.mrf.mxu0
        %6520 = vdwg.mxu0
        %v6521 = vpack.c.bf16 %v6518, %v6518
        %v6524 = vunpack.c.l.b16 %v6234
        %v6525 = vunpack.c.l.b16 %v6235
        %v6526 = vpack.c.b16 %v6525, %v6524
        %v6529 = vsel %vm553, %v6521, 0
        %6531 = vmatpush.bf16.msra.mxu0 0
        %6532 = vmatpush.bf16.msra.mxu0 0
        %6533 = vmatpush.bf16.msra.mxu0 0
        %6534 = vmatpush.bf16.msra.mxu0 0
        %6535 = vmatpush.bf16.msra.mxu0 0
        %6536 = vmatpush.bf16.msra.mxu0 0
        %6537 = vmatpush.bf16.msra.mxu0 0
        %6538 = vmatpush.bf16.msra.mxu0 %v6526
        %6539 = vmatmul.bf16.gmra.mxu0 %v6529
        %v6540 = vpop.f32.mrf.mxu0
        %v6541 = vadd.f32 0.0, %v6540
        %v6542 = vpop.f32.mrf.mxu0
        %6543 = vdwg.mxu0
        %v6544 = vadd.f32 %v6445, %v6541
        %6545 = vrot.lane.b32.xlu0 %v6329, 80
        %v6546 = vpop.permute.xlu0 %6545
        %v6549 = vunpack.c.l.b16 %v6228
        %v6550 = vunpack.c.l.b16 %v6229
        %v6551 = vpack.c.b16 %v6550, %v6549
        %v6554 = vsel %vm553, %v6546, 0
        %6556 = vmatpush.bf16.msra.mxu0 0
        %6557 = vmatpush.bf16.msra.mxu0 0
        %6558 = vmatpush.bf16.msra.mxu0 0
        %6559 = vmatpush.bf16.msra.mxu0 0
        %6560 = vmatpush.bf16.msra.mxu0 0
        %6561 = vmatpush.bf16.msra.mxu0 0
        %6562 = vmatpush.bf16.msra.mxu0 0
        %6563 = vmatpush.bf16.msra.mxu0 %v6551
        %6564 = vmatmul.bf16.gmra.mxu0 %v6554
        %v6565 = vpop.f32.mrf.mxu0
        %v6566 = vadd.f32 0.0, %v6565
        %v6567 = vpop.f32.mrf.mxu0
        %6568 = vdwg.mxu0
        %v6569 = vsel %vm6260, %v6566, -inf
        %6570 = vmax.xlane.f32.xlu0 %v6569
        %v6571 = vpop.xlane.xlu0 %6570
        %v6572 = vsub.f32 %v6566, %v6571
        %v6573 = vmul.f32 %v6572, 1.442695
        %v6574 = vpow.pop %v6573
        %v6575 = vsel %vm6260, %v6574, 0.0
        %6576 = vadd.xlane.f32.xlu0 %v6575
        %v6577 = vpop.xlane.xlu0 %6576
        %v6578 = vrcp.pop %v6577
        %v6579 = vmul.f32 %v6574, %v6578
        %v6580 = vpack.c.bf16 %v6579, %v6579
        %6581 = vrot.lane.b32.xlu0 %v6272, 16
        %v6582 = vpop.permute.xlu0 %6581
        %6583 = vrot.lane.b32.xlu0 %v6273, 16
        %v6584 = vpop.permute.xlu0 %6583
        %6585 = vrot.lane.b32.xlu0 %v6274, 16
        %v6586 = vpop.permute.xlu0 %6585
        %6587 = vrot.lane.b32.xlu0 %v6275, 16
        %v6588 = vpop.permute.xlu0 %6587
        %6589 = vrot.lane.b32.xlu0 %v6276, 16
        %v6590 = vpop.permute.xlu0 %6589
        %6591 = vrot.lane.b32.xlu0 %v6277, 16
        %v6592 = vpop.permute.xlu0 %6591
        %6593 = vrot.lane.b32.xlu0 %v6278, 16
        %v6594 = vpop.permute.xlu0 %6593
        %6595 = vrot.lane.b32.xlu0 %v6279, 16
        %v6596 = vpop.permute.xlu0 %6595
        %6605 = vmatpush.bf16.msra.mxu0 %v6596
        %6606 = vmatpush.bf16.msra.mxu0 %v6594
        %6607 = vmatpush.bf16.msra.mxu0 %v6592
        %6608 = vmatpush.bf16.msra.mxu0 %v6590
        %6609 = vmatpush.bf16.msra.mxu0 %v6588
        %6610 = vmatpush.bf16.msra.mxu0 %v6586
        %6611 = vmatpush.bf16.msra.mxu0 %v6584
        %6612 = vmatpush.bf16.msra.mxu0 %v6582
        %6613 = vmatmul.bf16.gmra.mxu0 %v6580
        %v6614 = vpop.f32.mrf.mxu0
        %v6615 = vadd.f32 0.0, %v6614
        %v6616 = vpop.f32.mrf.mxu0
        %6617 = vdwg.mxu0
        %v6618 = vpack.c.bf16 %v6615, %v6615
        %v6621 = vunpack.c.l.b16 %v6236
        %v6622 = vunpack.c.l.b16 %v6237
        %v6623 = vpack.c.b16 %v6622, %v6621
        %v6626 = vsel %vm553, %v6618, 0
        %6628 = vmatpush.bf16.msra.mxu0 0
        %6629 = vmatpush.bf16.msra.mxu0 0
        %6630 = vmatpush.bf16.msra.mxu0 0
        %6631 = vmatpush.bf16.msra.mxu0 0
        %6632 = vmatpush.bf16.msra.mxu0 0
        %6633 = vmatpush.bf16.msra.mxu0 0
        %6634 = vmatpush.bf16.msra.mxu0 0
        %6635 = vmatpush.bf16.msra.mxu0 %v6623
        %6636 = vmatmul.bf16.gmra.mxu0 %v6626
        %v6637 = vpop.f32.mrf.mxu0
        %v6638 = vadd.f32 0.0, %v6637
        %v6639 = vpop.f32.mrf.mxu0
        %6640 = vdwg.mxu0
        %v6641 = vadd.f32 %v6544, %v6638
        %v6642 = vld [vmem:[%s7 + $0x88] sm:$0x1]
        %v6643 = vperm.slane %v6642, 0
        %v6644 = vadd.f32 %v6641, %v6643
        %v6645 = vpack.c.bf16 %v1475, %v1475
        %v6646 = vld [vmem:[#allocation2 + $0x628] sm:$0xf]
        %v6647 = vld [vmem:[#allocation2 + $0x62c] sm:$0xf]
        %v6648 = vld [vmem:[#allocation2 + $0x630] sm:$0xf]
        %v6649 = vld [vmem:[#allocation2 + $0x634] sm:$0xf]
        %v6650 = vld [vmem:[#allocation2 + $0x638] sm:$0xf]
        %v6651 = vld [vmem:[#allocation2 + $0x63c] sm:$0xf]
        %v6652 = vld [vmem:[#allocation2 + $0x640] sm:$0xf]
        %v6653 = vld [vmem:[#allocation2 + $0x644] sm:$0xf]
        %v6654 = vld [vmem:[%s7 + $0x90] sm:$0x1]
        %v6655 = vperm.slane %v6654, 0
        %v6664 = vunpack.c.l.b16 %v6646
        %v6665 = vunpack.c.l.b16 %v6647
        %v6666 = vunpack.c.l.b16 %v6648
        %v6667 = vunpack.c.l.b16 %v6649
        %v6668 = vunpack.c.l.b16 %v6650
        %v6669 = vunpack.c.l.b16 %v6651
        %v6670 = vunpack.c.l.b16 %v6652
        %v6671 = vunpack.c.l.b16 %v6653
        %v6672 = vpack.c.b16 %v6665, %v6664
        %v6673 = vpack.c.b16 %v6667, %v6666
        %v6674 = vpack.c.b16 %v6669, %v6668
        %v6675 = vpack.c.b16 %v6671, %v6670
        %v6681 = vsel %vm1522, %v6645, 0
        %6683 = vmatpush.bf16.msra.mxu0 0
        %6684 = vmatpush.bf16.msra.mxu0 0
        %6685 = vmatpush.bf16.msra.mxu0 0
        %6686 = vmatpush.bf16.msra.mxu0 0
        %6687 = vmatpush.bf16.msra.mxu0 %v6675
        %6688 = vmatpush.bf16.msra.mxu0 %v6674
        %6689 = vmatpush.bf16.msra.mxu0 %v6673
        %6690 = vmatpush.bf16.msra.mxu0 %v6672
        %6691 = vmatmul.bf16.gmra.mxu0 %v6681
        %v6692 = vpop.f32.mrf.mxu0
        %v6693 = vadd.f32 %v6655, %v6692
        %v6694 = vpop.f32.mrf.mxu0
        %6695 = vdwg.mxu0
        %v6696 = vpack.c.bf16 %v6693, %v6693
        %v6697 = vld [vmem:[#allocation2 + $0x648] sm:$0xf]
        %v6698 = vld [vmem:[#allocation2 + $0x64c] sm:$0xf]
        %v6699 = vld [vmem:[#allocation2 + $0x650] sm:$0xf]
        %v6700 = vld [vmem:[#allocation2 + $0x654] sm:$0xf]
        %v6701 = vld [vmem:[#allocation2 + $0x658] sm:$0xf]
        %v6702 = vld [vmem:[#allocation2 + $0x65c] sm:$0xf]
        %v6703 = vld [vmem:[#allocation2 + $0x660] sm:$0xf]
        %v6704 = vld [vmem:[#allocation2 + $0x664] sm:$0xf]
        %v6705 = vld [vmem:[%s7 + $0x98] sm:$0x1]
        %v6706 = vperm.slane %v6705, 0
        %v6715 = vunpack.c.l.b16 %v6697
        %v6716 = vunpack.c.l.b16 %v6698
        %v6717 = vunpack.c.l.b16 %v6699
        %v6718 = vunpack.c.l.b16 %v6700
        %v6719 = vunpack.c.l.b16 %v6701
        %v6720 = vunpack.c.l.b16 %v6702
        %v6721 = vunpack.c.l.b16 %v6703
        %v6722 = vunpack.c.l.b16 %v6704
        %v6723 = vpack.c.b16 %v6716, %v6715
        %v6724 = vpack.c.b16 %v6718, %v6717
        %v6725 = vpack.c.b16 %v6720, %v6719
        %v6726 = vpack.c.b16 %v6722, %v6721
        %v6732 = vsel %vm1522, %v5505, 0
        %v6735 = vsel %vm1522, %v5506, 0
        %v6738 = vsel %vm1522, %v5507, 0
        %v6741 = vsel %vm1522, %v5508, 0
        %v6744 = vsel %vm1522, %v5509, 0
        %v6747 = vsel %vm1522, %v5510, 0
        %v6750 = vsel %vm1522, %v5511, 0
        %v6753 = vsel %vm1522, %v5512, 0
        %v6756 = vsel %vm1522, %v5513, 0
        %v6759 = vsel %vm1522, %v5514, 0
        %v6762 = vsel %vm1522, %v5515, 0
        %v6765 = vsel %vm1522, %v5516, 0
        %v6768 = vsel %vm1522, %v5517, 0
        %v6771 = vsel %vm1522, %v5518, 0
        %v6774 = vsel %vm1522, %v5519, 0
        %v6777 = vsel %vm1522, %v5520, 0
        %v6780 = vsel %vm1522, %v5521, 0
        %v6783 = vsel %vm1522, %v5522, 0
        %v6786 = vsel %vm1522, %v5523, 0
        %v6789 = vsel %vm1522, %v5524, 0
        %v6792 = vsel %vm1522, %v5525, 0
        %v6795 = vsel %vm1522, %v5526, 0
        %v6798 = vsel %vm1522, %v5527, 0
        %v6801 = vsel %vm1522, %v5528, 0
        %v6804 = vsel %vm1522, %v5529, 0
        %v6807 = vsel %vm1522, %v5530, 0
        %v6810 = vsel %vm1522, %v5531, 0
        %v6813 = vsel %vm1522, %v5532, 0
        %v6816 = vsel %vm1522, %v5533, 0
        %v6819 = vsel %vm1522, %v5534, 0
        %v6822 = vsel %vm1522, %v5535, 0
        %v6825 = vsel %vm1522, %v5536, 0
        %6827 = vmatpush.bf16.msra.mxu0 0
        %6828 = vmatpush.bf16.msra.mxu0 0
        %6829 = vmatpush.bf16.msra.mxu0 0
        %6830 = vmatpush.bf16.msra.mxu0 0
        %6831 = vmatpush.bf16.msra.mxu0 %v6726
        %6832 = vmatpush.bf16.msra.mxu0 %v6725
        %6833 = vmatpush.bf16.msra.mxu0 %v6724
        %6834 = vmatpush.bf16.msra.mxu0 %v6723
        %6835 = vmatmul.bf16.gmra.mxu0 %v6732
        %v6836 = vpop.f32.mrf.mxu0
        %v6837 = vadd.f32 %v6706, %v6836
        %v6838 = vpop.f32.mrf.mxu0
        %v6839 = vadd.f32 %v6706, %v6838
        %6840 = vmatmul.bf16.gmra.mxu0 %v6735
        %v6841 = vpop.f32.mrf.mxu0
        %v6842 = vadd.f32 %v6706, %v6841
        %v6843 = vpop.f32.mrf.mxu0
        %v6844 = vadd.f32 %v6706, %v6843
        %6845 = vmatmul.bf16.gmra.mxu0 %v6738
        %v6846 = vpop.f32.mrf.mxu0
        %v6847 = vadd.f32 %v6706, %v6846
        %v6848 = vpop.f32.mrf.mxu0
        %v6849 = vadd.f32 %v6706, %v6848
        %6850 = vmatmul.bf16.gmra.mxu0 %v6741
        %v6851 = vpop.f32.mrf.mxu0
        %v6852 = vadd.f32 %v6706, %v6851
        %v6853 = vpop.f32.mrf.mxu0
        %v6854 = vadd.f32 %v6706, %v6853
        %6855 = vmatmul.bf16.gmra.mxu0 %v6744
        %v6856 = vpop.f32.mrf.mxu0
        %v6857 = vadd.f32 %v6706, %v6856
        %v6858 = vpop.f32.mrf.mxu0
        %v6859 = vadd.f32 %v6706, %v6858
        %6860 = vmatmul.bf16.gmra.mxu0 %v6747
        %v6861 = vpop.f32.mrf.mxu0
        %v6862 = vadd.f32 %v6706, %v6861
        %v6863 = vpop.f32.mrf.mxu0
        %v6864 = vadd.f32 %v6706, %v6863
        %6865 = vmatmul.bf16.gmra.mxu0 %v6750
        %v6866 = vpop.f32.mrf.mxu0
        %v6867 = vadd.f32 %v6706, %v6866
        %v6868 = vpop.f32.mrf.mxu0
        %v6869 = vadd.f32 %v6706, %v6868
        %6870 = vmatmul.bf16.gmra.mxu0 %v6753
        %v6871 = vpop.f32.mrf.mxu0
        %v6872 = vadd.f32 %v6706, %v6871
        %v6873 = vpop.f32.mrf.mxu0
        %v6874 = vadd.f32 %v6706, %v6873
        %6875 = vmatmul.bf16.gmra.mxu0 %v6756
        %v6876 = vpop.f32.mrf.mxu0
        %v6877 = vadd.f32 %v6706, %v6876
        %v6878 = vpop.f32.mrf.mxu0
        %v6879 = vadd.f32 %v6706, %v6878
        %6880 = vmatmul.bf16.gmra.mxu0 %v6759
        %v6881 = vpop.f32.mrf.mxu0
        %v6882 = vadd.f32 %v6706, %v6881
        %v6883 = vpop.f32.mrf.mxu0
        %v6884 = vadd.f32 %v6706, %v6883
        %6885 = vmatmul.bf16.gmra.mxu0 %v6762
        %v6886 = vpop.f32.mrf.mxu0
        %v6887 = vadd.f32 %v6706, %v6886
        %v6888 = vpop.f32.mrf.mxu0
        %v6889 = vadd.f32 %v6706, %v6888
        %6890 = vmatmul.bf16.gmra.mxu0 %v6765
        %v6891 = vpop.f32.mrf.mxu0
        %v6892 = vadd.f32 %v6706, %v6891
        %v6893 = vpop.f32.mrf.mxu0
        %v6894 = vadd.f32 %v6706, %v6893
        %6895 = vmatmul.bf16.gmra.mxu0 %v6768
        %v6896 = vpop.f32.mrf.mxu0
        %v6897 = vadd.f32 %v6706, %v6896
        %v6898 = vpop.f32.mrf.mxu0
        %v6899 = vadd.f32 %v6706, %v6898
        %6900 = vmatmul.bf16.gmra.mxu0 %v6771
        %v6901 = vpop.f32.mrf.mxu0
        %v6902 = vadd.f32 %v6706, %v6901
        %v6903 = vpop.f32.mrf.mxu0
        %v6904 = vadd.f32 %v6706, %v6903
        %6905 = vmatmul.bf16.gmra.mxu0 %v6774
        %v6906 = vpop.f32.mrf.mxu0
        %v6907 = vadd.f32 %v6706, %v6906
        %v6908 = vpop.f32.mrf.mxu0
        %v6909 = vadd.f32 %v6706, %v6908
        %6910 = vmatmul.bf16.gmra.mxu0 %v6777
        %v6911 = vpop.f32.mrf.mxu0
        %v6912 = vadd.f32 %v6706, %v6911
        %v6913 = vpop.f32.mrf.mxu0
        %v6914 = vadd.f32 %v6706, %v6913
        %6915 = vmatmul.bf16.gmra.mxu0 %v6780
        %v6916 = vpop.f32.mrf.mxu0
        %v6917 = vadd.f32 %v6706, %v6916
        %v6918 = vpop.f32.mrf.mxu0
        %v6919 = vadd.f32 %v6706, %v6918
        %6920 = vmatmul.bf16.gmra.mxu0 %v6783
        %v6921 = vpop.f32.mrf.mxu0
        %v6922 = vadd.f32 %v6706, %v6921
        %v6923 = vpop.f32.mrf.mxu0
        %v6924 = vadd.f32 %v6706, %v6923
        %6925 = vmatmul.bf16.gmra.mxu0 %v6786
        %v6926 = vpop.f32.mrf.mxu0
        %v6927 = vadd.f32 %v6706, %v6926
        %v6928 = vpop.f32.mrf.mxu0
        %v6929 = vadd.f32 %v6706, %v6928
        %6930 = vmatmul.bf16.gmra.mxu0 %v6789
        %v6931 = vpop.f32.mrf.mxu0
        %v6932 = vadd.f32 %v6706, %v6931
        %v6933 = vpop.f32.mrf.mxu0
        %v6934 = vadd.f32 %v6706, %v6933
        %6935 = vmatmul.bf16.gmra.mxu0 %v6792
        %v6936 = vpop.f32.mrf.mxu0
        %v6937 = vadd.f32 %v6706, %v6936
        %v6938 = vpop.f32.mrf.mxu0
        %v6939 = vadd.f32 %v6706, %v6938
        %6940 = vmatmul.bf16.gmra.mxu0 %v6795
        %v6941 = vpop.f32.mrf.mxu0
        %v6942 = vadd.f32 %v6706, %v6941
        %v6943 = vpop.f32.mrf.mxu0
        %v6944 = vadd.f32 %v6706, %v6943
        %6945 = vmatmul.bf16.gmra.mxu0 %v6798
        %v6946 = vpop.f32.mrf.mxu0
        %v6947 = vadd.f32 %v6706, %v6946
        %v6948 = vpop.f32.mrf.mxu0
        %v6949 = vadd.f32 %v6706, %v6948
        %6950 = vmatmul.bf16.gmra.mxu0 %v6801
        %v6951 = vpop.f32.mrf.mxu0
        %v6952 = vadd.f32 %v6706, %v6951
        %v6953 = vpop.f32.mrf.mxu0
        %v6954 = vadd.f32 %v6706, %v6953
        %6955 = vmatmul.bf16.gmra.mxu0 %v6804
        %v6956 = vpop.f32.mrf.mxu0
        %v6957 = vadd.f32 %v6706, %v6956
        %v6958 = vpop.f32.mrf.mxu0
        %v6959 = vadd.f32 %v6706, %v6958
        %6960 = vmatmul.bf16.gmra.mxu0 %v6807
        %v6961 = vpop.f32.mrf.mxu0
        %v6962 = vadd.f32 %v6706, %v6961
        %v6963 = vpop.f32.mrf.mxu0
        %v6964 = vadd.f32 %v6706, %v6963
        %6965 = vmatmul.bf16.gmra.mxu0 %v6810
        %v6966 = vpop.f32.mrf.mxu0
        %v6967 = vadd.f32 %v6706, %v6966
        %v6968 = vpop.f32.mrf.mxu0
        %v6969 = vadd.f32 %v6706, %v6968
        %6970 = vmatmul.bf16.gmra.mxu0 %v6813
        %v6971 = vpop.f32.mrf.mxu0
        %v6972 = vadd.f32 %v6706, %v6971
        %v6973 = vpop.f32.mrf.mxu0
        %v6974 = vadd.f32 %v6706, %v6973
        %6975 = vmatmul.bf16.gmra.mxu0 %v6816
        %v6976 = vpop.f32.mrf.mxu0
        %v6977 = vadd.f32 %v6706, %v6976
        %v6978 = vpop.f32.mrf.mxu0
        %v6979 = vadd.f32 %v6706, %v6978
        %6980 = vmatmul.bf16.gmra.mxu0 %v6819
        %v6981 = vpop.f32.mrf.mxu0
        %v6982 = vadd.f32 %v6706, %v6981
        %v6983 = vpop.f32.mrf.mxu0
        %v6984 = vadd.f32 %v6706, %v6983
        %6985 = vmatmul.bf16.gmra.mxu0 %v6822
        %v6986 = vpop.f32.mrf.mxu0
        %v6987 = vadd.f32 %v6706, %v6986
        %v6988 = vpop.f32.mrf.mxu0
        %v6989 = vadd.f32 %v6706, %v6988
        %6990 = vmatmul.bf16.gmra.mxu0 %v6825
        %v6991 = vpop.f32.mrf.mxu0
        %v6992 = vadd.f32 %v6706, %v6991
        %v6993 = vpop.f32.mrf.mxu0
        %v6994 = vadd.f32 %v6706, %v6993
        %6995 = vdwg.mxu0
        %6996 = vxpose.xlu0.b32.start [1/16] %v6837, 128
        %6997 = vxpose.xlu0.b32.cont [2/16] %v6839, 128
        %6998 = vxpose.xlu0.b32.cont [3/16] %v6842, 128
        %6999 = vxpose.xlu0.b32.cont [4/16] %v6844, 128
        %7000 = vxpose.xlu0.b32.cont [5/16] %v6847, 128
        %7001 = vxpose.xlu0.b32.cont [6/16] %v6849, 128
        %7002 = vxpose.xlu0.b32.cont [7/16] %v6852, 128
        %7003 = vxpose.xlu0.b32.cont [8/16] %v6854, 128
        %7004 = vxpose.xlu0.b32.cont [9/16] %v6857, 128
        %7005 = vxpose.xlu0.b32.cont [10/16] %v6859, 128
        %7006 = vxpose.xlu0.b32.cont [11/16] %v6862, 128
        %7007 = vxpose.xlu0.b32.cont [12/16] %v6864, 128
        %7008 = vxpose.xlu0.b32.cont [13/16] %v6867, 128
        %7009 = vxpose.xlu0.b32.cont [14/16] %v6869, 128
        %7010 = vxpose.xlu0.b32.cont [15/16] %v6872, 128
        %7011 = vxpose.xlu0.b32.end [16/16] %v6874, 128
        %v7012 = vpop.trf.xlu0
        %v7013 = vpop.trf.xlu0
        %v7014 = vpop.trf.xlu0
        %v7015 = vpop.trf.xlu0
        %v7016 = vpop.trf.xlu0
        %v7017 = vpop.trf.xlu0
        %v7018 = vpop.trf.xlu0
        %v7019 = vpop.trf.xlu0
        %v7020 = vpop.trf.xlu0
        %v7021 = vpop.trf.xlu0
        %v7022 = vpop.trf.xlu0
        %v7023 = vpop.trf.xlu0
        %v7024 = vpop.trf.xlu0
        %v7025 = vpop.trf.xlu0
        %v7026 = vpop.trf.xlu0
        %v7027 = vpop.trf.xlu0
        %7028 = vxpose.xlu0.b32.start [1/16] %v6877, 128
        %7029 = vxpose.xlu0.b32.cont [2/16] %v6879, 128
        %7030 = vxpose.xlu0.b32.cont [3/16] %v6882, 128
        %7031 = vxpose.xlu0.b32.cont [4/16] %v6884, 128
        %7032 = vxpose.xlu0.b32.cont [5/16] %v6887, 128
        %7033 = vxpose.xlu0.b32.cont [6/16] %v6889, 128
        %7034 = vxpose.xlu0.b32.cont [7/16] %v6892, 128
        %7035 = vxpose.xlu0.b32.cont [8/16] %v6894, 128
        %7036 = vxpose.xlu0.b32.cont [9/16] %v6897, 128
        %7037 = vxpose.xlu0.b32.cont [10/16] %v6899, 128
        %7038 = vxpose.xlu0.b32.cont [11/16] %v6902, 128
        %7039 = vxpose.xlu0.b32.cont [12/16] %v6904, 128
        %7040 = vxpose.xlu0.b32.cont [13/16] %v6907, 128
        %7041 = vxpose.xlu0.b32.cont [14/16] %v6909, 128
        %7042 = vxpose.xlu0.b32.cont [15/16] %v6912, 128
        %7043 = vxpose.xlu0.b32.end [16/16] %v6914, 128
        %v7044 = vpop.trf.xlu0
        %v7045 = vpop.trf.xlu0
        %v7046 = vpop.trf.xlu0
        %v7047 = vpop.trf.xlu0
        %v7048 = vpop.trf.xlu0
        %v7049 = vpop.trf.xlu0
        %v7050 = vpop.trf.xlu0
        %v7051 = vpop.trf.xlu0
        %v7052 = vpop.trf.xlu0
        %v7053 = vpop.trf.xlu0
        %v7054 = vpop.trf.xlu0
        %v7055 = vpop.trf.xlu0
        %v7056 = vpop.trf.xlu0
        %v7057 = vpop.trf.xlu0
        %v7058 = vpop.trf.xlu0
        %v7059 = vpop.trf.xlu0
        %7060 = vxpose.xlu0.b32.start [1/16] %v6917, 128
        %7061 = vxpose.xlu0.b32.cont [2/16] %v6919, 128
        %7062 = vxpose.xlu0.b32.cont [3/16] %v6922, 128
        %7063 = vxpose.xlu0.b32.cont [4/16] %v6924, 128
        %7064 = vxpose.xlu0.b32.cont [5/16] %v6927, 128
        %7065 = vxpose.xlu0.b32.cont [6/16] %v6929, 128
        %7066 = vxpose.xlu0.b32.cont [7/16] %v6932, 128
        %7067 = vxpose.xlu0.b32.cont [8/16] %v6934, 128
        %7068 = vxpose.xlu0.b32.cont [9/16] %v6937, 128
        %7069 = vxpose.xlu0.b32.cont [10/16] %v6939, 128
        %7070 = vxpose.xlu0.b32.cont [11/16] %v6942, 128
        %7071 = vxpose.xlu0.b32.cont [12/16] %v6944, 128
        %7072 = vxpose.xlu0.b32.cont [13/16] %v6947, 128
        %7073 = vxpose.xlu0.b32.cont [14/16] %v6949, 128
        %7074 = vxpose.xlu0.b32.cont [15/16] %v6952, 128
        %7075 = vxpose.xlu0.b32.end [16/16] %v6954, 128
        %v7076 = vpop.trf.xlu0
        %v7077 = vpop.trf.xlu0
        %v7078 = vpop.trf.xlu0
        %v7079 = vpop.trf.xlu0
        %v7080 = vpop.trf.xlu0
        %v7081 = vpop.trf.xlu0
        %v7082 = vpop.trf.xlu0
        %v7083 = vpop.trf.xlu0
        %v7084 = vpop.trf.xlu0
        %v7085 = vpop.trf.xlu0
        %v7086 = vpop.trf.xlu0
        %v7087 = vpop.trf.xlu0
        %v7088 = vpop.trf.xlu0
        %v7089 = vpop.trf.xlu0
        %v7090 = vpop.trf.xlu0
        %v7091 = vpop.trf.xlu0
        %7092 = vxpose.xlu0.b32.start [1/16] %v6957, 128
        %7093 = vxpose.xlu0.b32.cont [2/16] %v6959, 128
        %7094 = vxpose.xlu0.b32.cont [3/16] %v6962, 128
        %7095 = vxpose.xlu0.b32.cont [4/16] %v6964, 128
        %7096 = vxpose.xlu0.b32.cont [5/16] %v6967, 128
        %7097 = vxpose.xlu0.b32.cont [6/16] %v6969, 128
        %7098 = vxpose.xlu0.b32.cont [7/16] %v6972, 128
        %7099 = vxpose.xlu0.b32.cont [8/16] %v6974, 128
        %7100 = vxpose.xlu0.b32.cont [9/16] %v6977, 128
        %7101 = vxpose.xlu0.b32.cont [10/16] %v6979, 128
        %7102 = vxpose.xlu0.b32.cont [11/16] %v6982, 128
        %7103 = vxpose.xlu0.b32.cont [12/16] %v6984, 128
        %7104 = vxpose.xlu0.b32.cont [13/16] %v6987, 128
        %7105 = vxpose.xlu0.b32.cont [14/16] %v6989, 128
        %7106 = vxpose.xlu0.b32.cont [15/16] %v6992, 128
        %7107 = vxpose.xlu0.b32.end [16/16] %v6994, 128
        %v7108 = vpop.trf.xlu0
        %v7109 = vpop.trf.xlu0
        %v7110 = vpop.trf.xlu0
        %v7111 = vpop.trf.xlu0
        %v7112 = vpop.trf.xlu0
        %v7113 = vpop.trf.xlu0
        %v7114 = vpop.trf.xlu0
        %v7115 = vpop.trf.xlu0
        %v7116 = vpop.trf.xlu0
        %v7117 = vpop.trf.xlu0
        %v7118 = vpop.trf.xlu0
        %v7119 = vpop.trf.xlu0
        %v7120 = vpop.trf.xlu0
        %v7121 = vpop.trf.xlu0
        %v7122 = vpop.trf.xlu0
        %v7123 = vpop.trf.xlu0
        %v7124 = vpack.c.bf16 %v7044, %v7012
        %v7125 = vpack.c.bf16 %v7108, %v7076
        %v7126 = vpack.c.bf16 %v7045, %v7013
        %v7127 = vpack.c.bf16 %v7109, %v7077
        %v7128 = vpack.c.bf16 %v7046, %v7014
        %v7129 = vpack.c.bf16 %v7110, %v7078
        %v7130 = vpack.c.bf16 %v7047, %v7015
        %v7131 = vpack.c.bf16 %v7111, %v7079
        %v7132 = vpack.c.bf16 %v7048, %v7016
        %v7133 = vpack.c.bf16 %v7112, %v7080
        %v7134 = vpack.c.bf16 %v7049, %v7017
        %v7135 = vpack.c.bf16 %v7113, %v7081
        %v7136 = vpack.c.bf16 %v7050, %v7018
        %v7137 = vpack.c.bf16 %v7114, %v7082
        %v7138 = vpack.c.bf16 %v7051, %v7019
        %v7139 = vpack.c.bf16 %v7115, %v7083
        %v7140 = vld [vmem:[#allocation2 + $0x668] sm:$0xf]
        %v7141 = vld [vmem:[#allocation2 + $0x66c] sm:$0xf]
        %v7142 = vld [vmem:[#allocation2 + $0x670] sm:$0xf]
        %v7143 = vld [vmem:[#allocation2 + $0x674] sm:$0xf]
        %v7144 = vld [vmem:[#allocation2 + $0x678] sm:$0xf]
        %v7145 = vld [vmem:[#allocation2 + $0x67c] sm:$0xf]
        %v7146 = vld [vmem:[#allocation2 + $0x680] sm:$0xf]
        %v7147 = vld [vmem:[#allocation2 + $0x684] sm:$0xf]
        %v7152 = vunpack.c.l.b16 %v7124
        %v7153 = vunpack.c.h.b16 %v7124
        %v7154 = vunpack.c.l.b16 %v7125
        %v7155 = vunpack.c.h.b16 %v7125
        %v7156 = vunpack.c.l.b16 %v7126
        %v7157 = vunpack.c.h.b16 %v7126
        %v7158 = vunpack.c.l.b16 %v7127
        %v7159 = vunpack.c.h.b16 %v7127
        %v7160 = vpack.c.b16 %v7156, %v7152
        %v7161 = vpack.c.b16 %v7157, %v7153
        %v7162 = vpack.c.b16 %v7158, %v7154
        %v7163 = vpack.c.b16 %v7159, %v7155
        %v7169 = vsel %vm553, %v6696, 0
        %7171 = vmatpush.bf16.msra.mxu0 0
        %7172 = vmatpush.bf16.msra.mxu0 0
        %7173 = vmatpush.bf16.msra.mxu0 0
        %7174 = vmatpush.bf16.msra.mxu0 0
        %7175 = vmatpush.bf16.msra.mxu0 0
        %7176 = vmatpush.bf16.msra.mxu0 0
        %7177 = vmatpush.bf16.msra.mxu0 0
        %7178 = vmatpush.bf16.msra.mxu0 %v7160
        %7179 = vmatmul.bf16.gmra.mxu0 %v7169
        %v7180 = vpop.f32.mrf.mxu0
        %v7181 = vadd.f32 0.0, %v7180
        %v7182 = vpop.f32.mrf.mxu0
        %7183 = vdwg.mxu0
        %7184 = vmatpush.bf16.msra.mxu0 0
        %7185 = vmatpush.bf16.msra.mxu0 0
        %7186 = vmatpush.bf16.msra.mxu0 0
        %7187 = vmatpush.bf16.msra.mxu0 0
        %7188 = vmatpush.bf16.msra.mxu0 0
        %7189 = vmatpush.bf16.msra.mxu0 0
        %7190 = vmatpush.bf16.msra.mxu0 0
        %7191 = vmatpush.bf16.msra.mxu0 %v7161
        %7192 = vmatmul.bf16.gmra.mxu0 %v7169
        %v7193 = vpop.f32.mrf.mxu0
        %v7194 = vadd.f32 0.0, %v7193
        %v7195 = vpop.f32.mrf.mxu0
        %7196 = vdwg.mxu0
        %7197 = vmatpush.bf16.msra.mxu0 0
        %7198 = vmatpush.bf16.msra.mxu0 0
        %7199 = vmatpush.bf16.msra.mxu0 0
        %7200 = vmatpush.bf16.msra.mxu0 0
        %7201 = vmatpush.bf16.msra.mxu0 0
        %7202 = vmatpush.bf16.msra.mxu0 0
        %7203 = vmatpush.bf16.msra.mxu0 0
        %7204 = vmatpush.bf16.msra.mxu0 %v7162
        %7205 = vmatmul.bf16.gmra.mxu0 %v7169
        %v7206 = vpop.f32.mrf.mxu0
        %v7207 = vadd.f32 0.0, %v7206
        %v7208 = vpop.f32.mrf.mxu0
        %7209 = vdwg.mxu0
        %7210 = vmatpush.bf16.msra.mxu0 0
        %7211 = vmatpush.bf16.msra.mxu0 0
        %7212 = vmatpush.bf16.msra.mxu0 0
        %7213 = vmatpush.bf16.msra.mxu0 0
        %7214 = vmatpush.bf16.msra.mxu0 0
        %7215 = vmatpush.bf16.msra.mxu0 0
        %7216 = vmatpush.bf16.msra.mxu0 0
        %7217 = vmatpush.bf16.msra.mxu0 %v7163
        %7218 = vmatmul.bf16.gmra.mxu0 %v7169
        %v7219 = vpop.f32.mrf.mxu0
        %v7220 = vadd.f32 0.0, %v7219
        %v7221 = vpop.f32.mrf.mxu0
        %7222 = vdwg.mxu0
        %vm7223 = vcmask 1046528
        %v7224 = vsel %vm7223, %v7181, -inf
        %v7225 = vsel %vm7223, %v7194, -inf
        %v7226 = vsel %vm7223, %v7207, -inf
        %v7227 = vsel %vm7223, %v7220, -inf
        %v7228 = vmax.f32 %v7224, %v7225
        %v7229 = vmax.f32 %v7226, %v7227
        %v7230 = vmax.f32 %v7228, %v7229
        %7231 = vmax.xlane.f32.xlu0 %v7230
        %v7232 = vpop.xlane.xlu0 %7231
        %v7233 = vsub.f32 %v7181, %v7232
        %v7234 = vsub.f32 %v7194, %v7232
        %v7235 = vsub.f32 %v7207, %v7232
        %v7236 = vsub.f32 %v7220, %v7232
        %v7237 = vmul.f32 %v7233, 1.442695
        %v7238 = vpow.pop %v7237
        %v7239 = vmul.f32 %v7234, 1.442695
        %v7240 = vpow.pop %v7239
        %v7241 = vmul.f32 %v7235, 1.442695
        %v7242 = vpow.pop %v7241
        %v7243 = vmul.f32 %v7236, 1.442695
        %v7244 = vpow.pop %v7243
        %v7245 = vsel %vm7223, %v7238, 0.0
        %v7246 = vsel %vm7223, %v7240, 0.0
        %v7247 = vadd.f32 %v7245, %v7246
        %v7248 = vsel %vm7223, %v7242, 0.0
        %v7249 = vadd.f32 %v7247, %v7248
        %v7250 = vsel %vm7223, %v7244, 0.0
        %v7251 = vadd.f32 %v7249, %v7250
        %7252 = vadd.xlane.f32.xlu0 %v7251
        %v7253 = vpop.xlane.xlu0 %7252
        %v7254 = vrcp.pop %v7253
        %v7255 = vmul.f32 %v7238, %v7254
        %v7256 = vmul.f32 %v7240, %v7254
        %v7257 = vmul.f32 %v7242, %v7254
        %v7258 = vmul.f32 %v7244, %v7254
        %v7259 = vpack.c.bf16 %v6839, %v6837
        %v7260 = vpack.c.bf16 %v6844, %v6842
        %v7261 = vpack.c.bf16 %v6849, %v6847
        %v7262 = vpack.c.bf16 %v6854, %v6852
        %v7263 = vpack.c.bf16 %v6859, %v6857
        %v7264 = vpack.c.bf16 %v6864, %v6862
        %v7265 = vpack.c.bf16 %v6869, %v6867
        %v7266 = vpack.c.bf16 %v6874, %v6872
        %v7267 = vpack.c.bf16 %v6879, %v6877
        %v7268 = vpack.c.bf16 %v6884, %v6882
        %v7269 = vpack.c.bf16 %v6889, %v6887
        %v7270 = vpack.c.bf16 %v6894, %v6892
        %v7271 = vpack.c.bf16 %v6899, %v6897
        %v7272 = vpack.c.bf16 %v6904, %v6902
        %v7273 = vpack.c.bf16 %v6909, %v6907
        %v7274 = vpack.c.bf16 %v6914, %v6912
        %v7275 = vpack.c.bf16 %v6919, %v6917
        %v7276 = vpack.c.bf16 %v6924, %v6922
        %v7277 = vpack.c.bf16 %v6929, %v6927
        %v7278 = vpack.c.bf16 %v6934, %v6932
        %v7279 = vpack.c.bf16 %v6939, %v6937
        %v7280 = vpack.c.bf16 %v6944, %v6942
        %v7281 = vpack.c.bf16 %v6949, %v6947
        %v7282 = vpack.c.bf16 %v6954, %v6952
        %v7283 = vpack.c.bf16 %v6959, %v6957
        %v7284 = vpack.c.bf16 %v6964, %v6962
        %v7285 = vpack.c.bf16 %v6969, %v6967
        %v7286 = vpack.c.bf16 %v6974, %v6972
        %v7287 = vpack.c.bf16 %v6979, %v6977
        %v7288 = vpack.c.bf16 %v6984, %v6982
        %v7289 = vpack.c.bf16 %v6989, %v6987
        %v7290 = vpack.c.bf16 %v6994, %v6992
        %v7291 = vpack.c.bf16 %v7255, %v7255
        %v7292 = vpack.c.bf16 %v7256, %v7256
        %v7293 = vpack.c.bf16 %v7257, %v7257
        %v7294 = vpack.c.bf16 %v7258, %v7258
        %7327 = vrot.lane.b32.xlu0 %v7259, 64
        %v7328 = vpop.permute.xlu0 %7327
        %7329 = vrot.lane.b32.xlu0 %v7260, 64
        %v7330 = vpop.permute.xlu0 %7329
        %7331 = vrot.lane.b32.xlu0 %v7261, 64
        %v7332 = vpop.permute.xlu0 %7331
        %7333 = vrot.lane.b32.xlu0 %v7262, 64
        %v7334 = vpop.permute.xlu0 %7333
        %7335 = vrot.lane.b32.xlu0 %v7263, 64
        %v7336 = vpop.permute.xlu0 %7335
        %7337 = vrot.lane.b32.xlu0 %v7264, 64
        %v7338 = vpop.permute.xlu0 %7337
        %7339 = vrot.lane.b32.xlu0 %v7265, 64
        %v7340 = vpop.permute.xlu0 %7339
        %7341 = vrot.lane.b32.xlu0 %v7266, 64
        %v7342 = vpop.permute.xlu0 %7341
        %7343 = vrot.lane.b32.xlu0 %v7267, 64
        %v7344 = vpop.permute.xlu0 %7343
        %7345 = vrot.lane.b32.xlu0 %v7268, 64
        %v7346 = vpop.permute.xlu0 %7345
        %7347 = vrot.lane.b32.xlu0 %v7269, 64
        %v7348 = vpop.permute.xlu0 %7347
        %7349 = vrot.lane.b32.xlu0 %v7270, 64
        %v7350 = vpop.permute.xlu0 %7349
        %7351 = vrot.lane.b32.xlu0 %v7271, 64
        %v7352 = vpop.permute.xlu0 %7351
        %7353 = vrot.lane.b32.xlu0 %v7272, 64
        %v7354 = vpop.permute.xlu0 %7353
        %7355 = vrot.lane.b32.xlu0 %v7273, 64
        %v7356 = vpop.permute.xlu0 %7355
        %7357 = vrot.lane.b32.xlu0 %v7274, 64
        %v7358 = vpop.permute.xlu0 %7357
        %7359 = vrot.lane.b32.xlu0 %v7275, 64
        %v7360 = vpop.permute.xlu0 %7359
        %7361 = vrot.lane.b32.xlu0 %v7276, 64
        %v7362 = vpop.permute.xlu0 %7361
        %7363 = vrot.lane.b32.xlu0 %v7277, 64
        %v7364 = vpop.permute.xlu0 %7363
        %7365 = vrot.lane.b32.xlu0 %v7278, 64
        %v7366 = vpop.permute.xlu0 %7365
        %7367 = vrot.lane.b32.xlu0 %v7279, 64
        %v7368 = vpop.permute.xlu0 %7367
        %7369 = vrot.lane.b32.xlu0 %v7280, 64
        %v7370 = vpop.permute.xlu0 %7369
        %7371 = vrot.lane.b32.xlu0 %v7281, 64
        %v7372 = vpop.permute.xlu0 %7371
        %7373 = vrot.lane.b32.xlu0 %v7282, 64
        %v7374 = vpop.permute.xlu0 %7373
        %7375 = vrot.lane.b32.xlu0 %v7283, 64
        %v7376 = vpop.permute.xlu0 %7375
        %7377 = vrot.lane.b32.xlu0 %v7284, 64
        %v7378 = vpop.permute.xlu0 %7377
        %7379 = vrot.lane.b32.xlu0 %v7285, 64
        %v7380 = vpop.permute.xlu0 %7379
        %7381 = vrot.lane.b32.xlu0 %v7286, 64
        %v7382 = vpop.permute.xlu0 %7381
        %7383 = vrot.lane.b32.xlu0 %v7287, 64
        %v7384 = vpop.permute.xlu0 %7383
        %7385 = vrot.lane.b32.xlu0 %v7288, 64
        %v7386 = vpop.permute.xlu0 %7385
        %7387 = vrot.lane.b32.xlu0 %v7289, 64
        %v7388 = vpop.permute.xlu0 %7387
        %7389 = vrot.lane.b32.xlu0 %v7290, 64
        %v7390 = vpop.permute.xlu0 %7389
        %7423 = vmatpush.bf16.msra.mxu0 %v7342
        %7424 = vmatpush.bf16.msra.mxu0 %v7340
        %7425 = vmatpush.bf16.msra.mxu0 %v7338
        %7426 = vmatpush.bf16.msra.mxu0 %v7336
        %7427 = vmatpush.bf16.msra.mxu0 %v7334
        %7428 = vmatpush.bf16.msra.mxu0 %v7332
        %7429 = vmatpush.bf16.msra.mxu0 %v7330
        %7430 = vmatpush.bf16.msra.mxu0 %v7328
        %7431 = vmatmul.bf16.gmra.mxu0 %v7291
        %v7432 = vpop.f32.mrf.mxu0
        %v7433 = vadd.f32 0.0, %v7432
        %v7434 = vpop.f32.mrf.mxu0
        %7435 = vdwg.mxu0
        %7436 = vmatpush.bf16.msra.mxu0 %v7358
        %7437 = vmatpush.bf16.msra.mxu0 %v7356
        %7438 = vmatpush.bf16.msra.mxu0 %v7354
        %7439 = vmatpush.bf16.msra.mxu0 %v7352
        %7440 = vmatpush.bf16.msra.mxu0 %v7350
        %7441 = vmatpush.bf16.msra.mxu0 %v7348
        %7442 = vmatpush.bf16.msra.mxu0 %v7346
        %7443 = vmatpush.bf16.msra.mxu0 %v7344
        %7444 = vmatmul.bf16.gmra.mxu0 %v7292
        %v7445 = vpop.f32.mrf.mxu0
        %v7446 = vadd.f32 %v7433, %v7445
        %v7447 = vpop.f32.mrf.mxu0
        %7448 = vdwg.mxu0
        %7449 = vmatpush.bf16.msra.mxu0 %v7374
        %7450 = vmatpush.bf16.msra.mxu0 %v7372
        %7451 = vmatpush.bf16.msra.mxu0 %v7370
        %7452 = vmatpush.bf16.msra.mxu0 %v7368
        %7453 = vmatpush.bf16.msra.mxu0 %v7366
        %7454 = vmatpush.bf16.msra.mxu0 %v7364
        %7455 = vmatpush.bf16.msra.mxu0 %v7362
        %7456 = vmatpush.bf16.msra.mxu0 %v7360
        %7457 = vmatmul.bf16.gmra.mxu0 %v7293
        %v7458 = vpop.f32.mrf.mxu0
        %v7459 = vadd.f32 %v7446, %v7458
        %v7460 = vpop.f32.mrf.mxu0
        %7461 = vdwg.mxu0
        %7462 = vmatpush.bf16.msra.mxu0 %v7390
        %7463 = vmatpush.bf16.msra.mxu0 %v7388
        %7464 = vmatpush.bf16.msra.mxu0 %v7386
        %7465 = vmatpush.bf16.msra.mxu0 %v7384
        %7466 = vmatpush.bf16.msra.mxu0 %v7382
        %7467 = vmatpush.bf16.msra.mxu0 %v7380
        %7468 = vmatpush.bf16.msra.mxu0 %v7378
        %7469 = vmatpush.bf16.msra.mxu0 %v7376
        %7470 = vmatmul.bf16.gmra.mxu0 %v7294
        %v7471 = vpop.f32.mrf.mxu0
        %v7472 = vadd.f32 %v7459, %v7471
        %v7473 = vpop.f32.mrf.mxu0
        %7474 = vdwg.mxu0
        %v7475 = vpack.c.bf16 %v7472, %v7472
        %v7477 = vunpack.c.l.b16 %v6696
        %v7478 = vpack.c.b16 %v7477, %v7477
        %7479 = vrot.lane.b32.xlu0 %v7478, 112
        %v7480 = vpop.permute.xlu0 %7479
        %v7485 = vunpack.c.l.b16 %v7128
        %v7486 = vunpack.c.h.b16 %v7128
        %v7487 = vunpack.c.l.b16 %v7129
        %v7488 = vunpack.c.h.b16 %v7129
        %v7489 = vunpack.c.l.b16 %v7130
        %v7490 = vunpack.c.h.b16 %v7130
        %v7491 = vunpack.c.l.b16 %v7131
        %v7492 = vunpack.c.h.b16 %v7131
        %v7493 = vpack.c.b16 %v7489, %v7485
        %v7494 = vpack.c.b16 %v7490, %v7486
        %v7495 = vpack.c.b16 %v7491, %v7487
        %v7496 = vpack.c.b16 %v7492, %v7488
        %v7502 = vsel %vm553, %v7480, 0
        %7504 = vmatpush.bf16.msra.mxu0 0
        %7505 = vmatpush.bf16.msra.mxu0 0
        %7506 = vmatpush.bf16.msra.mxu0 0
        %7507 = vmatpush.bf16.msra.mxu0 0
        %7508 = vmatpush.bf16.msra.mxu0 0
        %7509 = vmatpush.bf16.msra.mxu0 0
        %7510 = vmatpush.bf16.msra.mxu0 0
        %7511 = vmatpush.bf16.msra.mxu0 %v7493
        %7512 = vmatmul.bf16.gmra.mxu0 %v7502
        %v7513 = vpop.f32.mrf.mxu0
        %v7514 = vadd.f32 0.0, %v7513
        %v7515 = vpop.f32.mrf.mxu0
        %7516 = vdwg.mxu0
        %7517 = vmatpush.bf16.msra.mxu0 0
        %7518 = vmatpush.bf16.msra.mxu0 0
        %7519 = vmatpush.bf16.msra.mxu0 0
        %7520 = vmatpush.bf16.msra.mxu0 0
        %7521 = vmatpush.bf16.msra.mxu0 0
        %7522 = vmatpush.bf16.msra.mxu0 0
        %7523 = vmatpush.bf16.msra.mxu0 0
        %7524 = vmatpush.bf16.msra.mxu0 %v7494
        %7525 = vmatmul.bf16.gmra.mxu0 %v7502
        %v7526 = vpop.f32.mrf.mxu0
        %v7527 = vadd.f32 0.0, %v7526
        %v7528 = vpop.f32.mrf.mxu0
        %7529 = vdwg.mxu0
        %7530 = vmatpush.bf16.msra.mxu0 0
        %7531 = vmatpush.bf16.msra.mxu0 0
        %7532 = vmatpush.bf16.msra.mxu0 0
        %7533 = vmatpush.bf16.msra.mxu0 0
        %7534 = vmatpush.bf16.msra.mxu0 0
        %7535 = vmatpush.bf16.msra.mxu0 0
        %7536 = vmatpush.bf16.msra.mxu0 0
        %7537 = vmatpush.bf16.msra.mxu0 %v7495
        %7538 = vmatmul.bf16.gmra.mxu0 %v7502
        %v7539 = vpop.f32.mrf.mxu0
        %v7540 = vadd.f32 0.0, %v7539
        %v7541 = vpop.f32.mrf.mxu0
        %7542 = vdwg.mxu0
        %7543 = vmatpush.bf16.msra.mxu0 0
        %7544 = vmatpush.bf16.msra.mxu0 0
        %7545 = vmatpush.bf16.msra.mxu0 0
        %7546 = vmatpush.bf16.msra.mxu0 0
        %7547 = vmatpush.bf16.msra.mxu0 0
        %7548 = vmatpush.bf16.msra.mxu0 0
        %7549 = vmatpush.bf16.msra.mxu0 0
        %7550 = vmatpush.bf16.msra.mxu0 %v7496
        %7551 = vmatmul.bf16.gmra.mxu0 %v7502
        %v7552 = vpop.f32.mrf.mxu0
        %v7553 = vadd.f32 0.0, %v7552
        %v7554 = vpop.f32.mrf.mxu0
        %7555 = vdwg.mxu0
        %v7556 = vsel %vm7223, %v7514, -inf
        %v7557 = vsel %vm7223, %v7527, -inf
        %v7558 = vsel %vm7223, %v7540, -inf
        %v7559 = vsel %vm7223, %v7553, -inf
        %v7560 = vmax.f32 %v7556, %v7557
        %v7561 = vmax.f32 %v7558, %v7559
        %v7562 = vmax.f32 %v7560, %v7561
        %7563 = vmax.xlane.f32.xlu0 %v7562
        %v7564 = vpop.xlane.xlu0 %7563
        %v7565 = vsub.f32 %v7514, %v7564
        %v7566 = vsub.f32 %v7527, %v7564
        %v7567 = vsub.f32 %v7540, %v7564
        %v7568 = vsub.f32 %v7553, %v7564
        %v7569 = vmul.f32 %v7565, 1.442695
        %v7570 = vpow.pop %v7569
        %v7571 = vmul.f32 %v7566, 1.442695
        %v7572 = vpow.pop %v7571
        %v7573 = vmul.f32 %v7567, 1.442695
        %v7574 = vpow.pop %v7573
        %v7575 = vmul.f32 %v7568, 1.442695
        %v7576 = vpow.pop %v7575
        %v7577 = vsel %vm7223, %v7570, 0.0
        %v7578 = vsel %vm7223, %v7572, 0.0
        %v7579 = vadd.f32 %v7577, %v7578
        %v7580 = vsel %vm7223, %v7574, 0.0
        %v7581 = vadd.f32 %v7579, %v7580
        %v7582 = vsel %vm7223, %v7576, 0.0
        %v7583 = vadd.f32 %v7581, %v7582
        %7584 = vadd.xlane.f32.xlu0 %v7583
        %v7585 = vpop.xlane.xlu0 %7584
        %v7586 = vrcp.pop %v7585
        %v7587 = vmul.f32 %v7570, %v7586
        %v7588 = vmul.f32 %v7572, %v7586
        %v7589 = vmul.f32 %v7574, %v7586
        %v7590 = vmul.f32 %v7576, %v7586
        %v7591 = vpack.c.bf16 %v7587, %v7587
        %v7592 = vpack.c.bf16 %v7588, %v7588
        %v7593 = vpack.c.bf16 %v7589, %v7589
        %v7594 = vpack.c.bf16 %v7590, %v7590
        %7595 = vrot.lane.b32.xlu0 %v7259, 48
        %v7596 = vpop.permute.xlu0 %7595
        %7597 = vrot.lane.b32.xlu0 %v7260, 48
        %v7598 = vpop.permute.xlu0 %7597
        %7599 = vrot.lane.b32.xlu0 %v7261, 48
        %v7600 = vpop.permute.xlu0 %7599
        %7601 = vrot.lane.b32.xlu0 %v7262, 48
        %v7602 = vpop.permute.xlu0 %7601
        %7603 = vrot.lane.b32.xlu0 %v7263, 48
        %v7604 = vpop.permute.xlu0 %7603
        %7605 = vrot.lane.b32.xlu0 %v7264, 48
        %v7606 = vpop.permute.xlu0 %7605
        %7607 = vrot.lane.b32.xlu0 %v7265, 48
        %v7608 = vpop.permute.xlu0 %7607
        %7609 = vrot.lane.b32.xlu0 %v7266, 48
        %v7610 = vpop.permute.xlu0 %7609
        %7611 = vrot.lane.b32.xlu0 %v7267, 48
        %v7612 = vpop.permute.xlu0 %7611
        %7613 = vrot.lane.b32.xlu0 %v7268, 48
        %v7614 = vpop.permute.xlu0 %7613
        %7615 = vrot.lane.b32.xlu0 %v7269, 48
        %v7616 = vpop.permute.xlu0 %7615
        %7617 = vrot.lane.b32.xlu0 %v7270, 48
        %v7618 = vpop.permute.xlu0 %7617
        %7619 = vrot.lane.b32.xlu0 %v7271, 48
        %v7620 = vpop.permute.xlu0 %7619
        %7621 = vrot.lane.b32.xlu0 %v7272, 48
        %v7622 = vpop.permute.xlu0 %7621
        %7623 = vrot.lane.b32.xlu0 %v7273, 48
        %v7624 = vpop.permute.xlu0 %7623
        %7625 = vrot.lane.b32.xlu0 %v7274, 48
        %v7626 = vpop.permute.xlu0 %7625
        %7627 = vrot.lane.b32.xlu0 %v7275, 48
        %v7628 = vpop.permute.xlu0 %7627
        %7629 = vrot.lane.b32.xlu0 %v7276, 48
        %v7630 = vpop.permute.xlu0 %7629
        %7631 = vrot.lane.b32.xlu0 %v7277, 48
        %v7632 = vpop.permute.xlu0 %7631
        %7633 = vrot.lane.b32.xlu0 %v7278, 48
        %v7634 = vpop.permute.xlu0 %7633
        %7635 = vrot.lane.b32.xlu0 %v7279, 48
        %v7636 = vpop.permute.xlu0 %7635
        %7637 = vrot.lane.b32.xlu0 %v7280, 48
        %v7638 = vpop.permute.xlu0 %7637
        %7639 = vrot.lane.b32.xlu0 %v7281, 48
        %v7640 = vpop.permute.xlu0 %7639
        %7641 = vrot.lane.b32.xlu0 %v7282, 48
        %v7642 = vpop.permute.xlu0 %7641
        %7643 = vrot.lane.b32.xlu0 %v7283, 48
        %v7644 = vpop.permute.xlu0 %7643
        %7645 = vrot.lane.b32.xlu0 %v7284, 48
        %v7646 = vpop.permute.xlu0 %7645
        %7647 = vrot.lane.b32.xlu0 %v7285, 48
        %v7648 = vpop.permute.xlu0 %7647
        %7649 = vrot.lane.b32.xlu0 %v7286, 48
        %v7650 = vpop.permute.xlu0 %7649
        %7651 = vrot.lane.b32.xlu0 %v7287, 48
        %v7652 = vpop.permute.xlu0 %7651
        %7653 = vrot.lane.b32.xlu0 %v7288, 48
        %v7654 = vpop.permute.xlu0 %7653
        %7655 = vrot.lane.b32.xlu0 %v7289, 48
        %v7656 = vpop.permute.xlu0 %7655
        %7657 = vrot.lane.b32.xlu0 %v7290, 48
        %v7658 = vpop.permute.xlu0 %7657
        %7691 = vmatpush.bf16.msra.mxu0 %v7610
        %7692 = vmatpush.bf16.msra.mxu0 %v7608
        %7693 = vmatpush.bf16.msra.mxu0 %v7606
        %7694 = vmatpush.bf16.msra.mxu0 %v7604
        %7695 = vmatpush.bf16.msra.mxu0 %v7602
        %7696 = vmatpush.bf16.msra.mxu0 %v7600
        %7697 = vmatpush.bf16.msra.mxu0 %v7598
        %7698 = vmatpush.bf16.msra.mxu0 %v7596
        %7699 = vmatmul.bf16.gmra.mxu0 %v7591
        %v7700 = vpop.f32.mrf.mxu0
        %v7701 = vadd.f32 0.0, %v7700
        %v7702 = vpop.f32.mrf.mxu0
        %7703 = vdwg.mxu0
        %7704 = vmatpush.bf16.msra.mxu0 %v7626
        %7705 = vmatpush.bf16.msra.mxu0 %v7624
        %7706 = vmatpush.bf16.msra.mxu0 %v7622
        %7707 = vmatpush.bf16.msra.mxu0 %v7620
        %7708 = vmatpush.bf16.msra.mxu0 %v7618
        %7709 = vmatpush.bf16.msra.mxu0 %v7616
        %7710 = vmatpush.bf16.msra.mxu0 %v7614
        %7711 = vmatpush.bf16.msra.mxu0 %v7612
        %7712 = vmatmul.bf16.gmra.mxu0 %v7592
        %v7713 = vpop.f32.mrf.mxu0
        %v7714 = vadd.f32 %v7701, %v7713
        %v7715 = vpop.f32.mrf.mxu0
        %7716 = vdwg.mxu0
        %7717 = vmatpush.bf16.msra.mxu0 %v7642
        %7718 = vmatpush.bf16.msra.mxu0 %v7640
        %7719 = vmatpush.bf16.msra.mxu0 %v7638
        %7720 = vmatpush.bf16.msra.mxu0 %v7636
        %7721 = vmatpush.bf16.msra.mxu0 %v7634
        %7722 = vmatpush.bf16.msra.mxu0 %v7632
        %7723 = vmatpush.bf16.msra.mxu0 %v7630
        %7724 = vmatpush.bf16.msra.mxu0 %v7628
        %7725 = vmatmul.bf16.gmra.mxu0 %v7593
        %v7726 = vpop.f32.mrf.mxu0
        %v7727 = vadd.f32 %v7714, %v7726
        %v7728 = vpop.f32.mrf.mxu0
        %7729 = vdwg.mxu0
        %7730 = vmatpush.bf16.msra.mxu0 %v7658
        %7731 = vmatpush.bf16.msra.mxu0 %v7656
        %7732 = vmatpush.bf16.msra.mxu0 %v7654
        %7733 = vmatpush.bf16.msra.mxu0 %v7652
        %7734 = vmatpush.bf16.msra.mxu0 %v7650
        %7735 = vmatpush.bf16.msra.mxu0 %v7648
        %7736 = vmatpush.bf16.msra.mxu0 %v7646
        %7737 = vmatpush.bf16.msra.mxu0 %v7644
        %7738 = vmatmul.bf16.gmra.mxu0 %v7594
        %v7739 = vpop.f32.mrf.mxu0
        %v7740 = vadd.f32 %v7727, %v7739
        %v7741 = vpop.f32.mrf.mxu0
        %7742 = vdwg.mxu0
        %v7743 = vpack.c.bf16 %v7740, %v7740
        %v7746 = vunpack.c.l.b16 %v7142
        %v7747 = vunpack.c.l.b16 %v7143
        %v7748 = vpack.c.b16 %v7747, %v7746
        %v7751 = vsel %vm553, %v7743, 0
        %7753 = vmatpush.bf16.msra.mxu0 0
        %7754 = vmatpush.bf16.msra.mxu0 0
        %7755 = vmatpush.bf16.msra.mxu0 0
        %7756 = vmatpush.bf16.msra.mxu0 0
        %7757 = vmatpush.bf16.msra.mxu0 0
        %7758 = vmatpush.bf16.msra.mxu0 0
        %7759 = vmatpush.bf16.msra.mxu0 0
        %7760 = vmatpush.bf16.msra.mxu0 %v7748
        %7761 = vmatmul.bf16.gmra.mxu0 %v7751
        %v7762 = vpop.f32.mrf.mxu0
        %v7763 = vadd.f32 0.0, %v7762
        %v7764 = vpop.f32.mrf.mxu0
        %7765 = vdwg.mxu0
        %v7768 = vunpack.c.l.b16 %v7140
        %v7769 = vunpack.c.l.b16 %v7141
        %v7770 = vpack.c.b16 %v7769, %v7768
        %v7773 = vsel %vm553, %v7475, 0
        %7775 = vmatpush.bf16.msra.mxu0 0
        %7776 = vmatpush.bf16.msra.mxu0 0
        %7777 = vmatpush.bf16.msra.mxu0 0
        %7778 = vmatpush.bf16.msra.mxu0 0
        %7779 = vmatpush.bf16.msra.mxu0 0
        %7780 = vmatpush.bf16.msra.mxu0 0
        %7781 = vmatpush.bf16.msra.mxu0 0
        %7782 = vmatpush.bf16.msra.mxu0 %v7770
        %7783 = vmatmul.bf16.gmra.mxu0 %v7773
        %v7784 = vpop.f32.mrf.mxu0
        %v7785 = vadd.f32 %v7763, %v7784
        %v7786 = vpop.f32.mrf.mxu0
        %7787 = vdwg.mxu0
        %7788 = vrot.lane.b32.xlu0 %v7478, 96
        %v7789 = vpop.permute.xlu0 %7788
        %v7794 = vunpack.c.l.b16 %v7132
        %v7795 = vunpack.c.h.b16 %v7132
        %v7796 = vunpack.c.l.b16 %v7133
        %v7797 = vunpack.c.h.b16 %v7133
        %v7798 = vunpack.c.l.b16 %v7134
        %v7799 = vunpack.c.h.b16 %v7134
        %v7800 = vunpack.c.l.b16 %v7135
        %v7801 = vunpack.c.h.b16 %v7135
        %v7802 = vpack.c.b16 %v7798, %v7794
        %v7803 = vpack.c.b16 %v7799, %v7795
        %v7804 = vpack.c.b16 %v7800, %v7796
        %v7805 = vpack.c.b16 %v7801, %v7797
        %v7811 = vsel %vm553, %v7789, 0
        %7813 = vmatpush.bf16.msra.mxu0 0
        %7814 = vmatpush.bf16.msra.mxu0 0
        %7815 = vmatpush.bf16.msra.mxu0 0
        %7816 = vmatpush.bf16.msra.mxu0 0
        %7817 = vmatpush.bf16.msra.mxu0 0
        %7818 = vmatpush.bf16.msra.mxu0 0
        %7819 = vmatpush.bf16.msra.mxu0 0
        %7820 = vmatpush.bf16.msra.mxu0 %v7802
        %7821 = vmatmul.bf16.gmra.mxu0 %v7811
        %v7822 = vpop.f32.mrf.mxu0
        %v7823 = vadd.f32 0.0, %v7822
        %v7824 = vpop.f32.mrf.mxu0
        %7825 = vdwg.mxu0
        %7826 = vmatpush.bf16.msra.mxu0 0
        %7827 = vmatpush.bf16.msra.mxu0 0
        %7828 = vmatpush.bf16.msra.mxu0 0
        %7829 = vmatpush.bf16.msra.mxu0 0
        %7830 = vmatpush.bf16.msra.mxu0 0
        %7831 = vmatpush.bf16.msra.mxu0 0
        %7832 = vmatpush.bf16.msra.mxu0 0
        %7833 = vmatpush.bf16.msra.mxu0 %v7803
        %7834 = vmatmul.bf16.gmra.mxu0 %v7811
        %v7835 = vpop.f32.mrf.mxu0
        %v7836 = vadd.f32 0.0, %v7835
        %v7837 = vpop.f32.mrf.mxu0
        %7838 = vdwg.mxu0
        %7839 = vmatpush.bf16.msra.mxu0 0
        %7840 = vmatpush.bf16.msra.mxu0 0
        %7841 = vmatpush.bf16.msra.mxu0 0
        %7842 = vmatpush.bf16.msra.mxu0 0
        %7843 = vmatpush.bf16.msra.mxu0 0
        %7844 = vmatpush.bf16.msra.mxu0 0
        %7845 = vmatpush.bf16.msra.mxu0 0
        %7846 = vmatpush.bf16.msra.mxu0 %v7804
        %7847 = vmatmul.bf16.gmra.mxu0 %v7811
        %v7848 = vpop.f32.mrf.mxu0
        %v7849 = vadd.f32 0.0, %v7848
        %v7850 = vpop.f32.mrf.mxu0
        %7851 = vdwg.mxu0
        %7852 = vmatpush.bf16.msra.mxu0 0
        %7853 = vmatpush.bf16.msra.mxu0 0
        %7854 = vmatpush.bf16.msra.mxu0 0
        %7855 = vmatpush.bf16.msra.mxu0 0
        %7856 = vmatpush.bf16.msra.mxu0 0
        %7857 = vmatpush.bf16.msra.mxu0 0
        %7858 = vmatpush.bf16.msra.mxu0 0
        %7859 = vmatpush.bf16.msra.mxu0 %v7805
        %7860 = vmatmul.bf16.gmra.mxu0 %v7811
        %v7861 = vpop.f32.mrf.mxu0
        %v7862 = vadd.f32 0.0, %v7861
        %v7863 = vpop.f32.mrf.mxu0
        %7864 = vdwg.mxu0
        %v7865 = vsel %vm7223, %v7823, -inf
        %v7866 = vsel %vm7223, %v7836, -inf
        %v7867 = vsel %vm7223, %v7849, -inf
        %v7868 = vsel %vm7223, %v7862, -inf
        %v7869 = vmax.f32 %v7865, %v7866
        %v7870 = vmax.f32 %v7867, %v7868
        %v7871 = vmax.f32 %v7869, %v7870
        %7872 = vmax.xlane.f32.xlu0 %v7871
        %v7873 = vpop.xlane.xlu0 %7872
        %v7874 = vsub.f32 %v7823, %v7873
        %v7875 = vsub.f32 %v7836, %v7873
        %v7876 = vsub.f32 %v7849, %v7873
        %v7877 = vsub.f32 %v7862, %v7873
        %v7878 = vmul.f32 %v7874, 1.442695
        %v7879 = vpow.pop %v7878
        %v7880 = vmul.f32 %v7875, 1.442695
        %v7881 = vpow.pop %v7880
        %v7882 = vmul.f32 %v7876, 1.442695
        %v7883 = vpow.pop %v7882
        %v7884 = vmul.f32 %v7877, 1.442695
        %v7885 = vpow.pop %v7884
        %v7886 = vsel %vm7223, %v7879, 0.0
        %v7887 = vsel %vm7223, %v7881, 0.0
        %v7888 = vadd.f32 %v7886, %v7887
        %v7889 = vsel %vm7223, %v7883, 0.0
        %v7890 = vadd.f32 %v7888, %v7889
        %v7891 = vsel %vm7223, %v7885, 0.0
        %v7892 = vadd.f32 %v7890, %v7891
        %7893 = vadd.xlane.f32.xlu0 %v7892
        %v7894 = vpop.xlane.xlu0 %7893
        %v7895 = vrcp.pop %v7894
        %v7896 = vmul.f32 %v7879, %v7895
        %v7897 = vmul.f32 %v7881, %v7895
        %v7898 = vmul.f32 %v7883, %v7895
        %v7899 = vmul.f32 %v7885, %v7895
        %v7900 = vpack.c.bf16 %v7896, %v7896
        %v7901 = vpack.c.bf16 %v7897, %v7897
        %v7902 = vpack.c.bf16 %v7898, %v7898
        %v7903 = vpack.c.bf16 %v7899, %v7899
        %7904 = vrot.lane.b32.xlu0 %v7259, 32
        %v7905 = vpop.permute.xlu0 %7904
        %7906 = vrot.lane.b32.xlu0 %v7260, 32
        %v7907 = vpop.permute.xlu0 %7906
        %7908 = vrot.lane.b32.xlu0 %v7261, 32
        %v7909 = vpop.permute.xlu0 %7908
        %7910 = vrot.lane.b32.xlu0 %v7262, 32
        %v7911 = vpop.permute.xlu0 %7910
        %7912 = vrot.lane.b32.xlu0 %v7263, 32
        %v7913 = vpop.permute.xlu0 %7912
        %7914 = vrot.lane.b32.xlu0 %v7264, 32
        %v7915 = vpop.permute.xlu0 %7914
        %7916 = vrot.lane.b32.xlu0 %v7265, 32
        %v7917 = vpop.permute.xlu0 %7916
        %7918 = vrot.lane.b32.xlu0 %v7266, 32
        %v7919 = vpop.permute.xlu0 %7918
        %7920 = vrot.lane.b32.xlu0 %v7267, 32
        %v7921 = vpop.permute.xlu0 %7920
        %7922 = vrot.lane.b32.xlu0 %v7268, 32
        %v7923 = vpop.permute.xlu0 %7922
        %7924 = vrot.lane.b32.xlu0 %v7269, 32
        %v7925 = vpop.permute.xlu0 %7924
        %7926 = vrot.lane.b32.xlu0 %v7270, 32
        %v7927 = vpop.permute.xlu0 %7926
        %7928 = vrot.lane.b32.xlu0 %v7271, 32
        %v7929 = vpop.permute.xlu0 %7928
        %7930 = vrot.lane.b32.xlu0 %v7272, 32
        %v7931 = vpop.permute.xlu0 %7930
        %7932 = vrot.lane.b32.xlu0 %v7273, 32
        %v7933 = vpop.permute.xlu0 %7932
        %7934 = vrot.lane.b32.xlu0 %v7274, 32
        %v7935 = vpop.permute.xlu0 %7934
        %7936 = vrot.lane.b32.xlu0 %v7275, 32
        %v7937 = vpop.permute.xlu0 %7936
        %7938 = vrot.lane.b32.xlu0 %v7276, 32
        %v7939 = vpop.permute.xlu0 %7938
        %7940 = vrot.lane.b32.xlu0 %v7277, 32
        %v7941 = vpop.permute.xlu0 %7940
        %7942 = vrot.lane.b32.xlu0 %v7278, 32
        %v7943 = vpop.permute.xlu0 %7942
        %7944 = vrot.lane.b32.xlu0 %v7279, 32
        %v7945 = vpop.permute.xlu0 %7944
        %7946 = vrot.lane.b32.xlu0 %v7280, 32
        %v7947 = vpop.permute.xlu0 %7946
        %7948 = vrot.lane.b32.xlu0 %v7281, 32
        %v7949 = vpop.permute.xlu0 %7948
        %7950 = vrot.lane.b32.xlu0 %v7282, 32
        %v7951 = vpop.permute.xlu0 %7950
        %7952 = vrot.lane.b32.xlu0 %v7283, 32
        %v7953 = vpop.permute.xlu0 %7952
        %7954 = vrot.lane.b32.xlu0 %v7284, 32
        %v7955 = vpop.permute.xlu0 %7954
        %7956 = vrot.lane.b32.xlu0 %v7285, 32
        %v7957 = vpop.permute.xlu0 %7956
        %7958 = vrot.lane.b32.xlu0 %v7286, 32
        %v7959 = vpop.permute.xlu0 %7958
        %7960 = vrot.lane.b32.xlu0 %v7287, 32
        %v7961 = vpop.permute.xlu0 %7960
        %7962 = vrot.lane.b32.xlu0 %v7288, 32
        %v7963 = vpop.permute.xlu0 %7962
        %7964 = vrot.lane.b32.xlu0 %v7289, 32
        %v7965 = vpop.permute.xlu0 %7964
        %7966 = vrot.lane.b32.xlu0 %v7290, 32
        %v7967 = vpop.permute.xlu0 %7966
        %8000 = vmatpush.bf16.msra.mxu0 %v7919
        %8001 = vmatpush.bf16.msra.mxu0 %v7917
        %8002 = vmatpush.bf16.msra.mxu0 %v7915
        %8003 = vmatpush.bf16.msra.mxu0 %v7913
        %8004 = vmatpush.bf16.msra.mxu0 %v7911
        %8005 = vmatpush.bf16.msra.mxu0 %v7909
        %8006 = vmatpush.bf16.msra.mxu0 %v7907
        %8007 = vmatpush.bf16.msra.mxu0 %v7905
        %8008 = vmatmul.bf16.gmra.mxu0 %v7900
        %v8009 = vpop.f32.mrf.mxu0
        %v8010 = vadd.f32 0.0, %v8009
        %v8011 = vpop.f32.mrf.mxu0
        %8012 = vdwg.mxu0
        %8013 = vmatpush.bf16.msra.mxu0 %v7935
        %8014 = vmatpush.bf16.msra.mxu0 %v7933
        %8015 = vmatpush.bf16.msra.mxu0 %v7931
        %8016 = vmatpush.bf16.msra.mxu0 %v7929
        %8017 = vmatpush.bf16.msra.mxu0 %v7927
        %8018 = vmatpush.bf16.msra.mxu0 %v7925
        %8019 = vmatpush.bf16.msra.mxu0 %v7923
        %8020 = vmatpush.bf16.msra.mxu0 %v7921
        %8021 = vmatmul.bf16.gmra.mxu0 %v7901
        %v8022 = vpop.f32.mrf.mxu0
        %v8023 = vadd.f32 %v8010, %v8022
        %v8024 = vpop.f32.mrf.mxu0
        %8025 = vdwg.mxu0
        %8026 = vmatpush.bf16.msra.mxu0 %v7951
        %8027 = vmatpush.bf16.msra.mxu0 %v7949
        %8028 = vmatpush.bf16.msra.mxu0 %v7947
        %8029 = vmatpush.bf16.msra.mxu0 %v7945
        %8030 = vmatpush.bf16.msra.mxu0 %v7943
        %8031 = vmatpush.bf16.msra.mxu0 %v7941
        %8032 = vmatpush.bf16.msra.mxu0 %v7939
        %8033 = vmatpush.bf16.msra.mxu0 %v7937
        %8034 = vmatmul.bf16.gmra.mxu0 %v7902
        %v8035 = vpop.f32.mrf.mxu0
        %v8036 = vadd.f32 %v8023, %v8035
        %v8037 = vpop.f32.mrf.mxu0
        %8038 = vdwg.mxu0
        %8039 = vmatpush.bf16.msra.mxu0 %v7967
        %8040 = vmatpush.bf16.msra.mxu0 %v7965
        %8041 = vmatpush.bf16.msra.mxu0 %v7963
        %8042 = vmatpush.bf16.msra.mxu0 %v7961
        %8043 = vmatpush.bf16.msra.mxu0 %v7959
        %8044 = vmatpush.bf16.msra.mxu0 %v7957
        %8045 = vmatpush.bf16.msra.mxu0 %v7955
        %8046 = vmatpush.bf16.msra.mxu0 %v7953
        %8047 = vmatmul.bf16.gmra.mxu0 %v7903
        %v8048 = vpop.f32.mrf.mxu0
        %v8049 = vadd.f32 %v8036, %v8048
        %v8050 = vpop.f32.mrf.mxu0
        %8051 = vdwg.mxu0
        %v8052 = vpack.c.bf16 %v8049, %v8049
        %v8055 = vunpack.c.l.b16 %v7144
        %v8056 = vunpack.c.l.b16 %v7145
        %v8057 = vpack.c.b16 %v8056, %v8055
        %v8060 = vsel %vm553, %v8052, 0
        %8062 = vmatpush.bf16.msra.mxu0 0
        %8063 = vmatpush.bf16.msra.mxu0 0
        %8064 = vmatpush.bf16.msra.mxu0 0
        %8065 = vmatpush.bf16.msra.mxu0 0
        %8066 = vmatpush.bf16.msra.mxu0 0
        %8067 = vmatpush.bf16.msra.mxu0 0
        %8068 = vmatpush.bf16.msra.mxu0 0
        %8069 = vmatpush.bf16.msra.mxu0 %v8057
        %8070 = vmatmul.bf16.gmra.mxu0 %v8060
        %v8071 = vpop.f32.mrf.mxu0
        %v8072 = vadd.f32 0.0, %v8071
        %v8073 = vpop.f32.mrf.mxu0
        %8074 = vdwg.mxu0
        %v8075 = vadd.f32 %v7785, %v8072
        %8076 = vrot.lane.b32.xlu0 %v7478, 80
        %v8077 = vpop.permute.xlu0 %8076
        %v8082 = vunpack.c.l.b16 %v7136
        %v8083 = vunpack.c.h.b16 %v7136
        %v8084 = vunpack.c.l.b16 %v7137
        %v8085 = vunpack.c.h.b16 %v7137
        %v8086 = vunpack.c.l.b16 %v7138
        %v8087 = vunpack.c.h.b16 %v7138
        %v8088 = vunpack.c.l.b16 %v7139
        %v8089 = vunpack.c.h.b16 %v7139
        %v8090 = vpack.c.b16 %v8086, %v8082
        %v8091 = vpack.c.b16 %v8087, %v8083
        %v8092 = vpack.c.b16 %v8088, %v8084
        %v8093 = vpack.c.b16 %v8089, %v8085
        %v8099 = vsel %vm553, %v8077, 0
        %8101 = vmatpush.bf16.msra.mxu0 0
        %8102 = vmatpush.bf16.msra.mxu0 0
        %8103 = vmatpush.bf16.msra.mxu0 0
        %8104 = vmatpush.bf16.msra.mxu0 0
        %8105 = vmatpush.bf16.msra.mxu0 0
        %8106 = vmatpush.bf16.msra.mxu0 0
        %8107 = vmatpush.bf16.msra.mxu0 0
        %8108 = vmatpush.bf16.msra.mxu0 %v8090
        %8109 = vmatmul.bf16.gmra.mxu0 %v8099
        %v8110 = vpop.f32.mrf.mxu0
        %v8111 = vadd.f32 0.0, %v8110
        %v8112 = vpop.f32.mrf.mxu0
        %8113 = vdwg.mxu0
        %8114 = vmatpush.bf16.msra.mxu0 0
        %8115 = vmatpush.bf16.msra.mxu0 0
        %8116 = vmatpush.bf16.msra.mxu0 0
        %8117 = vmatpush.bf16.msra.mxu0 0
        %8118 = vmatpush.bf16.msra.mxu0 0
        %8119 = vmatpush.bf16.msra.mxu0 0
        %8120 = vmatpush.bf16.msra.mxu0 0
        %8121 = vmatpush.bf16.msra.mxu0 %v8091
        %8122 = vmatmul.bf16.gmra.mxu0 %v8099
        %v8123 = vpop.f32.mrf.mxu0
        %v8124 = vadd.f32 0.0, %v8123
        %v8125 = vpop.f32.mrf.mxu0
        %8126 = vdwg.mxu0
        %8127 = vmatpush.bf16.msra.mxu0 0
        %8128 = vmatpush.bf16.msra.mxu0 0
        %8129 = vmatpush.bf16.msra.mxu0 0
        %8130 = vmatpush.bf16.msra.mxu0 0
        %8131 = vmatpush.bf16.msra.mxu0 0
        %8132 = vmatpush.bf16.msra.mxu0 0
        %8133 = vmatpush.bf16.msra.mxu0 0
        %8134 = vmatpush.bf16.msra.mxu0 %v8092
        %8135 = vmatmul.bf16.gmra.mxu0 %v8099
        %v8136 = vpop.f32.mrf.mxu0
        %v8137 = vadd.f32 0.0, %v8136
        %v8138 = vpop.f32.mrf.mxu0
        %8139 = vdwg.mxu0
        %8140 = vmatpush.bf16.msra.mxu0 0
        %8141 = vmatpush.bf16.msra.mxu0 0
        %8142 = vmatpush.bf16.msra.mxu0 0
        %8143 = vmatpush.bf16.msra.mxu0 0
        %8144 = vmatpush.bf16.msra.mxu0 0
        %8145 = vmatpush.bf16.msra.mxu0 0
        %8146 = vmatpush.bf16.msra.mxu0 0
        %8147 = vmatpush.bf16.msra.mxu0 %v8093
        %8148 = vmatmul.bf16.gmra.mxu0 %v8099
        %v8149 = vpop.f32.mrf.mxu0
        %v8150 = vadd.f32 0.0, %v8149
        %v8151 = vpop.f32.mrf.mxu0
        %8152 = vdwg.mxu0
        %v8153 = vsel %vm7223, %v8111, -inf
        %v8154 = vsel %vm7223, %v8124, -inf
        %v8155 = vsel %vm7223, %v8137, -inf
        %v8156 = vsel %vm7223, %v8150, -inf
        %v8157 = vmax.f32 %v8153, %v8154
        %v8158 = vmax.f32 %v8155, %v8156
        %v8159 = vmax.f32 %v8157, %v8158
        %8160 = vmax.xlane.f32.xlu0 %v8159
        %v8161 = vpop.xlane.xlu0 %8160
        %v8162 = vsub.f32 %v8111, %v8161
        %v8163 = vsub.f32 %v8124, %v8161
        %v8164 = vsub.f32 %v8137, %v8161
        %v8165 = vsub.f32 %v8150, %v8161
        %v8166 = vmul.f32 %v8162, 1.442695
        %v8167 = vpow.pop %v8166
        %v8168 = vmul.f32 %v8163, 1.442695
        %v8169 = vpow.pop %v8168
        %v8170 = vmul.f32 %v8164, 1.442695
        %v8171 = vpow.pop %v8170
        %v8172 = vmul.f32 %v8165, 1.442695
        %v8173 = vpow.pop %v8172
        %v8174 = vsel %vm7223, %v8167, 0.0
        %v8175 = vsel %vm7223, %v8169, 0.0
        %v8176 = vadd.f32 %v8174, %v8175
        %v8177 = vsel %vm7223, %v8171, 0.0
        %v8178 = vadd.f32 %v8176, %v8177
        %v8179 = vsel %vm7223, %v8173, 0.0
        %v8180 = vadd.f32 %v8178, %v8179
        %8181 = vadd.xlane.f32.xlu0 %v8180
        %v8182 = vpop.xlane.xlu0 %8181
        %v8183 = vrcp.pop %v8182
        %v8184 = vmul.f32 %v8167, %v8183
        %v8185 = vmul.f32 %v8169, %v8183
        %v8186 = vmul.f32 %v8171, %v8183
        %v8187 = vmul.f32 %v8173, %v8183
        %v8188 = vpack.c.bf16 %v8184, %v8184
        %v8189 = vpack.c.bf16 %v8185, %v8185
        %v8190 = vpack.c.bf16 %v8186, %v8186
        %v8191 = vpack.c.bf16 %v8187, %v8187
        %8192 = vrot.lane.b32.xlu0 %v7259, 16
        %v8193 = vpop.permute.xlu0 %8192
        %8194 = vrot.lane.b32.xlu0 %v7260, 16
        %v8195 = vpop.permute.xlu0 %8194
        %8196 = vrot.lane.b32.xlu0 %v7261, 16
        %v8197 = vpop.permute.xlu0 %8196
        %8198 = vrot.lane.b32.xlu0 %v7262, 16
        %v8199 = vpop.permute.xlu0 %8198
        %8200 = vrot.lane.b32.xlu0 %v7263, 16
        %v8201 = vpop.permute.xlu0 %8200
        %8202 = vrot.lane.b32.xlu0 %v7264, 16
        %v8203 = vpop.permute.xlu0 %8202
        %8204 = vrot.lane.b32.xlu0 %v7265, 16
        %v8205 = vpop.permute.xlu0 %8204
        %8206 = vrot.lane.b32.xlu0 %v7266, 16
        %v8207 = vpop.permute.xlu0 %8206
        %8208 = vrot.lane.b32.xlu0 %v7267, 16
        %v8209 = vpop.permute.xlu0 %8208
        %8210 = vrot.lane.b32.xlu0 %v7268, 16
        %v8211 = vpop.permute.xlu0 %8210
        %8212 = vrot.lane.b32.xlu0 %v7269, 16
        %v8213 = vpop.permute.xlu0 %8212
        %8214 = vrot.lane.b32.xlu0 %v7270, 16
        %v8215 = vpop.permute.xlu0 %8214
        %8216 = vrot.lane.b32.xlu0 %v7271, 16
        %v8217 = vpop.permute.xlu0 %8216
        %8218 = vrot.lane.b32.xlu0 %v7272, 16
        %v8219 = vpop.permute.xlu0 %8218
        %8220 = vrot.lane.b32.xlu0 %v7273, 16
        %v8221 = vpop.permute.xlu0 %8220
        %8222 = vrot.lane.b32.xlu0 %v7274, 16
        %v8223 = vpop.permute.xlu0 %8222
        %8224 = vrot.lane.b32.xlu0 %v7275, 16
        %v8225 = vpop.permute.xlu0 %8224
        %8226 = vrot.lane.b32.xlu0 %v7276, 16
        %v8227 = vpop.permute.xlu0 %8226
        %8228 = vrot.lane.b32.xlu0 %v7277, 16
        %v8229 = vpop.permute.xlu0 %8228
        %8230 = vrot.lane.b32.xlu0 %v7278, 16
        %v8231 = vpop.permute.xlu0 %8230
        %8232 = vrot.lane.b32.xlu0 %v7279, 16
        %v8233 = vpop.permute.xlu0 %8232
        %8234 = vrot.lane.b32.xlu0 %v7280, 16
        %v8235 = vpop.permute.xlu0 %8234
        %8236 = vrot.lane.b32.xlu0 %v7281, 16
        %v8237 = vpop.permute.xlu0 %8236
        %8238 = vrot.lane.b32.xlu0 %v7282, 16
        %v8239 = vpop.permute.xlu0 %8238
        %8240 = vrot.lane.b32.xlu0 %v7283, 16
        %v8241 = vpop.permute.xlu0 %8240
        %8242 = vrot.lane.b32.xlu0 %v7284, 16
        %v8243 = vpop.permute.xlu0 %8242
        %8244 = vrot.lane.b32.xlu0 %v7285, 16
        %v8245 = vpop.permute.xlu0 %8244
        %8246 = vrot.lane.b32.xlu0 %v7286, 16
        %v8247 = vpop.permute.xlu0 %8246
        %8248 = vrot.lane.b32.xlu0 %v7287, 16
        %v8249 = vpop.permute.xlu0 %8248
        %8250 = vrot.lane.b32.xlu0 %v7288, 16
        %v8251 = vpop.permute.xlu0 %8250
        %8252 = vrot.lane.b32.xlu0 %v7289, 16
        %v8253 = vpop.permute.xlu0 %8252
        %8254 = vrot.lane.b32.xlu0 %v7290, 16
        %v8255 = vpop.permute.xlu0 %8254
        %8288 = vmatpush.bf16.msra.mxu0 %v8207
        %8289 = vmatpush.bf16.msra.mxu0 %v8205
        %8290 = vmatpush.bf16.msra.mxu0 %v8203
        %8291 = vmatpush.bf16.msra.mxu0 %v8201
        %8292 = vmatpush.bf16.msra.mxu0 %v8199
        %8293 = vmatpush.bf16.msra.mxu0 %v8197
        %8294 = vmatpush.bf16.msra.mxu0 %v8195
        %8295 = vmatpush.bf16.msra.mxu0 %v8193
        %8296 = vmatmul.bf16.gmra.mxu0 %v8188
        %v8297 = vpop.f32.mrf.mxu0
        %v8298 = vadd.f32 0.0, %v8297
        %v8299 = vpop.f32.mrf.mxu0
        %8300 = vdwg.mxu0
        %8301 = vmatpush.bf16.msra.mxu0 %v8223
        %8302 = vmatpush.bf16.msra.mxu0 %v8221
        %8303 = vmatpush.bf16.msra.mxu0 %v8219
        %8304 = vmatpush.bf16.msra.mxu0 %v8217
        %8305 = vmatpush.bf16.msra.mxu0 %v8215
        %8306 = vmatpush.bf16.msra.mxu0 %v8213
        %8307 = vmatpush.bf16.msra.mxu0 %v8211
        %8308 = vmatpush.bf16.msra.mxu0 %v8209
        %8309 = vmatmul.bf16.gmra.mxu0 %v8189
        %v8310 = vpop.f32.mrf.mxu0
        %v8311 = vadd.f32 %v8298, %v8310
        %v8312 = vpop.f32.mrf.mxu0
        %8313 = vdwg.mxu0
        %8314 = vmatpush.bf16.msra.mxu0 %v8239
        %8315 = vmatpush.bf16.msra.mxu0 %v8237
        %8316 = vmatpush.bf16.msra.mxu0 %v8235
        %8317 = vmatpush.bf16.msra.mxu0 %v8233
        %8318 = vmatpush.bf16.msra.mxu0 %v8231
        %8319 = vmatpush.bf16.msra.mxu0 %v8229
        %8320 = vmatpush.bf16.msra.mxu0 %v8227
        %8321 = vmatpush.bf16.msra.mxu0 %v8225
        %8322 = vmatmul.bf16.gmra.mxu0 %v8190
        %v8323 = vpop.f32.mrf.mxu0
        %v8324 = vadd.f32 %v8311, %v8323
        %v8325 = vpop.f32.mrf.mxu0
        %8326 = vdwg.mxu0
        %8327 = vmatpush.bf16.msra.mxu0 %v8255
        %8328 = vmatpush.bf16.msra.mxu0 %v8253
        %8329 = vmatpush.bf16.msra.mxu0 %v8251
        %8330 = vmatpush.bf16.msra.mxu0 %v8249
        %8331 = vmatpush.bf16.msra.mxu0 %v8247
        %8332 = vmatpush.bf16.msra.mxu0 %v8245
        %8333 = vmatpush.bf16.msra.mxu0 %v8243
        %8334 = vmatpush.bf16.msra.mxu0 %v8241
        %8335 = vmatmul.bf16.gmra.mxu0 %v8191
        %v8336 = vpop.f32.mrf.mxu0
        %v8337 = vadd.f32 %v8324, %v8336
        %v8338 = vpop.f32.mrf.mxu0
        %8339 = vdwg.mxu0
        %v8340 = vpack.c.bf16 %v8337, %v8337
        %v8343 = vunpack.c.l.b16 %v7146
        %v8344 = vunpack.c.l.b16 %v7147
        %v8345 = vpack.c.b16 %v8344, %v8343
        %v8348 = vsel %vm553, %v8340, 0
        %8350 = vmatpush.bf16.msra.mxu0 0
        %8351 = vmatpush.bf16.msra.mxu0 0
        %8352 = vmatpush.bf16.msra.mxu0 0
        %8353 = vmatpush.bf16.msra.mxu0 0
        %8354 = vmatpush.bf16.msra.mxu0 0
        %8355 = vmatpush.bf16.msra.mxu0 0
        %8356 = vmatpush.bf16.msra.mxu0 0
        %8357 = vmatpush.bf16.msra.mxu0 %v8345
        %8358 = vmatmul.bf16.gmra.mxu0 %v8348
        %v8359 = vpop.f32.mrf.mxu0
        %v8360 = vadd.f32 0.0, %v8359
        %v8361 = vpop.f32.mrf.mxu0
        %8362 = vdwg.mxu0
        %v8363 = vadd.f32 %v8075, %v8360
        %v8364 = vld [vmem:[%s7 + $0xa0] sm:$0x1]
        %v8365 = vperm.slane %v8364, 0
        %v8366 = vadd.f32 %v8363, %v8365
        %v8367 = vld [vmem:[%s7 + $0xa8] sm:$0x1]
        %v8368 = vadd.f32 %v769, %v8367
        %v8369 = vperm.slane %v8368, 0
        %v8370 = vadd.f32 %v6030, %v8369
        %v8371 = vadd.f32 %v6644, %v8369
        %v8372 = vadd.f32 %v8366, %v8369
        %v8374 = vrot.slane %v8370, 7
        %v8377 = vrot.slane %v8371, 4
        %v8380 = vrot.slane %v8372, 1
        %vm8382 = vcmask 1040384
        %v8383 = vsel %vm8382, %v8368, %v8374
        %vm8384 = vcmask 1043456
        %v8385 = vsel %vm8384, %v8383, %v8377
        %v8386 = vsel %vm7223, %v8385, %v8380
        %8387 = vst.msk [vmem:[%s435] sm:$0xff] %vm1522, %v8386
        %vm8388 = vcmask 521216
        %8389 = vst.msk [vmem:[%s435 + $0x8] sm:$0x3f] %vm8388, %v8380
        %vm8390 = vcmask 516096
        %8391 = vst.msk [vmem:[%s438] sm:$0x1] %vm8390, %v769
        %p8392 = scmp.lt.s32.totalorder %s22, 1
        %s8393 = scalar_select %p8392, %s22, 1
        %s8394 = smul.addr %s8393, 2
        %s8395 = smul.addr %s8394, 8
        %s8396 = scalar_lea.vmem %s8, %s8395
        %p8397 = scmp.lt.s32.totalorder %s22, 1
        %s8398 = scalar_select %p8397, %s22, 1
        %s8399 = scalar_lea.vmem %s9, %s8398
        // Predicated region
        $region57: #{net_forward.1} parent=51 // pred_check
          %p8400 = pneg %p233
        $region58: #{net_forward.1} parent=51 // pred_check_branch
          %8402 = sbr.rel (%p8400) target = $region60
        $region59: #{net_forward.1} parent=51 // pred_region
          _
        $region60: #{net_forward.1} parent=51 // pred_fallthru
          _
        // Predicated region
        $region61: #{net_forward.1} parent=51 // pred_check
          %p8403 = pneg %p259
        $region62: #{net_forward.1} parent=51 // pred_check_branch
          %8405 = sbr.rel (%p8403) target = $region64
        $region63: #{net_forward.1} parent=51 // pred_region
          _
        $region64: #{net_forward.1} parent=51 // pred_fallthru
          _
      $region52: #{net_forward.1} parent=5 // pred_fallthru
        _
      %p8406 = scmp.le.s32.totalorder 2, %s17
      // Predicated region
      $region65: #{net_forward.1} parent=5 // pred_check
        %p8407 = pneg %p8406
      $region66: #{net_forward.1} parent=5 // pred_check_branch
        %8409 = sbr.rel (%p8407) target = $region68
      $region67: #{net_forward.1} parent=5 // pred_region
        %s8410 = ssub.s32 %s17, 2
        // Predicated region
        $region69: #{net_forward.1} parent=67 // pred_check
          %p8411 = pneg %p239
        $region70: #{net_forward.1} parent=67 // pred_check_branch
          %8413 = sbr.rel (%p8411) target = $region72
        $region71: #{net_forward.1} parent=67 // pred_region
          %p8414 = scmp.lt.s32.totalorder %s23, 1
          %s8415 = scalar_select %p8414, %s23, 1
          %s8416 = smul.addr %s8415, 2
          %s8417 = smul.addr %s8416, 8
          %s8418 = scalar_lea.vmem %s8, %s8417
        $region72: #{net_forward.1} parent=67 // pred_fallthru
          _
        // Predicated region
        $region73: #{net_forward.1} parent=67 // pred_check
          %p8419 = pneg %p265
        $region74: #{net_forward.1} parent=67 // pred_check_branch
          %8421 = sbr.rel (%p8419) target = $region76
        $region75: #{net_forward.1} parent=67 // pred_region
          %p8422 = scmp.lt.s32.totalorder %s23, 1
          %s8423 = scalar_select %p8422, %s23, 1
          %s8424 = scalar_lea.vmem %s9, %s8423
        $region76: #{net_forward.1} parent=67 // pred_fallthru
          _
      $region68: #{net_forward.1} parent=5 // pred_fallthru
        _
    $region6: #{net_forward.1} parent=1 // loop_footer
      %s21 = sadd.s32 1, %s17
    $region7: #{net_forward.1} parent=1 // loop_footer_branch
      %16 = sbr.rel target = $region3
    $region8: #{net_forward.1} parent=1 // loop_exit
      _
    %8425 = vsyncpa [#allocation3], 1
    %s8426 = scalar_lea.sflag [#allocation3], 1
    %8427 = vsyncpa %s8426, 1

</llo_original>
